<compile_context>
chip_gen: v7x
topology: tpu7x:2x2x1
jax: 0.10.0
libtpu: 0.0.40
codegen_flags: <defaults>
</compile_context>

<pallas_src>
import functools

import jax
import jax.numpy as jnp
from jax import lax
from jax.experimental import pallas as pl
from jax.experimental.pallas import tpu as pltpu


# ---------------------------------------------------------------------------
# Kernel builder (closes over static shape configuration).
# ---------------------------------------------------------------------------
def _make_kernel(B, C, Cout, H, W, G):
    HW = H * W
    N = 2 * B          # x images then y images, stacked on the flat pixel axis
    M = N * HW          # total pixels carried through the shared-weight convs
    Mh = B * HW          # pixels after folding the x/y halves
    OFFS = [(kh - 1, kw - 1) for kh in range(3) for kw in range(3)]

    def kernel(x_ref, y_ref, w_ref, b_ref, wot_ref, bo_ref, gamma_ref, beta_ref,
               mask_ref, o_ref, buf0, buf1):
        # Zero only the guard lanes; every interior lane is overwritten below.
        # Guards make the lane-shifted tap loads in-bounds; their (zero) values are
        # always multiplied by a 0 mask, so they never affect real outputs.
        zguard = jnp.zeros((C, G), jnp.float32)
        buf0[:, 0:G] = zguard
        buf0[:, G + M:M + 2 * G] = zguard
        buf1[:, 0:G] = zguard
        buf1[:, G + M:M + 2 * G] = zguard

        # Place inputs: channels on sublanes, pixels on lanes (x images, then y).
        # HW is a multiple of 128 here, so these are aligned, unmasked stores.
        for n in range(B):
            buf0[:, G + n * HW:G + (n + 1) * HW] = x_ref[n]
            buf0[:, G + (B + n) * HW:G + (B + n + 1) * HW] = y_ref[n]

        def conv3x3_relu(src_ref, ci):
            # Nine accumulating (C, C) @ (C, M) tap matmuls; the tap shift is a
            # static lane-offset window of the guarded scratch, boundary reads are
            # zeroed by the per-tap validity mask.
            acc = jnp.zeros((C, M), jnp.float32)
            for t, (dh, dw) in enumerate(OFFS):
                d = dh * W + dw
                shifted = src_ref[:, G + d:G + d + M]
                if dh == 0 and dw == 0:
                    opnd = shifted                      # center tap: always valid
                else:
                    opnd = shifted * mask_ref[t:t + 1, :]
                acc = acc + jnp.dot(w_ref[ci, t], opnd,
                                    preferred_element_type=jnp.float32)
            return jnp.maximum(acc + b_ref[ci], 0.0)     # (C, M), lane-dense

        a1 = conv3x3_relu(buf0, 0)                       # x1 / y1
        buf1[:, G:G + M] = a1
        a2 = conv3x3_relu(buf1, 1)                       # x2 / y2
        buf0[:, G:G + M] = buf1[:, G:G + M] + a2         # conv3 input = a1 + a2
        a3 = conv3x3_relu(buf0, 2)                       # x3 / y3

        s = buf0[:, G:G + M] + a3                        # a1 + a2 + a3, (C, M)
        sc = s[:, 0:Mh] + s[:, Mh:M]                     # fold x-path + y-path

        # 1x1 conv, transposed: z[c_out, pixel] -> pixels on lanes for BN/store.
        z = jnp.dot(wot_ref[...], sc,
                    preferred_element_type=jnp.float32) + bo_ref[...]   # (Cout, Mh)

        # BatchNorm2d, training-mode batch stats (biased var), eps=1e-5.
        # Two-pass (mean-subtracted) variance avoids E[z^2]-E[z]^2 cancellation.
        inv_n = 1.0 / float(Mh)
        mean = jnp.sum(z, axis=1, keepdims=True) * inv_n                 # (Cout, 1)
        zc = z - mean
        var = jnp.sum(zc * zc, axis=1, keepdims=True) * inv_n
        zn = zc * lax.rsqrt(var + 1e-5) * gamma_ref[...] + beta_ref[...]
        out = jnp.maximum(zn, 0.0)                                       # (Cout, Mh)

        # Emit NCHW-flat: per image, (Cout, H*W) lane-dense store.
        for b in range(B):
            o_ref[b] = out[:, b * HW:(b + 1) * HW]

    return kernel


# ---------------------------------------------------------------------------
# Wrapper: NCHW in / NCHW out; parameters passed as a dict of JAX arrays.
# ---------------------------------------------------------------------------
@jax.jit
def densecat_cat_add_forward(x_nchw, y_nchw, params):
    x = x_nchw.astype(jnp.float32)
    y = y_nchw.astype(jnp.float32)
    B, C, H, W = x.shape
    Cout = params["wo"].shape[1]
    HW = H * W
    N = 2 * B
    M = N * HW
    Mh = B * HW
    # Guard width: >= W+1 (max tap shift), rounded up to a lane-aligned 128.
    G = ((W + 1 + 127) // 128) * 128

    # Free views (no HBM relayout): NCHW is already channels-on-sublanes per image.
    x2 = x.reshape(B, C, HW)
    y2 = y.reshape(B, C, HW)

    # Tap-major conv weights: (3 convs, 9 taps, Cout=C, Cin=C); HWIO -> (9, O, I).
    def taps(w_hwio):
        return jnp.transpose(w_hwio, (0, 1, 3, 2)).reshape(9, C, C)

    w3 = jnp.stack([taps(params["w1"]), taps(params["w2"]), taps(params["w3"])])
    b3 = jnp.stack([params["b1"].reshape(C, 1),
                    params["b2"].reshape(C, 1),
                    params["b3"].reshape(C, 1)])

    # Per-tap boundary-validity masks over the flat (image, row, col) pixel axis.
    p = jnp.arange(M, dtype=jnp.int32)
    r = (p % HW) // W
    c = p % W
    rows = []
    for kh in range(3):
        for kw in range(3):
            dh, dw = kh - 1, kw - 1
            ok = (r + dh >= 0) & (r + dh < H) & (c + dw >= 0) & (c + dw < W)
            rows.append(ok.astype(jnp.float32))
    mask = jnp.stack(rows)                               # (9, M)

    flops = (3 * 9 * 2 * C * C * M            # 27 tap matmuls
             + 2 * C * Cout * Mh              # 1x1 conv
             + 3 * 12 * C * M                 # mask mults, accumulate, ReLU, adds
             + 12 * Cout * Mh)                # BN + ReLU
    bytes_accessed = 4 * (2 * B * C * HW + B * Cout * HW + 9 * M
                          + 27 * C * C + 3 * C + C * Cout + 3 * Cout)
    scratch_bytes = 2 * 8 * (M + 2 * G) * 4   # two guarded buffers, sublane-padded
    vmem_limit = int(min(100 << 20,
                         max(16 << 20, 2 * (scratch_bytes + bytes_accessed))))

    vmem = pl.BlockSpec(memory_space=pltpu.MemorySpace.VMEM)
    out = pl.pallas_call(
        _make_kernel(B, C, Cout, H, W, G),
        out_shape=jax.ShapeDtypeStruct((B, Cout, HW), jnp.float32),
        in_specs=[vmem] * 9,
        out_specs=vmem,
        scratch_shapes=[
            pltpu.VMEM((C, M + 2 * G), jnp.float32),     # conv input ping buffer
            pltpu.VMEM((C, M + 2 * G), jnp.float32),     # a1 / pong buffer
        ],
        compiler_params=pltpu.CompilerParams(vmem_limit_bytes=vmem_limit),
        cost_estimate=pl.CostEstimate(flops=flops, transcendentals=Cout,
                                      bytes_accessed=bytes_accessed),
    )(x2, y2, w3, b3,
      params["wo"].T, params["bo"].reshape(Cout, 1),
      params["gamma"].reshape(Cout, 1), params["beta"].reshape(Cout, 1),
      mask)

    # (B, Cout, H*W) -> (B, Cout, H, W): free reshape, no relayout.
    return out.reshape(B, Cout, H, W)


# ---------------------------------------------------------------------------
# Pure-JAX reference (lax.conv) for correctness checking.
# ---------------------------------------------------------------------------
def _ref_forward(x_nchw, y_nchw, p):
    x = jnp.transpose(x_nchw, (0, 2, 3, 1)).astype(jnp.float32)
    y = jnp.transpose(y_nchw, (0, 2, 3, 1)).astype(jnp.float32)

    def conv(inp, w, b):
        o = lax.conv_general_dilated(inp, w, (1, 1), "SAME",
                                     dimension_numbers=("NHWC", "HWIO", "NHWC"),
                                     precision=lax.Precision.HIGHEST)
        return jnp.maximum(o + b, 0.0)

    x1 = conv(x, p["w1"], p["b1"])
    x2 = conv(x1, p["w2"], p["b2"])
    x3 = conv(x2 + x1, p["w3"], p["b3"])
    y1 = conv(y, p["w1"], p["b1"])
    y2 = conv(y1, p["w2"], p["b2"])
    y3 = conv(y2 + y1, p["w3"], p["b3"])
    s = x1 + x2 + x3 + y1 + y2 + y3

    z = jnp.einsum("bhwc,cd->bhwd", s, p["wo"],
                   precision=lax.Precision.HIGHEST) + p["bo"]
    mean = jnp.mean(z, axis=(0, 1, 2), keepdims=True)
    var = jnp.mean((z - mean) ** 2, axis=(0, 1, 2), keepdims=True)
    zn = (z - mean) * lax.rsqrt(var + 1e-5) * p["gamma"] + p["beta"]
    out = jnp.maximum(zn, 0.0)
    return jnp.transpose(out, (0, 3, 1, 2))


if __name__ == "__main__":
    B, Cin, H, W = 2, 4, 16, 16
    Cout = 8

    key = jax.random.PRNGKey(0)
    ks = jax.random.split(key, 12)

    x = jax.random.normal(ks[0], (B, Cin, H, W), jnp.float32)
    y = jax.random.normal(ks[1], (B, Cin, H, W), jnp.float32)

    params = {
        # 3x3 conv weights in HWIO layout (kh, kw, Cin, Cout).
        "w1": 0.2 * jax.random.normal(ks[2], (3, 3, Cin, Cin), jnp.float32),
        "b1": 0.1 * jax.random.normal(ks[3], (Cin,), jnp.float32),
        "w2": 0.2 * jax.random.normal(ks[4], (3, 3, Cin, Cin), jnp.float32),
        "b2": 0.1 * jax.random.normal(ks[5], (Cin,), jnp.float32),
        "w3": 0.2 * jax.random.normal(ks[6], (3, 3, Cin, Cin), jnp.float32),
        "b3": 0.1 * jax.random.normal(ks[7], (Cin,), jnp.float32),
        # 1x1 conv weight as (Cin, Cout) matmul.
        "wo": 0.2 * jax.random.normal(ks[8], (Cin, Cout), jnp.float32),
        "bo": 0.1 * jax.random.normal(ks[9], (Cout,), jnp.float32),
        # BatchNorm affine params.
        "gamma": 1.0 + 0.1 * jax.random.normal(ks[10], (Cout,), jnp.float32),
        "beta": 0.1 * jax.random.normal(ks[11], (Cout,), jnp.float32),
    }

    out = densecat_cat_add_forward(x, y, params)
    out = jax.block_until_ready(out)

    ref = _ref_forward(x, y, params)
    assert out.shape == (B, Cout, H, W)
    assert jnp.allclose(out, ref, rtol=1e-3, atol=1e-3), (
        float(jnp.max(jnp.abs(out - ref))))

    print("KERNEL_OK")
</pallas_src>

<mosaic_0001>
module attributes {stable_mosaic.version = 11 : i64} {
  func.func @kernel(%arg0: memref<2x4x256xf32, #tpu.memory_space<vmem>>, %arg1: memref<2x4x256xf32, #tpu.memory_space<vmem>>, %arg2: memref<3x9x4x4xf32, #tpu.memory_space<vmem>>, %arg3: memref<3x4x1xf32, #tpu.memory_space<vmem>>, %arg4: memref<8x4xf32, #tpu.memory_space<vmem>>, %arg5: memref<8x1xf32, #tpu.memory_space<vmem>>, %arg6: memref<8x1xf32, #tpu.memory_space<vmem>>, %arg7: memref<8x1xf32, #tpu.memory_space<vmem>>, %arg8: memref<9x1024xf32, #tpu.memory_space<vmem>>, %arg9: memref<2x8x256xf32, #tpu.memory_space<vmem>>, %arg10: memref<4x1280xf32, #tpu.memory_space<vmem>>, %arg11: memref<4x1280xf32, #tpu.memory_space<vmem>>) attributes {dimension_semantics = [], scalar_prefetch = 0 : i64, scratch_operands = 2 : i64, tpu.core_type = #tpu.core_type<tc>} {
    %cst = arith.constant 0.000000e+00 : f32
    %0 = vector.broadcast %cst : f32 to vector<4x128xf32>
    %c0 = arith.constant 0 : index
    %c0_0 = arith.constant 0 : index
    %1 = vector.load %arg10[%c0, %c0_0] : memref<4x1280xf32, #tpu.memory_space<vmem>>, vector<4x128xf32>
    tpu.vector_store %arg10[%c0, %c0_0], %0 {strides = array<i32>} : memref<4x1280xf32, #tpu.memory_space<vmem>>, vector<4x128xf32>,
    %c0_1 = arith.constant 0 : index
    %c1152 = arith.constant 1152 : index
    %2 = vector.load %arg10[%c0_1, %c1152] : memref<4x1280xf32, #tpu.memory_space<vmem>>, vector<4x128xf32>
    tpu.vector_store %arg10[%c0_1, %c1152], %0 {strides = array<i32>} : memref<4x1280xf32, #tpu.memory_space<vmem>>, vector<4x128xf32>,
    %c0_2 = arith.constant 0 : index
    %c0_3 = arith.constant 0 : index
    %3 = vector.load %arg11[%c0_2, %c0_3] : memref<4x1280xf32, #tpu.memory_space<vmem>>, vector<4x128xf32>
    tpu.vector_store %arg11[%c0_2, %c0_3], %0 {strides = array<i32>} : memref<4x1280xf32, #tpu.memory_space<vmem>>, vector<4x128xf32>,
    %c0_4 = arith.constant 0 : index
    %c1152_5 = arith.constant 1152 : index
    %4 = vector.load %arg11[%c0_4, %c1152_5] : memref<4x1280xf32, #tpu.memory_space<vmem>>, vector<4x128xf32>
    tpu.vector_store %arg11[%c0_4, %c1152_5], %0 {strides = array<i32>} : memref<4x1280xf32, #tpu.memory_space<vmem>>, vector<4x128xf32>,
    %c0_6 = arith.constant 0 : index
    %c0_7 = arith.constant 0 : index
    %c0_8 = arith.constant 0 : index
    %5 = vector.load %arg0[%c0_6, %c0_7, %c0_8] : memref<2x4x256xf32, #tpu.memory_space<vmem>>, vector<1x4x256xf32>
    %6 = vector.shape_cast %5 : vector<1x4x256xf32> to vector<4x256xf32>
    %c0_9 = arith.constant 0 : index
    %c128 = arith.constant 128 : index
    %7 = vector.load %arg10[%c0_9, %c128] : memref<4x1280xf32, #tpu.memory_space<vmem>>, vector<4x256xf32>
    tpu.vector_store %arg10[%c0_9, %c128], %6 {strides = array<i32>} : memref<4x1280xf32, #tpu.memory_space<vmem>>, vector<4x256xf32>,
    %c0_10 = arith.constant 0 : index
    %c0_11 = arith.constant 0 : index
    %c0_12 = arith.constant 0 : index
    %8 = vector.load %arg1[%c0_10, %c0_11, %c0_12] : memref<2x4x256xf32, #tpu.memory_space<vmem>>, vector<1x4x256xf32>
    %9 = vector.shape_cast %8 : vector<1x4x256xf32> to vector<4x256xf32>
    %c0_13 = arith.constant 0 : index
    %c640 = arith.constant 640 : index
    %10 = vector.load %arg10[%c0_13, %c640] : memref<4x1280xf32, #tpu.memory_space<vmem>>, vector<4x256xf32>
    tpu.vector_store %arg10[%c0_13, %c640], %9 {strides = array<i32>} : memref<4x1280xf32, #tpu.memory_space<vmem>>, vector<4x256xf32>,
    %c1 = arith.constant 1 : index
    %c0_14 = arith.constant 0 : index
    %c0_15 = arith.constant 0 : index
    %11 = vector.load %arg0[%c1, %c0_14, %c0_15] : memref<2x4x256xf32, #tpu.memory_space<vmem>>, vector<1x4x256xf32>
    %12 = vector.shape_cast %11 : vector<1x4x256xf32> to vector<4x256xf32>
    %c0_16 = arith.constant 0 : index
    %c384 = arith.constant 384 : index
    %13 = vector.load %arg10[%c0_16, %c384] : memref<4x1280xf32, #tpu.memory_space<vmem>>, vector<4x256xf32>
    tpu.vector_store %arg10[%c0_16, %c384], %12 {strides = array<i32>} : memref<4x1280xf32, #tpu.memory_space<vmem>>, vector<4x256xf32>,
    %c1_17 = arith.constant 1 : index
    %c0_18 = arith.constant 0 : index
    %c0_19 = arith.constant 0 : index
    %14 = vector.load %arg1[%c1_17, %c0_18, %c0_19] : memref<2x4x256xf32, #tpu.memory_space<vmem>>, vector<1x4x256xf32>
    %15 = vector.shape_cast %14 : vector<1x4x256xf32> to vector<4x256xf32>
    %c0_20 = arith.constant 0 : index
    %c896 = arith.constant 896 : index
    %16 = vector.load %arg10[%c0_20, %c896] : memref<4x1280xf32, #tpu.memory_space<vmem>>, vector<4x256xf32>
    tpu.vector_store %arg10[%c0_20, %c896], %15 {strides = array<i32>} : memref<4x1280xf32, #tpu.memory_space<vmem>>, vector<4x256xf32>,
    %cst_21 = arith.constant 0.000000e+00 : f32
    %17 = vector.broadcast %cst_21 : f32 to vector<4x1024xf32>
    %c0_22 = arith.constant 0 : index
    %c111 = arith.constant 111 : index
    %18 = vector.load %arg10[%c0_22, %c111] : memref<4x1280xf32, #tpu.memory_space<vmem>>, vector<4x1024xf32>
    %c0_23 = arith.constant 0 : index
    %c0_24 = arith.constant 0 : index
    %19 = vector.load %arg8[%c0_23, %c0_24] : memref<9x1024xf32, #tpu.memory_space<vmem>>, vector<1x1024xf32>
    %20 = vector.broadcast %19 : vector<1x1024xf32> to vector<4x1024xf32>
    %21 = arith.mulf %18, %20 : vector<4x1024xf32>
    %c0_25 = arith.constant 0 : index
    %c0_26 = arith.constant 0 : index
    %c0_27 = arith.constant 0 : index
    %c0_28 = arith.constant 0 : index
    %22 = vector.load %arg2[%c0_25, %c0_26, %c0_27, %c0_28] : memref<3x9x4x4xf32, #tpu.memory_space<vmem>>, vector<1x1x4x4xf32>
    %23 = vector.shape_cast %22 : vector<1x1x4x4xf32> to vector<4x4xf32>
    %cst_29 = arith.constant dense<0.000000e+00> : vector<4x1024xf32>
    %24 = tpu.matmul %23, %21, %cst_29 {dimension_numbers = #tpu.dot_dimension_numbers<[1], [0], [0], [1], [0, 0, 1, 1], [], []>} : vector<4x4xf32>, vector<4x1024xf32>, vector<4x1024xf32> -> vector<4x1024xf32>
    %25 = arith.addf %17, %24 : vector<4x1024xf32>
    %c0_30 = arith.constant 0 : index
    %c112 = arith.constant 112 : index
    %26 = vector.load %arg10[%c0_30, %c112] : memref<4x1280xf32, #tpu.memory_space<vmem>>, vector<4x1024xf32>
    %c1_31 = arith.constant 1 : index
    %c0_32 = arith.constant 0 : index
    %27 = vector.load %arg8[%c1_31, %c0_32] : memref<9x1024xf32, #tpu.memory_space<vmem>>, vector<1x1024xf32>
    %28 = vector.broadcast %27 : vector<1x1024xf32> to vector<4x1024xf32>
    %29 = arith.mulf %26, %28 : vector<4x1024xf32>
    %c0_33 = arith.constant 0 : index
    %c1_34 = arith.constant 1 : index
    %c0_35 = arith.constant 0 : index
    %c0_36 = arith.constant 0 : index
    %30 = vector.load %arg2[%c0_33, %c1_34, %c0_35, %c0_36] : memref<3x9x4x4xf32, #tpu.memory_space<vmem>>, vector<1x1x4x4xf32>
    %31 = vector.shape_cast %30 : vector<1x1x4x4xf32> to vector<4x4xf32>
    %cst_37 = arith.constant dense<0.000000e+00> : vector<4x1024xf32>
    %32 = tpu.matmul %31, %29, %cst_37 {dimension_numbers = #tpu.dot_dimension_numbers<[1], [0], [0], [1], [0, 0, 1, 1], [], []>} : vector<4x4xf32>, vector<4x1024xf32>, vector<4x1024xf32> -> vector<4x1024xf32>
    %33 = arith.addf %25, %32 : vector<4x1024xf32>
    %c0_38 = arith.constant 0 : index
    %c113 = arith.constant 113 : index
    %34 = vector.load %arg10[%c0_38, %c113] : memref<4x1280xf32, #tpu.memory_space<vmem>>, vector<4x1024xf32>
    %c2 = arith.constant 2 : index
    %c0_39 = arith.constant 0 : index
    %35 = vector.load %arg8[%c2, %c0_39] : memref<9x1024xf32, #tpu.memory_space<vmem>>, vector<1x1024xf32>
    %36 = vector.broadcast %35 : vector<1x1024xf32> to vector<4x1024xf32>
    %37 = arith.mulf %34, %36 : vector<4x1024xf32>
    %c0_40 = arith.constant 0 : index
    %c2_41 = arith.constant 2 : index
    %c0_42 = arith.constant 0 : index
    %c0_43 = arith.constant 0 : index
    %38 = vector.load %arg2[%c0_40, %c2_41, %c0_42, %c0_43] : memref<3x9x4x4xf32, #tpu.memory_space<vmem>>, vector<1x1x4x4xf32>
    %39 = vector.shape_cast %38 : vector<1x1x4x4xf32> to vector<4x4xf32>
    %cst_44 = arith.constant dense<0.000000e+00> : vector<4x1024xf32>
    %40 = tpu.matmul %39, %37, %cst_44 {dimension_numbers = #tpu.dot_dimension_numbers<[1], [0], [0], [1], [0, 0, 1, 1], [], []>} : vector<4x4xf32>, vector<4x1024xf32>, vector<4x1024xf32> -> vector<4x1024xf32>
    %41 = arith.addf %33, %40 : vector<4x1024xf32>
    %c0_45 = arith.constant 0 : index
    %c127 = arith.constant 127 : index
    %42 = vector.load %arg10[%c0_45, %c127] : memref<4x1280xf32, #tpu.memory_space<vmem>>, vector<4x1024xf32>
    %c3 = arith.constant 3 : index
    %c0_46 = arith.constant 0 : index
    %43 = vector.load %arg8[%c3, %c0_46] : memref<9x1024xf32, #tpu.memory_space<vmem>>, vector<1x1024xf32>
    %44 = vector.broadcast %43 : vector<1x1024xf32> to vector<4x1024xf32>
    %45 = arith.mulf %42, %44 : vector<4x1024xf32>
    %c0_47 = arith.constant 0 : index
    %c3_48 = arith.constant 3 : index
    %c0_49 = arith.constant 0 : index
    %c0_50 = arith.constant 0 : index
    %46 = vector.load %arg2[%c0_47, %c3_48, %c0_49, %c0_50] : memref<3x9x4x4xf32, #tpu.memory_space<vmem>>, vector<1x1x4x4xf32>
    %47 = vector.shape_cast %46 : vector<1x1x4x4xf32> to vector<4x4xf32>
    %cst_51 = arith.constant dense<0.000000e+00> : vector<4x1024xf32>
    %48 = tpu.matmul %47, %45, %cst_51 {dimension_numbers = #tpu.dot_dimension_numbers<[1], [0], [0], [1], [0, 0, 1, 1], [], []>} : vector<4x4xf32>, vector<4x1024xf32>, vector<4x1024xf32> -> vector<4x1024xf32>
    %49 = arith.addf %41, %48 : vector<4x1024xf32>
    %c0_52 = arith.constant 0 : index
    %c128_53 = arith.constant 128 : index
    %50 = vector.load %arg10[%c0_52, %c128_53] : memref<4x1280xf32, #tpu.memory_space<vmem>>, vector<4x1024xf32>
    %c0_54 = arith.constant 0 : index
    %c4 = arith.constant 4 : index
    %c0_55 = arith.constant 0 : index
    %c0_56 = arith.constant 0 : index
    %51 = vector.load %arg2[%c0_54, %c4, %c0_55, %c0_56] : memref<3x9x4x4xf32, #tpu.memory_space<vmem>>, vector<1x1x4x4xf32>
    %52 = vector.shape_cast %51 : vector<1x1x4x4xf32> to vector<4x4xf32>
    %cst_57 = arith.constant dense<0.000000e+00> : vector<4x1024xf32>
    %53 = tpu.matmul %52, %50, %cst_57 {dimension_numbers = #tpu.dot_dimension_numbers<[1], [0], [0], [1], [0, 0, 1, 1], [], []>} : vector<4x4xf32>, vector<4x1024xf32>, vector<4x1024xf32> -> vector<4x1024xf32>
    %54 = arith.addf %49, %53 : vector<4x1024xf32>
    %c0_58 = arith.constant 0 : index
    %c129 = arith.constant 129 : index
    %55 = vector.load %arg10[%c0_58, %c129] : memref<4x1280xf32, #tpu.memory_space<vmem>>, vector<4x1024xf32>
    %c5 = arith.constant 5 : index
    %c0_59 = arith.constant 0 : index
    %56 = vector.load %arg8[%c5, %c0_59] : memref<9x1024xf32, #tpu.memory_space<vmem>>, vector<1x1024xf32>
    %57 = vector.broadcast %56 : vector<1x1024xf32> to vector<4x1024xf32>
    %58 = arith.mulf %55, %57 : vector<4x1024xf32>
    %c0_60 = arith.constant 0 : index
    %c5_61 = arith.constant 5 : index
    %c0_62 = arith.constant 0 : index
    %c0_63 = arith.constant 0 : index
    %59 = vector.load %arg2[%c0_60, %c5_61, %c0_62, %c0_63] : memref<3x9x4x4xf32, #tpu.memory_space<vmem>>, vector<1x1x4x4xf32>
    %60 = vector.shape_cast %59 : vector<1x1x4x4xf32> to vector<4x4xf32>
    %cst_64 = arith.constant dense<0.000000e+00> : vector<4x1024xf32>
    %61 = tpu.matmul %60, %58, %cst_64 {dimension_numbers = #tpu.dot_dimension_numbers<[1], [0], [0], [1], [0, 0, 1, 1], [], []>} : vector<4x4xf32>, vector<4x1024xf32>, vector<4x1024xf32> -> vector<4x1024xf32>
    %62 = arith.addf %54, %61 : vector<4x1024xf32>
    %c0_65 = arith.constant 0 : index
    %c143 = arith.constant 143 : index
    %63 = vector.load %arg10[%c0_65, %c143] : memref<4x1280xf32, #tpu.memory_space<vmem>>, vector<4x1024xf32>
    %c6 = arith.constant 6 : index
    %c0_66 = arith.constant 0 : index
    %64 = vector.load %arg8[%c6, %c0_66] : memref<9x1024xf32, #tpu.memory_space<vmem>>, vector<1x1024xf32>
    %65 = vector.broadcast %64 : vector<1x1024xf32> to vector<4x1024xf32>
    %66 = arith.mulf %63, %65 : vector<4x1024xf32>
    %c0_67 = arith.constant 0 : index
    %c6_68 = arith.constant 6 : index
    %c0_69 = arith.constant 0 : index
    %c0_70 = arith.constant 0 : index
    %67 = vector.load %arg2[%c0_67, %c6_68, %c0_69, %c0_70] : memref<3x9x4x4xf32, #tpu.memory_space<vmem>>, vector<1x1x4x4xf32>
    %68 = vector.shape_cast %67 : vector<1x1x4x4xf32> to vector<4x4xf32>
    %cst_71 = arith.constant dense<0.000000e+00> : vector<4x1024xf32>
    %69 = tpu.matmul %68, %66, %cst_71 {dimension_numbers = #tpu.dot_dimension_numbers<[1], [0], [0], [1], [0, 0, 1, 1], [], []>} : vector<4x4xf32>, vector<4x1024xf32>, vector<4x1024xf32> -> vector<4x1024xf32>
    %70 = arith.addf %62, %69 : vector<4x1024xf32>
    %c0_72 = arith.constant 0 : index
    %c144 = arith.constant 144 : index
    %71 = vector.load %arg10[%c0_72, %c144] : memref<4x1280xf32, #tpu.memory_space<vmem>>, vector<4x1024xf32>
    %c7 = arith.constant 7 : index
    %c0_73 = arith.constant 0 : index
    %72 = vector.load %arg8[%c7, %c0_73] : memref<9x1024xf32, #tpu.memory_space<vmem>>, vector<1x1024xf32>
    %73 = vector.broadcast %72 : vector<1x1024xf32> to vector<4x1024xf32>
    %74 = arith.mulf %71, %73 : vector<4x1024xf32>
    %c0_74 = arith.constant 0 : index
    %c7_75 = arith.constant 7 : index
    %c0_76 = arith.constant 0 : index
    %c0_77 = arith.constant 0 : index
    %75 = vector.load %arg2[%c0_74, %c7_75, %c0_76, %c0_77] : memref<3x9x4x4xf32, #tpu.memory_space<vmem>>, vector<1x1x4x4xf32>
    %76 = vector.shape_cast %75 : vector<1x1x4x4xf32> to vector<4x4xf32>
    %cst_78 = arith.constant dense<0.000000e+00> : vector<4x1024xf32>
    %77 = tpu.matmul %76, %74, %cst_78 {dimension_numbers = #tpu.dot_dimension_numbers<[1], [0], [0], [1], [0, 0, 1, 1], [], []>} : vector<4x4xf32>, vector<4x1024xf32>, vector<4x1024xf32> -> vector<4x1024xf32>
    %78 = arith.addf %70, %77 : vector<4x1024xf32>
    %c0_79 = arith.constant 0 : index
    %c145 = arith.constant 145 : index
    %79 = vector.load %arg10[%c0_79, %c145] : memref<4x1280xf32, #tpu.memory_space<vmem>>, vector<4x1024xf32>
    %c8 = arith.constant 8 : index
    %c0_80 = arith.constant 0 : index
    %80 = vector.load %arg8[%c8, %c0_80] : memref<9x1024xf32, #tpu.memory_space<vmem>>, vector<1x1024xf32>
    %81 = vector.broadcast %80 : vector<1x1024xf32> to vector<4x1024xf32>
    %82 = arith.mulf %79, %81 : vector<4x1024xf32>
    %c0_81 = arith.constant 0 : index
    %c8_82 = arith.constant 8 : index
    %c0_83 = arith.constant 0 : index
    %c0_84 = arith.constant 0 : index
    %83 = vector.load %arg2[%c0_81, %c8_82, %c0_83, %c0_84] : memref<3x9x4x4xf32, #tpu.memory_space<vmem>>, vector<1x1x4x4xf32>
    %84 = vector.shape_cast %83 : vector<1x1x4x4xf32> to vector<4x4xf32>
    %cst_85 = arith.constant dense<0.000000e+00> : vector<4x1024xf32>
    %85 = tpu.matmul %84, %82, %cst_85 {dimension_numbers = #tpu.dot_dimension_numbers<[1], [0], [0], [1], [0, 0, 1, 1], [], []>} : vector<4x4xf32>, vector<4x1024xf32>, vector<4x1024xf32> -> vector<4x1024xf32>
    %86 = arith.addf %78, %85 : vector<4x1024xf32>
    %c0_86 = arith.constant 0 : index
    %c0_87 = arith.constant 0 : index
    %c0_88 = arith.constant 0 : index
    %87 = vector.load %arg3[%c0_86, %c0_87, %c0_88] : memref<3x4x1xf32, #tpu.memory_space<vmem>>, vector<1x4x1xf32>
    %88 = vector.shape_cast %87 : vector<1x4x1xf32> to vector<4x1xf32>
    %89 = vector.broadcast %88 : vector<4x1xf32> to vector<4x1024xf32>
    %90 = arith.addf %86, %89 : vector<4x1024xf32>
    %cst_89 = arith.constant 0.000000e+00 : f32
    %91 = vector.broadcast %cst_89 : f32 to vector<4x1024xf32>
    %92 = arith.maximumf %90, %91 : vector<4x1024xf32>
    %c0_90 = arith.constant 0 : index
    %c128_91 = arith.constant 128 : index
    %93 = vector.load %arg11[%c0_90, %c128_91] : memref<4x1280xf32, #tpu.memory_space<vmem>>, vector<4x1024xf32>
    tpu.vector_store %arg11[%c0_90, %c128_91], %92 {strides = array<i32>} : memref<4x1280xf32, #tpu.memory_space<vmem>>, vector<4x1024xf32>,
    %cst_92 = arith.constant 0.000000e+00 : f32
    %94 = vector.broadcast %cst_92 : f32 to vector<4x1024xf32>
    %c0_93 = arith.constant 0 : index
    %c111_94 = arith.constant 111 : index
    %95 = vector.load %arg11[%c0_93, %c111_94] : memref<4x1280xf32, #tpu.memory_space<vmem>>, vector<4x1024xf32>
    %c0_95 = arith.constant 0 : index
    %c0_96 = arith.constant 0 : index
    %96 = vector.load %arg8[%c0_95, %c0_96] : memref<9x1024xf32, #tpu.memory_space<vmem>>, vector<1x1024xf32>
    %97 = vector.broadcast %96 : vector<1x1024xf32> to vector<4x1024xf32>
    %98 = arith.mulf %95, %97 : vector<4x1024xf32>
    %c1_97 = arith.constant 1 : index
    %c0_98 = arith.constant 0 : index
    %c0_99 = arith.constant 0 : index
    %c0_100 = arith.constant 0 : index
    %99 = vector.load %arg2[%c1_97, %c0_98, %c0_99, %c0_100] : memref<3x9x4x4xf32, #tpu.memory_space<vmem>>, vector<1x1x4x4xf32>
    %100 = vector.shape_cast %99 : vector<1x1x4x4xf32> to vector<4x4xf32>
    %cst_101 = arith.constant dense<0.000000e+00> : vector<4x1024xf32>
    %101 = tpu.matmul %100, %98, %cst_101 {dimension_numbers = #tpu.dot_dimension_numbers<[1], [0], [0], [1], [0, 0, 1, 1], [], []>} : vector<4x4xf32>, vector<4x1024xf32>, vector<4x1024xf32> -> vector<4x1024xf32>
    %102 = arith.addf %94, %101 : vector<4x1024xf32>
    %c0_102 = arith.constant 0 : index
    %c112_103 = arith.constant 112 : index
    %103 = vector.load %arg11[%c0_102, %c112_103] : memref<4x1280xf32, #tpu.memory_space<vmem>>, vector<4x1024xf32>
    %c1_104 = arith.constant 1 : index
    %c0_105 = arith.constant 0 : index
    %104 = vector.load %arg8[%c1_104, %c0_105] : memref<9x1024xf32, #tpu.memory_space<vmem>>, vector<1x1024xf32>
    %105 = vector.broadcast %104 : vector<1x1024xf32> to vector<4x1024xf32>
    %106 = arith.mulf %103, %105 : vector<4x1024xf32>
    %c1_106 = arith.constant 1 : index
    %c1_107 = arith.constant 1 : index
    %c0_108 = arith.constant 0 : index
    %c0_109 = arith.constant 0 : index
    %107 = vector.load %arg2[%c1_106, %c1_107, %c0_108, %c0_109] : memref<3x9x4x4xf32, #tpu.memory_space<vmem>>, vector<1x1x4x4xf32>
    %108 = vector.shape_cast %107 : vector<1x1x4x4xf32> to vector<4x4xf32>
    %cst_110 = arith.constant dense<0.000000e+00> : vector<4x1024xf32>
    %109 = tpu.matmul %108, %106, %cst_110 {dimension_numbers = #tpu.dot_dimension_numbers<[1], [0], [0], [1], [0, 0, 1, 1], [], []>} : vector<4x4xf32>, vector<4x1024xf32>, vector<4x1024xf32> -> vector<4x1024xf32>
    %110 = arith.addf %102, %109 : vector<4x1024xf32>
    %c0_111 = arith.constant 0 : index
    %c113_112 = arith.constant 113 : index
    %111 = vector.load %arg11[%c0_111, %c113_112] : memref<4x1280xf32, #tpu.memory_space<vmem>>, vector<4x1024xf32>
    %c2_113 = arith.constant 2 : index
    %c0_114 = arith.constant 0 : index
    %112 = vector.load %arg8[%c2_113, %c0_114] : memref<9x1024xf32, #tpu.memory_space<vmem>>, vector<1x1024xf32>
    %113 = vector.broadcast %112 : vector<1x1024xf32> to vector<4x1024xf32>
    %114 = arith.mulf %111, %113 : vector<4x1024xf32>
    %c1_115 = arith.constant 1 : index
    %c2_116 = arith.constant 2 : index
    %c0_117 = arith.constant 0 : index
    %c0_118 = arith.constant 0 : index
    %115 = vector.load %arg2[%c1_115, %c2_116, %c0_117, %c0_118] : memref<3x9x4x4xf32, #tpu.memory_space<vmem>>, vector<1x1x4x4xf32>
    %116 = vector.shape_cast %115 : vector<1x1x4x4xf32> to vector<4x4xf32>
    %cst_119 = arith.constant dense<0.000000e+00> : vector<4x1024xf32>
    %117 = tpu.matmul %116, %114, %cst_119 {dimension_numbers = #tpu.dot_dimension_numbers<[1], [0], [0], [1], [0, 0, 1, 1], [], []>} : vector<4x4xf32>, vector<4x1024xf32>, vector<4x1024xf32> -> vector<4x1024xf32>
    %118 = arith.addf %110, %117 : vector<4x1024xf32>
    %c0_120 = arith.constant 0 : index
    %c127_121 = arith.constant 127 : index
    %119 = vector.load %arg11[%c0_120, %c127_121] : memref<4x1280xf32, #tpu.memory_space<vmem>>, vector<4x1024xf32>
    %c3_122 = arith.constant 3 : index
    %c0_123 = arith.constant 0 : index
    %120 = vector.load %arg8[%c3_122, %c0_123] : memref<9x1024xf32, #tpu.memory_space<vmem>>, vector<1x1024xf32>
    %121 = vector.broadcast %120 : vector<1x1024xf32> to vector<4x1024xf32>
    %122 = arith.mulf %119, %121 : vector<4x1024xf32>
    %c1_124 = arith.constant 1 : index
    %c3_125 = arith.constant 3 : index
    %c0_126 = arith.constant 0 : index
    %c0_127 = arith.constant 0 : index
    %123 = vector.load %arg2[%c1_124, %c3_125, %c0_126, %c0_127] : memref<3x9x4x4xf32, #tpu.memory_space<vmem>>, vector<1x1x4x4xf32>
    %124 = vector.shape_cast %123 : vector<1x1x4x4xf32> to vector<4x4xf32>
    %cst_128 = arith.constant dense<0.000000e+00> : vector<4x1024xf32>
    %125 = tpu.matmul %124, %122, %cst_128 {dimension_numbers = #tpu.dot_dimension_numbers<[1], [0], [0], [1], [0, 0, 1, 1], [], []>} : vector<4x4xf32>, vector<4x1024xf32>, vector<4x1024xf32> -> vector<4x1024xf32>
    %126 = arith.addf %118, %125 : vector<4x1024xf32>
    %c0_129 = arith.constant 0 : index
    %c128_130 = arith.constant 128 : index
    %127 = vector.load %arg11[%c0_129, %c128_130] : memref<4x1280xf32, #tpu.memory_space<vmem>>, vector<4x1024xf32>
    %c1_131 = arith.constant 1 : index
    %c4_132 = arith.constant 4 : index
    %c0_133 = arith.constant 0 : index
    %c0_134 = arith.constant 0 : index
    %128 = vector.load %arg2[%c1_131, %c4_132, %c0_133, %c0_134] : memref<3x9x4x4xf32, #tpu.memory_space<vmem>>, vector<1x1x4x4xf32>
    %129 = vector.shape_cast %128 : vector<1x1x4x4xf32> to vector<4x4xf32>
    %cst_135 = arith.constant dense<0.000000e+00> : vector<4x1024xf32>
    %130 = tpu.matmul %129, %127, %cst_135 {dimension_numbers = #tpu.dot_dimension_numbers<[1], [0], [0], [1], [0, 0, 1, 1], [], []>} : vector<4x4xf32>, vector<4x1024xf32>, vector<4x1024xf32> -> vector<4x1024xf32>
    %131 = arith.addf %126, %130 : vector<4x1024xf32>
    %c0_136 = arith.constant 0 : index
    %c129_137 = arith.constant 129 : index
    %132 = vector.load %arg11[%c0_136, %c129_137] : memref<4x1280xf32, #tpu.memory_space<vmem>>, vector<4x1024xf32>
    %c5_138 = arith.constant 5 : index
    %c0_139 = arith.constant 0 : index
    %133 = vector.load %arg8[%c5_138, %c0_139] : memref<9x1024xf32, #tpu.memory_space<vmem>>, vector<1x1024xf32>
    %134 = vector.broadcast %133 : vector<1x1024xf32> to vector<4x1024xf32>
    %135 = arith.mulf %132, %134 : vector<4x1024xf32>
    %c1_140 = arith.constant 1 : index
    %c5_141 = arith.constant 5 : index
    %c0_142 = arith.constant 0 : index
    %c0_143 = arith.constant 0 : index
    %136 = vector.load %arg2[%c1_140, %c5_141, %c0_142, %c0_143] : memref<3x9x4x4xf32, #tpu.memory_space<vmem>>, vector<1x1x4x4xf32>
    %137 = vector.shape_cast %136 : vector<1x1x4x4xf32> to vector<4x4xf32>
    %cst_144 = arith.constant dense<0.000000e+00> : vector<4x1024xf32>
    %138 = tpu.matmul %137, %135, %cst_144 {dimension_numbers = #tpu.dot_dimension_numbers<[1], [0], [0], [1], [0, 0, 1, 1], [], []>} : vector<4x4xf32>, vector<4x1024xf32>, vector<4x1024xf32> -> vector<4x1024xf32>
    %139 = arith.addf %131, %138 : vector<4x1024xf32>
    %c0_145 = arith.constant 0 : index
    %c143_146 = arith.constant 143 : index
    %140 = vector.load %arg11[%c0_145, %c143_146] : memref<4x1280xf32, #tpu.memory_space<vmem>>, vector<4x1024xf32>
    %c6_147 = arith.constant 6 : index
    %c0_148 = arith.constant 0 : index
    %141 = vector.load %arg8[%c6_147, %c0_148] : memref<9x1024xf32, #tpu.memory_space<vmem>>, vector<1x1024xf32>
    %142 = vector.broadcast %141 : vector<1x1024xf32> to vector<4x1024xf32>
    %143 = arith.mulf %140, %142 : vector<4x1024xf32>
    %c1_149 = arith.constant 1 : index
    %c6_150 = arith.constant 6 : index
    %c0_151 = arith.constant 0 : index
    %c0_152 = arith.constant 0 : index
    %144 = vector.load %arg2[%c1_149, %c6_150, %c0_151, %c0_152] : memref<3x9x4x4xf32, #tpu.memory_space<vmem>>, vector<1x1x4x4xf32>
    %145 = vector.shape_cast %144 : vector<1x1x4x4xf32> to vector<4x4xf32>
    %cst_153 = arith.constant dense<0.000000e+00> : vector<4x1024xf32>
    %146 = tpu.matmul %145, %143, %cst_153 {dimension_numbers = #tpu.dot_dimension_numbers<[1], [0], [0], [1], [0, 0, 1, 1], [], []>} : vector<4x4xf32>, vector<4x1024xf32>, vector<4x1024xf32> -> vector<4x1024xf32>
    %147 = arith.addf %139, %146 : vector<4x1024xf32>
    %c0_154 = arith.constant 0 : index
    %c144_155 = arith.constant 144 : index
    %148 = vector.load %arg11[%c0_154, %c144_155] : memref<4x1280xf32, #tpu.memory_space<vmem>>, vector<4x1024xf32>
    %c7_156 = arith.constant 7 : index
    %c0_157 = arith.constant 0 : index
    %149 = vector.load %arg8[%c7_156, %c0_157] : memref<9x1024xf32, #tpu.memory_space<vmem>>, vector<1x1024xf32>
    %150 = vector.broadcast %149 : vector<1x1024xf32> to vector<4x1024xf32>
    %151 = arith.mulf %148, %150 : vector<4x1024xf32>
    %c1_158 = arith.constant 1 : index
    %c7_159 = arith.constant 7 : index
    %c0_160 = arith.constant 0 : index
    %c0_161 = arith.constant 0 : index
    %152 = vector.load %arg2[%c1_158, %c7_159, %c0_160, %c0_161] : memref<3x9x4x4xf32, #tpu.memory_space<vmem>>, vector<1x1x4x4xf32>
    %153 = vector.shape_cast %152 : vector<1x1x4x4xf32> to vector<4x4xf32>
    %cst_162 = arith.constant dense<0.000000e+00> : vector<4x1024xf32>
    %154 = tpu.matmul %153, %151, %cst_162 {dimension_numbers = #tpu.dot_dimension_numbers<[1], [0], [0], [1], [0, 0, 1, 1], [], []>} : vector<4x4xf32>, vector<4x1024xf32>, vector<4x1024xf32> -> vector<4x1024xf32>
    %155 = arith.addf %147, %154 : vector<4x1024xf32>
    %c0_163 = arith.constant 0 : index
    %c145_164 = arith.constant 145 : index
    %156 = vector.load %arg11[%c0_163, %c145_164] : memref<4x1280xf32, #tpu.memory_space<vmem>>, vector<4x1024xf32>
    %c8_165 = arith.constant 8 : index
    %c0_166 = arith.constant 0 : index
    %157 = vector.load %arg8[%c8_165, %c0_166] : memref<9x1024xf32, #tpu.memory_space<vmem>>, vector<1x1024xf32>
    %158 = vector.broadcast %157 : vector<1x1024xf32> to vector<4x1024xf32>
    %159 = arith.mulf %156, %158 : vector<4x1024xf32>
    %c1_167 = arith.constant 1 : index
    %c8_168 = arith.constant 8 : index
    %c0_169 = arith.constant 0 : index
    %c0_170 = arith.constant 0 : index
    %160 = vector.load %arg2[%c1_167, %c8_168, %c0_169, %c0_170] : memref<3x9x4x4xf32, #tpu.memory_space<vmem>>, vector<1x1x4x4xf32>
    %161 = vector.shape_cast %160 : vector<1x1x4x4xf32> to vector<4x4xf32>
    %cst_171 = arith.constant dense<0.000000e+00> : vector<4x1024xf32>
    %162 = tpu.matmul %161, %159, %cst_171 {dimension_numbers = #tpu.dot_dimension_numbers<[1], [0], [0], [1], [0, 0, 1, 1], [], []>} : vector<4x4xf32>, vector<4x1024xf32>, vector<4x1024xf32> -> vector<4x1024xf32>
    %163 = arith.addf %155, %162 : vector<4x1024xf32>
    %c1_172 = arith.constant 1 : index
    %c0_173 = arith.constant 0 : index
    %c0_174 = arith.constant 0 : index
    %164 = vector.load %arg3[%c1_172, %c0_173, %c0_174] : memref<3x4x1xf32, #tpu.memory_space<vmem>>, vector<1x4x1xf32>
    %165 = vector.shape_cast %164 : vector<1x4x1xf32> to vector<4x1xf32>
    %166 = vector.broadcast %165 : vector<4x1xf32> to vector<4x1024xf32>
    %167 = arith.addf %163, %166 : vector<4x1024xf32>
    %cst_175 = arith.constant 0.000000e+00 : f32
    %168 = vector.broadcast %cst_175 : f32 to vector<4x1024xf32>
    %169 = arith.maximumf %167, %168 : vector<4x1024xf32>
    %c0_176 = arith.constant 0 : index
    %c128_177 = arith.constant 128 : index
    %170 = vector.load %arg11[%c0_176, %c128_177] : memref<4x1280xf32, #tpu.memory_space<vmem>>, vector<4x1024xf32>
    %171 = arith.addf %170, %169 : vector<4x1024xf32>
    %c0_178 = arith.constant 0 : index
    %c128_179 = arith.constant 128 : index
    %172 = vector.load %arg10[%c0_178, %c128_179] : memref<4x1280xf32, #tpu.memory_space<vmem>>, vector<4x1024xf32>
    tpu.vector_store %arg10[%c0_178, %c128_179], %171 {strides = array<i32>} : memref<4x1280xf32, #tpu.memory_space<vmem>>, vector<4x1024xf32>,
    %cst_180 = arith.constant 0.000000e+00 : f32
    %173 = vector.broadcast %cst_180 : f32 to vector<4x1024xf32>
    %c0_181 = arith.constant 0 : index
    %c111_182 = arith.constant 111 : index
    %174 = vector.load %arg10[%c0_181, %c111_182] : memref<4x1280xf32, #tpu.memory_space<vmem>>, vector<4x1024xf32>
    %c0_183 = arith.constant 0 : index
    %c0_184 = arith.constant 0 : index
    %175 = vector.load %arg8[%c0_183, %c0_184] : memref<9x1024xf32, #tpu.memory_space<vmem>>, vector<1x1024xf32>
    %176 = vector.broadcast %175 : vector<1x1024xf32> to vector<4x1024xf32>
    %177 = arith.mulf %174, %176 : vector<4x1024xf32>
    %c2_185 = arith.constant 2 : index
    %c0_186 = arith.constant 0 : index
    %c0_187 = arith.constant 0 : index
    %c0_188 = arith.constant 0 : index
    %178 = vector.load %arg2[%c2_185, %c0_186, %c0_187, %c0_188] : memref<3x9x4x4xf32, #tpu.memory_space<vmem>>, vector<1x1x4x4xf32>
    %179 = vector.shape_cast %178 : vector<1x1x4x4xf32> to vector<4x4xf32>
    %cst_189 = arith.constant dense<0.000000e+00> : vector<4x1024xf32>
    %180 = tpu.matmul %179, %177, %cst_189 {dimension_numbers = #tpu.dot_dimension_numbers<[1], [0], [0], [1], [0, 0, 1, 1], [], []>} : vector<4x4xf32>, vector<4x1024xf32>, vector<4x1024xf32> -> vector<4x1024xf32>
    %181 = arith.addf %173, %180 : vector<4x1024xf32>
    %c0_190 = arith.constant 0 : index
    %c112_191 = arith.constant 112 : index
    %182 = vector.load %arg10[%c0_190, %c112_191] : memref<4x1280xf32, #tpu.memory_space<vmem>>, vector<4x1024xf32>
    %c1_192 = arith.constant 1 : index
    %c0_193 = arith.constant 0 : index
    %183 = vector.load %arg8[%c1_192, %c0_193] : memref<9x1024xf32, #tpu.memory_space<vmem>>, vector<1x1024xf32>
    %184 = vector.broadcast %183 : vector<1x1024xf32> to vector<4x1024xf32>
    %185 = arith.mulf %182, %184 : vector<4x1024xf32>
    %c2_194 = arith.constant 2 : index
    %c1_195 = arith.constant 1 : index
    %c0_196 = arith.constant 0 : index
    %c0_197 = arith.constant 0 : index
    %186 = vector.load %arg2[%c2_194, %c1_195, %c0_196, %c0_197] : memref<3x9x4x4xf32, #tpu.memory_space<vmem>>, vector<1x1x4x4xf32>
    %187 = vector.shape_cast %186 : vector<1x1x4x4xf32> to vector<4x4xf32>
    %cst_198 = arith.constant dense<0.000000e+00> : vector<4x1024xf32>
    %188 = tpu.matmul %187, %185, %cst_198 {dimension_numbers = #tpu.dot_dimension_numbers<[1], [0], [0], [1], [0, 0, 1, 1], [], []>} : vector<4x4xf32>, vector<4x1024xf32>, vector<4x1024xf32> -> vector<4x1024xf32>
    %189 = arith.addf %181, %188 : vector<4x1024xf32>
    %c0_199 = arith.constant 0 : index
    %c113_200 = arith.constant 113 : index
    %190 = vector.load %arg10[%c0_199, %c113_200] : memref<4x1280xf32, #tpu.memory_space<vmem>>, vector<4x1024xf32>
    %c2_201 = arith.constant 2 : index
    %c0_202 = arith.constant 0 : index
    %191 = vector.load %arg8[%c2_201, %c0_202] : memref<9x1024xf32, #tpu.memory_space<vmem>>, vector<1x1024xf32>
    %192 = vector.broadcast %191 : vector<1x1024xf32> to vector<4x1024xf32>
    %193 = arith.mulf %190, %192 : vector<4x1024xf32>
    %c2_203 = arith.constant 2 : index
    %c2_204 = arith.constant 2 : index
    %c0_205 = arith.constant 0 : index
    %c0_206 = arith.constant 0 : index
    %194 = vector.load %arg2[%c2_203, %c2_204, %c0_205, %c0_206] : memref<3x9x4x4xf32, #tpu.memory_space<vmem>>, vector<1x1x4x4xf32>
    %195 = vector.shape_cast %194 : vector<1x1x4x4xf32> to vector<4x4xf32>
    %cst_207 = arith.constant dense<0.000000e+00> : vector<4x1024xf32>
    %196 = tpu.matmul %195, %193, %cst_207 {dimension_numbers = #tpu.dot_dimension_numbers<[1], [0], [0], [1], [0, 0, 1, 1], [], []>} : vector<4x4xf32>, vector<4x1024xf32>, vector<4x1024xf32> -> vector<4x1024xf32>
    %197 = arith.addf %189, %196 : vector<4x1024xf32>
    %c0_208 = arith.constant 0 : index
    %c127_209 = arith.constant 127 : index
    %198 = vector.load %arg10[%c0_208, %c127_209] : memref<4x1280xf32, #tpu.memory_space<vmem>>, vector<4x1024xf32>
    %c3_210 = arith.constant 3 : index
    %c0_211 = arith.constant 0 : index
    %199 = vector.load %arg8[%c3_210, %c0_211] : memref<9x1024xf32, #tpu.memory_space<vmem>>, vector<1x1024xf32>
    %200 = vector.broadcast %199 : vector<1x1024xf32> to vector<4x1024xf32>
    %201 = arith.mulf %198, %200 : vector<4x1024xf32>
    %c2_212 = arith.constant 2 : index
    %c3_213 = arith.constant 3 : index
    %c0_214 = arith.constant 0 : index
    %c0_215 = arith.constant 0 : index
    %202 = vector.load %arg2[%c2_212, %c3_213, %c0_214, %c0_215] : memref<3x9x4x4xf32, #tpu.memory_space<vmem>>, vector<1x1x4x4xf32>
    %203 = vector.shape_cast %202 : vector<1x1x4x4xf32> to vector<4x4xf32>
    %cst_216 = arith.constant dense<0.000000e+00> : vector<4x1024xf32>
    %204 = tpu.matmul %203, %201, %cst_216 {dimension_numbers = #tpu.dot_dimension_numbers<[1], [0], [0], [1], [0, 0, 1, 1], [], []>} : vector<4x4xf32>, vector<4x1024xf32>, vector<4x1024xf32> -> vector<4x1024xf32>
    %205 = arith.addf %197, %204 : vector<4x1024xf32>
    %c0_217 = arith.constant 0 : index
    %c128_218 = arith.constant 128 : index
    %206 = vector.load %arg10[%c0_217, %c128_218] : memref<4x1280xf32, #tpu.memory_space<vmem>>, vector<4x1024xf32>
    %c2_219 = arith.constant 2 : index
    %c4_220 = arith.constant 4 : index
    %c0_221 = arith.constant 0 : index
    %c0_222 = arith.constant 0 : index
    %207 = vector.load %arg2[%c2_219, %c4_220, %c0_221, %c0_222] : memref<3x9x4x4xf32, #tpu.memory_space<vmem>>, vector<1x1x4x4xf32>
    %208 = vector.shape_cast %207 : vector<1x1x4x4xf32> to vector<4x4xf32>
    %cst_223 = arith.constant dense<0.000000e+00> : vector<4x1024xf32>
    %209 = tpu.matmul %208, %206, %cst_223 {dimension_numbers = #tpu.dot_dimension_numbers<[1], [0], [0], [1], [0, 0, 1, 1], [], []>} : vector<4x4xf32>, vector<4x1024xf32>, vector<4x1024xf32> -> vector<4x1024xf32>
    %210 = arith.addf %205, %209 : vector<4x1024xf32>
    %c0_224 = arith.constant 0 : index
    %c129_225 = arith.constant 129 : index
    %211 = vector.load %arg10[%c0_224, %c129_225] : memref<4x1280xf32, #tpu.memory_space<vmem>>, vector<4x1024xf32>
    %c5_226 = arith.constant 5 : index
    %c0_227 = arith.constant 0 : index
    %212 = vector.load %arg8[%c5_226, %c0_227] : memref<9x1024xf32, #tpu.memory_space<vmem>>, vector<1x1024xf32>
    %213 = vector.broadcast %212 : vector<1x1024xf32> to vector<4x1024xf32>
    %214 = arith.mulf %211, %213 : vector<4x1024xf32>
    %c2_228 = arith.constant 2 : index
    %c5_229 = arith.constant 5 : index
    %c0_230 = arith.constant 0 : index
    %c0_231 = arith.constant 0 : index
    %215 = vector.load %arg2[%c2_228, %c5_229, %c0_230, %c0_231] : memref<3x9x4x4xf32, #tpu.memory_space<vmem>>, vector<1x1x4x4xf32>
    %216 = vector.shape_cast %215 : vector<1x1x4x4xf32> to vector<4x4xf32>
    %cst_232 = arith.constant dense<0.000000e+00> : vector<4x1024xf32>
    %217 = tpu.matmul %216, %214, %cst_232 {dimension_numbers = #tpu.dot_dimension_numbers<[1], [0], [0], [1], [0, 0, 1, 1], [], []>} : vector<4x4xf32>, vector<4x1024xf32>, vector<4x1024xf32> -> vector<4x1024xf32>
    %218 = arith.addf %210, %217 : vector<4x1024xf32>
    %c0_233 = arith.constant 0 : index
    %c143_234 = arith.constant 143 : index
    %219 = vector.load %arg10[%c0_233, %c143_234] : memref<4x1280xf32, #tpu.memory_space<vmem>>, vector<4x1024xf32>
    %c6_235 = arith.constant 6 : index
    %c0_236 = arith.constant 0 : index
    %220 = vector.load %arg8[%c6_235, %c0_236] : memref<9x1024xf32, #tpu.memory_space<vmem>>, vector<1x1024xf32>
    %221 = vector.broadcast %220 : vector<1x1024xf32> to vector<4x1024xf32>
    %222 = arith.mulf %219, %221 : vector<4x1024xf32>
    %c2_237 = arith.constant 2 : index
    %c6_238 = arith.constant 6 : index
    %c0_239 = arith.constant 0 : index
    %c0_240 = arith.constant 0 : index
    %223 = vector.load %arg2[%c2_237, %c6_238, %c0_239, %c0_240] : memref<3x9x4x4xf32, #tpu.memory_space<vmem>>, vector<1x1x4x4xf32>
    %224 = vector.shape_cast %223 : vector<1x1x4x4xf32> to vector<4x4xf32>
    %cst_241 = arith.constant dense<0.000000e+00> : vector<4x1024xf32>
    %225 = tpu.matmul %224, %222, %cst_241 {dimension_numbers = #tpu.dot_dimension_numbers<[1], [0], [0], [1], [0, 0, 1, 1], [], []>} : vector<4x4xf32>, vector<4x1024xf32>, vector<4x1024xf32> -> vector<4x1024xf32>
    %226 = arith.addf %218, %225 : vector<4x1024xf32>
    %c0_242 = arith.constant 0 : index
    %c144_243 = arith.constant 144 : index
    %227 = vector.load %arg10[%c0_242, %c144_243] : memref<4x1280xf32, #tpu.memory_space<vmem>>, vector<4x1024xf32>
    %c7_244 = arith.constant 7 : index
    %c0_245 = arith.constant 0 : index
    %228 = vector.load %arg8[%c7_244, %c0_245] : memref<9x1024xf32, #tpu.memory_space<vmem>>, vector<1x1024xf32>
    %229 = vector.broadcast %228 : vector<1x1024xf32> to vector<4x1024xf32>
    %230 = arith.mulf %227, %229 : vector<4x1024xf32>
    %c2_246 = arith.constant 2 : index
    %c7_247 = arith.constant 7 : index
    %c0_248 = arith.constant 0 : index
    %c0_249 = arith.constant 0 : index
    %231 = vector.load %arg2[%c2_246, %c7_247, %c0_248, %c0_249] : memref<3x9x4x4xf32, #tpu.memory_space<vmem>>, vector<1x1x4x4xf32>
    %232 = vector.shape_cast %231 : vector<1x1x4x4xf32> to vector<4x4xf32>
    %cst_250 = arith.constant dense<0.000000e+00> : vector<4x1024xf32>
    %233 = tpu.matmul %232, %230, %cst_250 {dimension_numbers = #tpu.dot_dimension_numbers<[1], [0], [0], [1], [0, 0, 1, 1], [], []>} : vector<4x4xf32>, vector<4x1024xf32>, vector<4x1024xf32> -> vector<4x1024xf32>
    %234 = arith.addf %226, %233 : vector<4x1024xf32>
    %c0_251 = arith.constant 0 : index
    %c145_252 = arith.constant 145 : index
    %235 = vector.load %arg10[%c0_251, %c145_252] : memref<4x1280xf32, #tpu.memory_space<vmem>>, vector<4x1024xf32>
    %c8_253 = arith.constant 8 : index
    %c0_254 = arith.constant 0 : index
    %236 = vector.load %arg8[%c8_253, %c0_254] : memref<9x1024xf32, #tpu.memory_space<vmem>>, vector<1x1024xf32>
    %237 = vector.broadcast %236 : vector<1x1024xf32> to vector<4x1024xf32>
    %238 = arith.mulf %235, %237 : vector<4x1024xf32>
    %c2_255 = arith.constant 2 : index
    %c8_256 = arith.constant 8 : index
    %c0_257 = arith.constant 0 : index
    %c0_258 = arith.constant 0 : index
    %239 = vector.load %arg2[%c2_255, %c8_256, %c0_257, %c0_258] : memref<3x9x4x4xf32, #tpu.memory_space<vmem>>, vector<1x1x4x4xf32>
    %240 = vector.shape_cast %239 : vector<1x1x4x4xf32> to vector<4x4xf32>
    %cst_259 = arith.constant dense<0.000000e+00> : vector<4x1024xf32>
    %241 = tpu.matmul %240, %238, %cst_259 {dimension_numbers = #tpu.dot_dimension_numbers<[1], [0], [0], [1], [0, 0, 1, 1], [], []>} : vector<4x4xf32>, vector<4x1024xf32>, vector<4x1024xf32> -> vector<4x1024xf32>
    %242 = arith.addf %234, %241 : vector<4x1024xf32>
    %c2_260 = arith.constant 2 : index
    %c0_261 = arith.constant 0 : index
    %c0_262 = arith.constant 0 : index
    %243 = vector.load %arg3[%c2_260, %c0_261, %c0_262] : memref<3x4x1xf32, #tpu.memory_space<vmem>>, vector<1x4x1xf32>
    %244 = vector.shape_cast %243 : vector<1x4x1xf32> to vector<4x1xf32>
    %245 = vector.broadcast %244 : vector<4x1xf32> to vector<4x1024xf32>
    %246 = arith.addf %242, %245 : vector<4x1024xf32>
    %cst_263 = arith.constant 0.000000e+00 : f32
    %247 = vector.broadcast %cst_263 : f32 to vector<4x1024xf32>
    %248 = arith.maximumf %246, %247 : vector<4x1024xf32>
    %c0_264 = arith.constant 0 : index
    %c128_265 = arith.constant 128 : index
    %249 = vector.load %arg10[%c0_264, %c128_265] : memref<4x1280xf32, #tpu.memory_space<vmem>>, vector<4x1024xf32>
    %250 = arith.addf %249, %248 : vector<4x1024xf32>
    %251 = vector.extract_strided_slice %250 {offsets = [0, 0], sizes = [4, 512], strides = [1, 1]} : vector<4x1024xf32> to vector<4x512xf32>
    %252 = vector.extract_strided_slice %250 {offsets = [0, 512], sizes = [4, 512], strides = [1, 1]} : vector<4x1024xf32> to vector<4x512xf32>
    %253 = arith.addf %251, %252 : vector<4x512xf32>
    %c0_266 = arith.constant 0 : index
    %c0_267 = arith.constant 0 : index
    %254 = vector.load %arg4[%c0_266, %c0_267] : memref<8x4xf32, #tpu.memory_space<vmem>>, vector<8x4xf32>
    %cst_268 = arith.constant dense<0.000000e+00> : vector<8x512xf32>
    %255 = tpu.matmul %254, %253, %cst_268 {dimension_numbers = #tpu.dot_dimension_numbers<[1], [0], [0], [1], [0, 0, 1, 1], [], []>} : vector<8x4xf32>, vector<4x512xf32>, vector<8x512xf32> -> vector<8x512xf32>
    %c0_269 = arith.constant 0 : index
    %c0_270 = arith.constant 0 : index
    %256 = vector.load %arg5[%c0_269, %c0_270] : memref<8x1xf32, #tpu.memory_space<vmem>>, vector<8x1xf32>
    %257 = vector.broadcast %256 : vector<8x1xf32> to vector<8x512xf32>
    %258 = arith.addf %255, %257 : vector<8x512xf32>
    %cst_271 = arith.constant dense<0.000000e+00> : vector<8xf32>
    %259 = vector.multi_reduction <add>, %258, %cst_271 [1] : vector<8x512xf32> to vector<8xf32>
    %260 = vector.shape_cast %259 : vector<8xf32> to vector<8x1xf32>
    %cst_272 = arith.constant 0.001953125 : f32
    %261 = vector.broadcast %cst_272 : f32 to vector<8x1xf32>
    %262 = arith.mulf %260, %261 : vector<8x1xf32>
    %263 = vector.broadcast %262 : vector<8x1xf32> to vector<8x512xf32>
    %264 = arith.subf %258, %263 : vector<8x512xf32>
    %265 = arith.mulf %264, %264 : vector<8x512xf32>
    %cst_273 = arith.constant dense<0.000000e+00> : vector<8xf32>
    %266 = vector.multi_reduction <add>, %265, %cst_273 [1] : vector<8x512xf32> to vector<8xf32>
    %267 = vector.shape_cast %266 : vector<8xf32> to vector<8x1xf32>
    %cst_274 = arith.constant 0.001953125 : f32
    %268 = vector.broadcast %cst_274 : f32 to vector<8x1xf32>
    %269 = arith.mulf %267, %268 : vector<8x1xf32>
    %cst_275 = arith.constant 9.99999974E-6 : f32
    %270 = vector.broadcast %cst_275 : f32 to vector<8x1xf32>
    %271 = arith.addf %269, %270 : vector<8x1xf32>
    %272 = math.rsqrt %271 : vector<8x1xf32>
    %273 = vector.broadcast %272 : vector<8x1xf32> to vector<8x512xf32>
    %274 = arith.mulf %264, %273 : vector<8x512xf32>
    %c0_276 = arith.constant 0 : index
    %c0_277 = arith.constant 0 : index
    %275 = vector.load %arg6[%c0_276, %c0_277] : memref<8x1xf32, #tpu.memory_space<vmem>>, vector<8x1xf32>
    %276 = vector.broadcast %275 : vector<8x1xf32> to vector<8x512xf32>
    %277 = arith.mulf %274, %276 : vector<8x512xf32>
    %c0_278 = arith.constant 0 : index
    %c0_279 = arith.constant 0 : index
    %278 = vector.load %arg7[%c0_278, %c0_279] : memref<8x1xf32, #tpu.memory_space<vmem>>, vector<8x1xf32>
    %279 = vector.broadcast %278 : vector<8x1xf32> to vector<8x512xf32>
    %280 = arith.addf %277, %279 : vector<8x512xf32>
    %cst_280 = arith.constant 0.000000e+00 : f32
    %281 = vector.broadcast %cst_280 : f32 to vector<8x512xf32>
    %282 = arith.maximumf %280, %281 : vector<8x512xf32>
    %283 = vector.extract_strided_slice %282 {offsets = [0, 0], sizes = [8, 256], strides = [1, 1]} : vector<8x512xf32> to vector<8x256xf32>
    %c0_281 = arith.constant 0 : index
    %c0_282 = arith.constant 0 : index
    %c0_283 = arith.constant 0 : index
    %284 = vector.load %arg9[%c0_281, %c0_282, %c0_283] : memref<2x8x256xf32, #tpu.memory_space<vmem>>, vector<1x8x256xf32>
    %285 = vector.shape_cast %284 : vector<1x8x256xf32> to vector<8x256xf32>
    %286 = vector.shape_cast %283 : vector<8x256xf32> to vector<1x8x256xf32>
    tpu.vector_store %arg9[%c0_281, %c0_282, %c0_283], %286 {strides = array<i32>} : memref<2x8x256xf32, #tpu.memory_space<vmem>>, vector<1x8x256xf32>,
    %287 = vector.extract_strided_slice %282 {offsets = [0, 256], sizes = [8, 256], strides = [1, 1]} : vector<8x512xf32> to vector<8x256xf32>
    %c1_284 = arith.constant 1 : index
    %c0_285 = arith.constant 0 : index
    %c0_286 = arith.constant 0 : index
    %288 = vector.load %arg9[%c1_284, %c0_285, %c0_286] : memref<2x8x256xf32, #tpu.memory_space<vmem>>, vector<1x8x256xf32>
    %289 = vector.shape_cast %288 : vector<1x8x256xf32> to vector<8x256xf32>
    %290 = vector.shape_cast %287 : vector<8x256xf32> to vector<1x8x256xf32>
    tpu.vector_store %arg9[%c1_284, %c0_285, %c0_286], %290 {strides = array<i32>} : memref<2x8x256xf32, #tpu.memory_space<vmem>>, vector<1x8x256xf32>,
    return
  }
}

</mosaic_0001>

<llo_original>
// kernel: densecat_cat_add_forward.1
$region0: #{densecat_cat_add_forward.1}
  #allocation0 [shape = 'u32[]', space=smem, size = 0x4, offset = 0x4, fixed_abs, tag = 'smem constant byte address 0x4 - core index']
  #allocation1 [shape = 'u32[144,128]{1,0:T(1,128)}', space=vmem, size = 0x12000, scoped, tag = 'internal scratch']
  #allocation2 [shape = 'f32[4,1280]{1,0:T(4,128)}', space=vmem, size = 0x5000, scoped, tag = 'scratch operand']
  #allocation3 [shape = 'f32[4,1280]{1,0:T(4,128)}', space=vmem, size = 0x5000, scoped, tag = 'scratch operand']
  %s0 = inlined_call_operand.vmem [shape: f32[2,4,256], index: 0, kind: input, shape index: {}]
  %s1 = inlined_call_operand.vmem [shape: f32[2,4,256], index: 1, kind: input, shape index: {}]
  %s2 = inlined_call_operand.vmem [shape: f32[3,9,4,4], index: 2, kind: input, shape index: {}]
  %s3 = inlined_call_operand.vmem [shape: f32[3,4,1], index: 3, kind: input, shape index: {}]
  %s4 = inlined_call_operand.vmem [shape: f32[8,4], index: 4, kind: input, shape index: {}]
  %s5 = inlined_call_operand.vmem [shape: f32[8,1], index: 5, kind: input, shape index: {}]
  %s6 = inlined_call_operand.vmem [shape: f32[8,1], index: 6, kind: input, shape index: {}]
  %s7 = inlined_call_operand.vmem [shape: f32[8,1], index: 7, kind: input, shape index: {}]
  %s8 = inlined_call_operand.vmem [shape: f32[9,1024], index: 8, kind: input, shape index: {}]
  %s9 = inlined_call_operand.vmem [shape: f32[2,8,256], index: 9, kind: output, shape index: {}]
  %s10 = sld [smem:[#allocation0]]
  $region46: #{densecat_cat_add_forward.1} parent=0
    _
  %s12 = ssub.s32 1, %s10
  %s13 = scalar_select 0, %s12, %s10
  // Predicated region
  $region2: #{densecat_cat_add_forward.1} parent=0 // pred_check
    _
  $region3: #{densecat_cat_add_forward.1} parent=0 // pred_check_branch
    %15 = sbr.rel (0) target = $region5
  $region4: #{densecat_cat_add_forward.1} parent=0 // pred_region
    _
  $region5: #{densecat_cat_add_forward.1} parent=0 // pred_fallthru
    _
  // Predicated region
  $region6: #{densecat_cat_add_forward.1} parent=0 // pred_check
    _
  $region7: #{densecat_cat_add_forward.1} parent=0 // pred_check_branch
    %17 = sbr.rel (0) target = $region9
  $region8: #{densecat_cat_add_forward.1} parent=0 // pred_region
    _
  $region9: #{densecat_cat_add_forward.1} parent=0 // pred_fallthru
    _
  // Predicated region
  $region10: #{densecat_cat_add_forward.1} parent=0 // pred_check
    _
  $region11: #{densecat_cat_add_forward.1} parent=0 // pred_check_branch
    %19 = sbr.rel (0) target = $region13
  $region12: #{densecat_cat_add_forward.1} parent=0 // pred_region
    _
  $region13: #{densecat_cat_add_forward.1} parent=0 // pred_fallthru
    _
  // Predicated region
  $region14: #{densecat_cat_add_forward.1} parent=0 // pred_check
    _
  $region15: #{densecat_cat_add_forward.1} parent=0 // pred_check_branch
    %21 = sbr.rel (0) target = $region17
  $region16: #{densecat_cat_add_forward.1} parent=0 // pred_region
    _
  $region17: #{densecat_cat_add_forward.1} parent=0 // pred_fallthru
    _
  // Predicated region
  $region18: #{densecat_cat_add_forward.1} parent=0 // pred_check
    _
  $region19: #{densecat_cat_add_forward.1} parent=0 // pred_check_branch
    %23 = sbr.rel (0) target = $region21
  $region20: #{densecat_cat_add_forward.1} parent=0 // pred_region
    _
  $region21: #{densecat_cat_add_forward.1} parent=0 // pred_fallthru
    _
  // Predicated region
  $region22: #{densecat_cat_add_forward.1} parent=0 // pred_check
    _
  $region23: #{densecat_cat_add_forward.1} parent=0 // pred_check_branch
    %25 = sbr.rel (0) target = $region25
  $region24: #{densecat_cat_add_forward.1} parent=0 // pred_region
    _
  $region25: #{densecat_cat_add_forward.1} parent=0 // pred_fallthru
    _
  // Predicated region
  $region26: #{densecat_cat_add_forward.1} parent=0 // pred_check
    _
  $region27: #{densecat_cat_add_forward.1} parent=0 // pred_check_branch
    %27 = sbr.rel (0) target = $region29
  $region28: #{densecat_cat_add_forward.1} parent=0 // pred_region
    _
  $region29: #{densecat_cat_add_forward.1} parent=0 // pred_fallthru
    _
  // Predicated region
  $region30: #{densecat_cat_add_forward.1} parent=0 // pred_check
    _
  $region31: #{densecat_cat_add_forward.1} parent=0 // pred_check_branch
    %29 = sbr.rel (0) target = $region33
  $region32: #{densecat_cat_add_forward.1} parent=0 // pred_region
    _
  $region33: #{densecat_cat_add_forward.1} parent=0 // pred_fallthru
    _
  // Predicated region
  $region34: #{densecat_cat_add_forward.1} parent=0 // pred_check
    _
  $region35: #{densecat_cat_add_forward.1} parent=0 // pred_check_branch
    %31 = sbr.rel (0) target = $region37
  $region36: #{densecat_cat_add_forward.1} parent=0 // pred_region
    _
  $region37: #{densecat_cat_add_forward.1} parent=0 // pred_fallthru
    _
  %32 = vst [vmem:[#allocation2] sm:$0xf] 0.0
  %33 = vst [vmem:[#allocation2 + $0x24] sm:$0xf] 0.0
  %34 = vst [vmem:[#allocation3] sm:$0xf] 0.0
  %35 = vst [vmem:[#allocation3 + $0x24] sm:$0xf] 0.0
  %v36 = vld [vmem:[%s0] sm:$0xff]
  %37 = vst [vmem:[#allocation2 + $0x4] sm:$0xff] %v36
  %v38 = vld [vmem:[%s1] sm:$0xff]
  %39 = vst [vmem:[#allocation2 + $0x14] sm:$0xff] %v38
  %s40 = scalar_lea.vmem %s0, 8
  %v41 = vld [vmem:[%s40] sm:$0xff]
  %42 = vst [vmem:[#allocation2 + $0xc] sm:$0xff] %v41
  %s43 = scalar_lea.vmem %s1, 8
  %v44 = vld [vmem:[%s43] sm:$0xff]
  %45 = vst [vmem:[#allocation2 + $0x1c] sm:$0xff] %v44
  %v46 = vld [vmem:[#allocation2] sm:$0xff]
  %v47 = vld [vmem:[#allocation2 + $0x8] sm:$0xff]
  %v48 = vld [vmem:[#allocation2 + $0x10] sm:$0xff]
  %v49 = vld [vmem:[#allocation2 + $0x18] sm:$0xff]
  %v50 = vld [vmem:[#allocation2 + $0x20] sm:$0xf]
  %v51 = vld [vmem:[%s8] ss:$8 sm:$0xf]
  %v52 = vld [vmem:[%s8] ss:$8 sm:$0xf0]
  %v53 = vor.u32 %v51, %v52
  %v55 = vlaneseq
  %v56 = vshrl.u32 %v55, 7
  %v57 = vsub.s32 0, %v56
  %v58 = vrot.slane %v53, %v57
  %v59 = vlaneseq
  %v60 = vshrl.u32 %v59, 7
  %v61 = vsub.s32 1, %v60
  %v62 = vrot.slane %v53, %v61
  %v63 = vlaneseq
  %v64 = vshrl.u32 %v63, 7
  %v65 = vsub.s32 2, %v64
  %v66 = vrot.slane %v53, %v65
  %v67 = vlaneseq
  %v68 = vshrl.u32 %v67, 7
  %v69 = vsub.s32 3, %v68
  %v70 = vrot.slane %v53, %v69
  %v71 = vlaneseq
  %v72 = vshrl.u32 %v71, 7
  %v73 = vsub.s32 4, %v72
  %v74 = vrot.slane %v53, %v73
  %v75 = vlaneseq
  %v76 = vshrl.u32 %v75, 7
  %v77 = vsub.s32 5, %v76
  %v78 = vrot.slane %v53, %v77
  %v79 = vlaneseq
  %v80 = vshrl.u32 %v79, 7
  %v81 = vsub.s32 6, %v80
  %v82 = vrot.slane %v53, %v81
  %v83 = vlaneseq
  %v84 = vshrl.u32 %v83, 7
  %v85 = vsub.s32 7, %v84
  %v86 = vrot.slane %v53, %v85
  %v87 = vcombine.low %v58, %v62
  %v88 = vcombine.low %v66, %v70
  %v89 = vcombine.low %v74, %v78
  %v90 = vcombine.low %v82, %v86
  %91 = vrot.lane.b32.xlu0 %v87, 111
  %v92 = vpop.permute.xlu0 %91
  %93 = vrot.lane.b32.xlu0 %v88, 111
  %v94 = vpop.permute.xlu0 %93
  %95 = vrot.lane.b32.xlu0 %v89, 111
  %v96 = vpop.permute.xlu0 %95
  %97 = vrot.lane.b32.xlu0 %v90, 111
  %v98 = vpop.permute.xlu0 %97
  %v99 = vrot.slane %v92, 4
  %v100 = vrot.slane %v94, 4
  %v101 = vrot.slane %v96, 4
  %v102 = vrot.slane %v98, 4
  %vm103 = vcmask 908288
  %v104 = vsel %vm103, %v99, %v92
  %vm105 = vcmask 1043456
  %v106 = vsel %vm105, %v99, %v100
  %v107 = vsel %vm103, %v106, %v94
  %v108 = vsel %vm105, %v100, %v101
  %v109 = vsel %vm103, %v108, %v96
  %v110 = vsel %vm105, %v101, %v102
  %v111 = vsel %vm103, %v110, %v98
  %v117 = vmul.f32 %v46, %v104
  %v118 = vmul.f32 %v47, %v107
  %v119 = vmul.f32 %v48, %v109
  %v120 = vmul.f32 %v49, %v111
  %v121 = vmul.f32 %v50, %v102
  %v122 = vld [vmem:[%s2] sm:$0xf]
  %s123 = scalar_lea.vmem %s8, 1
  %v124 = vld [vmem:[%s123] ss:$8 sm:$0xf]
  %v125 = vld [vmem:[%s123] ss:$8 sm:$0xf0]
  %v126 = vor.u32 %v124, %v125
  %v128 = vlaneseq
  %v129 = vshrl.u32 %v128, 7
  %v130 = vsub.s32 0, %v129
  %v131 = vrot.slane %v126, %v130
  %v132 = vlaneseq
  %v133 = vshrl.u32 %v132, 7
  %v134 = vsub.s32 1, %v133
  %v135 = vrot.slane %v126, %v134
  %v136 = vlaneseq
  %v137 = vshrl.u32 %v136, 7
  %v138 = vsub.s32 2, %v137
  %v139 = vrot.slane %v126, %v138
  %v140 = vlaneseq
  %v141 = vshrl.u32 %v140, 7
  %v142 = vsub.s32 3, %v141
  %v143 = vrot.slane %v126, %v142
  %v144 = vlaneseq
  %v145 = vshrl.u32 %v144, 7
  %v146 = vsub.s32 4, %v145
  %v147 = vrot.slane %v126, %v146
  %v148 = vlaneseq
  %v149 = vshrl.u32 %v148, 7
  %v150 = vsub.s32 5, %v149
  %v151 = vrot.slane %v126, %v150
  %v152 = vlaneseq
  %v153 = vshrl.u32 %v152, 7
  %v154 = vsub.s32 6, %v153
  %v155 = vrot.slane %v126, %v154
  %v156 = vlaneseq
  %v157 = vshrl.u32 %v156, 7
  %v158 = vsub.s32 7, %v157
  %v159 = vrot.slane %v126, %v158
  %v160 = vcombine.low %v131, %v135
  %v161 = vcombine.low %v139, %v143
  %v162 = vcombine.low %v147, %v151
  %v163 = vcombine.low %v155, %v159
  %164 = vrot.lane.b32.xlu0 %v160, 112
  %v165 = vpop.permute.xlu0 %164
  %166 = vrot.lane.b32.xlu0 %v161, 112
  %v167 = vpop.permute.xlu0 %166
  %168 = vrot.lane.b32.xlu0 %v162, 112
  %v169 = vpop.permute.xlu0 %168
  %170 = vrot.lane.b32.xlu0 %v163, 112
  %v171 = vpop.permute.xlu0 %170
  %v172 = vrot.slane %v165, 4
  %v173 = vrot.slane %v167, 4
  %v174 = vrot.slane %v169, 4
  %v175 = vrot.slane %v171, 4
  %vm176 = vcmask 916480
  %v177 = vsel %vm176, %v172, %v165
  %v178 = vsel %vm105, %v172, %v173
  %v179 = vsel %vm176, %v178, %v167
  %v180 = vsel %vm105, %v173, %v174
  %v181 = vsel %vm176, %v180, %v169
  %v182 = vsel %vm105, %v174, %v175
  %v183 = vsel %vm176, %v182, %v171
  %v189 = vmul.f32 %v46, %v177
  %v190 = vmul.f32 %v47, %v179
  %v191 = vmul.f32 %v48, %v181
  %v192 = vmul.f32 %v49, %v183
  %v193 = vmul.f32 %v50, %v175
  %s194 = scalar_lea.vmem %s2, 4
  %v195 = vld [vmem:[%s194] sm:$0xf]
  %v201 = vcombine.high %v189, %v189
  %v202 = vcombine.high %v190, %v190
  %v203 = vcombine.high %v191, %v191
  %v204 = vcombine.high %v192, %v192
  %205 = vrot.lane.b32.xlu0 %v189, 16
  %v206 = vpop.permute.xlu0 %205
  %207 = vrot.lane.b32.xlu0 %v201, 16
  %v208 = vpop.permute.xlu0 %207
  %209 = vrot.lane.b32.xlu0 %v190, 16
  %v210 = vpop.permute.xlu0 %209
  %211 = vrot.lane.b32.xlu0 %v202, 16
  %v212 = vpop.permute.xlu0 %211
  %213 = vrot.lane.b32.xlu0 %v191, 16
  %v214 = vpop.permute.xlu0 %213
  %215 = vrot.lane.b32.xlu0 %v203, 16
  %v216 = vpop.permute.xlu0 %215
  %217 = vrot.lane.b32.xlu0 %v192, 16
  %v218 = vpop.permute.xlu0 %217
  %219 = vrot.lane.b32.xlu0 %v204, 16
  %v220 = vpop.permute.xlu0 %219
  %221 = vrot.lane.b32.xlu0 %v193, 16
  %v222 = vpop.permute.xlu0 %221
  %vm223 = vcmask 130048
  %v224 = vsel %vm223, %v206, %v208
  %v225 = vsel %vm223, %v208, %v210
  %v226 = vsel %vm223, %v210, %v212
  %v227 = vsel %vm223, %v212, %v214
  %v228 = vsel %vm223, %v214, %v216
  %v229 = vsel %vm223, %v216, %v218
  %v230 = vsel %vm223, %v218, %v220
  %v231 = vsel %vm223, %v220, %v222
  %vm232 = vcmask 31744
  %v234 = vsel %vm232, %v195, 0
  %v236 = vsel %vm105, %v224, 0
  %v238 = vsel %vm105, %v225, 0
  %v240 = vsel %vm105, %v226, 0
  %v242 = vsel %vm105, %v227, 0
  %v244 = vsel %vm105, %v228, 0
  %v246 = vsel %vm105, %v229, 0
  %v248 = vsel %vm105, %v230, 0
  %v250 = vsel %vm105, %v231, 0
  %252 = vmatprep.subr.mxu0 %v238
  %253 = vmatpush1.msra.mxu0 %v236
  %254 = vmatprep.subr.mxu0 0.0
  %255 = vmatpush1.msra.mxu0 0.0
  %256 = vmatprep.subr.mxu0 0.0
  %257 = vmatpush1.msra.mxu0 0.0
  %258 = vmatprep.subr.mxu0 0.0
  %259 = vmatpush1.msra.mxu0 0.0
  %260 = vmatprep.subr.mxu0 0.0
  %261 = vmatpush1.msra.mxu0 0.0
  %262 = vmatprep.subr.mxu0 0.0
  %263 = vmatpush1.msra.mxu0 0.0
  %264 = vmatprep.subr.mxu0 0.0
  %265 = vmatpush1.msra.mxu0 0.0
  %266 = vmatprep.subr.mxu0 0.0
  %267 = vmatpush1.msra.mxu0 0.0
  %268 = vmatprep.subr.mxu0 0.0
  %269 = vmatpush1.msra.mxu0 0.0
  %270 = vmatprep.subr.mxu0 0.0
  %271 = vmatpush1.msra.mxu0 0.0
  %272 = vmatprep.subr.mxu0 0.0
  %273 = vmatpush1.msra.mxu0 0.0
  %274 = vmatprep.subr.mxu0 0.0
  %275 = vmatpush1.msra.mxu0 0.0
  %276 = vmatprep.subr.mxu0 0.0
  %277 = vmatpush1.msra.mxu0 0.0
  %278 = vmatprep.subr.mxu0 0.0
  %279 = vmatpush1.msra.mxu0 0.0
  %280 = vmatprep.subr.mxu0 0.0
  %281 = vmatpush1.msra.mxu0 0.0
  %282 = vmatprep.subr.mxu0 0.0
  %283 = vmatpush1.msra.mxu0 0.0
  %284 = vmatprep.subr.mxu0 0.0
  %285 = vmatpush1.msra.mxu0 0.0
  %286 = vmatprep.subr.mxu0 0.0
  %287 = vmatpush1.msra.mxu0 0.0
  %288 = vmatprep.subr.mxu0 0.0
  %289 = vmatpush1.msra.mxu0 0.0
  %290 = vmatprep.subr.mxu0 0.0
  %291 = vmatpush1.msra.mxu0 0.0
  %292 = vmatprep.subr.mxu0 0.0
  %293 = vmatpush1.msra.mxu0 0.0
  %294 = vmatprep.subr.mxu0 0.0
  %295 = vmatpush1.msra.mxu0 0.0
  %296 = vmatprep.subr.mxu0 0.0
  %297 = vmatpush1.msra.mxu0 0.0
  %298 = vmatprep.subr.mxu0 0.0
  %299 = vmatpush1.msra.mxu0 0.0
  %300 = vmatprep.subr.mxu0 0.0
  %301 = vmatpush1.msra.mxu0 0.0
  %302 = vmatprep.subr.mxu0 0.0
  %303 = vmatpush1.msra.mxu0 0.0
  %304 = vmatprep.subr.mxu0 0.0
  %305 = vmatpush1.msra.mxu0 0.0
  %306 = vmatprep.subr.mxu0 0.0
  %307 = vmatpush1.msra.mxu0 0.0
  %308 = vmatprep.subr.mxu0 0.0
  %309 = vmatpush1.msra.mxu0 0.0
  %310 = vmatprep.subr.mxu0 0.0
  %311 = vmatpush1.msra.mxu0 0.0
  %312 = vmatprep.subr.mxu0 0.0
  %313 = vmatpush1.msra.mxu0 0.0
  %314 = vmatprep.subr.mxu0 0.0
  %315 = vmatpush1.msra.mxu0 0.0
  %316 = vmatprep.mubr.f32.mxu0 0.0
  %317 = vmatmul.mubr.f32.gmra.mrb[0].mxu0 %v234
  %v318 = vpop.f32.mrb[0].mxu0
  %v319 = vadd.f32 0.0, %v318
  %v320 = vpop.f32.mrb[0].mxu0
  %v321 = vadd.f32 0.0, %v320
  %322 = vdwg.mxu0
  %323 = vmatprep.subr.mxu0 %v242
  %324 = vmatpush1.msra.mxu0 %v240
  %325 = vmatprep.subr.mxu0 0.0
  %326 = vmatpush1.msra.mxu0 0.0
  %327 = vmatprep.subr.mxu0 0.0
  %328 = vmatpush1.msra.mxu0 0.0
  %329 = vmatprep.subr.mxu0 0.0
  %330 = vmatpush1.msra.mxu0 0.0
  %331 = vmatprep.subr.mxu0 0.0
  %332 = vmatpush1.msra.mxu0 0.0
  %333 = vmatprep.subr.mxu0 0.0
  %334 = vmatpush1.msra.mxu0 0.0
  %335 = vmatprep.subr.mxu0 0.0
  %336 = vmatpush1.msra.mxu0 0.0
  %337 = vmatprep.subr.mxu0 0.0
  %338 = vmatpush1.msra.mxu0 0.0
  %339 = vmatprep.subr.mxu0 0.0
  %340 = vmatpush1.msra.mxu0 0.0
  %341 = vmatprep.subr.mxu0 0.0
  %342 = vmatpush1.msra.mxu0 0.0
  %343 = vmatprep.subr.mxu0 0.0
  %344 = vmatpush1.msra.mxu0 0.0
  %345 = vmatprep.subr.mxu0 0.0
  %346 = vmatpush1.msra.mxu0 0.0
  %347 = vmatprep.subr.mxu0 0.0
  %348 = vmatpush1.msra.mxu0 0.0
  %349 = vmatprep.subr.mxu0 0.0
  %350 = vmatpush1.msra.mxu0 0.0
  %351 = vmatprep.subr.mxu0 0.0
  %352 = vmatpush1.msra.mxu0 0.0
  %353 = vmatprep.subr.mxu0 0.0
  %354 = vmatpush1.msra.mxu0 0.0
  %355 = vmatprep.subr.mxu0 0.0
  %356 = vmatpush1.msra.mxu0 0.0
  %357 = vmatprep.subr.mxu0 0.0
  %358 = vmatpush1.msra.mxu0 0.0
  %359 = vmatprep.subr.mxu0 0.0
  %360 = vmatpush1.msra.mxu0 0.0
  %361 = vmatprep.subr.mxu0 0.0
  %362 = vmatpush1.msra.mxu0 0.0
  %363 = vmatprep.subr.mxu0 0.0
  %364 = vmatpush1.msra.mxu0 0.0
  %365 = vmatprep.subr.mxu0 0.0
  %366 = vmatpush1.msra.mxu0 0.0
  %367 = vmatprep.subr.mxu0 0.0
  %368 = vmatpush1.msra.mxu0 0.0
  %369 = vmatprep.subr.mxu0 0.0
  %370 = vmatpush1.msra.mxu0 0.0
  %371 = vmatprep.subr.mxu0 0.0
  %372 = vmatpush1.msra.mxu0 0.0
  %373 = vmatprep.subr.mxu0 0.0
  %374 = vmatpush1.msra.mxu0 0.0
  %375 = vmatprep.subr.mxu0 0.0
  %376 = vmatpush1.msra.mxu0 0.0
  %377 = vmatprep.subr.mxu0 0.0
  %378 = vmatpush1.msra.mxu0 0.0
  %379 = vmatprep.subr.mxu0 0.0
  %380 = vmatpush1.msra.mxu0 0.0
  %381 = vmatprep.subr.mxu0 0.0
  %382 = vmatpush1.msra.mxu0 0.0
  %383 = vmatprep.subr.mxu0 0.0
  %384 = vmatpush1.msra.mxu0 0.0
  %385 = vmatprep.subr.mxu0 0.0
  %386 = vmatpush1.msra.mxu0 0.0
  %387 = vmatprep.mubr.f32.mxu0 0.0
  %388 = vmatmul.mubr.f32.gmra.mrb[0].mxu0 %v234
  %v389 = vpop.f32.mrb[0].mxu0
  %v390 = vadd.f32 0.0, %v389
  %v391 = vpop.f32.mrb[0].mxu0
  %v392 = vadd.f32 0.0, %v391
  %393 = vdwg.mxu0
  %394 = vmatprep.subr.mxu0 %v246
  %395 = vmatpush1.msra.mxu0 %v244
  %396 = vmatprep.subr.mxu0 0.0
  %397 = vmatpush1.msra.mxu0 0.0
  %398 = vmatprep.subr.mxu0 0.0
  %399 = vmatpush1.msra.mxu0 0.0
  %400 = vmatprep.subr.mxu0 0.0
  %401 = vmatpush1.msra.mxu0 0.0
  %402 = vmatprep.subr.mxu0 0.0
  %403 = vmatpush1.msra.mxu0 0.0
  %404 = vmatprep.subr.mxu0 0.0
  %405 = vmatpush1.msra.mxu0 0.0
  %406 = vmatprep.subr.mxu0 0.0
  %407 = vmatpush1.msra.mxu0 0.0
  %408 = vmatprep.subr.mxu0 0.0
  %409 = vmatpush1.msra.mxu0 0.0
  %410 = vmatprep.subr.mxu0 0.0
  %411 = vmatpush1.msra.mxu0 0.0
  %412 = vmatprep.subr.mxu0 0.0
  %413 = vmatpush1.msra.mxu0 0.0
  %414 = vmatprep.subr.mxu0 0.0
  %415 = vmatpush1.msra.mxu0 0.0
  %416 = vmatprep.subr.mxu0 0.0
  %417 = vmatpush1.msra.mxu0 0.0
  %418 = vmatprep.subr.mxu0 0.0
  %419 = vmatpush1.msra.mxu0 0.0
  %420 = vmatprep.subr.mxu0 0.0
  %421 = vmatpush1.msra.mxu0 0.0
  %422 = vmatprep.subr.mxu0 0.0
  %423 = vmatpush1.msra.mxu0 0.0
  %424 = vmatprep.subr.mxu0 0.0
  %425 = vmatpush1.msra.mxu0 0.0
  %426 = vmatprep.subr.mxu0 0.0
  %427 = vmatpush1.msra.mxu0 0.0
  %428 = vmatprep.subr.mxu0 0.0
  %429 = vmatpush1.msra.mxu0 0.0
  %430 = vmatprep.subr.mxu0 0.0
  %431 = vmatpush1.msra.mxu0 0.0
  %432 = vmatprep.subr.mxu0 0.0
  %433 = vmatpush1.msra.mxu0 0.0
  %434 = vmatprep.subr.mxu0 0.0
  %435 = vmatpush1.msra.mxu0 0.0
  %436 = vmatprep.subr.mxu0 0.0
  %437 = vmatpush1.msra.mxu0 0.0
  %438 = vmatprep.subr.mxu0 0.0
  %439 = vmatpush1.msra.mxu0 0.0
  %440 = vmatprep.subr.mxu0 0.0
  %441 = vmatpush1.msra.mxu0 0.0
  %442 = vmatprep.subr.mxu0 0.0
  %443 = vmatpush1.msra.mxu0 0.0
  %444 = vmatprep.subr.mxu0 0.0
  %445 = vmatpush1.msra.mxu0 0.0
  %446 = vmatprep.subr.mxu0 0.0
  %447 = vmatpush1.msra.mxu0 0.0
  %448 = vmatprep.subr.mxu0 0.0
  %449 = vmatpush1.msra.mxu0 0.0
  %450 = vmatprep.subr.mxu0 0.0
  %451 = vmatpush1.msra.mxu0 0.0
  %452 = vmatprep.subr.mxu0 0.0
  %453 = vmatpush1.msra.mxu0 0.0
  %454 = vmatprep.subr.mxu0 0.0
  %455 = vmatpush1.msra.mxu0 0.0
  %456 = vmatprep.subr.mxu0 0.0
  %457 = vmatpush1.msra.mxu0 0.0
  %458 = vmatprep.mubr.f32.mxu0 0.0
  %459 = vmatmul.mubr.f32.gmra.mrb[0].mxu0 %v234
  %v460 = vpop.f32.mrb[0].mxu0
  %v461 = vadd.f32 0.0, %v460
  %v462 = vpop.f32.mrb[0].mxu0
  %v463 = vadd.f32 0.0, %v462
  %464 = vdwg.mxu0
  %465 = vmatprep.subr.mxu0 %v250
  %466 = vmatpush1.msra.mxu0 %v248
  %467 = vmatprep.subr.mxu0 0.0
  %468 = vmatpush1.msra.mxu0 0.0
  %469 = vmatprep.subr.mxu0 0.0
  %470 = vmatpush1.msra.mxu0 0.0
  %471 = vmatprep.subr.mxu0 0.0
  %472 = vmatpush1.msra.mxu0 0.0
  %473 = vmatprep.subr.mxu0 0.0
  %474 = vmatpush1.msra.mxu0 0.0
  %475 = vmatprep.subr.mxu0 0.0
  %476 = vmatpush1.msra.mxu0 0.0
  %477 = vmatprep.subr.mxu0 0.0
  %478 = vmatpush1.msra.mxu0 0.0
  %479 = vmatprep.subr.mxu0 0.0
  %480 = vmatpush1.msra.mxu0 0.0
  %481 = vmatprep.subr.mxu0 0.0
  %482 = vmatpush1.msra.mxu0 0.0
  %483 = vmatprep.subr.mxu0 0.0
  %484 = vmatpush1.msra.mxu0 0.0
  %485 = vmatprep.subr.mxu0 0.0
  %486 = vmatpush1.msra.mxu0 0.0
  %487 = vmatprep.subr.mxu0 0.0
  %488 = vmatpush1.msra.mxu0 0.0
  %489 = vmatprep.subr.mxu0 0.0
  %490 = vmatpush1.msra.mxu0 0.0
  %491 = vmatprep.subr.mxu0 0.0
  %492 = vmatpush1.msra.mxu0 0.0
  %493 = vmatprep.subr.mxu0 0.0
  %494 = vmatpush1.msra.mxu0 0.0
  %495 = vmatprep.subr.mxu0 0.0
  %496 = vmatpush1.msra.mxu0 0.0
  %497 = vmatprep.subr.mxu0 0.0
  %498 = vmatpush1.msra.mxu0 0.0
  %499 = vmatprep.subr.mxu0 0.0
  %500 = vmatpush1.msra.mxu0 0.0
  %501 = vmatprep.subr.mxu0 0.0
  %502 = vmatpush1.msra.mxu0 0.0
  %503 = vmatprep.subr.mxu0 0.0
  %504 = vmatpush1.msra.mxu0 0.0
  %505 = vmatprep.subr.mxu0 0.0
  %506 = vmatpush1.msra.mxu0 0.0
  %507 = vmatprep.subr.mxu0 0.0
  %508 = vmatpush1.msra.mxu0 0.0
  %509 = vmatprep.subr.mxu0 0.0
  %510 = vmatpush1.msra.mxu0 0.0
  %511 = vmatprep.subr.mxu0 0.0
  %512 = vmatpush1.msra.mxu0 0.0
  %513 = vmatprep.subr.mxu0 0.0
  %514 = vmatpush1.msra.mxu0 0.0
  %515 = vmatprep.subr.mxu0 0.0
  %516 = vmatpush1.msra.mxu0 0.0
  %517 = vmatprep.subr.mxu0 0.0
  %518 = vmatpush1.msra.mxu0 0.0
  %519 = vmatprep.subr.mxu0 0.0
  %520 = vmatpush1.msra.mxu0 0.0
  %521 = vmatprep.subr.mxu0 0.0
  %522 = vmatpush1.msra.mxu0 0.0
  %523 = vmatprep.subr.mxu0 0.0
  %524 = vmatpush1.msra.mxu0 0.0
  %525 = vmatprep.subr.mxu0 0.0
  %526 = vmatpush1.msra.mxu0 0.0
  %527 = vmatprep.subr.mxu0 0.0
  %528 = vmatpush1.msra.mxu0 0.0
  %529 = vmatprep.mubr.f32.mxu0 0.0
  %530 = vmatmul.mubr.f32.gmra.mrb[0].mxu0 %v234
  %v531 = vpop.f32.mrb[0].mxu0
  %v532 = vadd.f32 0.0, %v531
  %v533 = vpop.f32.mrb[0].mxu0
  %v534 = vadd.f32 0.0, %v533
  %535 = vdwg.mxu0
  %v541 = vcombine.high %v117, %v117
  %v542 = vcombine.high %v118, %v118
  %v543 = vcombine.high %v119, %v119
  %v544 = vcombine.high %v120, %v120
  %545 = vrot.lane.b32.xlu0 %v117, 17
  %v546 = vpop.permute.xlu0 %545
  %547 = vrot.lane.b32.xlu0 %v541, 17
  %v548 = vpop.permute.xlu0 %547
  %549 = vrot.lane.b32.xlu0 %v118, 17
  %v550 = vpop.permute.xlu0 %549
  %551 = vrot.lane.b32.xlu0 %v542, 17
  %v552 = vpop.permute.xlu0 %551
  %553 = vrot.lane.b32.xlu0 %v119, 17
  %v554 = vpop.permute.xlu0 %553
  %555 = vrot.lane.b32.xlu0 %v543, 17
  %v556 = vpop.permute.xlu0 %555
  %557 = vrot.lane.b32.xlu0 %v120, 17
  %v558 = vpop.permute.xlu0 %557
  %559 = vrot.lane.b32.xlu0 %v544, 17
  %v560 = vpop.permute.xlu0 %559
  %561 = vrot.lane.b32.xlu0 %v121, 17
  %v562 = vpop.permute.xlu0 %561
  %vm563 = vcmask 138240
  %v564 = vsel %vm563, %v546, %v548
  %v565 = vsel %vm563, %v548, %v550
  %v566 = vsel %vm563, %v550, %v552
  %v567 = vsel %vm563, %v552, %v554
  %v568 = vsel %vm563, %v554, %v556
  %v569 = vsel %vm563, %v556, %v558
  %v570 = vsel %vm563, %v558, %v560
  %v571 = vsel %vm563, %v560, %v562
  %v573 = vsel %vm232, %v122, 0
  %v575 = vsel %vm105, %v564, 0
  %v577 = vsel %vm105, %v565, 0
  %v579 = vsel %vm105, %v566, 0
  %v581 = vsel %vm105, %v567, 0
  %v583 = vsel %vm105, %v568, 0
  %v585 = vsel %vm105, %v569, 0
  %v587 = vsel %vm105, %v570, 0
  %v589 = vsel %vm105, %v571, 0
  %591 = vmatprep.subr.mxu0 %v577
  %592 = vmatpush1.msra.mxu0 %v575
  %593 = vmatprep.subr.mxu0 0.0
  %594 = vmatpush1.msra.mxu0 0.0
  %595 = vmatprep.subr.mxu0 0.0
  %596 = vmatpush1.msra.mxu0 0.0
  %597 = vmatprep.subr.mxu0 0.0
  %598 = vmatpush1.msra.mxu0 0.0
  %599 = vmatprep.subr.mxu0 0.0
  %600 = vmatpush1.msra.mxu0 0.0
  %601 = vmatprep.subr.mxu0 0.0
  %602 = vmatpush1.msra.mxu0 0.0
  %603 = vmatprep.subr.mxu0 0.0
  %604 = vmatpush1.msra.mxu0 0.0
  %605 = vmatprep.subr.mxu0 0.0
  %606 = vmatpush1.msra.mxu0 0.0
  %607 = vmatprep.subr.mxu0 0.0
  %608 = vmatpush1.msra.mxu0 0.0
  %609 = vmatprep.subr.mxu0 0.0
  %610 = vmatpush1.msra.mxu0 0.0
  %611 = vmatprep.subr.mxu0 0.0
  %612 = vmatpush1.msra.mxu0 0.0
  %613 = vmatprep.subr.mxu0 0.0
  %614 = vmatpush1.msra.mxu0 0.0
  %615 = vmatprep.subr.mxu0 0.0
  %616 = vmatpush1.msra.mxu0 0.0
  %617 = vmatprep.subr.mxu0 0.0
  %618 = vmatpush1.msra.mxu0 0.0
  %619 = vmatprep.subr.mxu0 0.0
  %620 = vmatpush1.msra.mxu0 0.0
  %621 = vmatprep.subr.mxu0 0.0
  %622 = vmatpush1.msra.mxu0 0.0
  %623 = vmatprep.subr.mxu0 0.0
  %624 = vmatpush1.msra.mxu0 0.0
  %625 = vmatprep.subr.mxu0 0.0
  %626 = vmatpush1.msra.mxu0 0.0
  %627 = vmatprep.subr.mxu0 0.0
  %628 = vmatpush1.msra.mxu0 0.0
  %629 = vmatprep.subr.mxu0 0.0
  %630 = vmatpush1.msra.mxu0 0.0
  %631 = vmatprep.subr.mxu0 0.0
  %632 = vmatpush1.msra.mxu0 0.0
  %633 = vmatprep.subr.mxu0 0.0
  %634 = vmatpush1.msra.mxu0 0.0
  %635 = vmatprep.subr.mxu0 0.0
  %636 = vmatpush1.msra.mxu0 0.0
  %637 = vmatprep.subr.mxu0 0.0
  %638 = vmatpush1.msra.mxu0 0.0
  %639 = vmatprep.subr.mxu0 0.0
  %640 = vmatpush1.msra.mxu0 0.0
  %641 = vmatprep.subr.mxu0 0.0
  %642 = vmatpush1.msra.mxu0 0.0
  %643 = vmatprep.subr.mxu0 0.0
  %644 = vmatpush1.msra.mxu0 0.0
  %645 = vmatprep.subr.mxu0 0.0
  %646 = vmatpush1.msra.mxu0 0.0
  %647 = vmatprep.subr.mxu0 0.0
  %648 = vmatpush1.msra.mxu0 0.0
  %649 = vmatprep.subr.mxu0 0.0
  %650 = vmatpush1.msra.mxu0 0.0
  %651 = vmatprep.subr.mxu0 0.0
  %652 = vmatpush1.msra.mxu0 0.0
  %653 = vmatprep.subr.mxu0 0.0
  %654 = vmatpush1.msra.mxu0 0.0
  %655 = vmatprep.mubr.f32.mxu0 0.0
  %656 = vmatmul.mubr.f32.gmra.mrb[0].mxu0 %v573
  %v657 = vpop.f32.mrb[0].mxu0
  %v658 = vadd.f32 %v319, %v657
  %v659 = vpop.f32.mrb[0].mxu0
  %v660 = vadd.f32 %v321, %v659
  %661 = vdwg.mxu0
  %662 = vmatprep.subr.mxu0 %v581
  %663 = vmatpush1.msra.mxu0 %v579
  %664 = vmatprep.subr.mxu0 0.0
  %665 = vmatpush1.msra.mxu0 0.0
  %666 = vmatprep.subr.mxu0 0.0
  %667 = vmatpush1.msra.mxu0 0.0
  %668 = vmatprep.subr.mxu0 0.0
  %669 = vmatpush1.msra.mxu0 0.0
  %670 = vmatprep.subr.mxu0 0.0
  %671 = vmatpush1.msra.mxu0 0.0
  %672 = vmatprep.subr.mxu0 0.0
  %673 = vmatpush1.msra.mxu0 0.0
  %674 = vmatprep.subr.mxu0 0.0
  %675 = vmatpush1.msra.mxu0 0.0
  %676 = vmatprep.subr.mxu0 0.0
  %677 = vmatpush1.msra.mxu0 0.0
  %678 = vmatprep.subr.mxu0 0.0
  %679 = vmatpush1.msra.mxu0 0.0
  %680 = vmatprep.subr.mxu0 0.0
  %681 = vmatpush1.msra.mxu0 0.0
  %682 = vmatprep.subr.mxu0 0.0
  %683 = vmatpush1.msra.mxu0 0.0
  %684 = vmatprep.subr.mxu0 0.0
  %685 = vmatpush1.msra.mxu0 0.0
  %686 = vmatprep.subr.mxu0 0.0
  %687 = vmatpush1.msra.mxu0 0.0
  %688 = vmatprep.subr.mxu0 0.0
  %689 = vmatpush1.msra.mxu0 0.0
  %690 = vmatprep.subr.mxu0 0.0
  %691 = vmatpush1.msra.mxu0 0.0
  %692 = vmatprep.subr.mxu0 0.0
  %693 = vmatpush1.msra.mxu0 0.0
  %694 = vmatprep.subr.mxu0 0.0
  %695 = vmatpush1.msra.mxu0 0.0
  %696 = vmatprep.subr.mxu0 0.0
  %697 = vmatpush1.msra.mxu0 0.0
  %698 = vmatprep.subr.mxu0 0.0
  %699 = vmatpush1.msra.mxu0 0.0
  %700 = vmatprep.subr.mxu0 0.0
  %701 = vmatpush1.msra.mxu0 0.0
  %702 = vmatprep.subr.mxu0 0.0
  %703 = vmatpush1.msra.mxu0 0.0
  %704 = vmatprep.subr.mxu0 0.0
  %705 = vmatpush1.msra.mxu0 0.0
  %706 = vmatprep.subr.mxu0 0.0
  %707 = vmatpush1.msra.mxu0 0.0
  %708 = vmatprep.subr.mxu0 0.0
  %709 = vmatpush1.msra.mxu0 0.0
  %710 = vmatprep.subr.mxu0 0.0
  %711 = vmatpush1.msra.mxu0 0.0
  %712 = vmatprep.subr.mxu0 0.0
  %713 = vmatpush1.msra.mxu0 0.0
  %714 = vmatprep.subr.mxu0 0.0
  %715 = vmatpush1.msra.mxu0 0.0
  %716 = vmatprep.subr.mxu0 0.0
  %717 = vmatpush1.msra.mxu0 0.0
  %718 = vmatprep.subr.mxu0 0.0
  %719 = vmatpush1.msra.mxu0 0.0
  %720 = vmatprep.subr.mxu0 0.0
  %721 = vmatpush1.msra.mxu0 0.0
  %722 = vmatprep.subr.mxu0 0.0
  %723 = vmatpush1.msra.mxu0 0.0
  %724 = vmatprep.subr.mxu0 0.0
  %725 = vmatpush1.msra.mxu0 0.0
  %726 = vmatprep.mubr.f32.mxu0 0.0
  %727 = vmatmul.mubr.f32.gmra.mrb[0].mxu0 %v573
  %v728 = vpop.f32.mrb[0].mxu0
  %v729 = vadd.f32 %v390, %v728
  %v730 = vpop.f32.mrb[0].mxu0
  %v731 = vadd.f32 %v392, %v730
  %732 = vdwg.mxu0
  %733 = vmatprep.subr.mxu0 %v585
  %734 = vmatpush1.msra.mxu0 %v583
  %735 = vmatprep.subr.mxu0 0.0
  %736 = vmatpush1.msra.mxu0 0.0
  %737 = vmatprep.subr.mxu0 0.0
  %738 = vmatpush1.msra.mxu0 0.0
  %739 = vmatprep.subr.mxu0 0.0
  %740 = vmatpush1.msra.mxu0 0.0
  %741 = vmatprep.subr.mxu0 0.0
  %742 = vmatpush1.msra.mxu0 0.0
  %743 = vmatprep.subr.mxu0 0.0
  %744 = vmatpush1.msra.mxu0 0.0
  %745 = vmatprep.subr.mxu0 0.0
  %746 = vmatpush1.msra.mxu0 0.0
  %747 = vmatprep.subr.mxu0 0.0
  %748 = vmatpush1.msra.mxu0 0.0
  %749 = vmatprep.subr.mxu0 0.0
  %750 = vmatpush1.msra.mxu0 0.0
  %751 = vmatprep.subr.mxu0 0.0
  %752 = vmatpush1.msra.mxu0 0.0
  %753 = vmatprep.subr.mxu0 0.0
  %754 = vmatpush1.msra.mxu0 0.0
  %755 = vmatprep.subr.mxu0 0.0
  %756 = vmatpush1.msra.mxu0 0.0
  %757 = vmatprep.subr.mxu0 0.0
  %758 = vmatpush1.msra.mxu0 0.0
  %759 = vmatprep.subr.mxu0 0.0
  %760 = vmatpush1.msra.mxu0 0.0
  %761 = vmatprep.subr.mxu0 0.0
  %762 = vmatpush1.msra.mxu0 0.0
  %763 = vmatprep.subr.mxu0 0.0
  %764 = vmatpush1.msra.mxu0 0.0
  %765 = vmatprep.subr.mxu0 0.0
  %766 = vmatpush1.msra.mxu0 0.0
  %767 = vmatprep.subr.mxu0 0.0
  %768 = vmatpush1.msra.mxu0 0.0
  %769 = vmatprep.subr.mxu0 0.0
  %770 = vmatpush1.msra.mxu0 0.0
  %771 = vmatprep.subr.mxu0 0.0
  %772 = vmatpush1.msra.mxu0 0.0
  %773 = vmatprep.subr.mxu0 0.0
  %774 = vmatpush1.msra.mxu0 0.0
  %775 = vmatprep.subr.mxu0 0.0
  %776 = vmatpush1.msra.mxu0 0.0
  %777 = vmatprep.subr.mxu0 0.0
  %778 = vmatpush1.msra.mxu0 0.0
  %779 = vmatprep.subr.mxu0 0.0
  %780 = vmatpush1.msra.mxu0 0.0
  %781 = vmatprep.subr.mxu0 0.0
  %782 = vmatpush1.msra.mxu0 0.0
  %783 = vmatprep.subr.mxu0 0.0
  %784 = vmatpush1.msra.mxu0 0.0
  %785 = vmatprep.subr.mxu0 0.0
  %786 = vmatpush1.msra.mxu0 0.0
  %787 = vmatprep.subr.mxu0 0.0
  %788 = vmatpush1.msra.mxu0 0.0
  %789 = vmatprep.subr.mxu0 0.0
  %790 = vmatpush1.msra.mxu0 0.0
  %791 = vmatprep.subr.mxu0 0.0
  %792 = vmatpush1.msra.mxu0 0.0
  %793 = vmatprep.subr.mxu0 0.0
  %794 = vmatpush1.msra.mxu0 0.0
  %795 = vmatprep.subr.mxu0 0.0
  %796 = vmatpush1.msra.mxu0 0.0
  %797 = vmatprep.mubr.f32.mxu0 0.0
  %798 = vmatmul.mubr.f32.gmra.mrb[0].mxu0 %v573
  %v799 = vpop.f32.mrb[0].mxu0
  %v800 = vadd.f32 %v461, %v799
  %v801 = vpop.f32.mrb[0].mxu0
  %v802 = vadd.f32 %v463, %v801
  %803 = vdwg.mxu0
  %804 = vmatprep.subr.mxu0 %v589
  %805 = vmatpush1.msra.mxu0 %v587
  %806 = vmatprep.subr.mxu0 0.0
  %807 = vmatpush1.msra.mxu0 0.0
  %808 = vmatprep.subr.mxu0 0.0
  %809 = vmatpush1.msra.mxu0 0.0
  %810 = vmatprep.subr.mxu0 0.0
  %811 = vmatpush1.msra.mxu0 0.0
  %812 = vmatprep.subr.mxu0 0.0
  %813 = vmatpush1.msra.mxu0 0.0
  %814 = vmatprep.subr.mxu0 0.0
  %815 = vmatpush1.msra.mxu0 0.0
  %816 = vmatprep.subr.mxu0 0.0
  %817 = vmatpush1.msra.mxu0 0.0
  %818 = vmatprep.subr.mxu0 0.0
  %819 = vmatpush1.msra.mxu0 0.0
  %820 = vmatprep.subr.mxu0 0.0
  %821 = vmatpush1.msra.mxu0 0.0
  %822 = vmatprep.subr.mxu0 0.0
  %823 = vmatpush1.msra.mxu0 0.0
  %824 = vmatprep.subr.mxu0 0.0
  %825 = vmatpush1.msra.mxu0 0.0
  %826 = vmatprep.subr.mxu0 0.0
  %827 = vmatpush1.msra.mxu0 0.0
  %828 = vmatprep.subr.mxu0 0.0
  %829 = vmatpush1.msra.mxu0 0.0
  %830 = vmatprep.subr.mxu0 0.0
  %831 = vmatpush1.msra.mxu0 0.0
  %832 = vmatprep.subr.mxu0 0.0
  %833 = vmatpush1.msra.mxu0 0.0
  %834 = vmatprep.subr.mxu0 0.0
  %835 = vmatpush1.msra.mxu0 0.0
  %836 = vmatprep.subr.mxu0 0.0
  %837 = vmatpush1.msra.mxu0 0.0
  %838 = vmatprep.subr.mxu0 0.0
  %839 = vmatpush1.msra.mxu0 0.0
  %840 = vmatprep.subr.mxu0 0.0
  %841 = vmatpush1.msra.mxu0 0.0
  %842 = vmatprep.subr.mxu0 0.0
  %843 = vmatpush1.msra.mxu0 0.0
  %844 = vmatprep.subr.mxu0 0.0
  %845 = vmatpush1.msra.mxu0 0.0
  %846 = vmatprep.subr.mxu0 0.0
  %847 = vmatpush1.msra.mxu0 0.0
  %848 = vmatprep.subr.mxu0 0.0
  %849 = vmatpush1.msra.mxu0 0.0
  %850 = vmatprep.subr.mxu0 0.0
  %851 = vmatpush1.msra.mxu0 0.0
  %852 = vmatprep.subr.mxu0 0.0
  %853 = vmatpush1.msra.mxu0 0.0
  %854 = vmatprep.subr.mxu0 0.0
  %855 = vmatpush1.msra.mxu0 0.0
  %856 = vmatprep.subr.mxu0 0.0
  %857 = vmatpush1.msra.mxu0 0.0
  %858 = vmatprep.subr.mxu0 0.0
  %859 = vmatpush1.msra.mxu0 0.0
  %860 = vmatprep.subr.mxu0 0.0
  %861 = vmatpush1.msra.mxu0 0.0
  %862 = vmatprep.subr.mxu0 0.0
  %863 = vmatpush1.msra.mxu0 0.0
  %864 = vmatprep.subr.mxu0 0.0
  %865 = vmatpush1.msra.mxu0 0.0
  %866 = vmatprep.subr.mxu0 0.0
  %867 = vmatpush1.msra.mxu0 0.0
  %868 = vmatprep.mubr.f32.mxu0 0.0
  %869 = vmatmul.mubr.f32.gmra.mrb[0].mxu0 %v573
  %v870 = vpop.f32.mrb[0].mxu0
  %v871 = vadd.f32 %v532, %v870
  %v872 = vpop.f32.mrb[0].mxu0
  %v873 = vadd.f32 %v534, %v872
  %874 = vdwg.mxu0
  %v875 = vld [vmem:[#allocation2] sm:$0xff]
  %v876 = vld [vmem:[#allocation2 + $0x8] sm:$0xff]
  %v877 = vld [vmem:[#allocation2 + $0x10] sm:$0xff]
  %v878 = vld [vmem:[#allocation2 + $0x18] sm:$0xff]
  %v879 = vld [vmem:[#allocation2 + $0x20] sm:$0xf]
  %s880 = scalar_lea.vmem %s8, 2
  %v881 = vld [vmem:[%s880] ss:$8 sm:$0xf]
  %v882 = vld [vmem:[%s880] ss:$8 sm:$0xf0]
  %v883 = vor.u32 %v881, %v882
  %v885 = vlaneseq
  %v886 = vshrl.u32 %v885, 7
  %v887 = vsub.s32 0, %v886
  %v888 = vrot.slane %v883, %v887
  %v889 = vlaneseq
  %v890 = vshrl.u32 %v889, 7
  %v891 = vsub.s32 1, %v890
  %v892 = vrot.slane %v883, %v891
  %v893 = vlaneseq
  %v894 = vshrl.u32 %v893, 7
  %v895 = vsub.s32 2, %v894
  %v896 = vrot.slane %v883, %v895
  %v897 = vlaneseq
  %v898 = vshrl.u32 %v897, 7
  %v899 = vsub.s32 3, %v898
  %v900 = vrot.slane %v883, %v899
  %v901 = vlaneseq
  %v902 = vshrl.u32 %v901, 7
  %v903 = vsub.s32 4, %v902
  %v904 = vrot.slane %v883, %v903
  %v905 = vlaneseq
  %v906 = vshrl.u32 %v905, 7
  %v907 = vsub.s32 5, %v906
  %v908 = vrot.slane %v883, %v907
  %v909 = vlaneseq
  %v910 = vshrl.u32 %v909, 7
  %v911 = vsub.s32 6, %v910
  %v912 = vrot.slane %v883, %v911
  %v913 = vlaneseq
  %v914 = vshrl.u32 %v913, 7
  %v915 = vsub.s32 7, %v914
  %v916 = vrot.slane %v883, %v915
  %v917 = vcombine.low %v888, %v892
  %v918 = vcombine.low %v896, %v900
  %v919 = vcombine.low %v904, %v908
  %v920 = vcombine.low %v912, %v916
  %921 = vrot.lane.b32.xlu0 %v917, 113
  %v922 = vpop.permute.xlu0 %921
  %923 = vrot.lane.b32.xlu0 %v918, 113
  %v924 = vpop.permute.xlu0 %923
  %925 = vrot.lane.b32.xlu0 %v919, 113
  %v926 = vpop.permute.xlu0 %925
  %927 = vrot.lane.b32.xlu0 %v920, 113
  %v928 = vpop.permute.xlu0 %927
  %v929 = vrot.slane %v922, 4
  %v930 = vrot.slane %v924, 4
  %v931 = vrot.slane %v926, 4
  %v932 = vrot.slane %v928, 4
  %vm933 = vcmask 924672
  %v934 = vsel %vm933, %v929, %v922
  %v935 = vsel %vm105, %v929, %v930
  %v936 = vsel %vm933, %v935, %v924
  %v937 = vsel %vm105, %v930, %v931
  %v938 = vsel %vm933, %v937, %v926
  %v939 = vsel %vm105, %v931, %v932
  %v940 = vsel %vm933, %v939, %v928
  %v946 = vmul.f32 %v875, %v934
  %v947 = vmul.f32 %v876, %v936
  %v948 = vmul.f32 %v877, %v938
  %v949 = vmul.f32 %v878, %v940
  %v950 = vmul.f32 %v879, %v932
  %s951 = scalar_lea.vmem %s2, 8
  %v952 = vld [vmem:[%s951] sm:$0xf]
  %v958 = vcombine.high %v946, %v946
  %v959 = vcombine.high %v947, %v947
  %v960 = vcombine.high %v948, %v948
  %v961 = vcombine.high %v949, %v949
  %962 = vrot.lane.b32.xlu0 %v946, 15
  %v963 = vpop.permute.xlu0 %962
  %964 = vrot.lane.b32.xlu0 %v958, 15
  %v965 = vpop.permute.xlu0 %964
  %966 = vrot.lane.b32.xlu0 %v947, 15
  %v967 = vpop.permute.xlu0 %966
  %968 = vrot.lane.b32.xlu0 %v959, 15
  %v969 = vpop.permute.xlu0 %968
  %970 = vrot.lane.b32.xlu0 %v948, 15
  %v971 = vpop.permute.xlu0 %970
  %972 = vrot.lane.b32.xlu0 %v960, 15
  %v973 = vpop.permute.xlu0 %972
  %974 = vrot.lane.b32.xlu0 %v949, 15
  %v975 = vpop.permute.xlu0 %974
  %976 = vrot.lane.b32.xlu0 %v961, 15
  %v977 = vpop.permute.xlu0 %976
  %978 = vrot.lane.b32.xlu0 %v950, 15
  %v979 = vpop.permute.xlu0 %978
  %vm980 = vcmask 121856
  %v981 = vsel %vm980, %v963, %v965
  %v982 = vsel %vm980, %v965, %v967
  %v983 = vsel %vm980, %v967, %v969
  %v984 = vsel %vm980, %v969, %v971
  %v985 = vsel %vm980, %v971, %v973
  %v986 = vsel %vm980, %v973, %v975
  %v987 = vsel %vm980, %v975, %v977
  %v988 = vsel %vm980, %v977, %v979
  %v990 = vsel %vm232, %v952, 0
  %v992 = vsel %vm105, %v981, 0
  %v994 = vsel %vm105, %v982, 0
  %v996 = vsel %vm105, %v983, 0
  %v998 = vsel %vm105, %v984, 0
  %v1000 = vsel %vm105, %v985, 0
  %v1002 = vsel %vm105, %v986, 0
  %v1004 = vsel %vm105, %v987, 0
  %v1006 = vsel %vm105, %v988, 0
  %1008 = vmatprep.subr.mxu0 %v994
  %1009 = vmatpush1.msra.mxu0 %v992
  %1010 = vmatprep.subr.mxu0 0.0
  %1011 = vmatpush1.msra.mxu0 0.0
  %1012 = vmatprep.subr.mxu0 0.0
  %1013 = vmatpush1.msra.mxu0 0.0
  %1014 = vmatprep.subr.mxu0 0.0
  %1015 = vmatpush1.msra.mxu0 0.0
  %1016 = vmatprep.subr.mxu0 0.0
  %1017 = vmatpush1.msra.mxu0 0.0
  %1018 = vmatprep.subr.mxu0 0.0
  %1019 = vmatpush1.msra.mxu0 0.0
  %1020 = vmatprep.subr.mxu0 0.0
  %1021 = vmatpush1.msra.mxu0 0.0
  %1022 = vmatprep.subr.mxu0 0.0
  %1023 = vmatpush1.msra.mxu0 0.0
  %1024 = vmatprep.subr.mxu0 0.0
  %1025 = vmatpush1.msra.mxu0 0.0
  %1026 = vmatprep.subr.mxu0 0.0
  %1027 = vmatpush1.msra.mxu0 0.0
  %1028 = vmatprep.subr.mxu0 0.0
  %1029 = vmatpush1.msra.mxu0 0.0
  %1030 = vmatprep.subr.mxu0 0.0
  %1031 = vmatpush1.msra.mxu0 0.0
  %1032 = vmatprep.subr.mxu0 0.0
  %1033 = vmatpush1.msra.mxu0 0.0
  %1034 = vmatprep.subr.mxu0 0.0
  %1035 = vmatpush1.msra.mxu0 0.0
  %1036 = vmatprep.subr.mxu0 0.0
  %1037 = vmatpush1.msra.mxu0 0.0
  %1038 = vmatprep.subr.mxu0 0.0
  %1039 = vmatpush1.msra.mxu0 0.0
  %1040 = vmatprep.subr.mxu0 0.0
  %1041 = vmatpush1.msra.mxu0 0.0
  %1042 = vmatprep.subr.mxu0 0.0
  %1043 = vmatpush1.msra.mxu0 0.0
  %1044 = vmatprep.subr.mxu0 0.0
  %1045 = vmatpush1.msra.mxu0 0.0
  %1046 = vmatprep.subr.mxu0 0.0
  %1047 = vmatpush1.msra.mxu0 0.0
  %1048 = vmatprep.subr.mxu0 0.0
  %1049 = vmatpush1.msra.mxu0 0.0
  %1050 = vmatprep.subr.mxu0 0.0
  %1051 = vmatpush1.msra.mxu0 0.0
  %1052 = vmatprep.subr.mxu0 0.0
  %1053 = vmatpush1.msra.mxu0 0.0
  %1054 = vmatprep.subr.mxu0 0.0
  %1055 = vmatpush1.msra.mxu0 0.0
  %1056 = vmatprep.subr.mxu0 0.0
  %1057 = vmatpush1.msra.mxu0 0.0
  %1058 = vmatprep.subr.mxu0 0.0
  %1059 = vmatpush1.msra.mxu0 0.0
  %1060 = vmatprep.subr.mxu0 0.0
  %1061 = vmatpush1.msra.mxu0 0.0
  %1062 = vmatprep.subr.mxu0 0.0
  %1063 = vmatpush1.msra.mxu0 0.0
  %1064 = vmatprep.subr.mxu0 0.0
  %1065 = vmatpush1.msra.mxu0 0.0
  %1066 = vmatprep.subr.mxu0 0.0
  %1067 = vmatpush1.msra.mxu0 0.0
  %1068 = vmatprep.subr.mxu0 0.0
  %1069 = vmatpush1.msra.mxu0 0.0
  %1070 = vmatprep.subr.mxu0 0.0
  %1071 = vmatpush1.msra.mxu0 0.0
  %1072 = vmatprep.mubr.f32.mxu0 0.0
  %1073 = vmatmul.mubr.f32.gmra.mrb[0].mxu0 %v990
  %v1074 = vpop.f32.mrb[0].mxu0
  %v1075 = vadd.f32 0.0, %v1074
  %v1076 = vpop.f32.mrb[0].mxu0
  %v1077 = vadd.f32 0.0, %v1076
  %1078 = vdwg.mxu0
  %1079 = vmatprep.subr.mxu0 %v998
  %1080 = vmatpush1.msra.mxu0 %v996
  %1081 = vmatprep.subr.mxu0 0.0
  %1082 = vmatpush1.msra.mxu0 0.0
  %1083 = vmatprep.subr.mxu0 0.0
  %1084 = vmatpush1.msra.mxu0 0.0
  %1085 = vmatprep.subr.mxu0 0.0
  %1086 = vmatpush1.msra.mxu0 0.0
  %1087 = vmatprep.subr.mxu0 0.0
  %1088 = vmatpush1.msra.mxu0 0.0
  %1089 = vmatprep.subr.mxu0 0.0
  %1090 = vmatpush1.msra.mxu0 0.0
  %1091 = vmatprep.subr.mxu0 0.0
  %1092 = vmatpush1.msra.mxu0 0.0
  %1093 = vmatprep.subr.mxu0 0.0
  %1094 = vmatpush1.msra.mxu0 0.0
  %1095 = vmatprep.subr.mxu0 0.0
  %1096 = vmatpush1.msra.mxu0 0.0
  %1097 = vmatprep.subr.mxu0 0.0
  %1098 = vmatpush1.msra.mxu0 0.0
  %1099 = vmatprep.subr.mxu0 0.0
  %1100 = vmatpush1.msra.mxu0 0.0
  %1101 = vmatprep.subr.mxu0 0.0
  %1102 = vmatpush1.msra.mxu0 0.0
  %1103 = vmatprep.subr.mxu0 0.0
  %1104 = vmatpush1.msra.mxu0 0.0
  %1105 = vmatprep.subr.mxu0 0.0
  %1106 = vmatpush1.msra.mxu0 0.0
  %1107 = vmatprep.subr.mxu0 0.0
  %1108 = vmatpush1.msra.mxu0 0.0
  %1109 = vmatprep.subr.mxu0 0.0
  %1110 = vmatpush1.msra.mxu0 0.0
  %1111 = vmatprep.subr.mxu0 0.0
  %1112 = vmatpush1.msra.mxu0 0.0
  %1113 = vmatprep.subr.mxu0 0.0
  %1114 = vmatpush1.msra.mxu0 0.0
  %1115 = vmatprep.subr.mxu0 0.0
  %1116 = vmatpush1.msra.mxu0 0.0
  %1117 = vmatprep.subr.mxu0 0.0
  %1118 = vmatpush1.msra.mxu0 0.0
  %1119 = vmatprep.subr.mxu0 0.0
  %1120 = vmatpush1.msra.mxu0 0.0
  %1121 = vmatprep.subr.mxu0 0.0
  %1122 = vmatpush1.msra.mxu0 0.0
  %1123 = vmatprep.subr.mxu0 0.0
  %1124 = vmatpush1.msra.mxu0 0.0
  %1125 = vmatprep.subr.mxu0 0.0
  %1126 = vmatpush1.msra.mxu0 0.0
  %1127 = vmatprep.subr.mxu0 0.0
  %1128 = vmatpush1.msra.mxu0 0.0
  %1129 = vmatprep.subr.mxu0 0.0
  %1130 = vmatpush1.msra.mxu0 0.0
  %1131 = vmatprep.subr.mxu0 0.0
  %1132 = vmatpush1.msra.mxu0 0.0
  %1133 = vmatprep.subr.mxu0 0.0
  %1134 = vmatpush1.msra.mxu0 0.0
  %1135 = vmatprep.subr.mxu0 0.0
  %1136 = vmatpush1.msra.mxu0 0.0
  %1137 = vmatprep.subr.mxu0 0.0
  %1138 = vmatpush1.msra.mxu0 0.0
  %1139 = vmatprep.subr.mxu0 0.0
  %1140 = vmatpush1.msra.mxu0 0.0
  %1141 = vmatprep.subr.mxu0 0.0
  %1142 = vmatpush1.msra.mxu0 0.0
  %1143 = vmatprep.mubr.f32.mxu0 0.0
  %1144 = vmatmul.mubr.f32.gmra.mrb[0].mxu0 %v990
  %v1145 = vpop.f32.mrb[0].mxu0
  %v1146 = vadd.f32 0.0, %v1145
  %v1147 = vpop.f32.mrb[0].mxu0
  %v1148 = vadd.f32 0.0, %v1147
  %1149 = vdwg.mxu0
  %1150 = vmatprep.subr.mxu0 %v1002
  %1151 = vmatpush1.msra.mxu0 %v1000
  %1152 = vmatprep.subr.mxu0 0.0
  %1153 = vmatpush1.msra.mxu0 0.0
  %1154 = vmatprep.subr.mxu0 0.0
  %1155 = vmatpush1.msra.mxu0 0.0
  %1156 = vmatprep.subr.mxu0 0.0
  %1157 = vmatpush1.msra.mxu0 0.0
  %1158 = vmatprep.subr.mxu0 0.0
  %1159 = vmatpush1.msra.mxu0 0.0
  %1160 = vmatprep.subr.mxu0 0.0
  %1161 = vmatpush1.msra.mxu0 0.0
  %1162 = vmatprep.subr.mxu0 0.0
  %1163 = vmatpush1.msra.mxu0 0.0
  %1164 = vmatprep.subr.mxu0 0.0
  %1165 = vmatpush1.msra.mxu0 0.0
  %1166 = vmatprep.subr.mxu0 0.0
  %1167 = vmatpush1.msra.mxu0 0.0
  %1168 = vmatprep.subr.mxu0 0.0
  %1169 = vmatpush1.msra.mxu0 0.0
  %1170 = vmatprep.subr.mxu0 0.0
  %1171 = vmatpush1.msra.mxu0 0.0
  %1172 = vmatprep.subr.mxu0 0.0
  %1173 = vmatpush1.msra.mxu0 0.0
  %1174 = vmatprep.subr.mxu0 0.0
  %1175 = vmatpush1.msra.mxu0 0.0
  %1176 = vmatprep.subr.mxu0 0.0
  %1177 = vmatpush1.msra.mxu0 0.0
  %1178 = vmatprep.subr.mxu0 0.0
  %1179 = vmatpush1.msra.mxu0 0.0
  %1180 = vmatprep.subr.mxu0 0.0
  %1181 = vmatpush1.msra.mxu0 0.0
  %1182 = vmatprep.subr.mxu0 0.0
  %1183 = vmatpush1.msra.mxu0 0.0
  %1184 = vmatprep.subr.mxu0 0.0
  %1185 = vmatpush1.msra.mxu0 0.0
  %1186 = vmatprep.subr.mxu0 0.0
  %1187 = vmatpush1.msra.mxu0 0.0
  %1188 = vmatprep.subr.mxu0 0.0
  %1189 = vmatpush1.msra.mxu0 0.0
  %1190 = vmatprep.subr.mxu0 0.0
  %1191 = vmatpush1.msra.mxu0 0.0
  %1192 = vmatprep.subr.mxu0 0.0
  %1193 = vmatpush1.msra.mxu0 0.0
  %1194 = vmatprep.subr.mxu0 0.0
  %1195 = vmatpush1.msra.mxu0 0.0
  %1196 = vmatprep.subr.mxu0 0.0
  %1197 = vmatpush1.msra.mxu0 0.0
  %1198 = vmatprep.subr.mxu0 0.0
  %1199 = vmatpush1.msra.mxu0 0.0
  %1200 = vmatprep.subr.mxu0 0.0
  %1201 = vmatpush1.msra.mxu0 0.0
  %1202 = vmatprep.subr.mxu0 0.0
  %1203 = vmatpush1.msra.mxu0 0.0
  %1204 = vmatprep.subr.mxu0 0.0
  %1205 = vmatpush1.msra.mxu0 0.0
  %1206 = vmatprep.subr.mxu0 0.0
  %1207 = vmatpush1.msra.mxu0 0.0
  %1208 = vmatprep.subr.mxu0 0.0
  %1209 = vmatpush1.msra.mxu0 0.0
  %1210 = vmatprep.subr.mxu0 0.0
  %1211 = vmatpush1.msra.mxu0 0.0
  %1212 = vmatprep.subr.mxu0 0.0
  %1213 = vmatpush1.msra.mxu0 0.0
  %1214 = vmatprep.mubr.f32.mxu0 0.0
  %1215 = vmatmul.mubr.f32.gmra.mrb[0].mxu0 %v990
  %v1216 = vpop.f32.mrb[0].mxu0
  %v1217 = vadd.f32 0.0, %v1216
  %v1218 = vpop.f32.mrb[0].mxu0
  %v1219 = vadd.f32 0.0, %v1218
  %1220 = vdwg.mxu0
  %1221 = vmatprep.subr.mxu0 %v1006
  %1222 = vmatpush1.msra.mxu0 %v1004
  %1223 = vmatprep.subr.mxu0 0.0
  %1224 = vmatpush1.msra.mxu0 0.0
  %1225 = vmatprep.subr.mxu0 0.0
  %1226 = vmatpush1.msra.mxu0 0.0
  %1227 = vmatprep.subr.mxu0 0.0
  %1228 = vmatpush1.msra.mxu0 0.0
  %1229 = vmatprep.subr.mxu0 0.0
  %1230 = vmatpush1.msra.mxu0 0.0
  %1231 = vmatprep.subr.mxu0 0.0
  %1232 = vmatpush1.msra.mxu0 0.0
  %1233 = vmatprep.subr.mxu0 0.0
  %1234 = vmatpush1.msra.mxu0 0.0
  %1235 = vmatprep.subr.mxu0 0.0
  %1236 = vmatpush1.msra.mxu0 0.0
  %1237 = vmatprep.subr.mxu0 0.0
  %1238 = vmatpush1.msra.mxu0 0.0
  %1239 = vmatprep.subr.mxu0 0.0
  %1240 = vmatpush1.msra.mxu0 0.0
  %1241 = vmatprep.subr.mxu0 0.0
  %1242 = vmatpush1.msra.mxu0 0.0
  %1243 = vmatprep.subr.mxu0 0.0
  %1244 = vmatpush1.msra.mxu0 0.0
  %1245 = vmatprep.subr.mxu0 0.0
  %1246 = vmatpush1.msra.mxu0 0.0
  %1247 = vmatprep.subr.mxu0 0.0
  %1248 = vmatpush1.msra.mxu0 0.0
  %1249 = vmatprep.subr.mxu0 0.0
  %1250 = vmatpush1.msra.mxu0 0.0
  %1251 = vmatprep.subr.mxu0 0.0
  %1252 = vmatpush1.msra.mxu0 0.0
  %1253 = vmatprep.subr.mxu0 0.0
  %1254 = vmatpush1.msra.mxu0 0.0
  %1255 = vmatprep.subr.mxu0 0.0
  %1256 = vmatpush1.msra.mxu0 0.0
  %1257 = vmatprep.subr.mxu0 0.0
  %1258 = vmatpush1.msra.mxu0 0.0
  %1259 = vmatprep.subr.mxu0 0.0
  %1260 = vmatpush1.msra.mxu0 0.0
  %1261 = vmatprep.subr.mxu0 0.0
  %1262 = vmatpush1.msra.mxu0 0.0
  %1263 = vmatprep.subr.mxu0 0.0
  %1264 = vmatpush1.msra.mxu0 0.0
  %1265 = vmatprep.subr.mxu0 0.0
  %1266 = vmatpush1.msra.mxu0 0.0
  %1267 = vmatprep.subr.mxu0 0.0
  %1268 = vmatpush1.msra.mxu0 0.0
  %1269 = vmatprep.subr.mxu0 0.0
  %1270 = vmatpush1.msra.mxu0 0.0
  %1271 = vmatprep.subr.mxu0 0.0
  %1272 = vmatpush1.msra.mxu0 0.0
  %1273 = vmatprep.subr.mxu0 0.0
  %1274 = vmatpush1.msra.mxu0 0.0
  %1275 = vmatprep.subr.mxu0 0.0
  %1276 = vmatpush1.msra.mxu0 0.0
  %1277 = vmatprep.subr.mxu0 0.0
  %1278 = vmatpush1.msra.mxu0 0.0
  %1279 = vmatprep.subr.mxu0 0.0
  %1280 = vmatpush1.msra.mxu0 0.0
  %1281 = vmatprep.subr.mxu0 0.0
  %1282 = vmatpush1.msra.mxu0 0.0
  %1283 = vmatprep.subr.mxu0 0.0
  %1284 = vmatpush1.msra.mxu0 0.0
  %1285 = vmatprep.mubr.f32.mxu0 0.0
  %1286 = vmatmul.mubr.f32.gmra.mrb[0].mxu0 %v990
  %v1287 = vpop.f32.mrb[0].mxu0
  %v1288 = vadd.f32 0.0, %v1287
  %v1289 = vpop.f32.mrb[0].mxu0
  %v1290 = vadd.f32 0.0, %v1289
  %1291 = vdwg.mxu0
  %v1292 = vadd.f32 %v658, %v1075
  %v1293 = vadd.f32 %v660, %v1077
  %v1294 = vadd.f32 %v729, %v1146
  %v1295 = vadd.f32 %v731, %v1148
  %v1296 = vadd.f32 %v800, %v1217
  %v1297 = vadd.f32 %v802, %v1219
  %v1298 = vadd.f32 %v871, %v1288
  %v1299 = vadd.f32 %v873, %v1290
  %v1300 = vld [vmem:[#allocation2] sm:$0xff]
  %v1301 = vld [vmem:[#allocation2 + $0x8] sm:$0xff]
  %v1302 = vld [vmem:[#allocation2 + $0x10] sm:$0xff]
  %v1303 = vld [vmem:[#allocation2 + $0x18] sm:$0xff]
  %v1304 = vld [vmem:[#allocation2 + $0x20] sm:$0xf]
  %s1305 = scalar_lea.vmem %s8, 3
  %v1306 = vld [vmem:[%s1305] ss:$8 sm:$0xf]
  %v1307 = vld [vmem:[%s1305] ss:$8 sm:$0xf0]
  %v1308 = vor.u32 %v1306, %v1307
  %v1310 = vlaneseq
  %v1311 = vshrl.u32 %v1310, 7
  %v1312 = vsub.s32 0, %v1311
  %v1313 = vrot.slane %v1308, %v1312
  %v1314 = vlaneseq
  %v1315 = vshrl.u32 %v1314, 7
  %v1316 = vsub.s32 1, %v1315
  %v1317 = vrot.slane %v1308, %v1316
  %v1318 = vlaneseq
  %v1319 = vshrl.u32 %v1318, 7
  %v1320 = vsub.s32 2, %v1319
  %v1321 = vrot.slane %v1308, %v1320
  %v1322 = vlaneseq
  %v1323 = vshrl.u32 %v1322, 7
  %v1324 = vsub.s32 3, %v1323
  %v1325 = vrot.slane %v1308, %v1324
  %v1326 = vlaneseq
  %v1327 = vshrl.u32 %v1326, 7
  %v1328 = vsub.s32 4, %v1327
  %v1329 = vrot.slane %v1308, %v1328
  %v1330 = vlaneseq
  %v1331 = vshrl.u32 %v1330, 7
  %v1332 = vsub.s32 5, %v1331
  %v1333 = vrot.slane %v1308, %v1332
  %v1334 = vlaneseq
  %v1335 = vshrl.u32 %v1334, 7
  %v1336 = vsub.s32 6, %v1335
  %v1337 = vrot.slane %v1308, %v1336
  %v1338 = vlaneseq
  %v1339 = vshrl.u32 %v1338, 7
  %v1340 = vsub.s32 7, %v1339
  %v1341 = vrot.slane %v1308, %v1340
  %v1342 = vcombine.low %v1313, %v1317
  %v1343 = vcombine.low %v1321, %v1325
  %v1344 = vcombine.low %v1329, %v1333
  %v1345 = vcombine.low %v1337, %v1341
  %1346 = vrot.lane.b32.xlu0 %v1342, 127
  %v1347 = vpop.permute.xlu0 %1346
  %1348 = vrot.lane.b32.xlu0 %v1343, 127
  %v1349 = vpop.permute.xlu0 %1348
  %1350 = vrot.lane.b32.xlu0 %v1344, 127
  %v1351 = vpop.permute.xlu0 %1350
  %1352 = vrot.lane.b32.xlu0 %v1345, 127
  %v1353 = vpop.permute.xlu0 %1352
  %v1354 = vrot.slane %v1347, 4
  %v1355 = vrot.slane %v1349, 4
  %v1356 = vrot.slane %v1351, 4
  %v1357 = vrot.slane %v1353, 4
  %vm1358 = vcmask 1039360
  %v1359 = vsel %vm1358, %v1354, %v1347
  %v1360 = vsel %vm105, %v1354, %v1355
  %v1361 = vsel %vm1358, %v1360, %v1349
  %v1362 = vsel %vm105, %v1355, %v1356
  %v1363 = vsel %vm1358, %v1362, %v1351
  %v1364 = vsel %vm105, %v1356, %v1357
  %v1365 = vsel %vm1358, %v1364, %v1353
  %v1371 = vmul.f32 %v1300, %v1359
  %v1372 = vmul.f32 %v1301, %v1361
  %v1373 = vmul.f32 %v1302, %v1363
  %v1374 = vmul.f32 %v1303, %v1365
  %v1375 = vmul.f32 %v1304, %v1357
  %s1376 = scalar_lea.vmem %s2, 12
  %v1377 = vld [vmem:[%s1376] sm:$0xf]
  %v1383 = vcombine.high %v1371, %v1371
  %v1384 = vcombine.high %v1372, %v1372
  %v1385 = vcombine.high %v1373, %v1373
  %v1386 = vcombine.high %v1374, %v1374
  %1387 = vrot.lane.b32.xlu0 %v1371, 1
  %v1388 = vpop.permute.xlu0 %1387
  %1389 = vrot.lane.b32.xlu0 %v1383, 1
  %v1390 = vpop.permute.xlu0 %1389
  %1391 = vrot.lane.b32.xlu0 %v1372, 1
  %v1392 = vpop.permute.xlu0 %1391
  %1393 = vrot.lane.b32.xlu0 %v1384, 1
  %v1394 = vpop.permute.xlu0 %1393
  %1395 = vrot.lane.b32.xlu0 %v1373, 1
  %v1396 = vpop.permute.xlu0 %1395
  %1397 = vrot.lane.b32.xlu0 %v1385, 1
  %v1398 = vpop.permute.xlu0 %1397
  %1399 = vrot.lane.b32.xlu0 %v1374, 1
  %v1400 = vpop.permute.xlu0 %1399
  %1401 = vrot.lane.b32.xlu0 %v1386, 1
  %v1402 = vpop.permute.xlu0 %1401
  %1403 = vrot.lane.b32.xlu0 %v1375, 1
  %v1404 = vpop.permute.xlu0 %1403
  %vm1405 = vcmask 7168
  %v1406 = vsel %vm1405, %v1388, %v1390
  %v1407 = vsel %vm1405, %v1390, %v1392
  %v1408 = vsel %vm1405, %v1392, %v1394
  %v1409 = vsel %vm1405, %v1394, %v1396
  %v1410 = vsel %vm1405, %v1396, %v1398
  %v1411 = vsel %vm1405, %v1398, %v1400
  %v1412 = vsel %vm1405, %v1400, %v1402
  %v1413 = vsel %vm1405, %v1402, %v1404
  %v1415 = vsel %vm232, %v1377, 0
  %v1417 = vsel %vm105, %v1406, 0
  %v1419 = vsel %vm105, %v1407, 0
  %v1421 = vsel %vm105, %v1408, 0
  %v1423 = vsel %vm105, %v1409, 0
  %v1425 = vsel %vm105, %v1410, 0
  %v1427 = vsel %vm105, %v1411, 0
  %v1429 = vsel %vm105, %v1412, 0
  %v1431 = vsel %vm105, %v1413, 0
  %1433 = vmatprep.subr.mxu0 %v1419
  %1434 = vmatpush1.msra.mxu0 %v1417
  %1435 = vmatprep.subr.mxu0 0.0
  %1436 = vmatpush1.msra.mxu0 0.0
  %1437 = vmatprep.subr.mxu0 0.0
  %1438 = vmatpush1.msra.mxu0 0.0
  %1439 = vmatprep.subr.mxu0 0.0
  %1440 = vmatpush1.msra.mxu0 0.0
  %1441 = vmatprep.subr.mxu0 0.0
  %1442 = vmatpush1.msra.mxu0 0.0
  %1443 = vmatprep.subr.mxu0 0.0
  %1444 = vmatpush1.msra.mxu0 0.0
  %1445 = vmatprep.subr.mxu0 0.0
  %1446 = vmatpush1.msra.mxu0 0.0
  %1447 = vmatprep.subr.mxu0 0.0
  %1448 = vmatpush1.msra.mxu0 0.0
  %1449 = vmatprep.subr.mxu0 0.0
  %1450 = vmatpush1.msra.mxu0 0.0
  %1451 = vmatprep.subr.mxu0 0.0
  %1452 = vmatpush1.msra.mxu0 0.0
  %1453 = vmatprep.subr.mxu0 0.0
  %1454 = vmatpush1.msra.mxu0 0.0
  %1455 = vmatprep.subr.mxu0 0.0
  %1456 = vmatpush1.msra.mxu0 0.0
  %1457 = vmatprep.subr.mxu0 0.0
  %1458 = vmatpush1.msra.mxu0 0.0
  %1459 = vmatprep.subr.mxu0 0.0
  %1460 = vmatpush1.msra.mxu0 0.0
  %1461 = vmatprep.subr.mxu0 0.0
  %1462 = vmatpush1.msra.mxu0 0.0
  %1463 = vmatprep.subr.mxu0 0.0
  %1464 = vmatpush1.msra.mxu0 0.0
  %1465 = vmatprep.subr.mxu0 0.0
  %1466 = vmatpush1.msra.mxu0 0.0
  %1467 = vmatprep.subr.mxu0 0.0
  %1468 = vmatpush1.msra.mxu0 0.0
  %1469 = vmatprep.subr.mxu0 0.0
  %1470 = vmatpush1.msra.mxu0 0.0
  %1471 = vmatprep.subr.mxu0 0.0
  %1472 = vmatpush1.msra.mxu0 0.0
  %1473 = vmatprep.subr.mxu0 0.0
  %1474 = vmatpush1.msra.mxu0 0.0
  %1475 = vmatprep.subr.mxu0 0.0
  %1476 = vmatpush1.msra.mxu0 0.0
  %1477 = vmatprep.subr.mxu0 0.0
  %1478 = vmatpush1.msra.mxu0 0.0
  %1479 = vmatprep.subr.mxu0 0.0
  %1480 = vmatpush1.msra.mxu0 0.0
  %1481 = vmatprep.subr.mxu0 0.0
  %1482 = vmatpush1.msra.mxu0 0.0
  %1483 = vmatprep.subr.mxu0 0.0
  %1484 = vmatpush1.msra.mxu0 0.0
  %1485 = vmatprep.subr.mxu0 0.0
  %1486 = vmatpush1.msra.mxu0 0.0
  %1487 = vmatprep.subr.mxu0 0.0
  %1488 = vmatpush1.msra.mxu0 0.0
  %1489 = vmatprep.subr.mxu0 0.0
  %1490 = vmatpush1.msra.mxu0 0.0
  %1491 = vmatprep.subr.mxu0 0.0
  %1492 = vmatpush1.msra.mxu0 0.0
  %1493 = vmatprep.subr.mxu0 0.0
  %1494 = vmatpush1.msra.mxu0 0.0
  %1495 = vmatprep.subr.mxu0 0.0
  %1496 = vmatpush1.msra.mxu0 0.0
  %1497 = vmatprep.mubr.f32.mxu0 0.0
  %1498 = vmatmul.mubr.f32.gmra.mrb[0].mxu0 %v1415
  %v1499 = vpop.f32.mrb[0].mxu0
  %v1500 = vadd.f32 0.0, %v1499
  %v1501 = vpop.f32.mrb[0].mxu0
  %v1502 = vadd.f32 0.0, %v1501
  %1503 = vdwg.mxu0
  %1504 = vmatprep.subr.mxu0 %v1423
  %1505 = vmatpush1.msra.mxu0 %v1421
  %1506 = vmatprep.subr.mxu0 0.0
  %1507 = vmatpush1.msra.mxu0 0.0
  %1508 = vmatprep.subr.mxu0 0.0
  %1509 = vmatpush1.msra.mxu0 0.0
  %1510 = vmatprep.subr.mxu0 0.0
  %1511 = vmatpush1.msra.mxu0 0.0
  %1512 = vmatprep.subr.mxu0 0.0
  %1513 = vmatpush1.msra.mxu0 0.0
  %1514 = vmatprep.subr.mxu0 0.0
  %1515 = vmatpush1.msra.mxu0 0.0
  %1516 = vmatprep.subr.mxu0 0.0
  %1517 = vmatpush1.msra.mxu0 0.0
  %1518 = vmatprep.subr.mxu0 0.0
  %1519 = vmatpush1.msra.mxu0 0.0
  %1520 = vmatprep.subr.mxu0 0.0
  %1521 = vmatpush1.msra.mxu0 0.0
  %1522 = vmatprep.subr.mxu0 0.0
  %1523 = vmatpush1.msra.mxu0 0.0
  %1524 = vmatprep.subr.mxu0 0.0
  %1525 = vmatpush1.msra.mxu0 0.0
  %1526 = vmatprep.subr.mxu0 0.0
  %1527 = vmatpush1.msra.mxu0 0.0
  %1528 = vmatprep.subr.mxu0 0.0
  %1529 = vmatpush1.msra.mxu0 0.0
  %1530 = vmatprep.subr.mxu0 0.0
  %1531 = vmatpush1.msra.mxu0 0.0
  %1532 = vmatprep.subr.mxu0 0.0
  %1533 = vmatpush1.msra.mxu0 0.0
  %1534 = vmatprep.subr.mxu0 0.0
  %1535 = vmatpush1.msra.mxu0 0.0
  %1536 = vmatprep.subr.mxu0 0.0
  %1537 = vmatpush1.msra.mxu0 0.0
  %1538 = vmatprep.subr.mxu0 0.0
  %1539 = vmatpush1.msra.mxu0 0.0
  %1540 = vmatprep.subr.mxu0 0.0
  %1541 = vmatpush1.msra.mxu0 0.0
  %1542 = vmatprep.subr.mxu0 0.0
  %1543 = vmatpush1.msra.mxu0 0.0
  %1544 = vmatprep.subr.mxu0 0.0
  %1545 = vmatpush1.msra.mxu0 0.0
  %1546 = vmatprep.subr.mxu0 0.0
  %1547 = vmatpush1.msra.mxu0 0.0
  %1548 = vmatprep.subr.mxu0 0.0
  %1549 = vmatpush1.msra.mxu0 0.0
  %1550 = vmatprep.subr.mxu0 0.0
  %1551 = vmatpush1.msra.mxu0 0.0
  %1552 = vmatprep.subr.mxu0 0.0
  %1553 = vmatpush1.msra.mxu0 0.0
  %1554 = vmatprep.subr.mxu0 0.0
  %1555 = vmatpush1.msra.mxu0 0.0
  %1556 = vmatprep.subr.mxu0 0.0
  %1557 = vmatpush1.msra.mxu0 0.0
  %1558 = vmatprep.subr.mxu0 0.0
  %1559 = vmatpush1.msra.mxu0 0.0
  %1560 = vmatprep.subr.mxu0 0.0
  %1561 = vmatpush1.msra.mxu0 0.0
  %1562 = vmatprep.subr.mxu0 0.0
  %1563 = vmatpush1.msra.mxu0 0.0
  %1564 = vmatprep.subr.mxu0 0.0
  %1565 = vmatpush1.msra.mxu0 0.0
  %1566 = vmatprep.subr.mxu0 0.0
  %1567 = vmatpush1.msra.mxu0 0.0
  %1568 = vmatprep.mubr.f32.mxu0 0.0
  %1569 = vmatmul.mubr.f32.gmra.mrb[0].mxu0 %v1415
  %v1570 = vpop.f32.mrb[0].mxu0
  %v1571 = vadd.f32 0.0, %v1570
  %v1572 = vpop.f32.mrb[0].mxu0
  %v1573 = vadd.f32 0.0, %v1572
  %1574 = vdwg.mxu0
  %1575 = vmatprep.subr.mxu0 %v1427
  %1576 = vmatpush1.msra.mxu0 %v1425
  %1577 = vmatprep.subr.mxu0 0.0
  %1578 = vmatpush1.msra.mxu0 0.0
  %1579 = vmatprep.subr.mxu0 0.0
  %1580 = vmatpush1.msra.mxu0 0.0
  %1581 = vmatprep.subr.mxu0 0.0
  %1582 = vmatpush1.msra.mxu0 0.0
  %1583 = vmatprep.subr.mxu0 0.0
  %1584 = vmatpush1.msra.mxu0 0.0
  %1585 = vmatprep.subr.mxu0 0.0
  %1586 = vmatpush1.msra.mxu0 0.0
  %1587 = vmatprep.subr.mxu0 0.0
  %1588 = vmatpush1.msra.mxu0 0.0
  %1589 = vmatprep.subr.mxu0 0.0
  %1590 = vmatpush1.msra.mxu0 0.0
  %1591 = vmatprep.subr.mxu0 0.0
  %1592 = vmatpush1.msra.mxu0 0.0
  %1593 = vmatprep.subr.mxu0 0.0
  %1594 = vmatpush1.msra.mxu0 0.0
  %1595 = vmatprep.subr.mxu0 0.0
  %1596 = vmatpush1.msra.mxu0 0.0
  %1597 = vmatprep.subr.mxu0 0.0
  %1598 = vmatpush1.msra.mxu0 0.0
  %1599 = vmatprep.subr.mxu0 0.0
  %1600 = vmatpush1.msra.mxu0 0.0
  %1601 = vmatprep.subr.mxu0 0.0
  %1602 = vmatpush1.msra.mxu0 0.0
  %1603 = vmatprep.subr.mxu0 0.0
  %1604 = vmatpush1.msra.mxu0 0.0
  %1605 = vmatprep.subr.mxu0 0.0
  %1606 = vmatpush1.msra.mxu0 0.0
  %1607 = vmatprep.subr.mxu0 0.0
  %1608 = vmatpush1.msra.mxu0 0.0
  %1609 = vmatprep.subr.mxu0 0.0
  %1610 = vmatpush1.msra.mxu0 0.0
  %1611 = vmatprep.subr.mxu0 0.0
  %1612 = vmatpush1.msra.mxu0 0.0
  %1613 = vmatprep.subr.mxu0 0.0
  %1614 = vmatpush1.msra.mxu0 0.0
  %1615 = vmatprep.subr.mxu0 0.0
  %1616 = vmatpush1.msra.mxu0 0.0
  %1617 = vmatprep.subr.mxu0 0.0
  %1618 = vmatpush1.msra.mxu0 0.0
  %1619 = vmatprep.subr.mxu0 0.0
  %1620 = vmatpush1.msra.mxu0 0.0
  %1621 = vmatprep.subr.mxu0 0.0
  %1622 = vmatpush1.msra.mxu0 0.0
  %1623 = vmatprep.subr.mxu0 0.0
  %1624 = vmatpush1.msra.mxu0 0.0
  %1625 = vmatprep.subr.mxu0 0.0
  %1626 = vmatpush1.msra.mxu0 0.0
  %1627 = vmatprep.subr.mxu0 0.0
  %1628 = vmatpush1.msra.mxu0 0.0
  %1629 = vmatprep.subr.mxu0 0.0
  %1630 = vmatpush1.msra.mxu0 0.0
  %1631 = vmatprep.subr.mxu0 0.0
  %1632 = vmatpush1.msra.mxu0 0.0
  %1633 = vmatprep.subr.mxu0 0.0
  %1634 = vmatpush1.msra.mxu0 0.0
  %1635 = vmatprep.subr.mxu0 0.0
  %1636 = vmatpush1.msra.mxu0 0.0
  %1637 = vmatprep.subr.mxu0 0.0
  %1638 = vmatpush1.msra.mxu0 0.0
  %1639 = vmatprep.mubr.f32.mxu0 0.0
  %1640 = vmatmul.mubr.f32.gmra.mrb[0].mxu0 %v1415
  %v1641 = vpop.f32.mrb[0].mxu0
  %v1642 = vadd.f32 0.0, %v1641
  %v1643 = vpop.f32.mrb[0].mxu0
  %v1644 = vadd.f32 0.0, %v1643
  %1645 = vdwg.mxu0
  %1646 = vmatprep.subr.mxu0 %v1431
  %1647 = vmatpush1.msra.mxu0 %v1429
  %1648 = vmatprep.subr.mxu0 0.0
  %1649 = vmatpush1.msra.mxu0 0.0
  %1650 = vmatprep.subr.mxu0 0.0
  %1651 = vmatpush1.msra.mxu0 0.0
  %1652 = vmatprep.subr.mxu0 0.0
  %1653 = vmatpush1.msra.mxu0 0.0
  %1654 = vmatprep.subr.mxu0 0.0
  %1655 = vmatpush1.msra.mxu0 0.0
  %1656 = vmatprep.subr.mxu0 0.0
  %1657 = vmatpush1.msra.mxu0 0.0
  %1658 = vmatprep.subr.mxu0 0.0
  %1659 = vmatpush1.msra.mxu0 0.0
  %1660 = vmatprep.subr.mxu0 0.0
  %1661 = vmatpush1.msra.mxu0 0.0
  %1662 = vmatprep.subr.mxu0 0.0
  %1663 = vmatpush1.msra.mxu0 0.0
  %1664 = vmatprep.subr.mxu0 0.0
  %1665 = vmatpush1.msra.mxu0 0.0
  %1666 = vmatprep.subr.mxu0 0.0
  %1667 = vmatpush1.msra.mxu0 0.0
  %1668 = vmatprep.subr.mxu0 0.0
  %1669 = vmatpush1.msra.mxu0 0.0
  %1670 = vmatprep.subr.mxu0 0.0
  %1671 = vmatpush1.msra.mxu0 0.0
  %1672 = vmatprep.subr.mxu0 0.0
  %1673 = vmatpush1.msra.mxu0 0.0
  %1674 = vmatprep.subr.mxu0 0.0
  %1675 = vmatpush1.msra.mxu0 0.0
  %1676 = vmatprep.subr.mxu0 0.0
  %1677 = vmatpush1.msra.mxu0 0.0
  %1678 = vmatprep.subr.mxu0 0.0
  %1679 = vmatpush1.msra.mxu0 0.0
  %1680 = vmatprep.subr.mxu0 0.0
  %1681 = vmatpush1.msra.mxu0 0.0
  %1682 = vmatprep.subr.mxu0 0.0
  %1683 = vmatpush1.msra.mxu0 0.0
  %1684 = vmatprep.subr.mxu0 0.0
  %1685 = vmatpush1.msra.mxu0 0.0
  %1686 = vmatprep.subr.mxu0 0.0
  %1687 = vmatpush1.msra.mxu0 0.0
  %1688 = vmatprep.subr.mxu0 0.0
  %1689 = vmatpush1.msra.mxu0 0.0
  %1690 = vmatprep.subr.mxu0 0.0
  %1691 = vmatpush1.msra.mxu0 0.0
  %1692 = vmatprep.subr.mxu0 0.0
  %1693 = vmatpush1.msra.mxu0 0.0
  %1694 = vmatprep.subr.mxu0 0.0
  %1695 = vmatpush1.msra.mxu0 0.0
  %1696 = vmatprep.subr.mxu0 0.0
  %1697 = vmatpush1.msra.mxu0 0.0
  %1698 = vmatprep.subr.mxu0 0.0
  %1699 = vmatpush1.msra.mxu0 0.0
  %1700 = vmatprep.subr.mxu0 0.0
  %1701 = vmatpush1.msra.mxu0 0.0
  %1702 = vmatprep.subr.mxu0 0.0
  %1703 = vmatpush1.msra.mxu0 0.0
  %1704 = vmatprep.subr.mxu0 0.0
  %1705 = vmatpush1.msra.mxu0 0.0
  %1706 = vmatprep.subr.mxu0 0.0
  %1707 = vmatpush1.msra.mxu0 0.0
  %1708 = vmatprep.subr.mxu0 0.0
  %1709 = vmatpush1.msra.mxu0 0.0
  %1710 = vmatprep.mubr.f32.mxu0 0.0
  %1711 = vmatmul.mubr.f32.gmra.mrb[0].mxu0 %v1415
  %v1712 = vpop.f32.mrb[0].mxu0
  %v1713 = vadd.f32 0.0, %v1712
  %v1714 = vpop.f32.mrb[0].mxu0
  %v1715 = vadd.f32 0.0, %v1714
  %1716 = vdwg.mxu0
  %v1717 = vadd.f32 %v1292, %v1500
  %v1718 = vadd.f32 %v1293, %v1502
  %v1719 = vadd.f32 %v1294, %v1571
  %v1720 = vadd.f32 %v1295, %v1573
  %v1721 = vadd.f32 %v1296, %v1642
  %v1722 = vadd.f32 %v1297, %v1644
  %v1723 = vadd.f32 %v1298, %v1713
  %v1724 = vadd.f32 %v1299, %v1715
  %v1725 = vld [vmem:[#allocation2 + $0x4] sm:$0xff]
  %v1726 = vld [vmem:[#allocation2 + $0xc] sm:$0xff]
  %v1727 = vld [vmem:[#allocation2 + $0x14] sm:$0xff]
  %v1728 = vld [vmem:[#allocation2 + $0x1c] sm:$0xff]
  %s1729 = scalar_lea.vmem %s2, 16
  %v1730 = vld [vmem:[%s1729] sm:$0xf]
  %v1735 = vcombine.high %v1725, %v1725
  %v1736 = vcombine.high %v1726, %v1726
  %v1737 = vcombine.high %v1727, %v1727
  %v1738 = vcombine.high %v1728, %v1728
  %v1740 = vsel %vm232, %v1730, 0
  %v1742 = vsel %vm105, %v1725, 0
  %v1744 = vsel %vm105, %v1735, 0
  %v1746 = vsel %vm105, %v1726, 0
  %v1748 = vsel %vm105, %v1736, 0
  %v1750 = vsel %vm105, %v1727, 0
  %v1752 = vsel %vm105, %v1737, 0
  %v1754 = vsel %vm105, %v1728, 0
  %v1756 = vsel %vm105, %v1738, 0
  %1758 = vmatprep.subr.mxu0 %v1744
  %1759 = vmatpush1.msra.mxu0 %v1742
  %1760 = vmatprep.subr.mxu0 0.0
  %1761 = vmatpush1.msra.mxu0 0.0
  %1762 = vmatprep.subr.mxu0 0.0
  %1763 = vmatpush1.msra.mxu0 0.0
  %1764 = vmatprep.subr.mxu0 0.0
  %1765 = vmatpush1.msra.mxu0 0.0
  %1766 = vmatprep.subr.mxu0 0.0
  %1767 = vmatpush1.msra.mxu0 0.0
  %1768 = vmatprep.subr.mxu0 0.0
  %1769 = vmatpush1.msra.mxu0 0.0
  %1770 = vmatprep.subr.mxu0 0.0
  %1771 = vmatpush1.msra.mxu0 0.0
  %1772 = vmatprep.subr.mxu0 0.0
  %1773 = vmatpush1.msra.mxu0 0.0
  %1774 = vmatprep.subr.mxu0 0.0
  %1775 = vmatpush1.msra.mxu0 0.0
  %1776 = vmatprep.subr.mxu0 0.0
  %1777 = vmatpush1.msra.mxu0 0.0
  %1778 = vmatprep.subr.mxu0 0.0
  %1779 = vmatpush1.msra.mxu0 0.0
  %1780 = vmatprep.subr.mxu0 0.0
  %1781 = vmatpush1.msra.mxu0 0.0
  %1782 = vmatprep.subr.mxu0 0.0
  %1783 = vmatpush1.msra.mxu0 0.0
  %1784 = vmatprep.subr.mxu0 0.0
  %1785 = vmatpush1.msra.mxu0 0.0
  %1786 = vmatprep.subr.mxu0 0.0
  %1787 = vmatpush1.msra.mxu0 0.0
  %1788 = vmatprep.subr.mxu0 0.0
  %1789 = vmatpush1.msra.mxu0 0.0
  %1790 = vmatprep.subr.mxu0 0.0
  %1791 = vmatpush1.msra.mxu0 0.0
  %1792 = vmatprep.subr.mxu0 0.0
  %1793 = vmatpush1.msra.mxu0 0.0
  %1794 = vmatprep.subr.mxu0 0.0
  %1795 = vmatpush1.msra.mxu0 0.0
  %1796 = vmatprep.subr.mxu0 0.0
  %1797 = vmatpush1.msra.mxu0 0.0
  %1798 = vmatprep.subr.mxu0 0.0
  %1799 = vmatpush1.msra.mxu0 0.0
  %1800 = vmatprep.subr.mxu0 0.0
  %1801 = vmatpush1.msra.mxu0 0.0
  %1802 = vmatprep.subr.mxu0 0.0
  %1803 = vmatpush1.msra.mxu0 0.0
  %1804 = vmatprep.subr.mxu0 0.0
  %1805 = vmatpush1.msra.mxu0 0.0
  %1806 = vmatprep.subr.mxu0 0.0
  %1807 = vmatpush1.msra.mxu0 0.0
  %1808 = vmatprep.subr.mxu0 0.0
  %1809 = vmatpush1.msra.mxu0 0.0
  %1810 = vmatprep.subr.mxu0 0.0
  %1811 = vmatpush1.msra.mxu0 0.0
  %1812 = vmatprep.subr.mxu0 0.0
  %1813 = vmatpush1.msra.mxu0 0.0
  %1814 = vmatprep.subr.mxu0 0.0
  %1815 = vmatpush1.msra.mxu0 0.0
  %1816 = vmatprep.subr.mxu0 0.0
  %1817 = vmatpush1.msra.mxu0 0.0
  %1818 = vmatprep.subr.mxu0 0.0
  %1819 = vmatpush1.msra.mxu0 0.0
  %1820 = vmatprep.subr.mxu0 0.0
  %1821 = vmatpush1.msra.mxu0 0.0
  %1822 = vmatprep.mubr.f32.mxu0 0.0
  %1823 = vmatmul.mubr.f32.gmra.mrb[0].mxu0 %v1740
  %v1824 = vpop.f32.mrb[0].mxu0
  %v1825 = vadd.f32 0.0, %v1824
  %v1826 = vpop.f32.mrb[0].mxu0
  %v1827 = vadd.f32 0.0, %v1826
  %1828 = vdwg.mxu0
  %1829 = vmatprep.subr.mxu0 %v1748
  %1830 = vmatpush1.msra.mxu0 %v1746
  %1831 = vmatprep.subr.mxu0 0.0
  %1832 = vmatpush1.msra.mxu0 0.0
  %1833 = vmatprep.subr.mxu0 0.0
  %1834 = vmatpush1.msra.mxu0 0.0
  %1835 = vmatprep.subr.mxu0 0.0
  %1836 = vmatpush1.msra.mxu0 0.0
  %1837 = vmatprep.subr.mxu0 0.0
  %1838 = vmatpush1.msra.mxu0 0.0
  %1839 = vmatprep.subr.mxu0 0.0
  %1840 = vmatpush1.msra.mxu0 0.0
  %1841 = vmatprep.subr.mxu0 0.0
  %1842 = vmatpush1.msra.mxu0 0.0
  %1843 = vmatprep.subr.mxu0 0.0
  %1844 = vmatpush1.msra.mxu0 0.0
  %1845 = vmatprep.subr.mxu0 0.0
  %1846 = vmatpush1.msra.mxu0 0.0
  %1847 = vmatprep.subr.mxu0 0.0
  %1848 = vmatpush1.msra.mxu0 0.0
  %1849 = vmatprep.subr.mxu0 0.0
  %1850 = vmatpush1.msra.mxu0 0.0
  %1851 = vmatprep.subr.mxu0 0.0
  %1852 = vmatpush1.msra.mxu0 0.0
  %1853 = vmatprep.subr.mxu0 0.0
  %1854 = vmatpush1.msra.mxu0 0.0
  %1855 = vmatprep.subr.mxu0 0.0
  %1856 = vmatpush1.msra.mxu0 0.0
  %1857 = vmatprep.subr.mxu0 0.0
  %1858 = vmatpush1.msra.mxu0 0.0
  %1859 = vmatprep.subr.mxu0 0.0
  %1860 = vmatpush1.msra.mxu0 0.0
  %1861 = vmatprep.subr.mxu0 0.0
  %1862 = vmatpush1.msra.mxu0 0.0
  %1863 = vmatprep.subr.mxu0 0.0
  %1864 = vmatpush1.msra.mxu0 0.0
  %1865 = vmatprep.subr.mxu0 0.0
  %1866 = vmatpush1.msra.mxu0 0.0
  %1867 = vmatprep.subr.mxu0 0.0
  %1868 = vmatpush1.msra.mxu0 0.0
  %1869 = vmatprep.subr.mxu0 0.0
  %1870 = vmatpush1.msra.mxu0 0.0
  %1871 = vmatprep.subr.mxu0 0.0
  %1872 = vmatpush1.msra.mxu0 0.0
  %1873 = vmatprep.subr.mxu0 0.0
  %1874 = vmatpush1.msra.mxu0 0.0
  %1875 = vmatprep.subr.mxu0 0.0
  %1876 = vmatpush1.msra.mxu0 0.0
  %1877 = vmatprep.subr.mxu0 0.0
  %1878 = vmatpush1.msra.mxu0 0.0
  %1879 = vmatprep.subr.mxu0 0.0
  %1880 = vmatpush1.msra.mxu0 0.0
  %1881 = vmatprep.subr.mxu0 0.0
  %1882 = vmatpush1.msra.mxu0 0.0
  %1883 = vmatprep.subr.mxu0 0.0
  %1884 = vmatpush1.msra.mxu0 0.0
  %1885 = vmatprep.subr.mxu0 0.0
  %1886 = vmatpush1.msra.mxu0 0.0
  %1887 = vmatprep.subr.mxu0 0.0
  %1888 = vmatpush1.msra.mxu0 0.0
  %1889 = vmatprep.subr.mxu0 0.0
  %1890 = vmatpush1.msra.mxu0 0.0
  %1891 = vmatprep.subr.mxu0 0.0
  %1892 = vmatpush1.msra.mxu0 0.0
  %1893 = vmatprep.mubr.f32.mxu0 0.0
  %1894 = vmatmul.mubr.f32.gmra.mrb[0].mxu0 %v1740
  %v1895 = vpop.f32.mrb[0].mxu0
  %v1896 = vadd.f32 0.0, %v1895
  %v1897 = vpop.f32.mrb[0].mxu0
  %v1898 = vadd.f32 0.0, %v1897
  %1899 = vdwg.mxu0
  %1900 = vmatprep.subr.mxu0 %v1752
  %1901 = vmatpush1.msra.mxu0 %v1750
  %1902 = vmatprep.subr.mxu0 0.0
  %1903 = vmatpush1.msra.mxu0 0.0
  %1904 = vmatprep.subr.mxu0 0.0
  %1905 = vmatpush1.msra.mxu0 0.0
  %1906 = vmatprep.subr.mxu0 0.0
  %1907 = vmatpush1.msra.mxu0 0.0
  %1908 = vmatprep.subr.mxu0 0.0
  %1909 = vmatpush1.msra.mxu0 0.0
  %1910 = vmatprep.subr.mxu0 0.0
  %1911 = vmatpush1.msra.mxu0 0.0
  %1912 = vmatprep.subr.mxu0 0.0
  %1913 = vmatpush1.msra.mxu0 0.0
  %1914 = vmatprep.subr.mxu0 0.0
  %1915 = vmatpush1.msra.mxu0 0.0
  %1916 = vmatprep.subr.mxu0 0.0
  %1917 = vmatpush1.msra.mxu0 0.0
  %1918 = vmatprep.subr.mxu0 0.0
  %1919 = vmatpush1.msra.mxu0 0.0
  %1920 = vmatprep.subr.mxu0 0.0
  %1921 = vmatpush1.msra.mxu0 0.0
  %1922 = vmatprep.subr.mxu0 0.0
  %1923 = vmatpush1.msra.mxu0 0.0
  %1924 = vmatprep.subr.mxu0 0.0
  %1925 = vmatpush1.msra.mxu0 0.0
  %1926 = vmatprep.subr.mxu0 0.0
  %1927 = vmatpush1.msra.mxu0 0.0
  %1928 = vmatprep.subr.mxu0 0.0
  %1929 = vmatpush1.msra.mxu0 0.0
  %1930 = vmatprep.subr.mxu0 0.0
  %1931 = vmatpush1.msra.mxu0 0.0
  %1932 = vmatprep.subr.mxu0 0.0
  %1933 = vmatpush1.msra.mxu0 0.0
  %1934 = vmatprep.subr.mxu0 0.0
  %1935 = vmatpush1.msra.mxu0 0.0
  %1936 = vmatprep.subr.mxu0 0.0
  %1937 = vmatpush1.msra.mxu0 0.0
  %1938 = vmatprep.subr.mxu0 0.0
  %1939 = vmatpush1.msra.mxu0 0.0
  %1940 = vmatprep.subr.mxu0 0.0
  %1941 = vmatpush1.msra.mxu0 0.0
  %1942 = vmatprep.subr.mxu0 0.0
  %1943 = vmatpush1.msra.mxu0 0.0
  %1944 = vmatprep.subr.mxu0 0.0
  %1945 = vmatpush1.msra.mxu0 0.0
  %1946 = vmatprep.subr.mxu0 0.0
  %1947 = vmatpush1.msra.mxu0 0.0
  %1948 = vmatprep.subr.mxu0 0.0
  %1949 = vmatpush1.msra.mxu0 0.0
  %1950 = vmatprep.subr.mxu0 0.0
  %1951 = vmatpush1.msra.mxu0 0.0
  %1952 = vmatprep.subr.mxu0 0.0
  %1953 = vmatpush1.msra.mxu0 0.0
  %1954 = vmatprep.subr.mxu0 0.0
  %1955 = vmatpush1.msra.mxu0 0.0
  %1956 = vmatprep.subr.mxu0 0.0
  %1957 = vmatpush1.msra.mxu0 0.0
  %1958 = vmatprep.subr.mxu0 0.0
  %1959 = vmatpush1.msra.mxu0 0.0
  %1960 = vmatprep.subr.mxu0 0.0
  %1961 = vmatpush1.msra.mxu0 0.0
  %1962 = vmatprep.subr.mxu0 0.0
  %1963 = vmatpush1.msra.mxu0 0.0
  %1964 = vmatprep.mubr.f32.mxu0 0.0
  %1965 = vmatmul.mubr.f32.gmra.mrb[0].mxu0 %v1740
  %v1966 = vpop.f32.mrb[0].mxu0
  %v1967 = vadd.f32 0.0, %v1966
  %v1968 = vpop.f32.mrb[0].mxu0
  %v1969 = vadd.f32 0.0, %v1968
  %1970 = vdwg.mxu0
  %1971 = vmatprep.subr.mxu0 %v1756
  %1972 = vmatpush1.msra.mxu0 %v1754
  %1973 = vmatprep.subr.mxu0 0.0
  %1974 = vmatpush1.msra.mxu0 0.0
  %1975 = vmatprep.subr.mxu0 0.0
  %1976 = vmatpush1.msra.mxu0 0.0
  %1977 = vmatprep.subr.mxu0 0.0
  %1978 = vmatpush1.msra.mxu0 0.0
  %1979 = vmatprep.subr.mxu0 0.0
  %1980 = vmatpush1.msra.mxu0 0.0
  %1981 = vmatprep.subr.mxu0 0.0
  %1982 = vmatpush1.msra.mxu0 0.0
  %1983 = vmatprep.subr.mxu0 0.0
  %1984 = vmatpush1.msra.mxu0 0.0
  %1985 = vmatprep.subr.mxu0 0.0
  %1986 = vmatpush1.msra.mxu0 0.0
  %1987 = vmatprep.subr.mxu0 0.0
  %1988 = vmatpush1.msra.mxu0 0.0
  %1989 = vmatprep.subr.mxu0 0.0
  %1990 = vmatpush1.msra.mxu0 0.0
  %1991 = vmatprep.subr.mxu0 0.0
  %1992 = vmatpush1.msra.mxu0 0.0
  %1993 = vmatprep.subr.mxu0 0.0
  %1994 = vmatpush1.msra.mxu0 0.0
  %1995 = vmatprep.subr.mxu0 0.0
  %1996 = vmatpush1.msra.mxu0 0.0
  %1997 = vmatprep.subr.mxu0 0.0
  %1998 = vmatpush1.msra.mxu0 0.0
  %1999 = vmatprep.subr.mxu0 0.0
  %2000 = vmatpush1.msra.mxu0 0.0
  %2001 = vmatprep.subr.mxu0 0.0
  %2002 = vmatpush1.msra.mxu0 0.0
  %2003 = vmatprep.subr.mxu0 0.0
  %2004 = vmatpush1.msra.mxu0 0.0
  %2005 = vmatprep.subr.mxu0 0.0
  %2006 = vmatpush1.msra.mxu0 0.0
  %2007 = vmatprep.subr.mxu0 0.0
  %2008 = vmatpush1.msra.mxu0 0.0
  %2009 = vmatprep.subr.mxu0 0.0
  %2010 = vmatpush1.msra.mxu0 0.0
  %2011 = vmatprep.subr.mxu0 0.0
  %2012 = vmatpush1.msra.mxu0 0.0
  %2013 = vmatprep.subr.mxu0 0.0
  %2014 = vmatpush1.msra.mxu0 0.0
  %2015 = vmatprep.subr.mxu0 0.0
  %2016 = vmatpush1.msra.mxu0 0.0
  %2017 = vmatprep.subr.mxu0 0.0
  %2018 = vmatpush1.msra.mxu0 0.0
  %2019 = vmatprep.subr.mxu0 0.0
  %2020 = vmatpush1.msra.mxu0 0.0
  %2021 = vmatprep.subr.mxu0 0.0
  %2022 = vmatpush1.msra.mxu0 0.0
  %2023 = vmatprep.subr.mxu0 0.0
  %2024 = vmatpush1.msra.mxu0 0.0
  %2025 = vmatprep.subr.mxu0 0.0
  %2026 = vmatpush1.msra.mxu0 0.0
  %2027 = vmatprep.subr.mxu0 0.0
  %2028 = vmatpush1.msra.mxu0 0.0
  %2029 = vmatprep.subr.mxu0 0.0
  %2030 = vmatpush1.msra.mxu0 0.0
  %2031 = vmatprep.subr.mxu0 0.0
  %2032 = vmatpush1.msra.mxu0 0.0
  %2033 = vmatprep.subr.mxu0 0.0
  %2034 = vmatpush1.msra.mxu0 0.0
  %2035 = vmatprep.mubr.f32.mxu0 0.0
  %2036 = vmatmul.mubr.f32.gmra.mrb[0].mxu0 %v1740
  %v2037 = vpop.f32.mrb[0].mxu0
  %v2038 = vadd.f32 0.0, %v2037
  %v2039 = vpop.f32.mrb[0].mxu0
  %v2040 = vadd.f32 0.0, %v2039
  %2041 = vdwg.mxu0
  %v2042 = vadd.f32 %v1717, %v1825
  %v2043 = vadd.f32 %v1718, %v1827
  %v2044 = vadd.f32 %v1719, %v1896
  %v2045 = vadd.f32 %v1720, %v1898
  %v2046 = vadd.f32 %v1721, %v1967
  %v2047 = vadd.f32 %v1722, %v1969
  %v2048 = vadd.f32 %v1723, %v2038
  %v2049 = vadd.f32 %v1724, %v2040
  %v2050 = vld [vmem:[#allocation2 + $0x4] sm:$0xff]
  %v2051 = vld [vmem:[#allocation2 + $0xc] sm:$0xff]
  %v2052 = vld [vmem:[#allocation2 + $0x14] sm:$0xff]
  %v2053 = vld [vmem:[#allocation2 + $0x1c] sm:$0xff]
  %v2054 = vld [vmem:[#allocation2 + $0x24] sm:$0xf]
  %s2055 = scalar_lea.vmem %s8, 5
  %v2056 = vld [vmem:[%s2055] ss:$8 sm:$0xf]
  %v2057 = vld [vmem:[%s2055] ss:$8 sm:$0xf0]
  %v2058 = vor.u32 %v2056, %v2057
  %v2060 = vlaneseq
  %v2061 = vshrl.u32 %v2060, 7
  %v2062 = vsub.s32 0, %v2061
  %v2063 = vrot.slane %v2058, %v2062
  %v2064 = vlaneseq
  %v2065 = vshrl.u32 %v2064, 7
  %v2066 = vsub.s32 1, %v2065
  %v2067 = vrot.slane %v2058, %v2066
  %v2068 = vlaneseq
  %v2069 = vshrl.u32 %v2068, 7
  %v2070 = vsub.s32 2, %v2069
  %v2071 = vrot.slane %v2058, %v2070
  %v2072 = vlaneseq
  %v2073 = vshrl.u32 %v2072, 7
  %v2074 = vsub.s32 3, %v2073
  %v2075 = vrot.slane %v2058, %v2074
  %v2076 = vlaneseq
  %v2077 = vshrl.u32 %v2076, 7
  %v2078 = vsub.s32 4, %v2077
  %v2079 = vrot.slane %v2058, %v2078
  %v2080 = vlaneseq
  %v2081 = vshrl.u32 %v2080, 7
  %v2082 = vsub.s32 5, %v2081
  %v2083 = vrot.slane %v2058, %v2082
  %v2084 = vlaneseq
  %v2085 = vshrl.u32 %v2084, 7
  %v2086 = vsub.s32 6, %v2085
  %v2087 = vrot.slane %v2058, %v2086
  %v2088 = vlaneseq
  %v2089 = vshrl.u32 %v2088, 7
  %v2090 = vsub.s32 7, %v2089
  %v2091 = vrot.slane %v2058, %v2090
  %v2092 = vcombine.low %v2063, %v2067
  %v2093 = vcombine.low %v2071, %v2075
  %v2094 = vcombine.low %v2079, %v2083
  %v2095 = vcombine.low %v2087, %v2091
  %2096 = vrot.lane.b32.xlu0 %v2092, 1
  %v2097 = vpop.permute.xlu0 %2096
  %2098 = vrot.lane.b32.xlu0 %v2093, 1
  %v2099 = vpop.permute.xlu0 %2098
  %2100 = vrot.lane.b32.xlu0 %v2094, 1
  %v2101 = vpop.permute.xlu0 %2100
  %2102 = vrot.lane.b32.xlu0 %v2095, 1
  %v2103 = vpop.permute.xlu0 %2102
  %v2104 = vrot.slane %v2097, 4
  %v2105 = vrot.slane %v2099, 4
  %v2106 = vrot.slane %v2101, 4
  %v2107 = vrot.slane %v2103, 4
  %v2108 = vsel %vm1405, %v2104, %v2097
  %v2109 = vsel %vm105, %v2104, %v2105
  %v2110 = vsel %vm1405, %v2109, %v2099
  %v2111 = vsel %vm105, %v2105, %v2106
  %v2112 = vsel %vm1405, %v2111, %v2101
  %v2113 = vsel %vm105, %v2106, %v2107
  %v2114 = vsel %vm1405, %v2113, %v2103
  %v2120 = vmul.f32 %v2050, %v2108
  %v2121 = vmul.f32 %v2051, %v2110
  %v2122 = vmul.f32 %v2052, %v2112
  %v2123 = vmul.f32 %v2053, %v2114
  %v2124 = vmul.f32 %v2054, %v2107
  %s2125 = scalar_lea.vmem %s2, 20
  %v2126 = vld [vmem:[%s2125] sm:$0xf]
  %v2132 = vcombine.high %v2120, %v2120
  %v2133 = vcombine.high %v2121, %v2121
  %v2134 = vcombine.high %v2122, %v2122
  %v2135 = vcombine.high %v2123, %v2123
  %2136 = vrot.lane.b32.xlu0 %v2120, 127
  %v2137 = vpop.permute.xlu0 %2136
  %2138 = vrot.lane.b32.xlu0 %v2132, 127
  %v2139 = vpop.permute.xlu0 %2138
  %2140 = vrot.lane.b32.xlu0 %v2121, 127
  %v2141 = vpop.permute.xlu0 %2140
  %2142 = vrot.lane.b32.xlu0 %v2133, 127
  %v2143 = vpop.permute.xlu0 %2142
  %2144 = vrot.lane.b32.xlu0 %v2122, 127
  %v2145 = vpop.permute.xlu0 %2144
  %2146 = vrot.lane.b32.xlu0 %v2134, 127
  %v2147 = vpop.permute.xlu0 %2146
  %2148 = vrot.lane.b32.xlu0 %v2123, 127
  %v2149 = vpop.permute.xlu0 %2148
  %2150 = vrot.lane.b32.xlu0 %v2135, 127
  %v2151 = vpop.permute.xlu0 %2150
  %2152 = vrot.lane.b32.xlu0 %v2124, 127
  %v2153 = vpop.permute.xlu0 %2152
  %v2154 = vsel %vm1358, %v2137, %v2139
  %v2155 = vsel %vm1358, %v2139, %v2141
  %v2156 = vsel %vm1358, %v2141, %v2143
  %v2157 = vsel %vm1358, %v2143, %v2145
  %v2158 = vsel %vm1358, %v2145, %v2147
  %v2159 = vsel %vm1358, %v2147, %v2149
  %v2160 = vsel %vm1358, %v2149, %v2151
  %v2161 = vsel %vm1358, %v2151, %v2153
  %v2163 = vsel %vm232, %v2126, 0
  %v2165 = vsel %vm105, %v2154, 0
  %v2167 = vsel %vm105, %v2155, 0
  %v2169 = vsel %vm105, %v2156, 0
  %v2171 = vsel %vm105, %v2157, 0
  %v2173 = vsel %vm105, %v2158, 0
  %v2175 = vsel %vm105, %v2159, 0
  %v2177 = vsel %vm105, %v2160, 0
  %v2179 = vsel %vm105, %v2161, 0
  %2181 = vmatprep.subr.mxu0 %v2167
  %2182 = vmatpush1.msra.mxu0 %v2165
  %2183 = vmatprep.subr.mxu0 0.0
  %2184 = vmatpush1.msra.mxu0 0.0
  %2185 = vmatprep.subr.mxu0 0.0
  %2186 = vmatpush1.msra.mxu0 0.0
  %2187 = vmatprep.subr.mxu0 0.0
  %2188 = vmatpush1.msra.mxu0 0.0
  %2189 = vmatprep.subr.mxu0 0.0
  %2190 = vmatpush1.msra.mxu0 0.0
  %2191 = vmatprep.subr.mxu0 0.0
  %2192 = vmatpush1.msra.mxu0 0.0
  %2193 = vmatprep.subr.mxu0 0.0
  %2194 = vmatpush1.msra.mxu0 0.0
  %2195 = vmatprep.subr.mxu0 0.0
  %2196 = vmatpush1.msra.mxu0 0.0
  %2197 = vmatprep.subr.mxu0 0.0
  %2198 = vmatpush1.msra.mxu0 0.0
  %2199 = vmatprep.subr.mxu0 0.0
  %2200 = vmatpush1.msra.mxu0 0.0
  %2201 = vmatprep.subr.mxu0 0.0
  %2202 = vmatpush1.msra.mxu0 0.0
  %2203 = vmatprep.subr.mxu0 0.0
  %2204 = vmatpush1.msra.mxu0 0.0
  %2205 = vmatprep.subr.mxu0 0.0
  %2206 = vmatpush1.msra.mxu0 0.0
  %2207 = vmatprep.subr.mxu0 0.0
  %2208 = vmatpush1.msra.mxu0 0.0
  %2209 = vmatprep.subr.mxu0 0.0
  %2210 = vmatpush1.msra.mxu0 0.0
  %2211 = vmatprep.subr.mxu0 0.0
  %2212 = vmatpush1.msra.mxu0 0.0
  %2213 = vmatprep.subr.mxu0 0.0
  %2214 = vmatpush1.msra.mxu0 0.0
  %2215 = vmatprep.subr.mxu0 0.0
  %2216 = vmatpush1.msra.mxu0 0.0
  %2217 = vmatprep.subr.mxu0 0.0
  %2218 = vmatpush1.msra.mxu0 0.0
  %2219 = vmatprep.subr.mxu0 0.0
  %2220 = vmatpush1.msra.mxu0 0.0
  %2221 = vmatprep.subr.mxu0 0.0
  %2222 = vmatpush1.msra.mxu0 0.0
  %2223 = vmatprep.subr.mxu0 0.0
  %2224 = vmatpush1.msra.mxu0 0.0
  %2225 = vmatprep.subr.mxu0 0.0
  %2226 = vmatpush1.msra.mxu0 0.0
  %2227 = vmatprep.subr.mxu0 0.0
  %2228 = vmatpush1.msra.mxu0 0.0
  %2229 = vmatprep.subr.mxu0 0.0
  %2230 = vmatpush1.msra.mxu0 0.0
  %2231 = vmatprep.subr.mxu0 0.0
  %2232 = vmatpush1.msra.mxu0 0.0
  %2233 = vmatprep.subr.mxu0 0.0
  %2234 = vmatpush1.msra.mxu0 0.0
  %2235 = vmatprep.subr.mxu0 0.0
  %2236 = vmatpush1.msra.mxu0 0.0
  %2237 = vmatprep.subr.mxu0 0.0
  %2238 = vmatpush1.msra.mxu0 0.0
  %2239 = vmatprep.subr.mxu0 0.0
  %2240 = vmatpush1.msra.mxu0 0.0
  %2241 = vmatprep.subr.mxu0 0.0
  %2242 = vmatpush1.msra.mxu0 0.0
  %2243 = vmatprep.subr.mxu0 0.0
  %2244 = vmatpush1.msra.mxu0 0.0
  %2245 = vmatprep.mubr.f32.mxu0 0.0
  %2246 = vmatmul.mubr.f32.gmra.mrb[0].mxu0 %v2163
  %v2247 = vpop.f32.mrb[0].mxu0
  %v2248 = vadd.f32 0.0, %v2247
  %v2249 = vpop.f32.mrb[0].mxu0
  %v2250 = vadd.f32 0.0, %v2249
  %2251 = vdwg.mxu0
  %2252 = vmatprep.subr.mxu0 %v2171
  %2253 = vmatpush1.msra.mxu0 %v2169
  %2254 = vmatprep.subr.mxu0 0.0
  %2255 = vmatpush1.msra.mxu0 0.0
  %2256 = vmatprep.subr.mxu0 0.0
  %2257 = vmatpush1.msra.mxu0 0.0
  %2258 = vmatprep.subr.mxu0 0.0
  %2259 = vmatpush1.msra.mxu0 0.0
  %2260 = vmatprep.subr.mxu0 0.0
  %2261 = vmatpush1.msra.mxu0 0.0
  %2262 = vmatprep.subr.mxu0 0.0
  %2263 = vmatpush1.msra.mxu0 0.0
  %2264 = vmatprep.subr.mxu0 0.0
  %2265 = vmatpush1.msra.mxu0 0.0
  %2266 = vmatprep.subr.mxu0 0.0
  %2267 = vmatpush1.msra.mxu0 0.0
  %2268 = vmatprep.subr.mxu0 0.0
  %2269 = vmatpush1.msra.mxu0 0.0
  %2270 = vmatprep.subr.mxu0 0.0
  %2271 = vmatpush1.msra.mxu0 0.0
  %2272 = vmatprep.subr.mxu0 0.0
  %2273 = vmatpush1.msra.mxu0 0.0
  %2274 = vmatprep.subr.mxu0 0.0
  %2275 = vmatpush1.msra.mxu0 0.0
  %2276 = vmatprep.subr.mxu0 0.0
  %2277 = vmatpush1.msra.mxu0 0.0
  %2278 = vmatprep.subr.mxu0 0.0
  %2279 = vmatpush1.msra.mxu0 0.0
  %2280 = vmatprep.subr.mxu0 0.0
  %2281 = vmatpush1.msra.mxu0 0.0
  %2282 = vmatprep.subr.mxu0 0.0
  %2283 = vmatpush1.msra.mxu0 0.0
  %2284 = vmatprep.subr.mxu0 0.0
  %2285 = vmatpush1.msra.mxu0 0.0
  %2286 = vmatprep.subr.mxu0 0.0
  %2287 = vmatpush1.msra.mxu0 0.0
  %2288 = vmatprep.subr.mxu0 0.0
  %2289 = vmatpush1.msra.mxu0 0.0
  %2290 = vmatprep.subr.mxu0 0.0
  %2291 = vmatpush1.msra.mxu0 0.0
  %2292 = vmatprep.subr.mxu0 0.0
  %2293 = vmatpush1.msra.mxu0 0.0
  %2294 = vmatprep.subr.mxu0 0.0
  %2295 = vmatpush1.msra.mxu0 0.0
  %2296 = vmatprep.subr.mxu0 0.0
  %2297 = vmatpush1.msra.mxu0 0.0
  %2298 = vmatprep.subr.mxu0 0.0
  %2299 = vmatpush1.msra.mxu0 0.0
  %2300 = vmatprep.subr.mxu0 0.0
  %2301 = vmatpush1.msra.mxu0 0.0
  %2302 = vmatprep.subr.mxu0 0.0
  %2303 = vmatpush1.msra.mxu0 0.0
  %2304 = vmatprep.subr.mxu0 0.0
  %2305 = vmatpush1.msra.mxu0 0.0
  %2306 = vmatprep.subr.mxu0 0.0
  %2307 = vmatpush1.msra.mxu0 0.0
  %2308 = vmatprep.subr.mxu0 0.0
  %2309 = vmatpush1.msra.mxu0 0.0
  %2310 = vmatprep.subr.mxu0 0.0
  %2311 = vmatpush1.msra.mxu0 0.0
  %2312 = vmatprep.subr.mxu0 0.0
  %2313 = vmatpush1.msra.mxu0 0.0
  %2314 = vmatprep.subr.mxu0 0.0
  %2315 = vmatpush1.msra.mxu0 0.0
  %2316 = vmatprep.mubr.f32.mxu0 0.0
  %2317 = vmatmul.mubr.f32.gmra.mrb[0].mxu0 %v2163
  %v2318 = vpop.f32.mrb[0].mxu0
  %v2319 = vadd.f32 0.0, %v2318
  %v2320 = vpop.f32.mrb[0].mxu0
  %v2321 = vadd.f32 0.0, %v2320
  %2322 = vdwg.mxu0
  %2323 = vmatprep.subr.mxu0 %v2175
  %2324 = vmatpush1.msra.mxu0 %v2173
  %2325 = vmatprep.subr.mxu0 0.0
  %2326 = vmatpush1.msra.mxu0 0.0
  %2327 = vmatprep.subr.mxu0 0.0
  %2328 = vmatpush1.msra.mxu0 0.0
  %2329 = vmatprep.subr.mxu0 0.0
  %2330 = vmatpush1.msra.mxu0 0.0
  %2331 = vmatprep.subr.mxu0 0.0
  %2332 = vmatpush1.msra.mxu0 0.0
  %2333 = vmatprep.subr.mxu0 0.0
  %2334 = vmatpush1.msra.mxu0 0.0
  %2335 = vmatprep.subr.mxu0 0.0
  %2336 = vmatpush1.msra.mxu0 0.0
  %2337 = vmatprep.subr.mxu0 0.0
  %2338 = vmatpush1.msra.mxu0 0.0
  %2339 = vmatprep.subr.mxu0 0.0
  %2340 = vmatpush1.msra.mxu0 0.0
  %2341 = vmatprep.subr.mxu0 0.0
  %2342 = vmatpush1.msra.mxu0 0.0
  %2343 = vmatprep.subr.mxu0 0.0
  %2344 = vmatpush1.msra.mxu0 0.0
  %2345 = vmatprep.subr.mxu0 0.0
  %2346 = vmatpush1.msra.mxu0 0.0
  %2347 = vmatprep.subr.mxu0 0.0
  %2348 = vmatpush1.msra.mxu0 0.0
  %2349 = vmatprep.subr.mxu0 0.0
  %2350 = vmatpush1.msra.mxu0 0.0
  %2351 = vmatprep.subr.mxu0 0.0
  %2352 = vmatpush1.msra.mxu0 0.0
  %2353 = vmatprep.subr.mxu0 0.0
  %2354 = vmatpush1.msra.mxu0 0.0
  %2355 = vmatprep.subr.mxu0 0.0
  %2356 = vmatpush1.msra.mxu0 0.0
  %2357 = vmatprep.subr.mxu0 0.0
  %2358 = vmatpush1.msra.mxu0 0.0
  %2359 = vmatprep.subr.mxu0 0.0
  %2360 = vmatpush1.msra.mxu0 0.0
  %2361 = vmatprep.subr.mxu0 0.0
  %2362 = vmatpush1.msra.mxu0 0.0
  %2363 = vmatprep.subr.mxu0 0.0
  %2364 = vmatpush1.msra.mxu0 0.0
  %2365 = vmatprep.subr.mxu0 0.0
  %2366 = vmatpush1.msra.mxu0 0.0
  %2367 = vmatprep.subr.mxu0 0.0
  %2368 = vmatpush1.msra.mxu0 0.0
  %2369 = vmatprep.subr.mxu0 0.0
  %2370 = vmatpush1.msra.mxu0 0.0
  %2371 = vmatprep.subr.mxu0 0.0
  %2372 = vmatpush1.msra.mxu0 0.0
  %2373 = vmatprep.subr.mxu0 0.0
  %2374 = vmatpush1.msra.mxu0 0.0
  %2375 = vmatprep.subr.mxu0 0.0
  %2376 = vmatpush1.msra.mxu0 0.0
  %2377 = vmatprep.subr.mxu0 0.0
  %2378 = vmatpush1.msra.mxu0 0.0
  %2379 = vmatprep.subr.mxu0 0.0
  %2380 = vmatpush1.msra.mxu0 0.0
  %2381 = vmatprep.subr.mxu0 0.0
  %2382 = vmatpush1.msra.mxu0 0.0
  %2383 = vmatprep.subr.mxu0 0.0
  %2384 = vmatpush1.msra.mxu0 0.0
  %2385 = vmatprep.subr.mxu0 0.0
  %2386 = vmatpush1.msra.mxu0 0.0
  %2387 = vmatprep.mubr.f32.mxu0 0.0
  %2388 = vmatmul.mubr.f32.gmra.mrb[0].mxu0 %v2163
  %v2389 = vpop.f32.mrb[0].mxu0
  %v2390 = vadd.f32 0.0, %v2389
  %v2391 = vpop.f32.mrb[0].mxu0
  %v2392 = vadd.f32 0.0, %v2391
  %2393 = vdwg.mxu0
  %2394 = vmatprep.subr.mxu0 %v2179
  %2395 = vmatpush1.msra.mxu0 %v2177
  %2396 = vmatprep.subr.mxu0 0.0
  %2397 = vmatpush1.msra.mxu0 0.0
  %2398 = vmatprep.subr.mxu0 0.0
  %2399 = vmatpush1.msra.mxu0 0.0
  %2400 = vmatprep.subr.mxu0 0.0
  %2401 = vmatpush1.msra.mxu0 0.0
  %2402 = vmatprep.subr.mxu0 0.0
  %2403 = vmatpush1.msra.mxu0 0.0
  %2404 = vmatprep.subr.mxu0 0.0
  %2405 = vmatpush1.msra.mxu0 0.0
  %2406 = vmatprep.subr.mxu0 0.0
  %2407 = vmatpush1.msra.mxu0 0.0
  %2408 = vmatprep.subr.mxu0 0.0
  %2409 = vmatpush1.msra.mxu0 0.0
  %2410 = vmatprep.subr.mxu0 0.0
  %2411 = vmatpush1.msra.mxu0 0.0
  %2412 = vmatprep.subr.mxu0 0.0
  %2413 = vmatpush1.msra.mxu0 0.0
  %2414 = vmatprep.subr.mxu0 0.0
  %2415 = vmatpush1.msra.mxu0 0.0
  %2416 = vmatprep.subr.mxu0 0.0
  %2417 = vmatpush1.msra.mxu0 0.0
  %2418 = vmatprep.subr.mxu0 0.0
  %2419 = vmatpush1.msra.mxu0 0.0
  %2420 = vmatprep.subr.mxu0 0.0
  %2421 = vmatpush1.msra.mxu0 0.0
  %2422 = vmatprep.subr.mxu0 0.0
  %2423 = vmatpush1.msra.mxu0 0.0
  %2424 = vmatprep.subr.mxu0 0.0
  %2425 = vmatpush1.msra.mxu0 0.0
  %2426 = vmatprep.subr.mxu0 0.0
  %2427 = vmatpush1.msra.mxu0 0.0
  %2428 = vmatprep.subr.mxu0 0.0
  %2429 = vmatpush1.msra.mxu0 0.0
  %2430 = vmatprep.subr.mxu0 0.0
  %2431 = vmatpush1.msra.mxu0 0.0
  %2432 = vmatprep.subr.mxu0 0.0
  %2433 = vmatpush1.msra.mxu0 0.0
  %2434 = vmatprep.subr.mxu0 0.0
  %2435 = vmatpush1.msra.mxu0 0.0
  %2436 = vmatprep.subr.mxu0 0.0
  %2437 = vmatpush1.msra.mxu0 0.0
  %2438 = vmatprep.subr.mxu0 0.0
  %2439 = vmatpush1.msra.mxu0 0.0
  %2440 = vmatprep.subr.mxu0 0.0
  %2441 = vmatpush1.msra.mxu0 0.0
  %2442 = vmatprep.subr.mxu0 0.0
  %2443 = vmatpush1.msra.mxu0 0.0
  %2444 = vmatprep.subr.mxu0 0.0
  %2445 = vmatpush1.msra.mxu0 0.0
  %2446 = vmatprep.subr.mxu0 0.0
  %2447 = vmatpush1.msra.mxu0 0.0
  %2448 = vmatprep.subr.mxu0 0.0
  %2449 = vmatpush1.msra.mxu0 0.0
  %2450 = vmatprep.subr.mxu0 0.0
  %2451 = vmatpush1.msra.mxu0 0.0
  %2452 = vmatprep.subr.mxu0 0.0
  %2453 = vmatpush1.msra.mxu0 0.0
  %2454 = vmatprep.subr.mxu0 0.0
  %2455 = vmatpush1.msra.mxu0 0.0
  %2456 = vmatprep.subr.mxu0 0.0
  %2457 = vmatpush1.msra.mxu0 0.0
  %2458 = vmatprep.mubr.f32.mxu0 0.0
  %2459 = vmatmul.mubr.f32.gmra.mrb[0].mxu0 %v2163
  %v2460 = vpop.f32.mrb[0].mxu0
  %v2461 = vadd.f32 0.0, %v2460
  %v2462 = vpop.f32.mrb[0].mxu0
  %v2463 = vadd.f32 0.0, %v2462
  %2464 = vdwg.mxu0
  %v2465 = vadd.f32 %v2042, %v2248
  %v2466 = vadd.f32 %v2043, %v2250
  %v2467 = vadd.f32 %v2044, %v2319
  %v2468 = vadd.f32 %v2045, %v2321
  %v2469 = vadd.f32 %v2046, %v2390
  %v2470 = vadd.f32 %v2047, %v2392
  %v2471 = vadd.f32 %v2048, %v2461
  %v2472 = vadd.f32 %v2049, %v2463
  %v2473 = vld [vmem:[#allocation2 + $0x4] sm:$0xff]
  %v2474 = vld [vmem:[#allocation2 + $0xc] sm:$0xff]
  %v2475 = vld [vmem:[#allocation2 + $0x14] sm:$0xff]
  %v2476 = vld [vmem:[#allocation2 + $0x1c] sm:$0xff]
  %v2477 = vld [vmem:[#allocation2 + $0x24] sm:$0xf]
  %s2478 = scalar_lea.vmem %s8, 6
  %v2479 = vld [vmem:[%s2478] ss:$8 sm:$0xf]
  %v2480 = vld [vmem:[%s2478] ss:$8 sm:$0xf0]
  %v2481 = vor.u32 %v2479, %v2480
  %v2483 = vlaneseq
  %v2484 = vshrl.u32 %v2483, 7
  %v2485 = vsub.s32 0, %v2484
  %v2486 = vrot.slane %v2481, %v2485
  %v2487 = vlaneseq
  %v2488 = vshrl.u32 %v2487, 7
  %v2489 = vsub.s32 1, %v2488
  %v2490 = vrot.slane %v2481, %v2489
  %v2491 = vlaneseq
  %v2492 = vshrl.u32 %v2491, 7
  %v2493 = vsub.s32 2, %v2492
  %v2494 = vrot.slane %v2481, %v2493
  %v2495 = vlaneseq
  %v2496 = vshrl.u32 %v2495, 7
  %v2497 = vsub.s32 3, %v2496
  %v2498 = vrot.slane %v2481, %v2497
  %v2499 = vlaneseq
  %v2500 = vshrl.u32 %v2499, 7
  %v2501 = vsub.s32 4, %v2500
  %v2502 = vrot.slane %v2481, %v2501
  %v2503 = vlaneseq
  %v2504 = vshrl.u32 %v2503, 7
  %v2505 = vsub.s32 5, %v2504
  %v2506 = vrot.slane %v2481, %v2505
  %v2507 = vlaneseq
  %v2508 = vshrl.u32 %v2507, 7
  %v2509 = vsub.s32 6, %v2508
  %v2510 = vrot.slane %v2481, %v2509
  %v2511 = vlaneseq
  %v2512 = vshrl.u32 %v2511, 7
  %v2513 = vsub.s32 7, %v2512
  %v2514 = vrot.slane %v2481, %v2513
  %v2515 = vcombine.low %v2486, %v2490
  %v2516 = vcombine.low %v2494, %v2498
  %v2517 = vcombine.low %v2502, %v2506
  %v2518 = vcombine.low %v2510, %v2514
  %2519 = vrot.lane.b32.xlu0 %v2515, 15
  %v2520 = vpop.permute.xlu0 %2519
  %2521 = vrot.lane.b32.xlu0 %v2516, 15
  %v2522 = vpop.permute.xlu0 %2521
  %2523 = vrot.lane.b32.xlu0 %v2517, 15
  %v2524 = vpop.permute.xlu0 %2523
  %2525 = vrot.lane.b32.xlu0 %v2518, 15
  %v2526 = vpop.permute.xlu0 %2525
  %v2527 = vrot.slane %v2520, 4
  %v2528 = vrot.slane %v2522, 4
  %v2529 = vrot.slane %v2524, 4
  %v2530 = vrot.slane %v2526, 4
  %v2531 = vsel %vm980, %v2527, %v2520
  %v2532 = vsel %vm105, %v2527, %v2528
  %v2533 = vsel %vm980, %v2532, %v2522
  %v2534 = vsel %vm105, %v2528, %v2529
  %v2535 = vsel %vm980, %v2534, %v2524
  %v2536 = vsel %vm105, %v2529, %v2530
  %v2537 = vsel %vm980, %v2536, %v2526
  %v2543 = vmul.f32 %v2473, %v2531
  %v2544 = vmul.f32 %v2474, %v2533
  %v2545 = vmul.f32 %v2475, %v2535
  %v2546 = vmul.f32 %v2476, %v2537
  %v2547 = vmul.f32 %v2477, %v2530
  %s2548 = scalar_lea.vmem %s2, 24
  %v2549 = vld [vmem:[%s2548] sm:$0xf]
  %v2555 = vcombine.high %v2543, %v2543
  %v2556 = vcombine.high %v2544, %v2544
  %v2557 = vcombine.high %v2545, %v2545
  %v2558 = vcombine.high %v2546, %v2546
  %2559 = vrot.lane.b32.xlu0 %v2543, 113
  %v2560 = vpop.permute.xlu0 %2559
  %2561 = vrot.lane.b32.xlu0 %v2555, 113
  %v2562 = vpop.permute.xlu0 %2561
  %2563 = vrot.lane.b32.xlu0 %v2544, 113
  %v2564 = vpop.permute.xlu0 %2563
  %2565 = vrot.lane.b32.xlu0 %v2556, 113
  %v2566 = vpop.permute.xlu0 %2565
  %2567 = vrot.lane.b32.xlu0 %v2545, 113
  %v2568 = vpop.permute.xlu0 %2567
  %2569 = vrot.lane.b32.xlu0 %v2557, 113
  %v2570 = vpop.permute.xlu0 %2569
  %2571 = vrot.lane.b32.xlu0 %v2546, 113
  %v2572 = vpop.permute.xlu0 %2571
  %2573 = vrot.lane.b32.xlu0 %v2558, 113
  %v2574 = vpop.permute.xlu0 %2573
  %2575 = vrot.lane.b32.xlu0 %v2547, 113
  %v2576 = vpop.permute.xlu0 %2575
  %v2577 = vsel %vm933, %v2560, %v2562
  %v2578 = vsel %vm933, %v2562, %v2564
  %v2579 = vsel %vm933, %v2564, %v2566
  %v2580 = vsel %vm933, %v2566, %v2568
  %v2581 = vsel %vm933, %v2568, %v2570
  %v2582 = vsel %vm933, %v2570, %v2572
  %v2583 = vsel %vm933, %v2572, %v2574
  %v2584 = vsel %vm933, %v2574, %v2576
  %v2586 = vsel %vm232, %v2549, 0
  %v2588 = vsel %vm105, %v2577, 0
  %v2590 = vsel %vm105, %v2578, 0
  %v2592 = vsel %vm105, %v2579, 0
  %v2594 = vsel %vm105, %v2580, 0
  %v2596 = vsel %vm105, %v2581, 0
  %v2598 = vsel %vm105, %v2582, 0
  %v2600 = vsel %vm105, %v2583, 0
  %v2602 = vsel %vm105, %v2584, 0
  %2604 = vmatprep.subr.mxu0 %v2590
  %2605 = vmatpush1.msra.mxu0 %v2588
  %2606 = vmatprep.subr.mxu0 0.0
  %2607 = vmatpush1.msra.mxu0 0.0
  %2608 = vmatprep.subr.mxu0 0.0
  %2609 = vmatpush1.msra.mxu0 0.0
  %2610 = vmatprep.subr.mxu0 0.0
  %2611 = vmatpush1.msra.mxu0 0.0
  %2612 = vmatprep.subr.mxu0 0.0
  %2613 = vmatpush1.msra.mxu0 0.0
  %2614 = vmatprep.subr.mxu0 0.0
  %2615 = vmatpush1.msra.mxu0 0.0
  %2616 = vmatprep.subr.mxu0 0.0
  %2617 = vmatpush1.msra.mxu0 0.0
  %2618 = vmatprep.subr.mxu0 0.0
  %2619 = vmatpush1.msra.mxu0 0.0
  %2620 = vmatprep.subr.mxu0 0.0
  %2621 = vmatpush1.msra.mxu0 0.0
  %2622 = vmatprep.subr.mxu0 0.0
  %2623 = vmatpush1.msra.mxu0 0.0
  %2624 = vmatprep.subr.mxu0 0.0
  %2625 = vmatpush1.msra.mxu0 0.0
  %2626 = vmatprep.subr.mxu0 0.0
  %2627 = vmatpush1.msra.mxu0 0.0
  %2628 = vmatprep.subr.mxu0 0.0
  %2629 = vmatpush1.msra.mxu0 0.0
  %2630 = vmatprep.subr.mxu0 0.0
  %2631 = vmatpush1.msra.mxu0 0.0
  %2632 = vmatprep.subr.mxu0 0.0
  %2633 = vmatpush1.msra.mxu0 0.0
  %2634 = vmatprep.subr.mxu0 0.0
  %2635 = vmatpush1.msra.mxu0 0.0
  %2636 = vmatprep.subr.mxu0 0.0
  %2637 = vmatpush1.msra.mxu0 0.0
  %2638 = vmatprep.subr.mxu0 0.0
  %2639 = vmatpush1.msra.mxu0 0.0
  %2640 = vmatprep.subr.mxu0 0.0
  %2641 = vmatpush1.msra.mxu0 0.0
  %2642 = vmatprep.subr.mxu0 0.0
  %2643 = vmatpush1.msra.mxu0 0.0
  %2644 = vmatprep.subr.mxu0 0.0
  %2645 = vmatpush1.msra.mxu0 0.0
  %2646 = vmatprep.subr.mxu0 0.0
  %2647 = vmatpush1.msra.mxu0 0.0
  %2648 = vmatprep.subr.mxu0 0.0
  %2649 = vmatpush1.msra.mxu0 0.0
  %2650 = vmatprep.subr.mxu0 0.0
  %2651 = vmatpush1.msra.mxu0 0.0
  %2652 = vmatprep.subr.mxu0 0.0
  %2653 = vmatpush1.msra.mxu0 0.0
  %2654 = vmatprep.subr.mxu0 0.0
  %2655 = vmatpush1.msra.mxu0 0.0
  %2656 = vmatprep.subr.mxu0 0.0
  %2657 = vmatpush1.msra.mxu0 0.0
  %2658 = vmatprep.subr.mxu0 0.0
  %2659 = vmatpush1.msra.mxu0 0.0
  %2660 = vmatprep.subr.mxu0 0.0
  %2661 = vmatpush1.msra.mxu0 0.0
  %2662 = vmatprep.subr.mxu0 0.0
  %2663 = vmatpush1.msra.mxu0 0.0
  %2664 = vmatprep.subr.mxu0 0.0
  %2665 = vmatpush1.msra.mxu0 0.0
  %2666 = vmatprep.subr.mxu0 0.0
  %2667 = vmatpush1.msra.mxu0 0.0
  %2668 = vmatprep.mubr.f32.mxu0 0.0
  %2669 = vmatmul.mubr.f32.gmra.mrb[0].mxu0 %v2586
  %v2670 = vpop.f32.mrb[0].mxu0
  %v2671 = vadd.f32 0.0, %v2670
  %v2672 = vpop.f32.mrb[0].mxu0
  %v2673 = vadd.f32 0.0, %v2672
  %2674 = vdwg.mxu0
  %2675 = vmatprep.subr.mxu0 %v2594
  %2676 = vmatpush1.msra.mxu0 %v2592
  %2677 = vmatprep.subr.mxu0 0.0
  %2678 = vmatpush1.msra.mxu0 0.0
  %2679 = vmatprep.subr.mxu0 0.0
  %2680 = vmatpush1.msra.mxu0 0.0
  %2681 = vmatprep.subr.mxu0 0.0
  %2682 = vmatpush1.msra.mxu0 0.0
  %2683 = vmatprep.subr.mxu0 0.0
  %2684 = vmatpush1.msra.mxu0 0.0
  %2685 = vmatprep.subr.mxu0 0.0
  %2686 = vmatpush1.msra.mxu0 0.0
  %2687 = vmatprep.subr.mxu0 0.0
  %2688 = vmatpush1.msra.mxu0 0.0
  %2689 = vmatprep.subr.mxu0 0.0
  %2690 = vmatpush1.msra.mxu0 0.0
  %2691 = vmatprep.subr.mxu0 0.0
  %2692 = vmatpush1.msra.mxu0 0.0
  %2693 = vmatprep.subr.mxu0 0.0
  %2694 = vmatpush1.msra.mxu0 0.0
  %2695 = vmatprep.subr.mxu0 0.0
  %2696 = vmatpush1.msra.mxu0 0.0
  %2697 = vmatprep.subr.mxu0 0.0
  %2698 = vmatpush1.msra.mxu0 0.0
  %2699 = vmatprep.subr.mxu0 0.0
  %2700 = vmatpush1.msra.mxu0 0.0
  %2701 = vmatprep.subr.mxu0 0.0
  %2702 = vmatpush1.msra.mxu0 0.0
  %2703 = vmatprep.subr.mxu0 0.0
  %2704 = vmatpush1.msra.mxu0 0.0
  %2705 = vmatprep.subr.mxu0 0.0
  %2706 = vmatpush1.msra.mxu0 0.0
  %2707 = vmatprep.subr.mxu0 0.0
  %2708 = vmatpush1.msra.mxu0 0.0
  %2709 = vmatprep.subr.mxu0 0.0
  %2710 = vmatpush1.msra.mxu0 0.0
  %2711 = vmatprep.subr.mxu0 0.0
  %2712 = vmatpush1.msra.mxu0 0.0
  %2713 = vmatprep.subr.mxu0 0.0
  %2714 = vmatpush1.msra.mxu0 0.0
  %2715 = vmatprep.subr.mxu0 0.0
  %2716 = vmatpush1.msra.mxu0 0.0
  %2717 = vmatprep.subr.mxu0 0.0
  %2718 = vmatpush1.msra.mxu0 0.0
  %2719 = vmatprep.subr.mxu0 0.0
  %2720 = vmatpush1.msra.mxu0 0.0
  %2721 = vmatprep.subr.mxu0 0.0
  %2722 = vmatpush1.msra.mxu0 0.0
  %2723 = vmatprep.subr.mxu0 0.0
  %2724 = vmatpush1.msra.mxu0 0.0
  %2725 = vmatprep.subr.mxu0 0.0
  %2726 = vmatpush1.msra.mxu0 0.0
  %2727 = vmatprep.subr.mxu0 0.0
  %2728 = vmatpush1.msra.mxu0 0.0
  %2729 = vmatprep.subr.mxu0 0.0
  %2730 = vmatpush1.msra.mxu0 0.0
  %2731 = vmatprep.subr.mxu0 0.0
  %2732 = vmatpush1.msra.mxu0 0.0
  %2733 = vmatprep.subr.mxu0 0.0
  %2734 = vmatpush1.msra.mxu0 0.0
  %2735 = vmatprep.subr.mxu0 0.0
  %2736 = vmatpush1.msra.mxu0 0.0
  %2737 = vmatprep.subr.mxu0 0.0
  %2738 = vmatpush1.msra.mxu0 0.0
  %2739 = vmatprep.mubr.f32.mxu0 0.0
  %2740 = vmatmul.mubr.f32.gmra.mrb[0].mxu0 %v2586
  %v2741 = vpop.f32.mrb[0].mxu0
  %v2742 = vadd.f32 0.0, %v2741
  %v2743 = vpop.f32.mrb[0].mxu0
  %v2744 = vadd.f32 0.0, %v2743
  %2745 = vdwg.mxu0
  %2746 = vmatprep.subr.mxu0 %v2598
  %2747 = vmatpush1.msra.mxu0 %v2596
  %2748 = vmatprep.subr.mxu0 0.0
  %2749 = vmatpush1.msra.mxu0 0.0
  %2750 = vmatprep.subr.mxu0 0.0
  %2751 = vmatpush1.msra.mxu0 0.0
  %2752 = vmatprep.subr.mxu0 0.0
  %2753 = vmatpush1.msra.mxu0 0.0
  %2754 = vmatprep.subr.mxu0 0.0
  %2755 = vmatpush1.msra.mxu0 0.0
  %2756 = vmatprep.subr.mxu0 0.0
  %2757 = vmatpush1.msra.mxu0 0.0
  %2758 = vmatprep.subr.mxu0 0.0
  %2759 = vmatpush1.msra.mxu0 0.0
  %2760 = vmatprep.subr.mxu0 0.0
  %2761 = vmatpush1.msra.mxu0 0.0
  %2762 = vmatprep.subr.mxu0 0.0
  %2763 = vmatpush1.msra.mxu0 0.0
  %2764 = vmatprep.subr.mxu0 0.0
  %2765 = vmatpush1.msra.mxu0 0.0
  %2766 = vmatprep.subr.mxu0 0.0
  %2767 = vmatpush1.msra.mxu0 0.0
  %2768 = vmatprep.subr.mxu0 0.0
  %2769 = vmatpush1.msra.mxu0 0.0
  %2770 = vmatprep.subr.mxu0 0.0
  %2771 = vmatpush1.msra.mxu0 0.0
  %2772 = vmatprep.subr.mxu0 0.0
  %2773 = vmatpush1.msra.mxu0 0.0
  %2774 = vmatprep.subr.mxu0 0.0
  %2775 = vmatpush1.msra.mxu0 0.0
  %2776 = vmatprep.subr.mxu0 0.0
  %2777 = vmatpush1.msra.mxu0 0.0
  %2778 = vmatprep.subr.mxu0 0.0
  %2779 = vmatpush1.msra.mxu0 0.0
  %2780 = vmatprep.subr.mxu0 0.0
  %2781 = vmatpush1.msra.mxu0 0.0
  %2782 = vmatprep.subr.mxu0 0.0
  %2783 = vmatpush1.msra.mxu0 0.0
  %2784 = vmatprep.subr.mxu0 0.0
  %2785 = vmatpush1.msra.mxu0 0.0
  %2786 = vmatprep.subr.mxu0 0.0
  %2787 = vmatpush1.msra.mxu0 0.0
  %2788 = vmatprep.subr.mxu0 0.0
  %2789 = vmatpush1.msra.mxu0 0.0
  %2790 = vmatprep.subr.mxu0 0.0
  %2791 = vmatpush1.msra.mxu0 0.0
  %2792 = vmatprep.subr.mxu0 0.0
  %2793 = vmatpush1.msra.mxu0 0.0
  %2794 = vmatprep.subr.mxu0 0.0
  %2795 = vmatpush1.msra.mxu0 0.0
  %2796 = vmatprep.subr.mxu0 0.0
  %2797 = vmatpush1.msra.mxu0 0.0
  %2798 = vmatprep.subr.mxu0 0.0
  %2799 = vmatpush1.msra.mxu0 0.0
  %2800 = vmatprep.subr.mxu0 0.0
  %2801 = vmatpush1.msra.mxu0 0.0
  %2802 = vmatprep.subr.mxu0 0.0
  %2803 = vmatpush1.msra.mxu0 0.0
  %2804 = vmatprep.subr.mxu0 0.0
  %2805 = vmatpush1.msra.mxu0 0.0
  %2806 = vmatprep.subr.mxu0 0.0
  %2807 = vmatpush1.msra.mxu0 0.0
  %2808 = vmatprep.subr.mxu0 0.0
  %2809 = vmatpush1.msra.mxu0 0.0
  %2810 = vmatprep.mubr.f32.mxu0 0.0
  %2811 = vmatmul.mubr.f32.gmra.mrb[0].mxu0 %v2586
  %v2812 = vpop.f32.mrb[0].mxu0
  %v2813 = vadd.f32 0.0, %v2812
  %v2814 = vpop.f32.mrb[0].mxu0
  %v2815 = vadd.f32 0.0, %v2814
  %2816 = vdwg.mxu0
  %2817 = vmatprep.subr.mxu0 %v2602
  %2818 = vmatpush1.msra.mxu0 %v2600
  %2819 = vmatprep.subr.mxu0 0.0
  %2820 = vmatpush1.msra.mxu0 0.0
  %2821 = vmatprep.subr.mxu0 0.0
  %2822 = vmatpush1.msra.mxu0 0.0
  %2823 = vmatprep.subr.mxu0 0.0
  %2824 = vmatpush1.msra.mxu0 0.0
  %2825 = vmatprep.subr.mxu0 0.0
  %2826 = vmatpush1.msra.mxu0 0.0
  %2827 = vmatprep.subr.mxu0 0.0
  %2828 = vmatpush1.msra.mxu0 0.0
  %2829 = vmatprep.subr.mxu0 0.0
  %2830 = vmatpush1.msra.mxu0 0.0
  %2831 = vmatprep.subr.mxu0 0.0
  %2832 = vmatpush1.msra.mxu0 0.0
  %2833 = vmatprep.subr.mxu0 0.0
  %2834 = vmatpush1.msra.mxu0 0.0
  %2835 = vmatprep.subr.mxu0 0.0
  %2836 = vmatpush1.msra.mxu0 0.0
  %2837 = vmatprep.subr.mxu0 0.0
  %2838 = vmatpush1.msra.mxu0 0.0
  %2839 = vmatprep.subr.mxu0 0.0
  %2840 = vmatpush1.msra.mxu0 0.0
  %2841 = vmatprep.subr.mxu0 0.0
  %2842 = vmatpush1.msra.mxu0 0.0
  %2843 = vmatprep.subr.mxu0 0.0
  %2844 = vmatpush1.msra.mxu0 0.0
  %2845 = vmatprep.subr.mxu0 0.0
  %2846 = vmatpush1.msra.mxu0 0.0
  %2847 = vmatprep.subr.mxu0 0.0
  %2848 = vmatpush1.msra.mxu0 0.0
  %2849 = vmatprep.subr.mxu0 0.0
  %2850 = vmatpush1.msra.mxu0 0.0
  %2851 = vmatprep.subr.mxu0 0.0
  %2852 = vmatpush1.msra.mxu0 0.0
  %2853 = vmatprep.subr.mxu0 0.0
  %2854 = vmatpush1.msra.mxu0 0.0
  %2855 = vmatprep.subr.mxu0 0.0
  %2856 = vmatpush1.msra.mxu0 0.0
  %2857 = vmatprep.subr.mxu0 0.0
  %2858 = vmatpush1.msra.mxu0 0.0
  %2859 = vmatprep.subr.mxu0 0.0
  %2860 = vmatpush1.msra.mxu0 0.0
  %2861 = vmatprep.subr.mxu0 0.0
  %2862 = vmatpush1.msra.mxu0 0.0
  %2863 = vmatprep.subr.mxu0 0.0
  %2864 = vmatpush1.msra.mxu0 0.0
  %2865 = vmatprep.subr.mxu0 0.0
  %2866 = vmatpush1.msra.mxu0 0.0
  %2867 = vmatprep.subr.mxu0 0.0
  %2868 = vmatpush1.msra.mxu0 0.0
  %2869 = vmatprep.subr.mxu0 0.0
  %2870 = vmatpush1.msra.mxu0 0.0
  %2871 = vmatprep.subr.mxu0 0.0
  %2872 = vmatpush1.msra.mxu0 0.0
  %2873 = vmatprep.subr.mxu0 0.0
  %2874 = vmatpush1.msra.mxu0 0.0
  %2875 = vmatprep.subr.mxu0 0.0
  %2876 = vmatpush1.msra.mxu0 0.0
  %2877 = vmatprep.subr.mxu0 0.0
  %2878 = vmatpush1.msra.mxu0 0.0
  %2879 = vmatprep.subr.mxu0 0.0
  %2880 = vmatpush1.msra.mxu0 0.0
  %2881 = vmatprep.mubr.f32.mxu0 0.0
  %2882 = vmatmul.mubr.f32.gmra.mrb[0].mxu0 %v2586
  %v2883 = vpop.f32.mrb[0].mxu0
  %v2884 = vadd.f32 0.0, %v2883
  %v2885 = vpop.f32.mrb[0].mxu0
  %v2886 = vadd.f32 0.0, %v2885
  %2887 = vdwg.mxu0
  %v2888 = vadd.f32 %v2465, %v2671
  %v2889 = vadd.f32 %v2466, %v2673
  %v2890 = vadd.f32 %v2467, %v2742
  %v2891 = vadd.f32 %v2468, %v2744
  %v2892 = vadd.f32 %v2469, %v2813
  %v2893 = vadd.f32 %v2470, %v2815
  %v2894 = vadd.f32 %v2471, %v2884
  %v2895 = vadd.f32 %v2472, %v2886
  %v2896 = vld [vmem:[#allocation2 + $0x4] sm:$0xff]
  %v2897 = vld [vmem:[#allocation2 + $0xc] sm:$0xff]
  %v2898 = vld [vmem:[#allocation2 + $0x14] sm:$0xff]
  %v2899 = vld [vmem:[#allocation2 + $0x1c] sm:$0xff]
  %v2900 = vld [vmem:[#allocation2 + $0x24] sm:$0xf]
  %s2901 = scalar_lea.vmem %s8, 7
  %v2902 = vld [vmem:[%s2901] ss:$8 sm:$0xf]
  %v2903 = vld [vmem:[%s2901] ss:$8 sm:$0xf0]
  %v2904 = vor.u32 %v2902, %v2903
  %v2906 = vlaneseq
  %v2907 = vshrl.u32 %v2906, 7
  %v2908 = vsub.s32 0, %v2907
  %v2909 = vrot.slane %v2904, %v2908
  %v2910 = vlaneseq
  %v2911 = vshrl.u32 %v2910, 7
  %v2912 = vsub.s32 1, %v2911
  %v2913 = vrot.slane %v2904, %v2912
  %v2914 = vlaneseq
  %v2915 = vshrl.u32 %v2914, 7
  %v2916 = vsub.s32 2, %v2915
  %v2917 = vrot.slane %v2904, %v2916
  %v2918 = vlaneseq
  %v2919 = vshrl.u32 %v2918, 7
  %v2920 = vsub.s32 3, %v2919
  %v2921 = vrot.slane %v2904, %v2920
  %v2922 = vlaneseq
  %v2923 = vshrl.u32 %v2922, 7
  %v2924 = vsub.s32 4, %v2923
  %v2925 = vrot.slane %v2904, %v2924
  %v2926 = vlaneseq
  %v2927 = vshrl.u32 %v2926, 7
  %v2928 = vsub.s32 5, %v2927
  %v2929 = vrot.slane %v2904, %v2928
  %v2930 = vlaneseq
  %v2931 = vshrl.u32 %v2930, 7
  %v2932 = vsub.s32 6, %v2931
  %v2933 = vrot.slane %v2904, %v2932
  %v2934 = vlaneseq
  %v2935 = vshrl.u32 %v2934, 7
  %v2936 = vsub.s32 7, %v2935
  %v2937 = vrot.slane %v2904, %v2936
  %v2938 = vcombine.low %v2909, %v2913
  %v2939 = vcombine.low %v2917, %v2921
  %v2940 = vcombine.low %v2925, %v2929
  %v2941 = vcombine.low %v2933, %v2937
  %2942 = vrot.lane.b32.xlu0 %v2938, 16
  %v2943 = vpop.permute.xlu0 %2942
  %2944 = vrot.lane.b32.xlu0 %v2939, 16
  %v2945 = vpop.permute.xlu0 %2944
  %2946 = vrot.lane.b32.xlu0 %v2940, 16
  %v2947 = vpop.permute.xlu0 %2946
  %2948 = vrot.lane.b32.xlu0 %v2941, 16
  %v2949 = vpop.permute.xlu0 %2948
  %v2950 = vrot.slane %v2943, 4
  %v2951 = vrot.slane %v2945, 4
  %v2952 = vrot.slane %v2947, 4
  %v2953 = vrot.slane %v2949, 4
  %v2954 = vsel %vm223, %v2950, %v2943
  %v2955 = vsel %vm105, %v2950, %v2951
  %v2956 = vsel %vm223, %v2955, %v2945
  %v2957 = vsel %vm105, %v2951, %v2952
  %v2958 = vsel %vm223, %v2957, %v2947
  %v2959 = vsel %vm105, %v2952, %v2953
  %v2960 = vsel %vm223, %v2959, %v2949
  %v2966 = vmul.f32 %v2896, %v2954
  %v2967 = vmul.f32 %v2897, %v2956
  %v2968 = vmul.f32 %v2898, %v2958
  %v2969 = vmul.f32 %v2899, %v2960
  %v2970 = vmul.f32 %v2900, %v2953
  %s2971 = scalar_lea.vmem %s2, 28
  %v2972 = vld [vmem:[%s2971] sm:$0xf]
  %v2978 = vcombine.high %v2966, %v2966
  %v2979 = vcombine.high %v2967, %v2967
  %v2980 = vcombine.high %v2968, %v2968
  %v2981 = vcombine.high %v2969, %v2969
  %2982 = vrot.lane.b32.xlu0 %v2966, 112
  %v2983 = vpop.permute.xlu0 %2982
  %2984 = vrot.lane.b32.xlu0 %v2978, 112
  %v2985 = vpop.permute.xlu0 %2984
  %2986 = vrot.lane.b32.xlu0 %v2967, 112
  %v2987 = vpop.permute.xlu0 %2986
  %2988 = vrot.lane.b32.xlu0 %v2979, 112
  %v2989 = vpop.permute.xlu0 %2988
  %2990 = vrot.lane.b32.xlu0 %v2968, 112
  %v2991 = vpop.permute.xlu0 %2990
  %2992 = vrot.lane.b32.xlu0 %v2980, 112
  %v2993 = vpop.permute.xlu0 %2992
  %2994 = vrot.lane.b32.xlu0 %v2969, 112
  %v2995 = vpop.permute.xlu0 %2994
  %2996 = vrot.lane.b32.xlu0 %v2981, 112
  %v2997 = vpop.permute.xlu0 %2996
  %2998 = vrot.lane.b32.xlu0 %v2970, 112
  %v2999 = vpop.permute.xlu0 %2998
  %v3000 = vsel %vm176, %v2983, %v2985
  %v3001 = vsel %vm176, %v2985, %v2987
  %v3002 = vsel %vm176, %v2987, %v2989
  %v3003 = vsel %vm176, %v2989, %v2991
  %v3004 = vsel %vm176, %v2991, %v2993
  %v3005 = vsel %vm176, %v2993, %v2995
  %v3006 = vsel %vm176, %v2995, %v2997
  %v3007 = vsel %vm176, %v2997, %v2999
  %v3009 = vsel %vm232, %v2972, 0
  %v3011 = vsel %vm105, %v3000, 0
  %v3013 = vsel %vm105, %v3001, 0
  %v3015 = vsel %vm105, %v3002, 0
  %v3017 = vsel %vm105, %v3003, 0
  %v3019 = vsel %vm105, %v3004, 0
  %v3021 = vsel %vm105, %v3005, 0
  %v3023 = vsel %vm105, %v3006, 0
  %v3025 = vsel %vm105, %v3007, 0
  %3027 = vmatprep.subr.mxu0 %v3013
  %3028 = vmatpush1.msra.mxu0 %v3011
  %3029 = vmatprep.subr.mxu0 0.0
  %3030 = vmatpush1.msra.mxu0 0.0
  %3031 = vmatprep.subr.mxu0 0.0
  %3032 = vmatpush1.msra.mxu0 0.0
  %3033 = vmatprep.subr.mxu0 0.0
  %3034 = vmatpush1.msra.mxu0 0.0
  %3035 = vmatprep.subr.mxu0 0.0
  %3036 = vmatpush1.msra.mxu0 0.0
  %3037 = vmatprep.subr.mxu0 0.0
  %3038 = vmatpush1.msra.mxu0 0.0
  %3039 = vmatprep.subr.mxu0 0.0
  %3040 = vmatpush1.msra.mxu0 0.0
  %3041 = vmatprep.subr.mxu0 0.0
  %3042 = vmatpush1.msra.mxu0 0.0
  %3043 = vmatprep.subr.mxu0 0.0
  %3044 = vmatpush1.msra.mxu0 0.0
  %3045 = vmatprep.subr.mxu0 0.0
  %3046 = vmatpush1.msra.mxu0 0.0
  %3047 = vmatprep.subr.mxu0 0.0
  %3048 = vmatpush1.msra.mxu0 0.0
  %3049 = vmatprep.subr.mxu0 0.0
  %3050 = vmatpush1.msra.mxu0 0.0
  %3051 = vmatprep.subr.mxu0 0.0
  %3052 = vmatpush1.msra.mxu0 0.0
  %3053 = vmatprep.subr.mxu0 0.0
  %3054 = vmatpush1.msra.mxu0 0.0
  %3055 = vmatprep.subr.mxu0 0.0
  %3056 = vmatpush1.msra.mxu0 0.0
  %3057 = vmatprep.subr.mxu0 0.0
  %3058 = vmatpush1.msra.mxu0 0.0
  %3059 = vmatprep.subr.mxu0 0.0
  %3060 = vmatpush1.msra.mxu0 0.0
  %3061 = vmatprep.subr.mxu0 0.0
  %3062 = vmatpush1.msra.mxu0 0.0
  %3063 = vmatprep.subr.mxu0 0.0
  %3064 = vmatpush1.msra.mxu0 0.0
  %3065 = vmatprep.subr.mxu0 0.0
  %3066 = vmatpush1.msra.mxu0 0.0
  %3067 = vmatprep.subr.mxu0 0.0
  %3068 = vmatpush1.msra.mxu0 0.0
  %3069 = vmatprep.subr.mxu0 0.0
  %3070 = vmatpush1.msra.mxu0 0.0
  %3071 = vmatprep.subr.mxu0 0.0
  %3072 = vmatpush1.msra.mxu0 0.0
  %3073 = vmatprep.subr.mxu0 0.0
  %3074 = vmatpush1.msra.mxu0 0.0
  %3075 = vmatprep.subr.mxu0 0.0
  %3076 = vmatpush1.msra.mxu0 0.0
  %3077 = vmatprep.subr.mxu0 0.0
  %3078 = vmatpush1.msra.mxu0 0.0
  %3079 = vmatprep.subr.mxu0 0.0
  %3080 = vmatpush1.msra.mxu0 0.0
  %3081 = vmatprep.subr.mxu0 0.0
  %3082 = vmatpush1.msra.mxu0 0.0
  %3083 = vmatprep.subr.mxu0 0.0
  %3084 = vmatpush1.msra.mxu0 0.0
  %3085 = vmatprep.subr.mxu0 0.0
  %3086 = vmatpush1.msra.mxu0 0.0
  %3087 = vmatprep.subr.mxu0 0.0
  %3088 = vmatpush1.msra.mxu0 0.0
  %3089 = vmatprep.subr.mxu0 0.0
  %3090 = vmatpush1.msra.mxu0 0.0
  %3091 = vmatprep.mubr.f32.mxu0 0.0
  %3092 = vmatmul.mubr.f32.gmra.mrb[0].mxu0 %v3009
  %v3093 = vpop.f32.mrb[0].mxu0
  %v3094 = vadd.f32 0.0, %v3093
  %v3095 = vpop.f32.mrb[0].mxu0
  %v3096 = vadd.f32 0.0, %v3095
  %3097 = vdwg.mxu0
  %3098 = vmatprep.subr.mxu0 %v3017
  %3099 = vmatpush1.msra.mxu0 %v3015
  %3100 = vmatprep.subr.mxu0 0.0
  %3101 = vmatpush1.msra.mxu0 0.0
  %3102 = vmatprep.subr.mxu0 0.0
  %3103 = vmatpush1.msra.mxu0 0.0
  %3104 = vmatprep.subr.mxu0 0.0
  %3105 = vmatpush1.msra.mxu0 0.0
  %3106 = vmatprep.subr.mxu0 0.0
  %3107 = vmatpush1.msra.mxu0 0.0
  %3108 = vmatprep.subr.mxu0 0.0
  %3109 = vmatpush1.msra.mxu0 0.0
  %3110 = vmatprep.subr.mxu0 0.0
  %3111 = vmatpush1.msra.mxu0 0.0
  %3112 = vmatprep.subr.mxu0 0.0
  %3113 = vmatpush1.msra.mxu0 0.0
  %3114 = vmatprep.subr.mxu0 0.0
  %3115 = vmatpush1.msra.mxu0 0.0
  %3116 = vmatprep.subr.mxu0 0.0
  %3117 = vmatpush1.msra.mxu0 0.0
  %3118 = vmatprep.subr.mxu0 0.0
  %3119 = vmatpush1.msra.mxu0 0.0
  %3120 = vmatprep.subr.mxu0 0.0
  %3121 = vmatpush1.msra.mxu0 0.0
  %3122 = vmatprep.subr.mxu0 0.0
  %3123 = vmatpush1.msra.mxu0 0.0
  %3124 = vmatprep.subr.mxu0 0.0
  %3125 = vmatpush1.msra.mxu0 0.0
  %3126 = vmatprep.subr.mxu0 0.0
  %3127 = vmatpush1.msra.mxu0 0.0
  %3128 = vmatprep.subr.mxu0 0.0
  %3129 = vmatpush1.msra.mxu0 0.0
  %3130 = vmatprep.subr.mxu0 0.0
  %3131 = vmatpush1.msra.mxu0 0.0
  %3132 = vmatprep.subr.mxu0 0.0
  %3133 = vmatpush1.msra.mxu0 0.0
  %3134 = vmatprep.subr.mxu0 0.0
  %3135 = vmatpush1.msra.mxu0 0.0
  %3136 = vmatprep.subr.mxu0 0.0
  %3137 = vmatpush1.msra.mxu0 0.0
  %3138 = vmatprep.subr.mxu0 0.0
  %3139 = vmatpush1.msra.mxu0 0.0
  %3140 = vmatprep.subr.mxu0 0.0
  %3141 = vmatpush1.msra.mxu0 0.0
  %3142 = vmatprep.subr.mxu0 0.0
  %3143 = vmatpush1.msra.mxu0 0.0
  %3144 = vmatprep.subr.mxu0 0.0
  %3145 = vmatpush1.msra.mxu0 0.0
  %3146 = vmatprep.subr.mxu0 0.0
  %3147 = vmatpush1.msra.mxu0 0.0
  %3148 = vmatprep.subr.mxu0 0.0
  %3149 = vmatpush1.msra.mxu0 0.0
  %3150 = vmatprep.subr.mxu0 0.0
  %3151 = vmatpush1.msra.mxu0 0.0
  %3152 = vmatprep.subr.mxu0 0.0
  %3153 = vmatpush1.msra.mxu0 0.0
  %3154 = vmatprep.subr.mxu0 0.0
  %3155 = vmatpush1.msra.mxu0 0.0
  %3156 = vmatprep.subr.mxu0 0.0
  %3157 = vmatpush1.msra.mxu0 0.0
  %3158 = vmatprep.subr.mxu0 0.0
  %3159 = vmatpush1.msra.mxu0 0.0
  %3160 = vmatprep.subr.mxu0 0.0
  %3161 = vmatpush1.msra.mxu0 0.0
  %3162 = vmatprep.mubr.f32.mxu0 0.0
  %3163 = vmatmul.mubr.f32.gmra.mrb[0].mxu0 %v3009
  %v3164 = vpop.f32.mrb[0].mxu0
  %v3165 = vadd.f32 0.0, %v3164
  %v3166 = vpop.f32.mrb[0].mxu0
  %v3167 = vadd.f32 0.0, %v3166
  %3168 = vdwg.mxu0
  %3169 = vmatprep.subr.mxu0 %v3021
  %3170 = vmatpush1.msra.mxu0 %v3019
  %3171 = vmatprep.subr.mxu0 0.0
  %3172 = vmatpush1.msra.mxu0 0.0
  %3173 = vmatprep.subr.mxu0 0.0
  %3174 = vmatpush1.msra.mxu0 0.0
  %3175 = vmatprep.subr.mxu0 0.0
  %3176 = vmatpush1.msra.mxu0 0.0
  %3177 = vmatprep.subr.mxu0 0.0
  %3178 = vmatpush1.msra.mxu0 0.0
  %3179 = vmatprep.subr.mxu0 0.0
  %3180 = vmatpush1.msra.mxu0 0.0
  %3181 = vmatprep.subr.mxu0 0.0
  %3182 = vmatpush1.msra.mxu0 0.0
  %3183 = vmatprep.subr.mxu0 0.0
  %3184 = vmatpush1.msra.mxu0 0.0
  %3185 = vmatprep.subr.mxu0 0.0
  %3186 = vmatpush1.msra.mxu0 0.0
  %3187 = vmatprep.subr.mxu0 0.0
  %3188 = vmatpush1.msra.mxu0 0.0
  %3189 = vmatprep.subr.mxu0 0.0
  %3190 = vmatpush1.msra.mxu0 0.0
  %3191 = vmatprep.subr.mxu0 0.0
  %3192 = vmatpush1.msra.mxu0 0.0
  %3193 = vmatprep.subr.mxu0 0.0
  %3194 = vmatpush1.msra.mxu0 0.0
  %3195 = vmatprep.subr.mxu0 0.0
  %3196 = vmatpush1.msra.mxu0 0.0
  %3197 = vmatprep.subr.mxu0 0.0
  %3198 = vmatpush1.msra.mxu0 0.0
  %3199 = vmatprep.subr.mxu0 0.0
  %3200 = vmatpush1.msra.mxu0 0.0
  %3201 = vmatprep.subr.mxu0 0.0
  %3202 = vmatpush1.msra.mxu0 0.0
  %3203 = vmatprep.subr.mxu0 0.0
  %3204 = vmatpush1.msra.mxu0 0.0
  %3205 = vmatprep.subr.mxu0 0.0
  %3206 = vmatpush1.msra.mxu0 0.0
  %3207 = vmatprep.subr.mxu0 0.0
  %3208 = vmatpush1.msra.mxu0 0.0
  %3209 = vmatprep.subr.mxu0 0.0
  %3210 = vmatpush1.msra.mxu0 0.0
  %3211 = vmatprep.subr.mxu0 0.0
  %3212 = vmatpush1.msra.mxu0 0.0
  %3213 = vmatprep.subr.mxu0 0.0
  %3214 = vmatpush1.msra.mxu0 0.0
  %3215 = vmatprep.subr.mxu0 0.0
  %3216 = vmatpush1.msra.mxu0 0.0
  %3217 = vmatprep.subr.mxu0 0.0
  %3218 = vmatpush1.msra.mxu0 0.0
  %3219 = vmatprep.subr.mxu0 0.0
  %3220 = vmatpush1.msra.mxu0 0.0
  %3221 = vmatprep.subr.mxu0 0.0
  %3222 = vmatpush1.msra.mxu0 0.0
  %3223 = vmatprep.subr.mxu0 0.0
  %3224 = vmatpush1.msra.mxu0 0.0
  %3225 = vmatprep.subr.mxu0 0.0
  %3226 = vmatpush1.msra.mxu0 0.0
  %3227 = vmatprep.subr.mxu0 0.0
  %3228 = vmatpush1.msra.mxu0 0.0
  %3229 = vmatprep.subr.mxu0 0.0
  %3230 = vmatpush1.msra.mxu0 0.0
  %3231 = vmatprep.subr.mxu0 0.0
  %3232 = vmatpush1.msra.mxu0 0.0
  %3233 = vmatprep.mubr.f32.mxu0 0.0
  %3234 = vmatmul.mubr.f32.gmra.mrb[0].mxu0 %v3009
  %v3235 = vpop.f32.mrb[0].mxu0
  %v3236 = vadd.f32 0.0, %v3235
  %v3237 = vpop.f32.mrb[0].mxu0
  %v3238 = vadd.f32 0.0, %v3237
  %3239 = vdwg.mxu0
  %3240 = vmatprep.subr.mxu0 %v3025
  %3241 = vmatpush1.msra.mxu0 %v3023
  %3242 = vmatprep.subr.mxu0 0.0
  %3243 = vmatpush1.msra.mxu0 0.0
  %3244 = vmatprep.subr.mxu0 0.0
  %3245 = vmatpush1.msra.mxu0 0.0
  %3246 = vmatprep.subr.mxu0 0.0
  %3247 = vmatpush1.msra.mxu0 0.0
  %3248 = vmatprep.subr.mxu0 0.0
  %3249 = vmatpush1.msra.mxu0 0.0
  %3250 = vmatprep.subr.mxu0 0.0
  %3251 = vmatpush1.msra.mxu0 0.0
  %3252 = vmatprep.subr.mxu0 0.0
  %3253 = vmatpush1.msra.mxu0 0.0
  %3254 = vmatprep.subr.mxu0 0.0
  %3255 = vmatpush1.msra.mxu0 0.0
  %3256 = vmatprep.subr.mxu0 0.0
  %3257 = vmatpush1.msra.mxu0 0.0
  %3258 = vmatprep.subr.mxu0 0.0
  %3259 = vmatpush1.msra.mxu0 0.0
  %3260 = vmatprep.subr.mxu0 0.0
  %3261 = vmatpush1.msra.mxu0 0.0
  %3262 = vmatprep.subr.mxu0 0.0
  %3263 = vmatpush1.msra.mxu0 0.0
  %3264 = vmatprep.subr.mxu0 0.0
  %3265 = vmatpush1.msra.mxu0 0.0
  %3266 = vmatprep.subr.mxu0 0.0
  %3267 = vmatpush1.msra.mxu0 0.0
  %3268 = vmatprep.subr.mxu0 0.0
  %3269 = vmatpush1.msra.mxu0 0.0
  %3270 = vmatprep.subr.mxu0 0.0
  %3271 = vmatpush1.msra.mxu0 0.0
  %3272 = vmatprep.subr.mxu0 0.0
  %3273 = vmatpush1.msra.mxu0 0.0
  %3274 = vmatprep.subr.mxu0 0.0
  %3275 = vmatpush1.msra.mxu0 0.0
  %3276 = vmatprep.subr.mxu0 0.0
  %3277 = vmatpush1.msra.mxu0 0.0
  %3278 = vmatprep.subr.mxu0 0.0
  %3279 = vmatpush1.msra.mxu0 0.0
  %3280 = vmatprep.subr.mxu0 0.0
  %3281 = vmatpush1.msra.mxu0 0.0
  %3282 = vmatprep.subr.mxu0 0.0
  %3283 = vmatpush1.msra.mxu0 0.0
  %3284 = vmatprep.subr.mxu0 0.0
  %3285 = vmatpush1.msra.mxu0 0.0
  %3286 = vmatprep.subr.mxu0 0.0
  %3287 = vmatpush1.msra.mxu0 0.0
  %3288 = vmatprep.subr.mxu0 0.0
  %3289 = vmatpush1.msra.mxu0 0.0
  %3290 = vmatprep.subr.mxu0 0.0
  %3291 = vmatpush1.msra.mxu0 0.0
  %3292 = vmatprep.subr.mxu0 0.0
  %3293 = vmatpush1.msra.mxu0 0.0
  %3294 = vmatprep.subr.mxu0 0.0
  %3295 = vmatpush1.msra.mxu0 0.0
  %3296 = vmatprep.subr.mxu0 0.0
  %3297 = vmatpush1.msra.mxu0 0.0
  %3298 = vmatprep.subr.mxu0 0.0
  %3299 = vmatpush1.msra.mxu0 0.0
  %3300 = vmatprep.subr.mxu0 0.0
  %3301 = vmatpush1.msra.mxu0 0.0
  %3302 = vmatprep.subr.mxu0 0.0
  %3303 = vmatpush1.msra.mxu0 0.0
  %3304 = vmatprep.mubr.f32.mxu0 0.0
  %3305 = vmatmul.mubr.f32.gmra.mrb[0].mxu0 %v3009
  %v3306 = vpop.f32.mrb[0].mxu0
  %v3307 = vadd.f32 0.0, %v3306
  %v3308 = vpop.f32.mrb[0].mxu0
  %v3309 = vadd.f32 0.0, %v3308
  %3310 = vdwg.mxu0
  %v3311 = vadd.f32 %v2888, %v3094
  %v3312 = vadd.f32 %v2889, %v3096
  %v3313 = vadd.f32 %v2890, %v3165
  %v3314 = vadd.f32 %v2891, %v3167
  %v3315 = vadd.f32 %v2892, %v3236
  %v3316 = vadd.f32 %v2893, %v3238
  %v3317 = vadd.f32 %v2894, %v3307
  %v3318 = vadd.f32 %v2895, %v3309
  %v3319 = vld [vmem:[#allocation2 + $0x4] sm:$0xff]
  %v3320 = vld [vmem:[#allocation2 + $0xc] sm:$0xff]
  %v3321 = vld [vmem:[#allocation2 + $0x14] sm:$0xff]
  %v3322 = vld [vmem:[#allocation2 + $0x1c] sm:$0xff]
  %v3323 = vld [vmem:[#allocation2 + $0x24] sm:$0xf]
  %s3324 = scalar_lea.vmem %s8, 64
  %v3325 = vld [vmem:[%s3324] ss:$8 sm:$0xf]
  %v3326 = vld [vmem:[%s3324] ss:$8 sm:$0xf0]
  %v3327 = vor.u32 %v3325, %v3326
  %v3329 = vlaneseq
  %v3330 = vshrl.u32 %v3329, 7
  %v3331 = vsub.s32 0, %v3330
  %v3332 = vrot.slane %v3327, %v3331
  %v3333 = vlaneseq
  %v3334 = vshrl.u32 %v3333, 7
  %v3335 = vsub.s32 1, %v3334
  %v3336 = vrot.slane %v3327, %v3335
  %v3337 = vlaneseq
  %v3338 = vshrl.u32 %v3337, 7
  %v3339 = vsub.s32 2, %v3338
  %v3340 = vrot.slane %v3327, %v3339
  %v3341 = vlaneseq
  %v3342 = vshrl.u32 %v3341, 7
  %v3343 = vsub.s32 3, %v3342
  %v3344 = vrot.slane %v3327, %v3343
  %v3345 = vlaneseq
  %v3346 = vshrl.u32 %v3345, 7
  %v3347 = vsub.s32 4, %v3346
  %v3348 = vrot.slane %v3327, %v3347
  %v3349 = vlaneseq
  %v3350 = vshrl.u32 %v3349, 7
  %v3351 = vsub.s32 5, %v3350
  %v3352 = vrot.slane %v3327, %v3351
  %v3353 = vlaneseq
  %v3354 = vshrl.u32 %v3353, 7
  %v3355 = vsub.s32 6, %v3354
  %v3356 = vrot.slane %v3327, %v3355
  %v3357 = vlaneseq
  %v3358 = vshrl.u32 %v3357, 7
  %v3359 = vsub.s32 7, %v3358
  %v3360 = vrot.slane %v3327, %v3359
  %v3361 = vcombine.low %v3332, %v3336
  %v3362 = vcombine.low %v3340, %v3344
  %v3363 = vcombine.low %v3348, %v3352
  %v3364 = vcombine.low %v3356, %v3360
  %3365 = vrot.lane.b32.xlu0 %v3361, 17
  %v3366 = vpop.permute.xlu0 %3365
  %3367 = vrot.lane.b32.xlu0 %v3362, 17
  %v3368 = vpop.permute.xlu0 %3367
  %3369 = vrot.lane.b32.xlu0 %v3363, 17
  %v3370 = vpop.permute.xlu0 %3369
  %3371 = vrot.lane.b32.xlu0 %v3364, 17
  %v3372 = vpop.permute.xlu0 %3371
  %v3373 = vrot.slane %v3366, 4
  %v3374 = vrot.slane %v3368, 4
  %v3375 = vrot.slane %v3370, 4
  %v3376 = vrot.slane %v3372, 4
  %v3377 = vsel %vm563, %v3373, %v3366
  %v3378 = vsel %vm105, %v3373, %v3374
  %v3379 = vsel %vm563, %v3378, %v3368
  %v3380 = vsel %vm105, %v3374, %v3375
  %v3381 = vsel %vm563, %v3380, %v3370
  %v3382 = vsel %vm105, %v3375, %v3376
  %v3383 = vsel %vm563, %v3382, %v3372
  %v3389 = vmul.f32 %v3319, %v3377
  %v3390 = vmul.f32 %v3320, %v3379
  %v3391 = vmul.f32 %v3321, %v3381
  %v3392 = vmul.f32 %v3322, %v3383
  %v3393 = vmul.f32 %v3323, %v3376
  %s3394 = scalar_lea.vmem %s2, 32
  %v3395 = vld [vmem:[%s3394] sm:$0xf]
  %v3401 = vcombine.high %v3389, %v3389
  %v3402 = vcombine.high %v3390, %v3390
  %v3403 = vcombine.high %v3391, %v3391
  %v3404 = vcombine.high %v3392, %v3392
  %3405 = vrot.lane.b32.xlu0 %v3389, 111
  %v3406 = vpop.permute.xlu0 %3405
  %3407 = vrot.lane.b32.xlu0 %v3401, 111
  %v3408 = vpop.permute.xlu0 %3407
  %3409 = vrot.lane.b32.xlu0 %v3390, 111
  %v3410 = vpop.permute.xlu0 %3409
  %3411 = vrot.lane.b32.xlu0 %v3402, 111
  %v3412 = vpop.permute.xlu0 %3411
  %3413 = vrot.lane.b32.xlu0 %v3391, 111
  %v3414 = vpop.permute.xlu0 %3413
  %3415 = vrot.lane.b32.xlu0 %v3403, 111
  %v3416 = vpop.permute.xlu0 %3415
  %3417 = vrot.lane.b32.xlu0 %v3392, 111
  %v3418 = vpop.permute.xlu0 %3417
  %3419 = vrot.lane.b32.xlu0 %v3404, 111
  %v3420 = vpop.permute.xlu0 %3419
  %3421 = vrot.lane.b32.xlu0 %v3393, 111
  %v3422 = vpop.permute.xlu0 %3421
  %v3423 = vsel %vm103, %v3406, %v3408
  %v3424 = vsel %vm103, %v3408, %v3410
  %v3425 = vsel %vm103, %v3410, %v3412
  %v3426 = vsel %vm103, %v3412, %v3414
  %v3427 = vsel %vm103, %v3414, %v3416
  %v3428 = vsel %vm103, %v3416, %v3418
  %v3429 = vsel %vm103, %v3418, %v3420
  %v3430 = vsel %vm103, %v3420, %v3422
  %v3432 = vsel %vm232, %v3395, 0
  %v3434 = vsel %vm105, %v3423, 0
  %v3436 = vsel %vm105, %v3424, 0
  %v3438 = vsel %vm105, %v3425, 0
  %v3440 = vsel %vm105, %v3426, 0
  %v3442 = vsel %vm105, %v3427, 0
  %v3444 = vsel %vm105, %v3428, 0
  %v3446 = vsel %vm105, %v3429, 0
  %v3448 = vsel %vm105, %v3430, 0
  %3450 = vmatprep.subr.mxu0 %v3436
  %3451 = vmatpush1.msra.mxu0 %v3434
  %3452 = vmatprep.subr.mxu0 0.0
  %3453 = vmatpush1.msra.mxu0 0.0
  %3454 = vmatprep.subr.mxu0 0.0
  %3455 = vmatpush1.msra.mxu0 0.0
  %3456 = vmatprep.subr.mxu0 0.0
  %3457 = vmatpush1.msra.mxu0 0.0
  %3458 = vmatprep.subr.mxu0 0.0
  %3459 = vmatpush1.msra.mxu0 0.0
  %3460 = vmatprep.subr.mxu0 0.0
  %3461 = vmatpush1.msra.mxu0 0.0
  %3462 = vmatprep.subr.mxu0 0.0
  %3463 = vmatpush1.msra.mxu0 0.0
  %3464 = vmatprep.subr.mxu0 0.0
  %3465 = vmatpush1.msra.mxu0 0.0
  %3466 = vmatprep.subr.mxu0 0.0
  %3467 = vmatpush1.msra.mxu0 0.0
  %3468 = vmatprep.subr.mxu0 0.0
  %3469 = vmatpush1.msra.mxu0 0.0
  %3470 = vmatprep.subr.mxu0 0.0
  %3471 = vmatpush1.msra.mxu0 0.0
  %3472 = vmatprep.subr.mxu0 0.0
  %3473 = vmatpush1.msra.mxu0 0.0
  %3474 = vmatprep.subr.mxu0 0.0
  %3475 = vmatpush1.msra.mxu0 0.0
  %3476 = vmatprep.subr.mxu0 0.0
  %3477 = vmatpush1.msra.mxu0 0.0
  %3478 = vmatprep.subr.mxu0 0.0
  %3479 = vmatpush1.msra.mxu0 0.0
  %3480 = vmatprep.subr.mxu0 0.0
  %3481 = vmatpush1.msra.mxu0 0.0
  %3482 = vmatprep.subr.mxu0 0.0
  %3483 = vmatpush1.msra.mxu0 0.0
  %3484 = vmatprep.subr.mxu0 0.0
  %3485 = vmatpush1.msra.mxu0 0.0
  %3486 = vmatprep.subr.mxu0 0.0
  %3487 = vmatpush1.msra.mxu0 0.0
  %3488 = vmatprep.subr.mxu0 0.0
  %3489 = vmatpush1.msra.mxu0 0.0
  %3490 = vmatprep.subr.mxu0 0.0
  %3491 = vmatpush1.msra.mxu0 0.0
  %3492 = vmatprep.subr.mxu0 0.0
  %3493 = vmatpush1.msra.mxu0 0.0
  %3494 = vmatprep.subr.mxu0 0.0
  %3495 = vmatpush1.msra.mxu0 0.0
  %3496 = vmatprep.subr.mxu0 0.0
  %3497 = vmatpush1.msra.mxu0 0.0
  %3498 = vmatprep.subr.mxu0 0.0
  %3499 = vmatpush1.msra.mxu0 0.0
  %3500 = vmatprep.subr.mxu0 0.0
  %3501 = vmatpush1.msra.mxu0 0.0
  %3502 = vmatprep.subr.mxu0 0.0
  %3503 = vmatpush1.msra.mxu0 0.0
  %3504 = vmatprep.subr.mxu0 0.0
  %3505 = vmatpush1.msra.mxu0 0.0
  %3506 = vmatprep.subr.mxu0 0.0
  %3507 = vmatpush1.msra.mxu0 0.0
  %3508 = vmatprep.subr.mxu0 0.0
  %3509 = vmatpush1.msra.mxu0 0.0
  %3510 = vmatprep.subr.mxu0 0.0
  %3511 = vmatpush1.msra.mxu0 0.0
  %3512 = vmatprep.subr.mxu0 0.0
  %3513 = vmatpush1.msra.mxu0 0.0
  %3514 = vmatprep.mubr.f32.mxu0 0.0
  %3515 = vmatmul.mubr.f32.gmra.mrb[0].mxu0 %v3432
  %v3516 = vpop.f32.mrb[0].mxu0
  %v3517 = vadd.f32 0.0, %v3516
  %v3518 = vpop.f32.mrb[0].mxu0
  %v3519 = vadd.f32 0.0, %v3518
  %3520 = vdwg.mxu0
  %3521 = vmatprep.subr.mxu0 %v3440
  %3522 = vmatpush1.msra.mxu0 %v3438
  %3523 = vmatprep.subr.mxu0 0.0
  %3524 = vmatpush1.msra.mxu0 0.0
  %3525 = vmatprep.subr.mxu0 0.0
  %3526 = vmatpush1.msra.mxu0 0.0
  %3527 = vmatprep.subr.mxu0 0.0
  %3528 = vmatpush1.msra.mxu0 0.0
  %3529 = vmatprep.subr.mxu0 0.0
  %3530 = vmatpush1.msra.mxu0 0.0
  %3531 = vmatprep.subr.mxu0 0.0
  %3532 = vmatpush1.msra.mxu0 0.0
  %3533 = vmatprep.subr.mxu0 0.0
  %3534 = vmatpush1.msra.mxu0 0.0
  %3535 = vmatprep.subr.mxu0 0.0
  %3536 = vmatpush1.msra.mxu0 0.0
  %3537 = vmatprep.subr.mxu0 0.0
  %3538 = vmatpush1.msra.mxu0 0.0
  %3539 = vmatprep.subr.mxu0 0.0
  %3540 = vmatpush1.msra.mxu0 0.0
  %3541 = vmatprep.subr.mxu0 0.0
  %3542 = vmatpush1.msra.mxu0 0.0
  %3543 = vmatprep.subr.mxu0 0.0
  %3544 = vmatpush1.msra.mxu0 0.0
  %3545 = vmatprep.subr.mxu0 0.0
  %3546 = vmatpush1.msra.mxu0 0.0
  %3547 = vmatprep.subr.mxu0 0.0
  %3548 = vmatpush1.msra.mxu0 0.0
  %3549 = vmatprep.subr.mxu0 0.0
  %3550 = vmatpush1.msra.mxu0 0.0
  %3551 = vmatprep.subr.mxu0 0.0
  %3552 = vmatpush1.msra.mxu0 0.0
  %3553 = vmatprep.subr.mxu0 0.0
  %3554 = vmatpush1.msra.mxu0 0.0
  %3555 = vmatprep.subr.mxu0 0.0
  %3556 = vmatpush1.msra.mxu0 0.0
  %3557 = vmatprep.subr.mxu0 0.0
  %3558 = vmatpush1.msra.mxu0 0.0
  %3559 = vmatprep.subr.mxu0 0.0
  %3560 = vmatpush1.msra.mxu0 0.0
  %3561 = vmatprep.subr.mxu0 0.0
  %3562 = vmatpush1.msra.mxu0 0.0
  %3563 = vmatprep.subr.mxu0 0.0
  %3564 = vmatpush1.msra.mxu0 0.0
  %3565 = vmatprep.subr.mxu0 0.0
  %3566 = vmatpush1.msra.mxu0 0.0
  %3567 = vmatprep.subr.mxu0 0.0
  %3568 = vmatpush1.msra.mxu0 0.0
  %3569 = vmatprep.subr.mxu0 0.0
  %3570 = vmatpush1.msra.mxu0 0.0
  %3571 = vmatprep.subr.mxu0 0.0
  %3572 = vmatpush1.msra.mxu0 0.0
  %3573 = vmatprep.subr.mxu0 0.0
  %3574 = vmatpush1.msra.mxu0 0.0
  %3575 = vmatprep.subr.mxu0 0.0
  %3576 = vmatpush1.msra.mxu0 0.0
  %3577 = vmatprep.subr.mxu0 0.0
  %3578 = vmatpush1.msra.mxu0 0.0
  %3579 = vmatprep.subr.mxu0 0.0
  %3580 = vmatpush1.msra.mxu0 0.0
  %3581 = vmatprep.subr.mxu0 0.0
  %3582 = vmatpush1.msra.mxu0 0.0
  %3583 = vmatprep.subr.mxu0 0.0
  %3584 = vmatpush1.msra.mxu0 0.0
  %3585 = vmatprep.mubr.f32.mxu0 0.0
  %3586 = vmatmul.mubr.f32.gmra.mrb[0].mxu0 %v3432
  %v3587 = vpop.f32.mrb[0].mxu0
  %v3588 = vadd.f32 0.0, %v3587
  %v3589 = vpop.f32.mrb[0].mxu0
  %v3590 = vadd.f32 0.0, %v3589
  %3591 = vdwg.mxu0
  %3592 = vmatprep.subr.mxu0 %v3444
  %3593 = vmatpush1.msra.mxu0 %v3442
  %3594 = vmatprep.subr.mxu0 0.0
  %3595 = vmatpush1.msra.mxu0 0.0
  %3596 = vmatprep.subr.mxu0 0.0
  %3597 = vmatpush1.msra.mxu0 0.0
  %3598 = vmatprep.subr.mxu0 0.0
  %3599 = vmatpush1.msra.mxu0 0.0
  %3600 = vmatprep.subr.mxu0 0.0
  %3601 = vmatpush1.msra.mxu0 0.0
  %3602 = vmatprep.subr.mxu0 0.0
  %3603 = vmatpush1.msra.mxu0 0.0
  %3604 = vmatprep.subr.mxu0 0.0
  %3605 = vmatpush1.msra.mxu0 0.0
  %3606 = vmatprep.subr.mxu0 0.0
  %3607 = vmatpush1.msra.mxu0 0.0
  %3608 = vmatprep.subr.mxu0 0.0
  %3609 = vmatpush1.msra.mxu0 0.0
  %3610 = vmatprep.subr.mxu0 0.0
  %3611 = vmatpush1.msra.mxu0 0.0
  %3612 = vmatprep.subr.mxu0 0.0
  %3613 = vmatpush1.msra.mxu0 0.0
  %3614 = vmatprep.subr.mxu0 0.0
  %3615 = vmatpush1.msra.mxu0 0.0
  %3616 = vmatprep.subr.mxu0 0.0
  %3617 = vmatpush1.msra.mxu0 0.0
  %3618 = vmatprep.subr.mxu0 0.0
  %3619 = vmatpush1.msra.mxu0 0.0
  %3620 = vmatprep.subr.mxu0 0.0
  %3621 = vmatpush1.msra.mxu0 0.0
  %3622 = vmatprep.subr.mxu0 0.0
  %3623 = vmatpush1.msra.mxu0 0.0
  %3624 = vmatprep.subr.mxu0 0.0
  %3625 = vmatpush1.msra.mxu0 0.0
  %3626 = vmatprep.subr.mxu0 0.0
  %3627 = vmatpush1.msra.mxu0 0.0
  %3628 = vmatprep.subr.mxu0 0.0
  %3629 = vmatpush1.msra.mxu0 0.0
  %3630 = vmatprep.subr.mxu0 0.0
  %3631 = vmatpush1.msra.mxu0 0.0
  %3632 = vmatprep.subr.mxu0 0.0
  %3633 = vmatpush1.msra.mxu0 0.0
  %3634 = vmatprep.subr.mxu0 0.0
  %3635 = vmatpush1.msra.mxu0 0.0
  %3636 = vmatprep.subr.mxu0 0.0
  %3637 = vmatpush1.msra.mxu0 0.0
  %3638 = vmatprep.subr.mxu0 0.0
  %3639 = vmatpush1.msra.mxu0 0.0
  %3640 = vmatprep.subr.mxu0 0.0
  %3641 = vmatpush1.msra.mxu0 0.0
  %3642 = vmatprep.subr.mxu0 0.0
  %3643 = vmatpush1.msra.mxu0 0.0
  %3644 = vmatprep.subr.mxu0 0.0
  %3645 = vmatpush1.msra.mxu0 0.0
  %3646 = vmatprep.subr.mxu0 0.0
  %3647 = vmatpush1.msra.mxu0 0.0
  %3648 = vmatprep.subr.mxu0 0.0
  %3649 = vmatpush1.msra.mxu0 0.0
  %3650 = vmatprep.subr.mxu0 0.0
  %3651 = vmatpush1.msra.mxu0 0.0
  %3652 = vmatprep.subr.mxu0 0.0
  %3653 = vmatpush1.msra.mxu0 0.0
  %3654 = vmatprep.subr.mxu0 0.0
  %3655 = vmatpush1.msra.mxu0 0.0
  %3656 = vmatprep.mubr.f32.mxu0 0.0
  %3657 = vmatmul.mubr.f32.gmra.mrb[0].mxu0 %v3432
  %v3658 = vpop.f32.mrb[0].mxu0
  %v3659 = vadd.f32 0.0, %v3658
  %v3660 = vpop.f32.mrb[0].mxu0
  %v3661 = vadd.f32 0.0, %v3660
  %3662 = vdwg.mxu0
  %3663 = vmatprep.subr.mxu0 %v3448
  %3664 = vmatpush1.msra.mxu0 %v3446
  %3665 = vmatprep.subr.mxu0 0.0
  %3666 = vmatpush1.msra.mxu0 0.0
  %3667 = vmatprep.subr.mxu0 0.0
  %3668 = vmatpush1.msra.mxu0 0.0
  %3669 = vmatprep.subr.mxu0 0.0
  %3670 = vmatpush1.msra.mxu0 0.0
  %3671 = vmatprep.subr.mxu0 0.0
  %3672 = vmatpush1.msra.mxu0 0.0
  %3673 = vmatprep.subr.mxu0 0.0
  %3674 = vmatpush1.msra.mxu0 0.0
  %3675 = vmatprep.subr.mxu0 0.0
  %3676 = vmatpush1.msra.mxu0 0.0
  %3677 = vmatprep.subr.mxu0 0.0
  %3678 = vmatpush1.msra.mxu0 0.0
  %3679 = vmatprep.subr.mxu0 0.0
  %3680 = vmatpush1.msra.mxu0 0.0
  %3681 = vmatprep.subr.mxu0 0.0
  %3682 = vmatpush1.msra.mxu0 0.0
  %3683 = vmatprep.subr.mxu0 0.0
  %3684 = vmatpush1.msra.mxu0 0.0
  %3685 = vmatprep.subr.mxu0 0.0
  %3686 = vmatpush1.msra.mxu0 0.0
  %3687 = vmatprep.subr.mxu0 0.0
  %3688 = vmatpush1.msra.mxu0 0.0
  %3689 = vmatprep.subr.mxu0 0.0
  %3690 = vmatpush1.msra.mxu0 0.0
  %3691 = vmatprep.subr.mxu0 0.0
  %3692 = vmatpush1.msra.mxu0 0.0
  %3693 = vmatprep.subr.mxu0 0.0
  %3694 = vmatpush1.msra.mxu0 0.0
  %3695 = vmatprep.subr.mxu0 0.0
  %3696 = vmatpush1.msra.mxu0 0.0
  %3697 = vmatprep.subr.mxu0 0.0
  %3698 = vmatpush1.msra.mxu0 0.0
  %3699 = vmatprep.subr.mxu0 0.0
  %3700 = vmatpush1.msra.mxu0 0.0
  %3701 = vmatprep.subr.mxu0 0.0
  %3702 = vmatpush1.msra.mxu0 0.0
  %3703 = vmatprep.subr.mxu0 0.0
  %3704 = vmatpush1.msra.mxu0 0.0
  %3705 = vmatprep.subr.mxu0 0.0
  %3706 = vmatpush1.msra.mxu0 0.0
  %3707 = vmatprep.subr.mxu0 0.0
  %3708 = vmatpush1.msra.mxu0 0.0
  %3709 = vmatprep.subr.mxu0 0.0
  %3710 = vmatpush1.msra.mxu0 0.0
  %3711 = vmatprep.subr.mxu0 0.0
  %3712 = vmatpush1.msra.mxu0 0.0
  %3713 = vmatprep.subr.mxu0 0.0
  %3714 = vmatpush1.msra.mxu0 0.0
  %3715 = vmatprep.subr.mxu0 0.0
  %3716 = vmatpush1.msra.mxu0 0.0
  %3717 = vmatprep.subr.mxu0 0.0
  %3718 = vmatpush1.msra.mxu0 0.0
  %3719 = vmatprep.subr.mxu0 0.0
  %3720 = vmatpush1.msra.mxu0 0.0
  %3721 = vmatprep.subr.mxu0 0.0
  %3722 = vmatpush1.msra.mxu0 0.0
  %3723 = vmatprep.subr.mxu0 0.0
  %3724 = vmatpush1.msra.mxu0 0.0
  %3725 = vmatprep.subr.mxu0 0.0
  %3726 = vmatpush1.msra.mxu0 0.0
  %3727 = vmatprep.mubr.f32.mxu0 0.0
  %3728 = vmatmul.mubr.f32.gmra.mrb[0].mxu0 %v3432
  %v3729 = vpop.f32.mrb[0].mxu0
  %v3730 = vadd.f32 0.0, %v3729
  %v3731 = vpop.f32.mrb[0].mxu0
  %v3732 = vadd.f32 0.0, %v3731
  %3733 = vdwg.mxu0
  %v3734 = vadd.f32 %v3311, %v3517
  %v3735 = vadd.f32 %v3312, %v3519
  %v3736 = vadd.f32 %v3313, %v3588
  %v3737 = vadd.f32 %v3314, %v3590
  %v3738 = vadd.f32 %v3315, %v3659
  %v3739 = vadd.f32 %v3316, %v3661
  %v3740 = vadd.f32 %v3317, %v3730
  %v3741 = vadd.f32 %v3318, %v3732
  %v3742 = vld [vmem:[%s3] sm:$0xf]
  %3744 = vset.pattern.permute.xlu0 0
  %3745 = vperm.xlu0 %3744, %v3742
  %v3746 = vpop.permute.xlu0 %3745
  %v3748 = vadd.f32 %v3734, %v3746
  %v3749 = vadd.f32 %v3735, %v3746
  %v3750 = vadd.f32 %v3736, %v3746
  %v3751 = vadd.f32 %v3737, %v3746
  %v3752 = vadd.f32 %v3738, %v3746
  %v3753 = vadd.f32 %v3739, %v3746
  %v3754 = vadd.f32 %v3740, %v3746
  %v3755 = vadd.f32 %v3741, %v3746
  %v3756 = vmax.f32 %v3748, 0.0
  %v3757 = vmax.f32 %v3749, 0.0
  %v3758 = vmax.f32 %v3750, 0.0
  %v3759 = vmax.f32 %v3751, 0.0
  %v3760 = vmax.f32 %v3752, 0.0
  %v3761 = vmax.f32 %v3753, 0.0
  %v3762 = vmax.f32 %v3754, 0.0
  %v3763 = vmax.f32 %v3755, 0.0
  %v3772 = vcombine.low %v3756, %v3757
  %v3773 = vcombine.low %v3758, %v3759
  %v3774 = vcombine.low %v3760, %v3761
  %v3775 = vcombine.low %v3762, %v3763
  %3780 = vst [vmem:[#allocation3 + $0x4] sm:$0xff] %v3772
  %3781 = vst [vmem:[#allocation3 + $0xc] sm:$0xff] %v3773
  %3782 = vst [vmem:[#allocation3 + $0x14] sm:$0xff] %v3774
  %3783 = vst [vmem:[#allocation3 + $0x1c] sm:$0xff] %v3775
  %v3784 = vld [vmem:[#allocation3] sm:$0xff]
  %v3785 = vld [vmem:[#allocation3 + $0x8] sm:$0xff]
  %v3786 = vld [vmem:[#allocation3 + $0x10] sm:$0xff]
  %v3787 = vld [vmem:[#allocation3 + $0x18] sm:$0xff]
  %v3788 = vld [vmem:[#allocation3 + $0x20] sm:$0xf]
  %v3789 = vld [vmem:[%s8] ss:$8 sm:$0xf]
  %v3790 = vld [vmem:[%s8] ss:$8 sm:$0xf0]
  %v3791 = vor.u32 %v3789, %v3790
  %v3793 = vlaneseq
  %v3794 = vshrl.u32 %v3793, 7
  %v3795 = vsub.s32 0, %v3794
  %v3796 = vrot.slane %v3791, %v3795
  %v3797 = vlaneseq
  %v3798 = vshrl.u32 %v3797, 7
  %v3799 = vsub.s32 1, %v3798
  %v3800 = vrot.slane %v3791, %v3799
  %v3801 = vlaneseq
  %v3802 = vshrl.u32 %v3801, 7
  %v3803 = vsub.s32 2, %v3802
  %v3804 = vrot.slane %v3791, %v3803
  %v3805 = vlaneseq
  %v3806 = vshrl.u32 %v3805, 7
  %v3807 = vsub.s32 3, %v3806
  %v3808 = vrot.slane %v3791, %v3807
  %v3809 = vlaneseq
  %v3810 = vshrl.u32 %v3809, 7
  %v3811 = vsub.s32 4, %v3810
  %v3812 = vrot.slane %v3791, %v3811
  %v3813 = vlaneseq
  %v3814 = vshrl.u32 %v3813, 7
  %v3815 = vsub.s32 5, %v3814
  %v3816 = vrot.slane %v3791, %v3815
  %v3817 = vlaneseq
  %v3818 = vshrl.u32 %v3817, 7
  %v3819 = vsub.s32 6, %v3818
  %v3820 = vrot.slane %v3791, %v3819
  %v3821 = vlaneseq
  %v3822 = vshrl.u32 %v3821, 7
  %v3823 = vsub.s32 7, %v3822
  %v3824 = vrot.slane %v3791, %v3823
  %v3825 = vcombine.low %v3796, %v3800
  %v3826 = vcombine.low %v3804, %v3808
  %v3827 = vcombine.low %v3812, %v3816
  %v3828 = vcombine.low %v3820, %v3824
  %3829 = vrot.lane.b32.xlu0 %v3825, 111
  %v3830 = vpop.permute.xlu0 %3829
  %3831 = vrot.lane.b32.xlu0 %v3826, 111
  %v3832 = vpop.permute.xlu0 %3831
  %3833 = vrot.lane.b32.xlu0 %v3827, 111
  %v3834 = vpop.permute.xlu0 %3833
  %3835 = vrot.lane.b32.xlu0 %v3828, 111
  %v3836 = vpop.permute.xlu0 %3835
  %v3837 = vrot.slane %v3830, 4
  %v3838 = vrot.slane %v3832, 4
  %v3839 = vrot.slane %v3834, 4
  %v3840 = vrot.slane %v3836, 4
  %v3841 = vsel %vm103, %v3837, %v3830
  %v3842 = vsel %vm105, %v3837, %v3838
  %v3843 = vsel %vm103, %v3842, %v3832
  %v3844 = vsel %vm105, %v3838, %v3839
  %v3845 = vsel %vm103, %v3844, %v3834
  %v3846 = vsel %vm105, %v3839, %v3840
  %v3847 = vsel %vm103, %v3846, %v3836
  %v3853 = vmul.f32 %v3784, %v3841
  %v3854 = vmul.f32 %v3785, %v3843
  %v3855 = vmul.f32 %v3786, %v3845
  %v3856 = vmul.f32 %v3787, %v3847
  %v3857 = vmul.f32 %v3788, %v3840
  %s3858 = scalar_lea.vmem %s2, 36
  %v3859 = vld [vmem:[%s3858] sm:$0xf]
  %v3860 = vld [vmem:[%s123] ss:$8 sm:$0xf]
  %v3861 = vld [vmem:[%s123] ss:$8 sm:$0xf0]
  %v3862 = vor.u32 %v3860, %v3861
  %v3864 = vlaneseq
  %v3865 = vshrl.u32 %v3864, 7
  %v3866 = vsub.s32 0, %v3865
  %v3867 = vrot.slane %v3862, %v3866
  %v3868 = vlaneseq
  %v3869 = vshrl.u32 %v3868, 7
  %v3870 = vsub.s32 1, %v3869
  %v3871 = vrot.slane %v3862, %v3870
  %v3872 = vlaneseq
  %v3873 = vshrl.u32 %v3872, 7
  %v3874 = vsub.s32 2, %v3873
  %v3875 = vrot.slane %v3862, %v3874
  %v3876 = vlaneseq
  %v3877 = vshrl.u32 %v3876, 7
  %v3878 = vsub.s32 3, %v3877
  %v3879 = vrot.slane %v3862, %v3878
  %v3880 = vlaneseq
  %v3881 = vshrl.u32 %v3880, 7
  %v3882 = vsub.s32 4, %v3881
  %v3883 = vrot.slane %v3862, %v3882
  %v3884 = vlaneseq
  %v3885 = vshrl.u32 %v3884, 7
  %v3886 = vsub.s32 5, %v3885
  %v3887 = vrot.slane %v3862, %v3886
  %v3888 = vlaneseq
  %v3889 = vshrl.u32 %v3888, 7
  %v3890 = vsub.s32 6, %v3889
  %v3891 = vrot.slane %v3862, %v3890
  %v3892 = vlaneseq
  %v3893 = vshrl.u32 %v3892, 7
  %v3894 = vsub.s32 7, %v3893
  %v3895 = vrot.slane %v3862, %v3894
  %v3896 = vcombine.low %v3867, %v3871
  %v3897 = vcombine.low %v3875, %v3879
  %v3898 = vcombine.low %v3883, %v3887
  %v3899 = vcombine.low %v3891, %v3895
  %3900 = vrot.lane.b32.xlu0 %v3896, 112
  %v3901 = vpop.permute.xlu0 %3900
  %3902 = vrot.lane.b32.xlu0 %v3897, 112
  %v3903 = vpop.permute.xlu0 %3902
  %3904 = vrot.lane.b32.xlu0 %v3898, 112
  %v3905 = vpop.permute.xlu0 %3904
  %3906 = vrot.lane.b32.xlu0 %v3899, 112
  %v3907 = vpop.permute.xlu0 %3906
  %v3908 = vrot.slane %v3901, 4
  %v3909 = vrot.slane %v3903, 4
  %v3910 = vrot.slane %v3905, 4
  %v3911 = vrot.slane %v3907, 4
  %v3912 = vsel %vm176, %v3908, %v3901
  %v3913 = vsel %vm105, %v3908, %v3909
  %v3914 = vsel %vm176, %v3913, %v3903
  %v3915 = vsel %vm105, %v3909, %v3910
  %v3916 = vsel %vm176, %v3915, %v3905
  %v3917 = vsel %vm105, %v3910, %v3911
  %v3918 = vsel %vm176, %v3917, %v3907
  %v3924 = vmul.f32 %v3784, %v3912
  %v3925 = vmul.f32 %v3785, %v3914
  %v3926 = vmul.f32 %v3786, %v3916
  %v3927 = vmul.f32 %v3787, %v3918
  %v3928 = vmul.f32 %v3788, %v3911
  %s3929 = scalar_lea.vmem %s2, 40
  %v3930 = vld [vmem:[%s3929] sm:$0xf]
  %v3936 = vcombine.high %v3924, %v3924
  %v3937 = vcombine.high %v3925, %v3925
  %v3938 = vcombine.high %v3926, %v3926
  %v3939 = vcombine.high %v3927, %v3927
  %3940 = vrot.lane.b32.xlu0 %v3924, 16
  %v3941 = vpop.permute.xlu0 %3940
  %3942 = vrot.lane.b32.xlu0 %v3936, 16
  %v3943 = vpop.permute.xlu0 %3942
  %3944 = vrot.lane.b32.xlu0 %v3925, 16
  %v3945 = vpop.permute.xlu0 %3944
  %3946 = vrot.lane.b32.xlu0 %v3937, 16
  %v3947 = vpop.permute.xlu0 %3946
  %3948 = vrot.lane.b32.xlu0 %v3926, 16
  %v3949 = vpop.permute.xlu0 %3948
  %3950 = vrot.lane.b32.xlu0 %v3938, 16
  %v3951 = vpop.permute.xlu0 %3950
  %3952 = vrot.lane.b32.xlu0 %v3927, 16
  %v3953 = vpop.permute.xlu0 %3952
  %3954 = vrot.lane.b32.xlu0 %v3939, 16
  %v3955 = vpop.permute.xlu0 %3954
  %3956 = vrot.lane.b32.xlu0 %v3928, 16
  %v3957 = vpop.permute.xlu0 %3956
  %v3958 = vsel %vm223, %v3941, %v3943
  %v3959 = vsel %vm223, %v3943, %v3945
  %v3960 = vsel %vm223, %v3945, %v3947
  %v3961 = vsel %vm223, %v3947, %v3949
  %v3962 = vsel %vm223, %v3949, %v3951
  %v3963 = vsel %vm223, %v3951, %v3953
  %v3964 = vsel %vm223, %v3953, %v3955
  %v3965 = vsel %vm223, %v3955, %v3957
  %v3967 = vsel %vm232, %v3930, 0
  %v3969 = vsel %vm105, %v3958, 0
  %v3971 = vsel %vm105, %v3959, 0
  %v3973 = vsel %vm105, %v3960, 0
  %v3975 = vsel %vm105, %v3961, 0
  %v3977 = vsel %vm105, %v3962, 0
  %v3979 = vsel %vm105, %v3963, 0
  %v3981 = vsel %vm105, %v3964, 0
  %v3983 = vsel %vm105, %v3965, 0
  %3985 = vmatprep.subr.mxu0 %v3971
  %3986 = vmatpush1.msra.mxu0 %v3969
  %3987 = vmatprep.subr.mxu0 0.0
  %3988 = vmatpush1.msra.mxu0 0.0
  %3989 = vmatprep.subr.mxu0 0.0
  %3990 = vmatpush1.msra.mxu0 0.0
  %3991 = vmatprep.subr.mxu0 0.0
  %3992 = vmatpush1.msra.mxu0 0.0
  %3993 = vmatprep.subr.mxu0 0.0
  %3994 = vmatpush1.msra.mxu0 0.0
  %3995 = vmatprep.subr.mxu0 0.0
  %3996 = vmatpush1.msra.mxu0 0.0
  %3997 = vmatprep.subr.mxu0 0.0
  %3998 = vmatpush1.msra.mxu0 0.0
  %3999 = vmatprep.subr.mxu0 0.0
  %4000 = vmatpush1.msra.mxu0 0.0
  %4001 = vmatprep.subr.mxu0 0.0
  %4002 = vmatpush1.msra.mxu0 0.0
  %4003 = vmatprep.subr.mxu0 0.0
  %4004 = vmatpush1.msra.mxu0 0.0
  %4005 = vmatprep.subr.mxu0 0.0
  %4006 = vmatpush1.msra.mxu0 0.0
  %4007 = vmatprep.subr.mxu0 0.0
  %4008 = vmatpush1.msra.mxu0 0.0
  %4009 = vmatprep.subr.mxu0 0.0
  %4010 = vmatpush1.msra.mxu0 0.0
  %4011 = vmatprep.subr.mxu0 0.0
  %4012 = vmatpush1.msra.mxu0 0.0
  %4013 = vmatprep.subr.mxu0 0.0
  %4014 = vmatpush1.msra.mxu0 0.0
  %4015 = vmatprep.subr.mxu0 0.0
  %4016 = vmatpush1.msra.mxu0 0.0
  %4017 = vmatprep.subr.mxu0 0.0
  %4018 = vmatpush1.msra.mxu0 0.0
  %4019 = vmatprep.subr.mxu0 0.0
  %4020 = vmatpush1.msra.mxu0 0.0
  %4021 = vmatprep.subr.mxu0 0.0
  %4022 = vmatpush1.msra.mxu0 0.0
  %4023 = vmatprep.subr.mxu0 0.0
  %4024 = vmatpush1.msra.mxu0 0.0
  %4025 = vmatprep.subr.mxu0 0.0
  %4026 = vmatpush1.msra.mxu0 0.0
  %4027 = vmatprep.subr.mxu0 0.0
  %4028 = vmatpush1.msra.mxu0 0.0
  %4029 = vmatprep.subr.mxu0 0.0
  %4030 = vmatpush1.msra.mxu0 0.0
  %4031 = vmatprep.subr.mxu0 0.0
  %4032 = vmatpush1.msra.mxu0 0.0
  %4033 = vmatprep.subr.mxu0 0.0
  %4034 = vmatpush1.msra.mxu0 0.0
  %4035 = vmatprep.subr.mxu0 0.0
  %4036 = vmatpush1.msra.mxu0 0.0
  %4037 = vmatprep.subr.mxu0 0.0
  %4038 = vmatpush1.msra.mxu0 0.0
  %4039 = vmatprep.subr.mxu0 0.0
  %4040 = vmatpush1.msra.mxu0 0.0
  %4041 = vmatprep.subr.mxu0 0.0
  %4042 = vmatpush1.msra.mxu0 0.0
  %4043 = vmatprep.subr.mxu0 0.0
  %4044 = vmatpush1.msra.mxu0 0.0
  %4045 = vmatprep.subr.mxu0 0.0
  %4046 = vmatpush1.msra.mxu0 0.0
  %4047 = vmatprep.subr.mxu0 0.0
  %4048 = vmatpush1.msra.mxu0 0.0
  %4049 = vmatprep.mubr.f32.mxu0 0.0
  %4050 = vmatmul.mubr.f32.gmra.mrb[0].mxu0 %v3967
  %v4051 = vpop.f32.mrb[0].mxu0
  %v4052 = vadd.f32 0.0, %v4051
  %v4053 = vpop.f32.mrb[0].mxu0
  %v4054 = vadd.f32 0.0, %v4053
  %4055 = vdwg.mxu0
  %4056 = vmatprep.subr.mxu0 %v3975
  %4057 = vmatpush1.msra.mxu0 %v3973
  %4058 = vmatprep.subr.mxu0 0.0
  %4059 = vmatpush1.msra.mxu0 0.0
  %4060 = vmatprep.subr.mxu0 0.0
  %4061 = vmatpush1.msra.mxu0 0.0
  %4062 = vmatprep.subr.mxu0 0.0
  %4063 = vmatpush1.msra.mxu0 0.0
  %4064 = vmatprep.subr.mxu0 0.0
  %4065 = vmatpush1.msra.mxu0 0.0
  %4066 = vmatprep.subr.mxu0 0.0
  %4067 = vmatpush1.msra.mxu0 0.0
  %4068 = vmatprep.subr.mxu0 0.0
  %4069 = vmatpush1.msra.mxu0 0.0
  %4070 = vmatprep.subr.mxu0 0.0
  %4071 = vmatpush1.msra.mxu0 0.0
  %4072 = vmatprep.subr.mxu0 0.0
  %4073 = vmatpush1.msra.mxu0 0.0
  %4074 = vmatprep.subr.mxu0 0.0
  %4075 = vmatpush1.msra.mxu0 0.0
  %4076 = vmatprep.subr.mxu0 0.0
  %4077 = vmatpush1.msra.mxu0 0.0
  %4078 = vmatprep.subr.mxu0 0.0
  %4079 = vmatpush1.msra.mxu0 0.0
  %4080 = vmatprep.subr.mxu0 0.0
  %4081 = vmatpush1.msra.mxu0 0.0
  %4082 = vmatprep.subr.mxu0 0.0
  %4083 = vmatpush1.msra.mxu0 0.0
  %4084 = vmatprep.subr.mxu0 0.0
  %4085 = vmatpush1.msra.mxu0 0.0
  %4086 = vmatprep.subr.mxu0 0.0
  %4087 = vmatpush1.msra.mxu0 0.0
  %4088 = vmatprep.subr.mxu0 0.0
  %4089 = vmatpush1.msra.mxu0 0.0
  %4090 = vmatprep.subr.mxu0 0.0
  %4091 = vmatpush1.msra.mxu0 0.0
  %4092 = vmatprep.subr.mxu0 0.0
  %4093 = vmatpush1.msra.mxu0 0.0
  %4094 = vmatprep.subr.mxu0 0.0
  %4095 = vmatpush1.msra.mxu0 0.0
  %4096 = vmatprep.subr.mxu0 0.0
  %4097 = vmatpush1.msra.mxu0 0.0
  %4098 = vmatprep.subr.mxu0 0.0
  %4099 = vmatpush1.msra.mxu0 0.0
  %4100 = vmatprep.subr.mxu0 0.0
  %4101 = vmatpush1.msra.mxu0 0.0
  %4102 = vmatprep.subr.mxu0 0.0
  %4103 = vmatpush1.msra.mxu0 0.0
  %4104 = vmatprep.subr.mxu0 0.0
  %4105 = vmatpush1.msra.mxu0 0.0
  %4106 = vmatprep.subr.mxu0 0.0
  %4107 = vmatpush1.msra.mxu0 0.0
  %4108 = vmatprep.subr.mxu0 0.0
  %4109 = vmatpush1.msra.mxu0 0.0
  %4110 = vmatprep.subr.mxu0 0.0
  %4111 = vmatpush1.msra.mxu0 0.0
  %4112 = vmatprep.subr.mxu0 0.0
  %4113 = vmatpush1.msra.mxu0 0.0
  %4114 = vmatprep.subr.mxu0 0.0
  %4115 = vmatpush1.msra.mxu0 0.0
  %4116 = vmatprep.subr.mxu0 0.0
  %4117 = vmatpush1.msra.mxu0 0.0
  %4118 = vmatprep.subr.mxu0 0.0
  %4119 = vmatpush1.msra.mxu0 0.0
  %4120 = vmatprep.mubr.f32.mxu0 0.0
  %4121 = vmatmul.mubr.f32.gmra.mrb[0].mxu0 %v3967
  %v4122 = vpop.f32.mrb[0].mxu0
  %v4123 = vadd.f32 0.0, %v4122
  %v4124 = vpop.f32.mrb[0].mxu0
  %v4125 = vadd.f32 0.0, %v4124
  %4126 = vdwg.mxu0
  %4127 = vmatprep.subr.mxu0 %v3979
  %4128 = vmatpush1.msra.mxu0 %v3977
  %4129 = vmatprep.subr.mxu0 0.0
  %4130 = vmatpush1.msra.mxu0 0.0
  %4131 = vmatprep.subr.mxu0 0.0
  %4132 = vmatpush1.msra.mxu0 0.0
  %4133 = vmatprep.subr.mxu0 0.0
  %4134 = vmatpush1.msra.mxu0 0.0
  %4135 = vmatprep.subr.mxu0 0.0
  %4136 = vmatpush1.msra.mxu0 0.0
  %4137 = vmatprep.subr.mxu0 0.0
  %4138 = vmatpush1.msra.mxu0 0.0
  %4139 = vmatprep.subr.mxu0 0.0
  %4140 = vmatpush1.msra.mxu0 0.0
  %4141 = vmatprep.subr.mxu0 0.0
  %4142 = vmatpush1.msra.mxu0 0.0
  %4143 = vmatprep.subr.mxu0 0.0
  %4144 = vmatpush1.msra.mxu0 0.0
  %4145 = vmatprep.subr.mxu0 0.0
  %4146 = vmatpush1.msra.mxu0 0.0
  %4147 = vmatprep.subr.mxu0 0.0
  %4148 = vmatpush1.msra.mxu0 0.0
  %4149 = vmatprep.subr.mxu0 0.0
  %4150 = vmatpush1.msra.mxu0 0.0
  %4151 = vmatprep.subr.mxu0 0.0
  %4152 = vmatpush1.msra.mxu0 0.0
  %4153 = vmatprep.subr.mxu0 0.0
  %4154 = vmatpush1.msra.mxu0 0.0
  %4155 = vmatprep.subr.mxu0 0.0
  %4156 = vmatpush1.msra.mxu0 0.0
  %4157 = vmatprep.subr.mxu0 0.0
  %4158 = vmatpush1.msra.mxu0 0.0
  %4159 = vmatprep.subr.mxu0 0.0
  %4160 = vmatpush1.msra.mxu0 0.0
  %4161 = vmatprep.subr.mxu0 0.0
  %4162 = vmatpush1.msra.mxu0 0.0
  %4163 = vmatprep.subr.mxu0 0.0
  %4164 = vmatpush1.msra.mxu0 0.0
  %4165 = vmatprep.subr.mxu0 0.0
  %4166 = vmatpush1.msra.mxu0 0.0
  %4167 = vmatprep.subr.mxu0 0.0
  %4168 = vmatpush1.msra.mxu0 0.0
  %4169 = vmatprep.subr.mxu0 0.0
  %4170 = vmatpush1.msra.mxu0 0.0
  %4171 = vmatprep.subr.mxu0 0.0
  %4172 = vmatpush1.msra.mxu0 0.0
  %4173 = vmatprep.subr.mxu0 0.0
  %4174 = vmatpush1.msra.mxu0 0.0
  %4175 = vmatprep.subr.mxu0 0.0
  %4176 = vmatpush1.msra.mxu0 0.0
  %4177 = vmatprep.subr.mxu0 0.0
  %4178 = vmatpush1.msra.mxu0 0.0
  %4179 = vmatprep.subr.mxu0 0.0
  %4180 = vmatpush1.msra.mxu0 0.0
  %4181 = vmatprep.subr.mxu0 0.0
  %4182 = vmatpush1.msra.mxu0 0.0
  %4183 = vmatprep.subr.mxu0 0.0
  %4184 = vmatpush1.msra.mxu0 0.0
  %4185 = vmatprep.subr.mxu0 0.0
  %4186 = vmatpush1.msra.mxu0 0.0
  %4187 = vmatprep.subr.mxu0 0.0
  %4188 = vmatpush1.msra.mxu0 0.0
  %4189 = vmatprep.subr.mxu0 0.0
  %4190 = vmatpush1.msra.mxu0 0.0
  %4191 = vmatprep.mubr.f32.mxu0 0.0
  %4192 = vmatmul.mubr.f32.gmra.mrb[0].mxu0 %v3967
  %v4193 = vpop.f32.mrb[0].mxu0
  %v4194 = vadd.f32 0.0, %v4193
  %v4195 = vpop.f32.mrb[0].mxu0
  %v4196 = vadd.f32 0.0, %v4195
  %4197 = vdwg.mxu0
  %4198 = vmatprep.subr.mxu0 %v3983
  %4199 = vmatpush1.msra.mxu0 %v3981
  %4200 = vmatprep.subr.mxu0 0.0
  %4201 = vmatpush1.msra.mxu0 0.0
  %4202 = vmatprep.subr.mxu0 0.0
  %4203 = vmatpush1.msra.mxu0 0.0
  %4204 = vmatprep.subr.mxu0 0.0
  %4205 = vmatpush1.msra.mxu0 0.0
  %4206 = vmatprep.subr.mxu0 0.0
  %4207 = vmatpush1.msra.mxu0 0.0
  %4208 = vmatprep.subr.mxu0 0.0
  %4209 = vmatpush1.msra.mxu0 0.0
  %4210 = vmatprep.subr.mxu0 0.0
  %4211 = vmatpush1.msra.mxu0 0.0
  %4212 = vmatprep.subr.mxu0 0.0
  %4213 = vmatpush1.msra.mxu0 0.0
  %4214 = vmatprep.subr.mxu0 0.0
  %4215 = vmatpush1.msra.mxu0 0.0
  %4216 = vmatprep.subr.mxu0 0.0
  %4217 = vmatpush1.msra.mxu0 0.0
  %4218 = vmatprep.subr.mxu0 0.0
  %4219 = vmatpush1.msra.mxu0 0.0
  %4220 = vmatprep.subr.mxu0 0.0
  %4221 = vmatpush1.msra.mxu0 0.0
  %4222 = vmatprep.subr.mxu0 0.0
  %4223 = vmatpush1.msra.mxu0 0.0
  %4224 = vmatprep.subr.mxu0 0.0
  %4225 = vmatpush1.msra.mxu0 0.0
  %4226 = vmatprep.subr.mxu0 0.0
  %4227 = vmatpush1.msra.mxu0 0.0
  %4228 = vmatprep.subr.mxu0 0.0
  %4229 = vmatpush1.msra.mxu0 0.0
  %4230 = vmatprep.subr.mxu0 0.0
  %4231 = vmatpush1.msra.mxu0 0.0
  %4232 = vmatprep.subr.mxu0 0.0
  %4233 = vmatpush1.msra.mxu0 0.0
  %4234 = vmatprep.subr.mxu0 0.0
  %4235 = vmatpush1.msra.mxu0 0.0
  %4236 = vmatprep.subr.mxu0 0.0
  %4237 = vmatpush1.msra.mxu0 0.0
  %4238 = vmatprep.subr.mxu0 0.0
  %4239 = vmatpush1.msra.mxu0 0.0
  %4240 = vmatprep.subr.mxu0 0.0
  %4241 = vmatpush1.msra.mxu0 0.0
  %4242 = vmatprep.subr.mxu0 0.0
  %4243 = vmatpush1.msra.mxu0 0.0
  %4244 = vmatprep.subr.mxu0 0.0
  %4245 = vmatpush1.msra.mxu0 0.0
  %4246 = vmatprep.subr.mxu0 0.0
  %4247 = vmatpush1.msra.mxu0 0.0
  %4248 = vmatprep.subr.mxu0 0.0
  %4249 = vmatpush1.msra.mxu0 0.0
  %4250 = vmatprep.subr.mxu0 0.0
  %4251 = vmatpush1.msra.mxu0 0.0
  %4252 = vmatprep.subr.mxu0 0.0
  %4253 = vmatpush1.msra.mxu0 0.0
  %4254 = vmatprep.subr.mxu0 0.0
  %4255 = vmatpush1.msra.mxu0 0.0
  %4256 = vmatprep.subr.mxu0 0.0
  %4257 = vmatpush1.msra.mxu0 0.0
  %4258 = vmatprep.subr.mxu0 0.0
  %4259 = vmatpush1.msra.mxu0 0.0
  %4260 = vmatprep.subr.mxu0 0.0
  %4261 = vmatpush1.msra.mxu0 0.0
  %4262 = vmatprep.mubr.f32.mxu0 0.0
  %4263 = vmatmul.mubr.f32.gmra.mrb[0].mxu0 %v3967
  %v4264 = vpop.f32.mrb[0].mxu0
  %v4265 = vadd.f32 0.0, %v4264
  %v4266 = vpop.f32.mrb[0].mxu0
  %v4267 = vadd.f32 0.0, %v4266
  %4268 = vdwg.mxu0
  %v4274 = vcombine.high %v3853, %v3853
  %v4275 = vcombine.high %v3854, %v3854
  %v4276 = vcombine.high %v3855, %v3855
  %v4277 = vcombine.high %v3856, %v3856
  %4278 = vrot.lane.b32.xlu0 %v3853, 17
  %v4279 = vpop.permute.xlu0 %4278
  %4280 = vrot.lane.b32.xlu0 %v4274, 17
  %v4281 = vpop.permute.xlu0 %4280
  %4282 = vrot.lane.b32.xlu0 %v3854, 17
  %v4283 = vpop.permute.xlu0 %4282
  %4284 = vrot.lane.b32.xlu0 %v4275, 17
  %v4285 = vpop.permute.xlu0 %4284
  %4286 = vrot.lane.b32.xlu0 %v3855, 17
  %v4287 = vpop.permute.xlu0 %4286
  %4288 = vrot.lane.b32.xlu0 %v4276, 17
  %v4289 = vpop.permute.xlu0 %4288
  %4290 = vrot.lane.b32.xlu0 %v3856, 17
  %v4291 = vpop.permute.xlu0 %4290
  %4292 = vrot.lane.b32.xlu0 %v4277, 17
  %v4293 = vpop.permute.xlu0 %4292
  %4294 = vrot.lane.b32.xlu0 %v3857, 17
  %v4295 = vpop.permute.xlu0 %4294
  %v4296 = vsel %vm563, %v4279, %v4281
  %v4297 = vsel %vm563, %v4281, %v4283
  %v4298 = vsel %vm563, %v4283, %v4285
  %v4299 = vsel %vm563, %v4285, %v4287
  %v4300 = vsel %vm563, %v4287, %v4289
  %v4301 = vsel %vm563, %v4289, %v4291
  %v4302 = vsel %vm563, %v4291, %v4293
  %v4303 = vsel %vm563, %v4293, %v4295
  %v4305 = vsel %vm232, %v3859, 0
  %v4307 = vsel %vm105, %v4296, 0
  %v4309 = vsel %vm105, %v4297, 0
  %v4311 = vsel %vm105, %v4298, 0
  %v4313 = vsel %vm105, %v4299, 0
  %v4315 = vsel %vm105, %v4300, 0
  %v4317 = vsel %vm105, %v4301, 0
  %v4319 = vsel %vm105, %v4302, 0
  %v4321 = vsel %vm105, %v4303, 0
  %4323 = vmatprep.subr.mxu0 %v4309
  %4324 = vmatpush1.msra.mxu0 %v4307
  %4325 = vmatprep.subr.mxu0 0.0
  %4326 = vmatpush1.msra.mxu0 0.0
  %4327 = vmatprep.subr.mxu0 0.0
  %4328 = vmatpush1.msra.mxu0 0.0
  %4329 = vmatprep.subr.mxu0 0.0
  %4330 = vmatpush1.msra.mxu0 0.0
  %4331 = vmatprep.subr.mxu0 0.0
  %4332 = vmatpush1.msra.mxu0 0.0
  %4333 = vmatprep.subr.mxu0 0.0
  %4334 = vmatpush1.msra.mxu0 0.0
  %4335 = vmatprep.subr.mxu0 0.0
  %4336 = vmatpush1.msra.mxu0 0.0
  %4337 = vmatprep.subr.mxu0 0.0
  %4338 = vmatpush1.msra.mxu0 0.0
  %4339 = vmatprep.subr.mxu0 0.0
  %4340 = vmatpush1.msra.mxu0 0.0
  %4341 = vmatprep.subr.mxu0 0.0
  %4342 = vmatpush1.msra.mxu0 0.0
  %4343 = vmatprep.subr.mxu0 0.0
  %4344 = vmatpush1.msra.mxu0 0.0
  %4345 = vmatprep.subr.mxu0 0.0
  %4346 = vmatpush1.msra.mxu0 0.0
  %4347 = vmatprep.subr.mxu0 0.0
  %4348 = vmatpush1.msra.mxu0 0.0
  %4349 = vmatprep.subr.mxu0 0.0
  %4350 = vmatpush1.msra.mxu0 0.0
  %4351 = vmatprep.subr.mxu0 0.0
  %4352 = vmatpush1.msra.mxu0 0.0
  %4353 = vmatprep.subr.mxu0 0.0
  %4354 = vmatpush1.msra.mxu0 0.0
  %4355 = vmatprep.subr.mxu0 0.0
  %4356 = vmatpush1.msra.mxu0 0.0
  %4357 = vmatprep.subr.mxu0 0.0
  %4358 = vmatpush1.msra.mxu0 0.0
  %4359 = vmatprep.subr.mxu0 0.0
  %4360 = vmatpush1.msra.mxu0 0.0
  %4361 = vmatprep.subr.mxu0 0.0
  %4362 = vmatpush1.msra.mxu0 0.0
  %4363 = vmatprep.subr.mxu0 0.0
  %4364 = vmatpush1.msra.mxu0 0.0
  %4365 = vmatprep.subr.mxu0 0.0
  %4366 = vmatpush1.msra.mxu0 0.0
  %4367 = vmatprep.subr.mxu0 0.0
  %4368 = vmatpush1.msra.mxu0 0.0
  %4369 = vmatprep.subr.mxu0 0.0
  %4370 = vmatpush1.msra.mxu0 0.0
  %4371 = vmatprep.subr.mxu0 0.0
  %4372 = vmatpush1.msra.mxu0 0.0
  %4373 = vmatprep.subr.mxu0 0.0
  %4374 = vmatpush1.msra.mxu0 0.0
  %4375 = vmatprep.subr.mxu0 0.0
  %4376 = vmatpush1.msra.mxu0 0.0
  %4377 = vmatprep.subr.mxu0 0.0
  %4378 = vmatpush1.msra.mxu0 0.0
  %4379 = vmatprep.subr.mxu0 0.0
  %4380 = vmatpush1.msra.mxu0 0.0
  %4381 = vmatprep.subr.mxu0 0.0
  %4382 = vmatpush1.msra.mxu0 0.0
  %4383 = vmatprep.subr.mxu0 0.0
  %4384 = vmatpush1.msra.mxu0 0.0
  %4385 = vmatprep.subr.mxu0 0.0
  %4386 = vmatpush1.msra.mxu0 0.0
  %4387 = vmatprep.mubr.f32.mxu0 0.0
  %4388 = vmatmul.mubr.f32.gmra.mrb[0].mxu0 %v4305
  %v4389 = vpop.f32.mrb[0].mxu0
  %v4390 = vadd.f32 %v4052, %v4389
  %v4391 = vpop.f32.mrb[0].mxu0
  %v4392 = vadd.f32 %v4054, %v4391
  %4393 = vdwg.mxu0
  %4394 = vmatprep.subr.mxu0 %v4313
  %4395 = vmatpush1.msra.mxu0 %v4311
  %4396 = vmatprep.subr.mxu0 0.0
  %4397 = vmatpush1.msra.mxu0 0.0
  %4398 = vmatprep.subr.mxu0 0.0
  %4399 = vmatpush1.msra.mxu0 0.0
  %4400 = vmatprep.subr.mxu0 0.0
  %4401 = vmatpush1.msra.mxu0 0.0
  %4402 = vmatprep.subr.mxu0 0.0
  %4403 = vmatpush1.msra.mxu0 0.0
  %4404 = vmatprep.subr.mxu0 0.0
  %4405 = vmatpush1.msra.mxu0 0.0
  %4406 = vmatprep.subr.mxu0 0.0
  %4407 = vmatpush1.msra.mxu0 0.0
  %4408 = vmatprep.subr.mxu0 0.0
  %4409 = vmatpush1.msra.mxu0 0.0
  %4410 = vmatprep.subr.mxu0 0.0
  %4411 = vmatpush1.msra.mxu0 0.0
  %4412 = vmatprep.subr.mxu0 0.0
  %4413 = vmatpush1.msra.mxu0 0.0
  %4414 = vmatprep.subr.mxu0 0.0
  %4415 = vmatpush1.msra.mxu0 0.0
  %4416 = vmatprep.subr.mxu0 0.0
  %4417 = vmatpush1.msra.mxu0 0.0
  %4418 = vmatprep.subr.mxu0 0.0
  %4419 = vmatpush1.msra.mxu0 0.0
  %4420 = vmatprep.subr.mxu0 0.0
  %4421 = vmatpush1.msra.mxu0 0.0
  %4422 = vmatprep.subr.mxu0 0.0
  %4423 = vmatpush1.msra.mxu0 0.0
  %4424 = vmatprep.subr.mxu0 0.0
  %4425 = vmatpush1.msra.mxu0 0.0
  %4426 = vmatprep.subr.mxu0 0.0
  %4427 = vmatpush1.msra.mxu0 0.0
  %4428 = vmatprep.subr.mxu0 0.0
  %4429 = vmatpush1.msra.mxu0 0.0
  %4430 = vmatprep.subr.mxu0 0.0
  %4431 = vmatpush1.msra.mxu0 0.0
  %4432 = vmatprep.subr.mxu0 0.0
  %4433 = vmatpush1.msra.mxu0 0.0
  %4434 = vmatprep.subr.mxu0 0.0
  %4435 = vmatpush1.msra.mxu0 0.0
  %4436 = vmatprep.subr.mxu0 0.0
  %4437 = vmatpush1.msra.mxu0 0.0
  %4438 = vmatprep.subr.mxu0 0.0
  %4439 = vmatpush1.msra.mxu0 0.0
  %4440 = vmatprep.subr.mxu0 0.0
  %4441 = vmatpush1.msra.mxu0 0.0
  %4442 = vmatprep.subr.mxu0 0.0
  %4443 = vmatpush1.msra.mxu0 0.0
  %4444 = vmatprep.subr.mxu0 0.0
  %4445 = vmatpush1.msra.mxu0 0.0
  %4446 = vmatprep.subr.mxu0 0.0
  %4447 = vmatpush1.msra.mxu0 0.0
  %4448 = vmatprep.subr.mxu0 0.0
  %4449 = vmatpush1.msra.mxu0 0.0
  %4450 = vmatprep.subr.mxu0 0.0
  %4451 = vmatpush1.msra.mxu0 0.0
  %4452 = vmatprep.subr.mxu0 0.0
  %4453 = vmatpush1.msra.mxu0 0.0
  %4454 = vmatprep.subr.mxu0 0.0
  %4455 = vmatpush1.msra.mxu0 0.0
  %4456 = vmatprep.subr.mxu0 0.0
  %4457 = vmatpush1.msra.mxu0 0.0
  %4458 = vmatprep.mubr.f32.mxu0 0.0
  %4459 = vmatmul.mubr.f32.gmra.mrb[0].mxu0 %v4305
  %v4460 = vpop.f32.mrb[0].mxu0
  %v4461 = vadd.f32 %v4123, %v4460
  %v4462 = vpop.f32.mrb[0].mxu0
  %v4463 = vadd.f32 %v4125, %v4462
  %4464 = vdwg.mxu0
  %4465 = vmatprep.subr.mxu0 %v4317
  %4466 = vmatpush1.msra.mxu0 %v4315
  %4467 = vmatprep.subr.mxu0 0.0
  %4468 = vmatpush1.msra.mxu0 0.0
  %4469 = vmatprep.subr.mxu0 0.0
  %4470 = vmatpush1.msra.mxu0 0.0
  %4471 = vmatprep.subr.mxu0 0.0
  %4472 = vmatpush1.msra.mxu0 0.0
  %4473 = vmatprep.subr.mxu0 0.0
  %4474 = vmatpush1.msra.mxu0 0.0
  %4475 = vmatprep.subr.mxu0 0.0
  %4476 = vmatpush1.msra.mxu0 0.0
  %4477 = vmatprep.subr.mxu0 0.0
  %4478 = vmatpush1.msra.mxu0 0.0
  %4479 = vmatprep.subr.mxu0 0.0
  %4480 = vmatpush1.msra.mxu0 0.0
  %4481 = vmatprep.subr.mxu0 0.0
  %4482 = vmatpush1.msra.mxu0 0.0
  %4483 = vmatprep.subr.mxu0 0.0
  %4484 = vmatpush1.msra.mxu0 0.0
  %4485 = vmatprep.subr.mxu0 0.0
  %4486 = vmatpush1.msra.mxu0 0.0
  %4487 = vmatprep.subr.mxu0 0.0
  %4488 = vmatpush1.msra.mxu0 0.0
  %4489 = vmatprep.subr.mxu0 0.0
  %4490 = vmatpush1.msra.mxu0 0.0
  %4491 = vmatprep.subr.mxu0 0.0
  %4492 = vmatpush1.msra.mxu0 0.0
  %4493 = vmatprep.subr.mxu0 0.0
  %4494 = vmatpush1.msra.mxu0 0.0
  %4495 = vmatprep.subr.mxu0 0.0
  %4496 = vmatpush1.msra.mxu0 0.0
  %4497 = vmatprep.subr.mxu0 0.0
  %4498 = vmatpush1.msra.mxu0 0.0
  %4499 = vmatprep.subr.mxu0 0.0
  %4500 = vmatpush1.msra.mxu0 0.0
  %4501 = vmatprep.subr.mxu0 0.0
  %4502 = vmatpush1.msra.mxu0 0.0
  %4503 = vmatprep.subr.mxu0 0.0
  %4504 = vmatpush1.msra.mxu0 0.0
  %4505 = vmatprep.subr.mxu0 0.0
  %4506 = vmatpush1.msra.mxu0 0.0
  %4507 = vmatprep.subr.mxu0 0.0
  %4508 = vmatpush1.msra.mxu0 0.0
  %4509 = vmatprep.subr.mxu0 0.0
  %4510 = vmatpush1.msra.mxu0 0.0
  %4511 = vmatprep.subr.mxu0 0.0
  %4512 = vmatpush1.msra.mxu0 0.0
  %4513 = vmatprep.subr.mxu0 0.0
  %4514 = vmatpush1.msra.mxu0 0.0
  %4515 = vmatprep.subr.mxu0 0.0
  %4516 = vmatpush1.msra.mxu0 0.0
  %4517 = vmatprep.subr.mxu0 0.0
  %4518 = vmatpush1.msra.mxu0 0.0
  %4519 = vmatprep.subr.mxu0 0.0
  %4520 = vmatpush1.msra.mxu0 0.0
  %4521 = vmatprep.subr.mxu0 0.0
  %4522 = vmatpush1.msra.mxu0 0.0
  %4523 = vmatprep.subr.mxu0 0.0
  %4524 = vmatpush1.msra.mxu0 0.0
  %4525 = vmatprep.subr.mxu0 0.0
  %4526 = vmatpush1.msra.mxu0 0.0
  %4527 = vmatprep.subr.mxu0 0.0
  %4528 = vmatpush1.msra.mxu0 0.0
  %4529 = vmatprep.mubr.f32.mxu0 0.0
  %4530 = vmatmul.mubr.f32.gmra.mrb[0].mxu0 %v4305
  %v4531 = vpop.f32.mrb[0].mxu0
  %v4532 = vadd.f32 %v4194, %v4531
  %v4533 = vpop.f32.mrb[0].mxu0
  %v4534 = vadd.f32 %v4196, %v4533
  %4535 = vdwg.mxu0
  %4536 = vmatprep.subr.mxu0 %v4321
  %4537 = vmatpush1.msra.mxu0 %v4319
  %4538 = vmatprep.subr.mxu0 0.0
  %4539 = vmatpush1.msra.mxu0 0.0
  %4540 = vmatprep.subr.mxu0 0.0
  %4541 = vmatpush1.msra.mxu0 0.0
  %4542 = vmatprep.subr.mxu0 0.0
  %4543 = vmatpush1.msra.mxu0 0.0
  %4544 = vmatprep.subr.mxu0 0.0
  %4545 = vmatpush1.msra.mxu0 0.0
  %4546 = vmatprep.subr.mxu0 0.0
  %4547 = vmatpush1.msra.mxu0 0.0
  %4548 = vmatprep.subr.mxu0 0.0
  %4549 = vmatpush1.msra.mxu0 0.0
  %4550 = vmatprep.subr.mxu0 0.0
  %4551 = vmatpush1.msra.mxu0 0.0
  %4552 = vmatprep.subr.mxu0 0.0
  %4553 = vmatpush1.msra.mxu0 0.0
  %4554 = vmatprep.subr.mxu0 0.0
  %4555 = vmatpush1.msra.mxu0 0.0
  %4556 = vmatprep.subr.mxu0 0.0
  %4557 = vmatpush1.msra.mxu0 0.0
  %4558 = vmatprep.subr.mxu0 0.0
  %4559 = vmatpush1.msra.mxu0 0.0
  %4560 = vmatprep.subr.mxu0 0.0
  %4561 = vmatpush1.msra.mxu0 0.0
  %4562 = vmatprep.subr.mxu0 0.0
  %4563 = vmatpush1.msra.mxu0 0.0
  %4564 = vmatprep.subr.mxu0 0.0
  %4565 = vmatpush1.msra.mxu0 0.0
  %4566 = vmatprep.subr.mxu0 0.0
  %4567 = vmatpush1.msra.mxu0 0.0
  %4568 = vmatprep.subr.mxu0 0.0
  %4569 = vmatpush1.msra.mxu0 0.0
  %4570 = vmatprep.subr.mxu0 0.0
  %4571 = vmatpush1.msra.mxu0 0.0
  %4572 = vmatprep.subr.mxu0 0.0
  %4573 = vmatpush1.msra.mxu0 0.0
  %4574 = vmatprep.subr.mxu0 0.0
  %4575 = vmatpush1.msra.mxu0 0.0
  %4576 = vmatprep.subr.mxu0 0.0
  %4577 = vmatpush1.msra.mxu0 0.0
  %4578 = vmatprep.subr.mxu0 0.0
  %4579 = vmatpush1.msra.mxu0 0.0
  %4580 = vmatprep.subr.mxu0 0.0
  %4581 = vmatpush1.msra.mxu0 0.0
  %4582 = vmatprep.subr.mxu0 0.0
  %4583 = vmatpush1.msra.mxu0 0.0
  %4584 = vmatprep.subr.mxu0 0.0
  %4585 = vmatpush1.msra.mxu0 0.0
  %4586 = vmatprep.subr.mxu0 0.0
  %4587 = vmatpush1.msra.mxu0 0.0
  %4588 = vmatprep.subr.mxu0 0.0
  %4589 = vmatpush1.msra.mxu0 0.0
  %4590 = vmatprep.subr.mxu0 0.0
  %4591 = vmatpush1.msra.mxu0 0.0
  %4592 = vmatprep.subr.mxu0 0.0
  %4593 = vmatpush1.msra.mxu0 0.0
  %4594 = vmatprep.subr.mxu0 0.0
  %4595 = vmatpush1.msra.mxu0 0.0
  %4596 = vmatprep.subr.mxu0 0.0
  %4597 = vmatpush1.msra.mxu0 0.0
  %4598 = vmatprep.subr.mxu0 0.0
  %4599 = vmatpush1.msra.mxu0 0.0
  %4600 = vmatprep.mubr.f32.mxu0 0.0
  %4601 = vmatmul.mubr.f32.gmra.mrb[0].mxu0 %v4305
  %v4602 = vpop.f32.mrb[0].mxu0
  %v4603 = vadd.f32 %v4265, %v4602
  %v4604 = vpop.f32.mrb[0].mxu0
  %v4605 = vadd.f32 %v4267, %v4604
  %4606 = vdwg.mxu0
  %v4607 = vld [vmem:[#allocation3] sm:$0xff]
  %v4608 = vld [vmem:[#allocation3 + $0x8] sm:$0xff]
  %v4609 = vld [vmem:[#allocation3 + $0x10] sm:$0xff]
  %v4610 = vld [vmem:[#allocation3 + $0x18] sm:$0xff]
  %v4611 = vld [vmem:[#allocation3 + $0x20] sm:$0xf]
  %v4612 = vld [vmem:[%s880] ss:$8 sm:$0xf]
  %v4613 = vld [vmem:[%s880] ss:$8 sm:$0xf0]
  %v4614 = vor.u32 %v4612, %v4613
  %v4616 = vlaneseq
  %v4617 = vshrl.u32 %v4616, 7
  %v4618 = vsub.s32 0, %v4617
  %v4619 = vrot.slane %v4614, %v4618
  %v4620 = vlaneseq
  %v4621 = vshrl.u32 %v4620, 7
  %v4622 = vsub.s32 1, %v4621
  %v4623 = vrot.slane %v4614, %v4622
  %v4624 = vlaneseq
  %v4625 = vshrl.u32 %v4624, 7
  %v4626 = vsub.s32 2, %v4625
  %v4627 = vrot.slane %v4614, %v4626
  %v4628 = vlaneseq
  %v4629 = vshrl.u32 %v4628, 7
  %v4630 = vsub.s32 3, %v4629
  %v4631 = vrot.slane %v4614, %v4630
  %v4632 = vlaneseq
  %v4633 = vshrl.u32 %v4632, 7
  %v4634 = vsub.s32 4, %v4633
  %v4635 = vrot.slane %v4614, %v4634
  %v4636 = vlaneseq
  %v4637 = vshrl.u32 %v4636, 7
  %v4638 = vsub.s32 5, %v4637
  %v4639 = vrot.slane %v4614, %v4638
  %v4640 = vlaneseq
  %v4641 = vshrl.u32 %v4640, 7
  %v4642 = vsub.s32 6, %v4641
  %v4643 = vrot.slane %v4614, %v4642
  %v4644 = vlaneseq
  %v4645 = vshrl.u32 %v4644, 7
  %v4646 = vsub.s32 7, %v4645
  %v4647 = vrot.slane %v4614, %v4646
  %v4648 = vcombine.low %v4619, %v4623
  %v4649 = vcombine.low %v4627, %v4631
  %v4650 = vcombine.low %v4635, %v4639
  %v4651 = vcombine.low %v4643, %v4647
  %4652 = vrot.lane.b32.xlu0 %v4648, 113
  %v4653 = vpop.permute.xlu0 %4652
  %4654 = vrot.lane.b32.xlu0 %v4649, 113
  %v4655 = vpop.permute.xlu0 %4654
  %4656 = vrot.lane.b32.xlu0 %v4650, 113
  %v4657 = vpop.permute.xlu0 %4656
  %4658 = vrot.lane.b32.xlu0 %v4651, 113
  %v4659 = vpop.permute.xlu0 %4658
  %v4660 = vrot.slane %v4653, 4
  %v4661 = vrot.slane %v4655, 4
  %v4662 = vrot.slane %v4657, 4
  %v4663 = vrot.slane %v4659, 4
  %v4664 = vsel %vm933, %v4660, %v4653
  %v4665 = vsel %vm105, %v4660, %v4661
  %v4666 = vsel %vm933, %v4665, %v4655
  %v4667 = vsel %vm105, %v4661, %v4662
  %v4668 = vsel %vm933, %v4667, %v4657
  %v4669 = vsel %vm105, %v4662, %v4663
  %v4670 = vsel %vm933, %v4669, %v4659
  %v4676 = vmul.f32 %v4607, %v4664
  %v4677 = vmul.f32 %v4608, %v4666
  %v4678 = vmul.f32 %v4609, %v4668
  %v4679 = vmul.f32 %v4610, %v4670
  %v4680 = vmul.f32 %v4611, %v4663
  %s4681 = scalar_lea.vmem %s2, 44
  %v4682 = vld [vmem:[%s4681] sm:$0xf]
  %v4688 = vcombine.high %v4676, %v4676
  %v4689 = vcombine.high %v4677, %v4677
  %v4690 = vcombine.high %v4678, %v4678
  %v4691 = vcombine.high %v4679, %v4679
  %4692 = vrot.lane.b32.xlu0 %v4676, 15
  %v4693 = vpop.permute.xlu0 %4692
  %4694 = vrot.lane.b32.xlu0 %v4688, 15
  %v4695 = vpop.permute.xlu0 %4694
  %4696 = vrot.lane.b32.xlu0 %v4677, 15
  %v4697 = vpop.permute.xlu0 %4696
  %4698 = vrot.lane.b32.xlu0 %v4689, 15
  %v4699 = vpop.permute.xlu0 %4698
  %4700 = vrot.lane.b32.xlu0 %v4678, 15
  %v4701 = vpop.permute.xlu0 %4700
  %4702 = vrot.lane.b32.xlu0 %v4690, 15
  %v4703 = vpop.permute.xlu0 %4702
  %4704 = vrot.lane.b32.xlu0 %v4679, 15
  %v4705 = vpop.permute.xlu0 %4704
  %4706 = vrot.lane.b32.xlu0 %v4691, 15
  %v4707 = vpop.permute.xlu0 %4706
  %4708 = vrot.lane.b32.xlu0 %v4680, 15
  %v4709 = vpop.permute.xlu0 %4708
  %v4710 = vsel %vm980, %v4693, %v4695
  %v4711 = vsel %vm980, %v4695, %v4697
  %v4712 = vsel %vm980, %v4697, %v4699
  %v4713 = vsel %vm980, %v4699, %v4701
  %v4714 = vsel %vm980, %v4701, %v4703
  %v4715 = vsel %vm980, %v4703, %v4705
  %v4716 = vsel %vm980, %v4705, %v4707
  %v4717 = vsel %vm980, %v4707, %v4709
  %v4719 = vsel %vm232, %v4682, 0
  %v4721 = vsel %vm105, %v4710, 0
  %v4723 = vsel %vm105, %v4711, 0
  %v4725 = vsel %vm105, %v4712, 0
  %v4727 = vsel %vm105, %v4713, 0
  %v4729 = vsel %vm105, %v4714, 0
  %v4731 = vsel %vm105, %v4715, 0
  %v4733 = vsel %vm105, %v4716, 0
  %v4735 = vsel %vm105, %v4717, 0
  %4737 = vmatprep.subr.mxu0 %v4723
  %4738 = vmatpush1.msra.mxu0 %v4721
  %4739 = vmatprep.subr.mxu0 0.0
  %4740 = vmatpush1.msra.mxu0 0.0
  %4741 = vmatprep.subr.mxu0 0.0
  %4742 = vmatpush1.msra.mxu0 0.0
  %4743 = vmatprep.subr.mxu0 0.0
  %4744 = vmatpush1.msra.mxu0 0.0
  %4745 = vmatprep.subr.mxu0 0.0
  %4746 = vmatpush1.msra.mxu0 0.0
  %4747 = vmatprep.subr.mxu0 0.0
  %4748 = vmatpush1.msra.mxu0 0.0
  %4749 = vmatprep.subr.mxu0 0.0
  %4750 = vmatpush1.msra.mxu0 0.0
  %4751 = vmatprep.subr.mxu0 0.0
  %4752 = vmatpush1.msra.mxu0 0.0
  %4753 = vmatprep.subr.mxu0 0.0
  %4754 = vmatpush1.msra.mxu0 0.0
  %4755 = vmatprep.subr.mxu0 0.0
  %4756 = vmatpush1.msra.mxu0 0.0
  %4757 = vmatprep.subr.mxu0 0.0
  %4758 = vmatpush1.msra.mxu0 0.0
  %4759 = vmatprep.subr.mxu0 0.0
  %4760 = vmatpush1.msra.mxu0 0.0
  %4761 = vmatprep.subr.mxu0 0.0
  %4762 = vmatpush1.msra.mxu0 0.0
  %4763 = vmatprep.subr.mxu0 0.0
  %4764 = vmatpush1.msra.mxu0 0.0
  %4765 = vmatprep.subr.mxu0 0.0
  %4766 = vmatpush1.msra.mxu0 0.0
  %4767 = vmatprep.subr.mxu0 0.0
  %4768 = vmatpush1.msra.mxu0 0.0
  %4769 = vmatprep.subr.mxu0 0.0
  %4770 = vmatpush1.msra.mxu0 0.0
  %4771 = vmatprep.subr.mxu0 0.0
  %4772 = vmatpush1.msra.mxu0 0.0
  %4773 = vmatprep.subr.mxu0 0.0
  %4774 = vmatpush1.msra.mxu0 0.0
  %4775 = vmatprep.subr.mxu0 0.0
  %4776 = vmatpush1.msra.mxu0 0.0
  %4777 = vmatprep.subr.mxu0 0.0
  %4778 = vmatpush1.msra.mxu0 0.0
  %4779 = vmatprep.subr.mxu0 0.0
  %4780 = vmatpush1.msra.mxu0 0.0
  %4781 = vmatprep.subr.mxu0 0.0
  %4782 = vmatpush1.msra.mxu0 0.0
  %4783 = vmatprep.subr.mxu0 0.0
  %4784 = vmatpush1.msra.mxu0 0.0
  %4785 = vmatprep.subr.mxu0 0.0
  %4786 = vmatpush1.msra.mxu0 0.0
  %4787 = vmatprep.subr.mxu0 0.0
  %4788 = vmatpush1.msra.mxu0 0.0
  %4789 = vmatprep.subr.mxu0 0.0
  %4790 = vmatpush1.msra.mxu0 0.0
  %4791 = vmatprep.subr.mxu0 0.0
  %4792 = vmatpush1.msra.mxu0 0.0
  %4793 = vmatprep.subr.mxu0 0.0
  %4794 = vmatpush1.msra.mxu0 0.0
  %4795 = vmatprep.subr.mxu0 0.0
  %4796 = vmatpush1.msra.mxu0 0.0
  %4797 = vmatprep.subr.mxu0 0.0
  %4798 = vmatpush1.msra.mxu0 0.0
  %4799 = vmatprep.subr.mxu0 0.0
  %4800 = vmatpush1.msra.mxu0 0.0
  %4801 = vmatprep.mubr.f32.mxu0 0.0
  %4802 = vmatmul.mubr.f32.gmra.mrb[0].mxu0 %v4719
  %v4803 = vpop.f32.mrb[0].mxu0
  %v4804 = vadd.f32 0.0, %v4803
  %v4805 = vpop.f32.mrb[0].mxu0
  %v4806 = vadd.f32 0.0, %v4805
  %4807 = vdwg.mxu0
  %4808 = vmatprep.subr.mxu0 %v4727
  %4809 = vmatpush1.msra.mxu0 %v4725
  %4810 = vmatprep.subr.mxu0 0.0
  %4811 = vmatpush1.msra.mxu0 0.0
  %4812 = vmatprep.subr.mxu0 0.0
  %4813 = vmatpush1.msra.mxu0 0.0
  %4814 = vmatprep.subr.mxu0 0.0
  %4815 = vmatpush1.msra.mxu0 0.0
  %4816 = vmatprep.subr.mxu0 0.0
  %4817 = vmatpush1.msra.mxu0 0.0
  %4818 = vmatprep.subr.mxu0 0.0
  %4819 = vmatpush1.msra.mxu0 0.0
  %4820 = vmatprep.subr.mxu0 0.0
  %4821 = vmatpush1.msra.mxu0 0.0
  %4822 = vmatprep.subr.mxu0 0.0
  %4823 = vmatpush1.msra.mxu0 0.0
  %4824 = vmatprep.subr.mxu0 0.0
  %4825 = vmatpush1.msra.mxu0 0.0
  %4826 = vmatprep.subr.mxu0 0.0
  %4827 = vmatpush1.msra.mxu0 0.0
  %4828 = vmatprep.subr.mxu0 0.0
  %4829 = vmatpush1.msra.mxu0 0.0
  %4830 = vmatprep.subr.mxu0 0.0
  %4831 = vmatpush1.msra.mxu0 0.0
  %4832 = vmatprep.subr.mxu0 0.0
  %4833 = vmatpush1.msra.mxu0 0.0
  %4834 = vmatprep.subr.mxu0 0.0
  %4835 = vmatpush1.msra.mxu0 0.0
  %4836 = vmatprep.subr.mxu0 0.0
  %4837 = vmatpush1.msra.mxu0 0.0
  %4838 = vmatprep.subr.mxu0 0.0
  %4839 = vmatpush1.msra.mxu0 0.0
  %4840 = vmatprep.subr.mxu0 0.0
  %4841 = vmatpush1.msra.mxu0 0.0
  %4842 = vmatprep.subr.mxu0 0.0
  %4843 = vmatpush1.msra.mxu0 0.0
  %4844 = vmatprep.subr.mxu0 0.0
  %4845 = vmatpush1.msra.mxu0 0.0
  %4846 = vmatprep.subr.mxu0 0.0
  %4847 = vmatpush1.msra.mxu0 0.0
  %4848 = vmatprep.subr.mxu0 0.0
  %4849 = vmatpush1.msra.mxu0 0.0
  %4850 = vmatprep.subr.mxu0 0.0
  %4851 = vmatpush1.msra.mxu0 0.0
  %4852 = vmatprep.subr.mxu0 0.0
  %4853 = vmatpush1.msra.mxu0 0.0
  %4854 = vmatprep.subr.mxu0 0.0
  %4855 = vmatpush1.msra.mxu0 0.0
  %4856 = vmatprep.subr.mxu0 0.0
  %4857 = vmatpush1.msra.mxu0 0.0
  %4858 = vmatprep.subr.mxu0 0.0
  %4859 = vmatpush1.msra.mxu0 0.0
  %4860 = vmatprep.subr.mxu0 0.0
  %4861 = vmatpush1.msra.mxu0 0.0
  %4862 = vmatprep.subr.mxu0 0.0
  %4863 = vmatpush1.msra.mxu0 0.0
  %4864 = vmatprep.subr.mxu0 0.0
  %4865 = vmatpush1.msra.mxu0 0.0
  %4866 = vmatprep.subr.mxu0 0.0
  %4867 = vmatpush1.msra.mxu0 0.0
  %4868 = vmatprep.subr.mxu0 0.0
  %4869 = vmatpush1.msra.mxu0 0.0
  %4870 = vmatprep.subr.mxu0 0.0
  %4871 = vmatpush1.msra.mxu0 0.0
  %4872 = vmatprep.mubr.f32.mxu0 0.0
  %4873 = vmatmul.mubr.f32.gmra.mrb[0].mxu0 %v4719
  %v4874 = vpop.f32.mrb[0].mxu0
  %v4875 = vadd.f32 0.0, %v4874
  %v4876 = vpop.f32.mrb[0].mxu0
  %v4877 = vadd.f32 0.0, %v4876
  %4878 = vdwg.mxu0
  %4879 = vmatprep.subr.mxu0 %v4731
  %4880 = vmatpush1.msra.mxu0 %v4729
  %4881 = vmatprep.subr.mxu0 0.0
  %4882 = vmatpush1.msra.mxu0 0.0
  %4883 = vmatprep.subr.mxu0 0.0
  %4884 = vmatpush1.msra.mxu0 0.0
  %4885 = vmatprep.subr.mxu0 0.0
  %4886 = vmatpush1.msra.mxu0 0.0
  %4887 = vmatprep.subr.mxu0 0.0
  %4888 = vmatpush1.msra.mxu0 0.0
  %4889 = vmatprep.subr.mxu0 0.0
  %4890 = vmatpush1.msra.mxu0 0.0
  %4891 = vmatprep.subr.mxu0 0.0
  %4892 = vmatpush1.msra.mxu0 0.0
  %4893 = vmatprep.subr.mxu0 0.0
  %4894 = vmatpush1.msra.mxu0 0.0
  %4895 = vmatprep.subr.mxu0 0.0
  %4896 = vmatpush1.msra.mxu0 0.0
  %4897 = vmatprep.subr.mxu0 0.0
  %4898 = vmatpush1.msra.mxu0 0.0
  %4899 = vmatprep.subr.mxu0 0.0
  %4900 = vmatpush1.msra.mxu0 0.0
  %4901 = vmatprep.subr.mxu0 0.0
  %4902 = vmatpush1.msra.mxu0 0.0
  %4903 = vmatprep.subr.mxu0 0.0
  %4904 = vmatpush1.msra.mxu0 0.0
  %4905 = vmatprep.subr.mxu0 0.0
  %4906 = vmatpush1.msra.mxu0 0.0
  %4907 = vmatprep.subr.mxu0 0.0
  %4908 = vmatpush1.msra.mxu0 0.0
  %4909 = vmatprep.subr.mxu0 0.0
  %4910 = vmatpush1.msra.mxu0 0.0
  %4911 = vmatprep.subr.mxu0 0.0
  %4912 = vmatpush1.msra.mxu0 0.0
  %4913 = vmatprep.subr.mxu0 0.0
  %4914 = vmatpush1.msra.mxu0 0.0
  %4915 = vmatprep.subr.mxu0 0.0
  %4916 = vmatpush1.msra.mxu0 0.0
  %4917 = vmatprep.subr.mxu0 0.0
  %4918 = vmatpush1.msra.mxu0 0.0
  %4919 = vmatprep.subr.mxu0 0.0
  %4920 = vmatpush1.msra.mxu0 0.0
  %4921 = vmatprep.subr.mxu0 0.0
  %4922 = vmatpush1.msra.mxu0 0.0
  %4923 = vmatprep.subr.mxu0 0.0
  %4924 = vmatpush1.msra.mxu0 0.0
  %4925 = vmatprep.subr.mxu0 0.0
  %4926 = vmatpush1.msra.mxu0 0.0
  %4927 = vmatprep.subr.mxu0 0.0
  %4928 = vmatpush1.msra.mxu0 0.0
  %4929 = vmatprep.subr.mxu0 0.0
  %4930 = vmatpush1.msra.mxu0 0.0
  %4931 = vmatprep.subr.mxu0 0.0
  %4932 = vmatpush1.msra.mxu0 0.0
  %4933 = vmatprep.subr.mxu0 0.0
  %4934 = vmatpush1.msra.mxu0 0.0
  %4935 = vmatprep.subr.mxu0 0.0
  %4936 = vmatpush1.msra.mxu0 0.0
  %4937 = vmatprep.subr.mxu0 0.0
  %4938 = vmatpush1.msra.mxu0 0.0
  %4939 = vmatprep.subr.mxu0 0.0
  %4940 = vmatpush1.msra.mxu0 0.0
  %4941 = vmatprep.subr.mxu0 0.0
  %4942 = vmatpush1.msra.mxu0 0.0
  %4943 = vmatprep.mubr.f32.mxu0 0.0
  %4944 = vmatmul.mubr.f32.gmra.mrb[0].mxu0 %v4719
  %v4945 = vpop.f32.mrb[0].mxu0
  %v4946 = vadd.f32 0.0, %v4945
  %v4947 = vpop.f32.mrb[0].mxu0
  %v4948 = vadd.f32 0.0, %v4947
  %4949 = vdwg.mxu0
  %4950 = vmatprep.subr.mxu0 %v4735
  %4951 = vmatpush1.msra.mxu0 %v4733
  %4952 = vmatprep.subr.mxu0 0.0
  %4953 = vmatpush1.msra.mxu0 0.0
  %4954 = vmatprep.subr.mxu0 0.0
  %4955 = vmatpush1.msra.mxu0 0.0
  %4956 = vmatprep.subr.mxu0 0.0
  %4957 = vmatpush1.msra.mxu0 0.0
  %4958 = vmatprep.subr.mxu0 0.0
  %4959 = vmatpush1.msra.mxu0 0.0
  %4960 = vmatprep.subr.mxu0 0.0
  %4961 = vmatpush1.msra.mxu0 0.0
  %4962 = vmatprep.subr.mxu0 0.0
  %4963 = vmatpush1.msra.mxu0 0.0
  %4964 = vmatprep.subr.mxu0 0.0
  %4965 = vmatpush1.msra.mxu0 0.0
  %4966 = vmatprep.subr.mxu0 0.0
  %4967 = vmatpush1.msra.mxu0 0.0
  %4968 = vmatprep.subr.mxu0 0.0
  %4969 = vmatpush1.msra.mxu0 0.0
  %4970 = vmatprep.subr.mxu0 0.0
  %4971 = vmatpush1.msra.mxu0 0.0
  %4972 = vmatprep.subr.mxu0 0.0
  %4973 = vmatpush1.msra.mxu0 0.0
  %4974 = vmatprep.subr.mxu0 0.0
  %4975 = vmatpush1.msra.mxu0 0.0
  %4976 = vmatprep.subr.mxu0 0.0
  %4977 = vmatpush1.msra.mxu0 0.0
  %4978 = vmatprep.subr.mxu0 0.0
  %4979 = vmatpush1.msra.mxu0 0.0
  %4980 = vmatprep.subr.mxu0 0.0
  %4981 = vmatpush1.msra.mxu0 0.0
  %4982 = vmatprep.subr.mxu0 0.0
  %4983 = vmatpush1.msra.mxu0 0.0
  %4984 = vmatprep.subr.mxu0 0.0
  %4985 = vmatpush1.msra.mxu0 0.0
  %4986 = vmatprep.subr.mxu0 0.0
  %4987 = vmatpush1.msra.mxu0 0.0
  %4988 = vmatprep.subr.mxu0 0.0
  %4989 = vmatpush1.msra.mxu0 0.0
  %4990 = vmatprep.subr.mxu0 0.0
  %4991 = vmatpush1.msra.mxu0 0.0
  %4992 = vmatprep.subr.mxu0 0.0
  %4993 = vmatpush1.msra.mxu0 0.0
  %4994 = vmatprep.subr.mxu0 0.0
  %4995 = vmatpush1.msra.mxu0 0.0
  %4996 = vmatprep.subr.mxu0 0.0
  %4997 = vmatpush1.msra.mxu0 0.0
  %4998 = vmatprep.subr.mxu0 0.0
  %4999 = vmatpush1.msra.mxu0 0.0
  %5000 = vmatprep.subr.mxu0 0.0
  %5001 = vmatpush1.msra.mxu0 0.0
  %5002 = vmatprep.subr.mxu0 0.0
  %5003 = vmatpush1.msra.mxu0 0.0
  %5004 = vmatprep.subr.mxu0 0.0
  %5005 = vmatpush1.msra.mxu0 0.0
  %5006 = vmatprep.subr.mxu0 0.0
  %5007 = vmatpush1.msra.mxu0 0.0
  %5008 = vmatprep.subr.mxu0 0.0
  %5009 = vmatpush1.msra.mxu0 0.0
  %5010 = vmatprep.subr.mxu0 0.0
  %5011 = vmatpush1.msra.mxu0 0.0
  %5012 = vmatprep.subr.mxu0 0.0
  %5013 = vmatpush1.msra.mxu0 0.0
  %5014 = vmatprep.mubr.f32.mxu0 0.0
  %5015 = vmatmul.mubr.f32.gmra.mrb[0].mxu0 %v4719
  %v5016 = vpop.f32.mrb[0].mxu0
  %v5017 = vadd.f32 0.0, %v5016
  %v5018 = vpop.f32.mrb[0].mxu0
  %v5019 = vadd.f32 0.0, %v5018
  %5020 = vdwg.mxu0
  %v5021 = vadd.f32 %v4390, %v4804
  %v5022 = vadd.f32 %v4392, %v4806
  %v5023 = vadd.f32 %v4461, %v4875
  %v5024 = vadd.f32 %v4463, %v4877
  %v5025 = vadd.f32 %v4532, %v4946
  %v5026 = vadd.f32 %v4534, %v4948
  %v5027 = vadd.f32 %v4603, %v5017
  %v5028 = vadd.f32 %v4605, %v5019
  %v5029 = vld [vmem:[#allocation3] sm:$0xff]
  %v5030 = vld [vmem:[#allocation3 + $0x8] sm:$0xff]
  %v5031 = vld [vmem:[#allocation3 + $0x10] sm:$0xff]
  %v5032 = vld [vmem:[#allocation3 + $0x18] sm:$0xff]
  %v5033 = vld [vmem:[#allocation3 + $0x20] sm:$0xf]
  %v5034 = vld [vmem:[%s1305] ss:$8 sm:$0xf]
  %v5035 = vld [vmem:[%s1305] ss:$8 sm:$0xf0]
  %v5036 = vor.u32 %v5034, %v5035
  %v5038 = vlaneseq
  %v5039 = vshrl.u32 %v5038, 7
  %v5040 = vsub.s32 0, %v5039
  %v5041 = vrot.slane %v5036, %v5040
  %v5042 = vlaneseq
  %v5043 = vshrl.u32 %v5042, 7
  %v5044 = vsub.s32 1, %v5043
  %v5045 = vrot.slane %v5036, %v5044
  %v5046 = vlaneseq
  %v5047 = vshrl.u32 %v5046, 7
  %v5048 = vsub.s32 2, %v5047
  %v5049 = vrot.slane %v5036, %v5048
  %v5050 = vlaneseq
  %v5051 = vshrl.u32 %v5050, 7
  %v5052 = vsub.s32 3, %v5051
  %v5053 = vrot.slane %v5036, %v5052
  %v5054 = vlaneseq
  %v5055 = vshrl.u32 %v5054, 7
  %v5056 = vsub.s32 4, %v5055
  %v5057 = vrot.slane %v5036, %v5056
  %v5058 = vlaneseq
  %v5059 = vshrl.u32 %v5058, 7
  %v5060 = vsub.s32 5, %v5059
  %v5061 = vrot.slane %v5036, %v5060
  %v5062 = vlaneseq
  %v5063 = vshrl.u32 %v5062, 7
  %v5064 = vsub.s32 6, %v5063
  %v5065 = vrot.slane %v5036, %v5064
  %v5066 = vlaneseq
  %v5067 = vshrl.u32 %v5066, 7
  %v5068 = vsub.s32 7, %v5067
  %v5069 = vrot.slane %v5036, %v5068
  %v5070 = vcombine.low %v5041, %v5045
  %v5071 = vcombine.low %v5049, %v5053
  %v5072 = vcombine.low %v5057, %v5061
  %v5073 = vcombine.low %v5065, %v5069
  %5074 = vrot.lane.b32.xlu0 %v5070, 127
  %v5075 = vpop.permute.xlu0 %5074
  %5076 = vrot.lane.b32.xlu0 %v5071, 127
  %v5077 = vpop.permute.xlu0 %5076
  %5078 = vrot.lane.b32.xlu0 %v5072, 127
  %v5079 = vpop.permute.xlu0 %5078
  %5080 = vrot.lane.b32.xlu0 %v5073, 127
  %v5081 = vpop.permute.xlu0 %5080
  %v5082 = vrot.slane %v5075, 4
  %v5083 = vrot.slane %v5077, 4
  %v5084 = vrot.slane %v5079, 4
  %v5085 = vrot.slane %v5081, 4
  %v5086 = vsel %vm1358, %v5082, %v5075
  %v5087 = vsel %vm105, %v5082, %v5083
  %v5088 = vsel %vm1358, %v5087, %v5077
  %v5089 = vsel %vm105, %v5083, %v5084
  %v5090 = vsel %vm1358, %v5089, %v5079
  %v5091 = vsel %vm105, %v5084, %v5085
  %v5092 = vsel %vm1358, %v5091, %v5081
  %v5098 = vmul.f32 %v5029, %v5086
  %v5099 = vmul.f32 %v5030, %v5088
  %v5100 = vmul.f32 %v5031, %v5090
  %v5101 = vmul.f32 %v5032, %v5092
  %v5102 = vmul.f32 %v5033, %v5085
  %s5103 = scalar_lea.vmem %s2, 48
  %v5104 = vld [vmem:[%s5103] sm:$0xf]
  %v5110 = vcombine.high %v5098, %v5098
  %v5111 = vcombine.high %v5099, %v5099
  %v5112 = vcombine.high %v5100, %v5100
  %v5113 = vcombine.high %v5101, %v5101
  %5114 = vrot.lane.b32.xlu0 %v5098, 1
  %v5115 = vpop.permute.xlu0 %5114
  %5116 = vrot.lane.b32.xlu0 %v5110, 1
  %v5117 = vpop.permute.xlu0 %5116
  %5118 = vrot.lane.b32.xlu0 %v5099, 1
  %v5119 = vpop.permute.xlu0 %5118
  %5120 = vrot.lane.b32.xlu0 %v5111, 1
  %v5121 = vpop.permute.xlu0 %5120
  %5122 = vrot.lane.b32.xlu0 %v5100, 1
  %v5123 = vpop.permute.xlu0 %5122
  %5124 = vrot.lane.b32.xlu0 %v5112, 1
  %v5125 = vpop.permute.xlu0 %5124
  %5126 = vrot.lane.b32.xlu0 %v5101, 1
  %v5127 = vpop.permute.xlu0 %5126
  %5128 = vrot.lane.b32.xlu0 %v5113, 1
  %v5129 = vpop.permute.xlu0 %5128
  %5130 = vrot.lane.b32.xlu0 %v5102, 1
  %v5131 = vpop.permute.xlu0 %5130
  %v5132 = vsel %vm1405, %v5115, %v5117
  %v5133 = vsel %vm1405, %v5117, %v5119
  %v5134 = vsel %vm1405, %v5119, %v5121
  %v5135 = vsel %vm1405, %v5121, %v5123
  %v5136 = vsel %vm1405, %v5123, %v5125
  %v5137 = vsel %vm1405, %v5125, %v5127
  %v5138 = vsel %vm1405, %v5127, %v5129
  %v5139 = vsel %vm1405, %v5129, %v5131
  %v5141 = vsel %vm232, %v5104, 0
  %v5143 = vsel %vm105, %v5132, 0
  %v5145 = vsel %vm105, %v5133, 0
  %v5147 = vsel %vm105, %v5134, 0
  %v5149 = vsel %vm105, %v5135, 0
  %v5151 = vsel %vm105, %v5136, 0
  %v5153 = vsel %vm105, %v5137, 0
  %v5155 = vsel %vm105, %v5138, 0
  %v5157 = vsel %vm105, %v5139, 0
  %5159 = vmatprep.subr.mxu0 %v5145
  %5160 = vmatpush1.msra.mxu0 %v5143
  %5161 = vmatprep.subr.mxu0 0.0
  %5162 = vmatpush1.msra.mxu0 0.0
  %5163 = vmatprep.subr.mxu0 0.0
  %5164 = vmatpush1.msra.mxu0 0.0
  %5165 = vmatprep.subr.mxu0 0.0
  %5166 = vmatpush1.msra.mxu0 0.0
  %5167 = vmatprep.subr.mxu0 0.0
  %5168 = vmatpush1.msra.mxu0 0.0
  %5169 = vmatprep.subr.mxu0 0.0
  %5170 = vmatpush1.msra.mxu0 0.0
  %5171 = vmatprep.subr.mxu0 0.0
  %5172 = vmatpush1.msra.mxu0 0.0
  %5173 = vmatprep.subr.mxu0 0.0
  %5174 = vmatpush1.msra.mxu0 0.0
  %5175 = vmatprep.subr.mxu0 0.0
  %5176 = vmatpush1.msra.mxu0 0.0
  %5177 = vmatprep.subr.mxu0 0.0
  %5178 = vmatpush1.msra.mxu0 0.0
  %5179 = vmatprep.subr.mxu0 0.0
  %5180 = vmatpush1.msra.mxu0 0.0
  %5181 = vmatprep.subr.mxu0 0.0
  %5182 = vmatpush1.msra.mxu0 0.0
  %5183 = vmatprep.subr.mxu0 0.0
  %5184 = vmatpush1.msra.mxu0 0.0
  %5185 = vmatprep.subr.mxu0 0.0
  %5186 = vmatpush1.msra.mxu0 0.0
  %5187 = vmatprep.subr.mxu0 0.0
  %5188 = vmatpush1.msra.mxu0 0.0
  %5189 = vmatprep.subr.mxu0 0.0
  %5190 = vmatpush1.msra.mxu0 0.0
  %5191 = vmatprep.subr.mxu0 0.0
  %5192 = vmatpush1.msra.mxu0 0.0
  %5193 = vmatprep.subr.mxu0 0.0
  %5194 = vmatpush1.msra.mxu0 0.0
  %5195 = vmatprep.subr.mxu0 0.0
  %5196 = vmatpush1.msra.mxu0 0.0
  %5197 = vmatprep.subr.mxu0 0.0
  %5198 = vmatpush1.msra.mxu0 0.0
  %5199 = vmatprep.subr.mxu0 0.0
  %5200 = vmatpush1.msra.mxu0 0.0
  %5201 = vmatprep.subr.mxu0 0.0
  %5202 = vmatpush1.msra.mxu0 0.0
  %5203 = vmatprep.subr.mxu0 0.0
  %5204 = vmatpush1.msra.mxu0 0.0
  %5205 = vmatprep.subr.mxu0 0.0
  %5206 = vmatpush1.msra.mxu0 0.0
  %5207 = vmatprep.subr.mxu0 0.0
  %5208 = vmatpush1.msra.mxu0 0.0
  %5209 = vmatprep.subr.mxu0 0.0
  %5210 = vmatpush1.msra.mxu0 0.0
  %5211 = vmatprep.subr.mxu0 0.0
  %5212 = vmatpush1.msra.mxu0 0.0
  %5213 = vmatprep.subr.mxu0 0.0
  %5214 = vmatpush1.msra.mxu0 0.0
  %5215 = vmatprep.subr.mxu0 0.0
  %5216 = vmatpush1.msra.mxu0 0.0
  %5217 = vmatprep.subr.mxu0 0.0
  %5218 = vmatpush1.msra.mxu0 0.0
  %5219 = vmatprep.subr.mxu0 0.0
  %5220 = vmatpush1.msra.mxu0 0.0
  %5221 = vmatprep.subr.mxu0 0.0
  %5222 = vmatpush1.msra.mxu0 0.0
  %5223 = vmatprep.mubr.f32.mxu0 0.0
  %5224 = vmatmul.mubr.f32.gmra.mrb[0].mxu0 %v5141
  %v5225 = vpop.f32.mrb[0].mxu0
  %v5226 = vadd.f32 0.0, %v5225
  %v5227 = vpop.f32.mrb[0].mxu0
  %v5228 = vadd.f32 0.0, %v5227
  %5229 = vdwg.mxu0
  %5230 = vmatprep.subr.mxu0 %v5149
  %5231 = vmatpush1.msra.mxu0 %v5147
  %5232 = vmatprep.subr.mxu0 0.0
  %5233 = vmatpush1.msra.mxu0 0.0
  %5234 = vmatprep.subr.mxu0 0.0
  %5235 = vmatpush1.msra.mxu0 0.0
  %5236 = vmatprep.subr.mxu0 0.0
  %5237 = vmatpush1.msra.mxu0 0.0
  %5238 = vmatprep.subr.mxu0 0.0
  %5239 = vmatpush1.msra.mxu0 0.0
  %5240 = vmatprep.subr.mxu0 0.0
  %5241 = vmatpush1.msra.mxu0 0.0
  %5242 = vmatprep.subr.mxu0 0.0
  %5243 = vmatpush1.msra.mxu0 0.0
  %5244 = vmatprep.subr.mxu0 0.0
  %5245 = vmatpush1.msra.mxu0 0.0
  %5246 = vmatprep.subr.mxu0 0.0
  %5247 = vmatpush1.msra.mxu0 0.0
  %5248 = vmatprep.subr.mxu0 0.0
  %5249 = vmatpush1.msra.mxu0 0.0
  %5250 = vmatprep.subr.mxu0 0.0
  %5251 = vmatpush1.msra.mxu0 0.0
  %5252 = vmatprep.subr.mxu0 0.0
  %5253 = vmatpush1.msra.mxu0 0.0
  %5254 = vmatprep.subr.mxu0 0.0
  %5255 = vmatpush1.msra.mxu0 0.0
  %5256 = vmatprep.subr.mxu0 0.0
  %5257 = vmatpush1.msra.mxu0 0.0
  %5258 = vmatprep.subr.mxu0 0.0
  %5259 = vmatpush1.msra.mxu0 0.0
  %5260 = vmatprep.subr.mxu0 0.0
  %5261 = vmatpush1.msra.mxu0 0.0
  %5262 = vmatprep.subr.mxu0 0.0
  %5263 = vmatpush1.msra.mxu0 0.0
  %5264 = vmatprep.subr.mxu0 0.0
  %5265 = vmatpush1.msra.mxu0 0.0
  %5266 = vmatprep.subr.mxu0 0.0
  %5267 = vmatpush1.msra.mxu0 0.0
  %5268 = vmatprep.subr.mxu0 0.0
  %5269 = vmatpush1.msra.mxu0 0.0
  %5270 = vmatprep.subr.mxu0 0.0
  %5271 = vmatpush1.msra.mxu0 0.0
  %5272 = vmatprep.subr.mxu0 0.0
  %5273 = vmatpush1.msra.mxu0 0.0
  %5274 = vmatprep.subr.mxu0 0.0
  %5275 = vmatpush1.msra.mxu0 0.0
  %5276 = vmatprep.subr.mxu0 0.0
  %5277 = vmatpush1.msra.mxu0 0.0
  %5278 = vmatprep.subr.mxu0 0.0
  %5279 = vmatpush1.msra.mxu0 0.0
  %5280 = vmatprep.subr.mxu0 0.0
  %5281 = vmatpush1.msra.mxu0 0.0
  %5282 = vmatprep.subr.mxu0 0.0
  %5283 = vmatpush1.msra.mxu0 0.0
  %5284 = vmatprep.subr.mxu0 0.0
  %5285 = vmatpush1.msra.mxu0 0.0
  %5286 = vmatprep.subr.mxu0 0.0
  %5287 = vmatpush1.msra.mxu0 0.0
  %5288 = vmatprep.subr.mxu0 0.0
  %5289 = vmatpush1.msra.mxu0 0.0
  %5290 = vmatprep.subr.mxu0 0.0
  %5291 = vmatpush1.msra.mxu0 0.0
  %5292 = vmatprep.subr.mxu0 0.0
  %5293 = vmatpush1.msra.mxu0 0.0
  %5294 = vmatprep.mubr.f32.mxu0 0.0
  %5295 = vmatmul.mubr.f32.gmra.mrb[0].mxu0 %v5141
  %v5296 = vpop.f32.mrb[0].mxu0
  %v5297 = vadd.f32 0.0, %v5296
  %v5298 = vpop.f32.mrb[0].mxu0
  %v5299 = vadd.f32 0.0, %v5298
  %5300 = vdwg.mxu0
  %5301 = vmatprep.subr.mxu0 %v5153
  %5302 = vmatpush1.msra.mxu0 %v5151
  %5303 = vmatprep.subr.mxu0 0.0
  %5304 = vmatpush1.msra.mxu0 0.0
  %5305 = vmatprep.subr.mxu0 0.0
  %5306 = vmatpush1.msra.mxu0 0.0
  %5307 = vmatprep.subr.mxu0 0.0
  %5308 = vmatpush1.msra.mxu0 0.0
  %5309 = vmatprep.subr.mxu0 0.0
  %5310 = vmatpush1.msra.mxu0 0.0
  %5311 = vmatprep.subr.mxu0 0.0
  %5312 = vmatpush1.msra.mxu0 0.0
  %5313 = vmatprep.subr.mxu0 0.0
  %5314 = vmatpush1.msra.mxu0 0.0
  %5315 = vmatprep.subr.mxu0 0.0
  %5316 = vmatpush1.msra.mxu0 0.0
  %5317 = vmatprep.subr.mxu0 0.0
  %5318 = vmatpush1.msra.mxu0 0.0
  %5319 = vmatprep.subr.mxu0 0.0
  %5320 = vmatpush1.msra.mxu0 0.0
  %5321 = vmatprep.subr.mxu0 0.0
  %5322 = vmatpush1.msra.mxu0 0.0
  %5323 = vmatprep.subr.mxu0 0.0
  %5324 = vmatpush1.msra.mxu0 0.0
  %5325 = vmatprep.subr.mxu0 0.0
  %5326 = vmatpush1.msra.mxu0 0.0
  %5327 = vmatprep.subr.mxu0 0.0
  %5328 = vmatpush1.msra.mxu0 0.0
  %5329 = vmatprep.subr.mxu0 0.0
  %5330 = vmatpush1.msra.mxu0 0.0
  %5331 = vmatprep.subr.mxu0 0.0
  %5332 = vmatpush1.msra.mxu0 0.0
  %5333 = vmatprep.subr.mxu0 0.0
  %5334 = vmatpush1.msra.mxu0 0.0
  %5335 = vmatprep.subr.mxu0 0.0
  %5336 = vmatpush1.msra.mxu0 0.0
  %5337 = vmatprep.subr.mxu0 0.0
  %5338 = vmatpush1.msra.mxu0 0.0
  %5339 = vmatprep.subr.mxu0 0.0
  %5340 = vmatpush1.msra.mxu0 0.0
  %5341 = vmatprep.subr.mxu0 0.0
  %5342 = vmatpush1.msra.mxu0 0.0
  %5343 = vmatprep.subr.mxu0 0.0
  %5344 = vmatpush1.msra.mxu0 0.0
  %5345 = vmatprep.subr.mxu0 0.0
  %5346 = vmatpush1.msra.mxu0 0.0
  %5347 = vmatprep.subr.mxu0 0.0
  %5348 = vmatpush1.msra.mxu0 0.0
  %5349 = vmatprep.subr.mxu0 0.0
  %5350 = vmatpush1.msra.mxu0 0.0
  %5351 = vmatprep.subr.mxu0 0.0
  %5352 = vmatpush1.msra.mxu0 0.0
  %5353 = vmatprep.subr.mxu0 0.0
  %5354 = vmatpush1.msra.mxu0 0.0
  %5355 = vmatprep.subr.mxu0 0.0
  %5356 = vmatpush1.msra.mxu0 0.0
  %5357 = vmatprep.subr.mxu0 0.0
  %5358 = vmatpush1.msra.mxu0 0.0
  %5359 = vmatprep.subr.mxu0 0.0
  %5360 = vmatpush1.msra.mxu0 0.0
  %5361 = vmatprep.subr.mxu0 0.0
  %5362 = vmatpush1.msra.mxu0 0.0
  %5363 = vmatprep.subr.mxu0 0.0
  %5364 = vmatpush1.msra.mxu0 0.0
  %5365 = vmatprep.mubr.f32.mxu0 0.0
  %5366 = vmatmul.mubr.f32.gmra.mrb[0].mxu0 %v5141
  %v5367 = vpop.f32.mrb[0].mxu0
  %v5368 = vadd.f32 0.0, %v5367
  %v5369 = vpop.f32.mrb[0].mxu0
  %v5370 = vadd.f32 0.0, %v5369
  %5371 = vdwg.mxu0
  %5372 = vmatprep.subr.mxu0 %v5157
  %5373 = vmatpush1.msra.mxu0 %v5155
  %5374 = vmatprep.subr.mxu0 0.0
  %5375 = vmatpush1.msra.mxu0 0.0
  %5376 = vmatprep.subr.mxu0 0.0
  %5377 = vmatpush1.msra.mxu0 0.0
  %5378 = vmatprep.subr.mxu0 0.0
  %5379 = vmatpush1.msra.mxu0 0.0
  %5380 = vmatprep.subr.mxu0 0.0
  %5381 = vmatpush1.msra.mxu0 0.0
  %5382 = vmatprep.subr.mxu0 0.0
  %5383 = vmatpush1.msra.mxu0 0.0
  %5384 = vmatprep.subr.mxu0 0.0
  %5385 = vmatpush1.msra.mxu0 0.0
  %5386 = vmatprep.subr.mxu0 0.0
  %5387 = vmatpush1.msra.mxu0 0.0
  %5388 = vmatprep.subr.mxu0 0.0
  %5389 = vmatpush1.msra.mxu0 0.0
  %5390 = vmatprep.subr.mxu0 0.0
  %5391 = vmatpush1.msra.mxu0 0.0
  %5392 = vmatprep.subr.mxu0 0.0
  %5393 = vmatpush1.msra.mxu0 0.0
  %5394 = vmatprep.subr.mxu0 0.0
  %5395 = vmatpush1.msra.mxu0 0.0
  %5396 = vmatprep.subr.mxu0 0.0
  %5397 = vmatpush1.msra.mxu0 0.0
  %5398 = vmatprep.subr.mxu0 0.0
  %5399 = vmatpush1.msra.mxu0 0.0
  %5400 = vmatprep.subr.mxu0 0.0
  %5401 = vmatpush1.msra.mxu0 0.0
  %5402 = vmatprep.subr.mxu0 0.0
  %5403 = vmatpush1.msra.mxu0 0.0
  %5404 = vmatprep.subr.mxu0 0.0
  %5405 = vmatpush1.msra.mxu0 0.0
  %5406 = vmatprep.subr.mxu0 0.0
  %5407 = vmatpush1.msra.mxu0 0.0
  %5408 = vmatprep.subr.mxu0 0.0
  %5409 = vmatpush1.msra.mxu0 0.0
  %5410 = vmatprep.subr.mxu0 0.0
  %5411 = vmatpush1.msra.mxu0 0.0
  %5412 = vmatprep.subr.mxu0 0.0
  %5413 = vmatpush1.msra.mxu0 0.0
  %5414 = vmatprep.subr.mxu0 0.0
  %5415 = vmatpush1.msra.mxu0 0.0
  %5416 = vmatprep.subr.mxu0 0.0
  %5417 = vmatpush1.msra.mxu0 0.0
  %5418 = vmatprep.subr.mxu0 0.0
  %5419 = vmatpush1.msra.mxu0 0.0
  %5420 = vmatprep.subr.mxu0 0.0
  %5421 = vmatpush1.msra.mxu0 0.0
  %5422 = vmatprep.subr.mxu0 0.0
  %5423 = vmatpush1.msra.mxu0 0.0
  %5424 = vmatprep.subr.mxu0 0.0
  %5425 = vmatpush1.msra.mxu0 0.0
  %5426 = vmatprep.subr.mxu0 0.0
  %5427 = vmatpush1.msra.mxu0 0.0
  %5428 = vmatprep.subr.mxu0 0.0
  %5429 = vmatpush1.msra.mxu0 0.0
  %5430 = vmatprep.subr.mxu0 0.0
  %5431 = vmatpush1.msra.mxu0 0.0
  %5432 = vmatprep.subr.mxu0 0.0
  %5433 = vmatpush1.msra.mxu0 0.0
  %5434 = vmatprep.subr.mxu0 0.0
  %5435 = vmatpush1.msra.mxu0 0.0
  %5436 = vmatprep.mubr.f32.mxu0 0.0
  %5437 = vmatmul.mubr.f32.gmra.mrb[0].mxu0 %v5141
  %v5438 = vpop.f32.mrb[0].mxu0
  %v5439 = vadd.f32 0.0, %v5438
  %v5440 = vpop.f32.mrb[0].mxu0
  %v5441 = vadd.f32 0.0, %v5440
  %5442 = vdwg.mxu0
  %v5443 = vadd.f32 %v5021, %v5226
  %v5444 = vadd.f32 %v5022, %v5228
  %v5445 = vadd.f32 %v5023, %v5297
  %v5446 = vadd.f32 %v5024, %v5299
  %v5447 = vadd.f32 %v5025, %v5368
  %v5448 = vadd.f32 %v5026, %v5370
  %v5449 = vadd.f32 %v5027, %v5439
  %v5450 = vadd.f32 %v5028, %v5441
  %v5451 = vld [vmem:[#allocation3 + $0x4] sm:$0xff]
  %v5452 = vld [vmem:[#allocation3 + $0xc] sm:$0xff]
  %v5453 = vld [vmem:[#allocation3 + $0x14] sm:$0xff]
  %v5454 = vld [vmem:[#allocation3 + $0x1c] sm:$0xff]
  %s5455 = scalar_lea.vmem %s2, 52
  %v5456 = vld [vmem:[%s5455] sm:$0xf]
  %v5461 = vcombine.high %v5451, %v5451
  %v5462 = vcombine.high %v5452, %v5452
  %v5463 = vcombine.high %v5453, %v5453
  %v5464 = vcombine.high %v5454, %v5454
  %v5466 = vsel %vm232, %v5456, 0
  %v5468 = vsel %vm105, %v5451, 0
  %v5470 = vsel %vm105, %v5461, 0
  %v5472 = vsel %vm105, %v5452, 0
  %v5474 = vsel %vm105, %v5462, 0
  %v5476 = vsel %vm105, %v5453, 0
  %v5478 = vsel %vm105, %v5463, 0
  %v5480 = vsel %vm105, %v5454, 0
  %v5482 = vsel %vm105, %v5464, 0
  %5484 = vmatprep.subr.mxu0 %v5470
  %5485 = vmatpush1.msra.mxu0 %v5468
  %5486 = vmatprep.subr.mxu0 0.0
  %5487 = vmatpush1.msra.mxu0 0.0
  %5488 = vmatprep.subr.mxu0 0.0
  %5489 = vmatpush1.msra.mxu0 0.0
  %5490 = vmatprep.subr.mxu0 0.0
  %5491 = vmatpush1.msra.mxu0 0.0
  %5492 = vmatprep.subr.mxu0 0.0
  %5493 = vmatpush1.msra.mxu0 0.0
  %5494 = vmatprep.subr.mxu0 0.0
  %5495 = vmatpush1.msra.mxu0 0.0
  %5496 = vmatprep.subr.mxu0 0.0
  %5497 = vmatpush1.msra.mxu0 0.0
  %5498 = vmatprep.subr.mxu0 0.0
  %5499 = vmatpush1.msra.mxu0 0.0
  %5500 = vmatprep.subr.mxu0 0.0
  %5501 = vmatpush1.msra.mxu0 0.0
  %5502 = vmatprep.subr.mxu0 0.0
  %5503 = vmatpush1.msra.mxu0 0.0
  %5504 = vmatprep.subr.mxu0 0.0
  %5505 = vmatpush1.msra.mxu0 0.0
  %5506 = vmatprep.subr.mxu0 0.0
  %5507 = vmatpush1.msra.mxu0 0.0
  %5508 = vmatprep.subr.mxu0 0.0
  %5509 = vmatpush1.msra.mxu0 0.0
  %5510 = vmatprep.subr.mxu0 0.0
  %5511 = vmatpush1.msra.mxu0 0.0
  %5512 = vmatprep.subr.mxu0 0.0
  %5513 = vmatpush1.msra.mxu0 0.0
  %5514 = vmatprep.subr.mxu0 0.0
  %5515 = vmatpush1.msra.mxu0 0.0
  %5516 = vmatprep.subr.mxu0 0.0
  %5517 = vmatpush1.msra.mxu0 0.0
  %5518 = vmatprep.subr.mxu0 0.0
  %5519 = vmatpush1.msra.mxu0 0.0
  %5520 = vmatprep.subr.mxu0 0.0
  %5521 = vmatpush1.msra.mxu0 0.0
  %5522 = vmatprep.subr.mxu0 0.0
  %5523 = vmatpush1.msra.mxu0 0.0
  %5524 = vmatprep.subr.mxu0 0.0
  %5525 = vmatpush1.msra.mxu0 0.0
  %5526 = vmatprep.subr.mxu0 0.0
  %5527 = vmatpush1.msra.mxu0 0.0
  %5528 = vmatprep.subr.mxu0 0.0
  %5529 = vmatpush1.msra.mxu0 0.0
  %5530 = vmatprep.subr.mxu0 0.0
  %5531 = vmatpush1.msra.mxu0 0.0
  %5532 = vmatprep.subr.mxu0 0.0
  %5533 = vmatpush1.msra.mxu0 0.0
  %5534 = vmatprep.subr.mxu0 0.0
  %5535 = vmatpush1.msra.mxu0 0.0
  %5536 = vmatprep.subr.mxu0 0.0
  %5537 = vmatpush1.msra.mxu0 0.0
  %5538 = vmatprep.subr.mxu0 0.0
  %5539 = vmatpush1.msra.mxu0 0.0
  %5540 = vmatprep.subr.mxu0 0.0
  %5541 = vmatpush1.msra.mxu0 0.0
  %5542 = vmatprep.subr.mxu0 0.0
  %5543 = vmatpush1.msra.mxu0 0.0
  %5544 = vmatprep.subr.mxu0 0.0
  %5545 = vmatpush1.msra.mxu0 0.0
  %5546 = vmatprep.subr.mxu0 0.0
  %5547 = vmatpush1.msra.mxu0 0.0
  %5548 = vmatprep.mubr.f32.mxu0 0.0
  %5549 = vmatmul.mubr.f32.gmra.mrb[0].mxu0 %v5466
  %v5550 = vpop.f32.mrb[0].mxu0
  %v5551 = vadd.f32 0.0, %v5550
  %v5552 = vpop.f32.mrb[0].mxu0
  %v5553 = vadd.f32 0.0, %v5552
  %5554 = vdwg.mxu0
  %5555 = vmatprep.subr.mxu0 %v5474
  %5556 = vmatpush1.msra.mxu0 %v5472
  %5557 = vmatprep.subr.mxu0 0.0
  %5558 = vmatpush1.msra.mxu0 0.0
  %5559 = vmatprep.subr.mxu0 0.0
  %5560 = vmatpush1.msra.mxu0 0.0
  %5561 = vmatprep.subr.mxu0 0.0
  %5562 = vmatpush1.msra.mxu0 0.0
  %5563 = vmatprep.subr.mxu0 0.0
  %5564 = vmatpush1.msra.mxu0 0.0
  %5565 = vmatprep.subr.mxu0 0.0
  %5566 = vmatpush1.msra.mxu0 0.0
  %5567 = vmatprep.subr.mxu0 0.0
  %5568 = vmatpush1.msra.mxu0 0.0
  %5569 = vmatprep.subr.mxu0 0.0
  %5570 = vmatpush1.msra.mxu0 0.0
  %5571 = vmatprep.subr.mxu0 0.0
  %5572 = vmatpush1.msra.mxu0 0.0
  %5573 = vmatprep.subr.mxu0 0.0
  %5574 = vmatpush1.msra.mxu0 0.0
  %5575 = vmatprep.subr.mxu0 0.0
  %5576 = vmatpush1.msra.mxu0 0.0
  %5577 = vmatprep.subr.mxu0 0.0
  %5578 = vmatpush1.msra.mxu0 0.0
  %5579 = vmatprep.subr.mxu0 0.0
  %5580 = vmatpush1.msra.mxu0 0.0
  %5581 = vmatprep.subr.mxu0 0.0
  %5582 = vmatpush1.msra.mxu0 0.0
  %5583 = vmatprep.subr.mxu0 0.0
  %5584 = vmatpush1.msra.mxu0 0.0
  %5585 = vmatprep.subr.mxu0 0.0
  %5586 = vmatpush1.msra.mxu0 0.0
  %5587 = vmatprep.subr.mxu0 0.0
  %5588 = vmatpush1.msra.mxu0 0.0
  %5589 = vmatprep.subr.mxu0 0.0
  %5590 = vmatpush1.msra.mxu0 0.0
  %5591 = vmatprep.subr.mxu0 0.0
  %5592 = vmatpush1.msra.mxu0 0.0
  %5593 = vmatprep.subr.mxu0 0.0
  %5594 = vmatpush1.msra.mxu0 0.0
  %5595 = vmatprep.subr.mxu0 0.0
  %5596 = vmatpush1.msra.mxu0 0.0
  %5597 = vmatprep.subr.mxu0 0.0
  %5598 = vmatpush1.msra.mxu0 0.0
  %5599 = vmatprep.subr.mxu0 0.0
  %5600 = vmatpush1.msra.mxu0 0.0
  %5601 = vmatprep.subr.mxu0 0.0
  %5602 = vmatpush1.msra.mxu0 0.0
  %5603 = vmatprep.subr.mxu0 0.0
  %5604 = vmatpush1.msra.mxu0 0.0
  %5605 = vmatprep.subr.mxu0 0.0
  %5606 = vmatpush1.msra.mxu0 0.0
  %5607 = vmatprep.subr.mxu0 0.0
  %5608 = vmatpush1.msra.mxu0 0.0
  %5609 = vmatprep.subr.mxu0 0.0
  %5610 = vmatpush1.msra.mxu0 0.0
  %5611 = vmatprep.subr.mxu0 0.0
  %5612 = vmatpush1.msra.mxu0 0.0
  %5613 = vmatprep.subr.mxu0 0.0
  %5614 = vmatpush1.msra.mxu0 0.0
  %5615 = vmatprep.subr.mxu0 0.0
  %5616 = vmatpush1.msra.mxu0 0.0
  %5617 = vmatprep.subr.mxu0 0.0
  %5618 = vmatpush1.msra.mxu0 0.0
  %5619 = vmatprep.mubr.f32.mxu0 0.0
  %5620 = vmatmul.mubr.f32.gmra.mrb[0].mxu0 %v5466
  %v5621 = vpop.f32.mrb[0].mxu0
  %v5622 = vadd.f32 0.0, %v5621
  %v5623 = vpop.f32.mrb[0].mxu0
  %v5624 = vadd.f32 0.0, %v5623
  %5625 = vdwg.mxu0
  %5626 = vmatprep.subr.mxu0 %v5478
  %5627 = vmatpush1.msra.mxu0 %v5476
  %5628 = vmatprep.subr.mxu0 0.0
  %5629 = vmatpush1.msra.mxu0 0.0
  %5630 = vmatprep.subr.mxu0 0.0
  %5631 = vmatpush1.msra.mxu0 0.0
  %5632 = vmatprep.subr.mxu0 0.0
  %5633 = vmatpush1.msra.mxu0 0.0
  %5634 = vmatprep.subr.mxu0 0.0
  %5635 = vmatpush1.msra.mxu0 0.0
  %5636 = vmatprep.subr.mxu0 0.0
  %5637 = vmatpush1.msra.mxu0 0.0
  %5638 = vmatprep.subr.mxu0 0.0
  %5639 = vmatpush1.msra.mxu0 0.0
  %5640 = vmatprep.subr.mxu0 0.0
  %5641 = vmatpush1.msra.mxu0 0.0
  %5642 = vmatprep.subr.mxu0 0.0
  %5643 = vmatpush1.msra.mxu0 0.0
  %5644 = vmatprep.subr.mxu0 0.0
  %5645 = vmatpush1.msra.mxu0 0.0
  %5646 = vmatprep.subr.mxu0 0.0
  %5647 = vmatpush1.msra.mxu0 0.0
  %5648 = vmatprep.subr.mxu0 0.0
  %5649 = vmatpush1.msra.mxu0 0.0
  %5650 = vmatprep.subr.mxu0 0.0
  %5651 = vmatpush1.msra.mxu0 0.0
  %5652 = vmatprep.subr.mxu0 0.0
  %5653 = vmatpush1.msra.mxu0 0.0
  %5654 = vmatprep.subr.mxu0 0.0
  %5655 = vmatpush1.msra.mxu0 0.0
  %5656 = vmatprep.subr.mxu0 0.0
  %5657 = vmatpush1.msra.mxu0 0.0
  %5658 = vmatprep.subr.mxu0 0.0
  %5659 = vmatpush1.msra.mxu0 0.0
  %5660 = vmatprep.subr.mxu0 0.0
  %5661 = vmatpush1.msra.mxu0 0.0
  %5662 = vmatprep.subr.mxu0 0.0
  %5663 = vmatpush1.msra.mxu0 0.0
  %5664 = vmatprep.subr.mxu0 0.0
  %5665 = vmatpush1.msra.mxu0 0.0
  %5666 = vmatprep.subr.mxu0 0.0
  %5667 = vmatpush1.msra.mxu0 0.0
  %5668 = vmatprep.subr.mxu0 0.0
  %5669 = vmatpush1.msra.mxu0 0.0
  %5670 = vmatprep.subr.mxu0 0.0
  %5671 = vmatpush1.msra.mxu0 0.0
  %5672 = vmatprep.subr.mxu0 0.0
  %5673 = vmatpush1.msra.mxu0 0.0
  %5674 = vmatprep.subr.mxu0 0.0
  %5675 = vmatpush1.msra.mxu0 0.0
  %5676 = vmatprep.subr.mxu0 0.0
  %5677 = vmatpush1.msra.mxu0 0.0
  %5678 = vmatprep.subr.mxu0 0.0
  %5679 = vmatpush1.msra.mxu0 0.0
  %5680 = vmatprep.subr.mxu0 0.0
  %5681 = vmatpush1.msra.mxu0 0.0
  %5682 = vmatprep.subr.mxu0 0.0
  %5683 = vmatpush1.msra.mxu0 0.0
  %5684 = vmatprep.subr.mxu0 0.0
  %5685 = vmatpush1.msra.mxu0 0.0
  %5686 = vmatprep.subr.mxu0 0.0
  %5687 = vmatpush1.msra.mxu0 0.0
  %5688 = vmatprep.subr.mxu0 0.0
  %5689 = vmatpush1.msra.mxu0 0.0
  %5690 = vmatprep.mubr.f32.mxu0 0.0
  %5691 = vmatmul.mubr.f32.gmra.mrb[0].mxu0 %v5466
  %v5692 = vpop.f32.mrb[0].mxu0
  %v5693 = vadd.f32 0.0, %v5692
  %v5694 = vpop.f32.mrb[0].mxu0
  %v5695 = vadd.f32 0.0, %v5694
  %5696 = vdwg.mxu0
  %5697 = vmatprep.subr.mxu0 %v5482
  %5698 = vmatpush1.msra.mxu0 %v5480
  %5699 = vmatprep.subr.mxu0 0.0
  %5700 = vmatpush1.msra.mxu0 0.0
  %5701 = vmatprep.subr.mxu0 0.0
  %5702 = vmatpush1.msra.mxu0 0.0
  %5703 = vmatprep.subr.mxu0 0.0
  %5704 = vmatpush1.msra.mxu0 0.0
  %5705 = vmatprep.subr.mxu0 0.0
  %5706 = vmatpush1.msra.mxu0 0.0
  %5707 = vmatprep.subr.mxu0 0.0
  %5708 = vmatpush1.msra.mxu0 0.0
  %5709 = vmatprep.subr.mxu0 0.0
  %5710 = vmatpush1.msra.mxu0 0.0
  %5711 = vmatprep.subr.mxu0 0.0
  %5712 = vmatpush1.msra.mxu0 0.0
  %5713 = vmatprep.subr.mxu0 0.0
  %5714 = vmatpush1.msra.mxu0 0.0
  %5715 = vmatprep.subr.mxu0 0.0
  %5716 = vmatpush1.msra.mxu0 0.0
  %5717 = vmatprep.subr.mxu0 0.0
  %5718 = vmatpush1.msra.mxu0 0.0
  %5719 = vmatprep.subr.mxu0 0.0
  %5720 = vmatpush1.msra.mxu0 0.0
  %5721 = vmatprep.subr.mxu0 0.0
  %5722 = vmatpush1.msra.mxu0 0.0
  %5723 = vmatprep.subr.mxu0 0.0
  %5724 = vmatpush1.msra.mxu0 0.0
  %5725 = vmatprep.subr.mxu0 0.0
  %5726 = vmatpush1.msra.mxu0 0.0
  %5727 = vmatprep.subr.mxu0 0.0
  %5728 = vmatpush1.msra.mxu0 0.0
  %5729 = vmatprep.subr.mxu0 0.0
  %5730 = vmatpush1.msra.mxu0 0.0
  %5731 = vmatprep.subr.mxu0 0.0
  %5732 = vmatpush1.msra.mxu0 0.0
  %5733 = vmatprep.subr.mxu0 0.0
  %5734 = vmatpush1.msra.mxu0 0.0
  %5735 = vmatprep.subr.mxu0 0.0
  %5736 = vmatpush1.msra.mxu0 0.0
  %5737 = vmatprep.subr.mxu0 0.0
  %5738 = vmatpush1.msra.mxu0 0.0
  %5739 = vmatprep.subr.mxu0 0.0
  %5740 = vmatpush1.msra.mxu0 0.0
  %5741 = vmatprep.subr.mxu0 0.0
  %5742 = vmatpush1.msra.mxu0 0.0
  %5743 = vmatprep.subr.mxu0 0.0
  %5744 = vmatpush1.msra.mxu0 0.0
  %5745 = vmatprep.subr.mxu0 0.0
  %5746 = vmatpush1.msra.mxu0 0.0
  %5747 = vmatprep.subr.mxu0 0.0
  %5748 = vmatpush1.msra.mxu0 0.0
  %5749 = vmatprep.subr.mxu0 0.0
  %5750 = vmatpush1.msra.mxu0 0.0
  %5751 = vmatprep.subr.mxu0 0.0
  %5752 = vmatpush1.msra.mxu0 0.0
  %5753 = vmatprep.subr.mxu0 0.0
  %5754 = vmatpush1.msra.mxu0 0.0
  %5755 = vmatprep.subr.mxu0 0.0
  %5756 = vmatpush1.msra.mxu0 0.0
  %5757 = vmatprep.subr.mxu0 0.0
  %5758 = vmatpush1.msra.mxu0 0.0
  %5759 = vmatprep.subr.mxu0 0.0
  %5760 = vmatpush1.msra.mxu0 0.0
  %5761 = vmatprep.mubr.f32.mxu0 0.0
  %5762 = vmatmul.mubr.f32.gmra.mrb[0].mxu0 %v5466
  %v5763 = vpop.f32.mrb[0].mxu0
  %v5764 = vadd.f32 0.0, %v5763
  %v5765 = vpop.f32.mrb[0].mxu0
  %v5766 = vadd.f32 0.0, %v5765
  %5767 = vdwg.mxu0
  %v5768 = vadd.f32 %v5443, %v5551
  %v5769 = vadd.f32 %v5444, %v5553
  %v5770 = vadd.f32 %v5445, %v5622
  %v5771 = vadd.f32 %v5446, %v5624
  %v5772 = vadd.f32 %v5447, %v5693
  %v5773 = vadd.f32 %v5448, %v5695
  %v5774 = vadd.f32 %v5449, %v5764
  %v5775 = vadd.f32 %v5450, %v5766
  %v5776 = vld [vmem:[#allocation3 + $0x4] sm:$0xff]
  %v5777 = vld [vmem:[#allocation3 + $0xc] sm:$0xff]
  %v5778 = vld [vmem:[#allocation3 + $0x14] sm:$0xff]
  %v5779 = vld [vmem:[#allocation3 + $0x1c] sm:$0xff]
  %v5780 = vld [vmem:[#allocation3 + $0x24] sm:$0xf]
  %v5781 = vld [vmem:[%s2055] ss:$8 sm:$0xf]
  %v5782 = vld [vmem:[%s2055] ss:$8 sm:$0xf0]
  %v5783 = vor.u32 %v5781, %v5782
  %v5785 = vlaneseq
  %v5786 = vshrl.u32 %v5785, 7
  %v5787 = vsub.s32 0, %v5786
  %v5788 = vrot.slane %v5783, %v5787
  %v5789 = vlaneseq
  %v5790 = vshrl.u32 %v5789, 7
  %v5791 = vsub.s32 1, %v5790
  %v5792 = vrot.slane %v5783, %v5791
  %v5793 = vlaneseq
  %v5794 = vshrl.u32 %v5793, 7
  %v5795 = vsub.s32 2, %v5794
  %v5796 = vrot.slane %v5783, %v5795
  %v5797 = vlaneseq
  %v5798 = vshrl.u32 %v5797, 7
  %v5799 = vsub.s32 3, %v5798
  %v5800 = vrot.slane %v5783, %v5799
  %v5801 = vlaneseq
  %v5802 = vshrl.u32 %v5801, 7
  %v5803 = vsub.s32 4, %v5802
  %v5804 = vrot.slane %v5783, %v5803
  %v5805 = vlaneseq
  %v5806 = vshrl.u32 %v5805, 7
  %v5807 = vsub.s32 5, %v5806
  %v5808 = vrot.slane %v5783, %v5807
  %v5809 = vlaneseq
  %v5810 = vshrl.u32 %v5809, 7
  %v5811 = vsub.s32 6, %v5810
  %v5812 = vrot.slane %v5783, %v5811
  %v5813 = vlaneseq
  %v5814 = vshrl.u32 %v5813, 7
  %v5815 = vsub.s32 7, %v5814
  %v5816 = vrot.slane %v5783, %v5815
  %v5817 = vcombine.low %v5788, %v5792
  %v5818 = vcombine.low %v5796, %v5800
  %v5819 = vcombine.low %v5804, %v5808
  %v5820 = vcombine.low %v5812, %v5816
  %5821 = vrot.lane.b32.xlu0 %v5817, 1
  %v5822 = vpop.permute.xlu0 %5821
  %5823 = vrot.lane.b32.xlu0 %v5818, 1
  %v5824 = vpop.permute.xlu0 %5823
  %5825 = vrot.lane.b32.xlu0 %v5819, 1
  %v5826 = vpop.permute.xlu0 %5825
  %5827 = vrot.lane.b32.xlu0 %v5820, 1
  %v5828 = vpop.permute.xlu0 %5827
  %v5829 = vrot.slane %v5822, 4
  %v5830 = vrot.slane %v5824, 4
  %v5831 = vrot.slane %v5826, 4
  %v5832 = vrot.slane %v5828, 4
  %v5833 = vsel %vm1405, %v5829, %v5822
  %v5834 = vsel %vm105, %v5829, %v5830
  %v5835 = vsel %vm1405, %v5834, %v5824
  %v5836 = vsel %vm105, %v5830, %v5831
  %v5837 = vsel %vm1405, %v5836, %v5826
  %v5838 = vsel %vm105, %v5831, %v5832
  %v5839 = vsel %vm1405, %v5838, %v5828
  %v5845 = vmul.f32 %v5776, %v5833
  %v5846 = vmul.f32 %v5777, %v5835
  %v5847 = vmul.f32 %v5778, %v5837
  %v5848 = vmul.f32 %v5779, %v5839
  %v5849 = vmul.f32 %v5780, %v5832
  %s5850 = scalar_lea.vmem %s2, 56
  %v5851 = vld [vmem:[%s5850] sm:$0xf]
  %v5857 = vcombine.high %v5845, %v5845
  %v5858 = vcombine.high %v5846, %v5846
  %v5859 = vcombine.high %v5847, %v5847
  %v5860 = vcombine.high %v5848, %v5848
  %5861 = vrot.lane.b32.xlu0 %v5845, 127
  %v5862 = vpop.permute.xlu0 %5861
  %5863 = vrot.lane.b32.xlu0 %v5857, 127
  %v5864 = vpop.permute.xlu0 %5863
  %5865 = vrot.lane.b32.xlu0 %v5846, 127
  %v5866 = vpop.permute.xlu0 %5865
  %5867 = vrot.lane.b32.xlu0 %v5858, 127
  %v5868 = vpop.permute.xlu0 %5867
  %5869 = vrot.lane.b32.xlu0 %v5847, 127
  %v5870 = vpop.permute.xlu0 %5869
  %5871 = vrot.lane.b32.xlu0 %v5859, 127
  %v5872 = vpop.permute.xlu0 %5871
  %5873 = vrot.lane.b32.xlu0 %v5848, 127
  %v5874 = vpop.permute.xlu0 %5873
  %5875 = vrot.lane.b32.xlu0 %v5860, 127
  %v5876 = vpop.permute.xlu0 %5875
  %5877 = vrot.lane.b32.xlu0 %v5849, 127
  %v5878 = vpop.permute.xlu0 %5877
  %v5879 = vsel %vm1358, %v5862, %v5864
  %v5880 = vsel %vm1358, %v5864, %v5866
  %v5881 = vsel %vm1358, %v5866, %v5868
  %v5882 = vsel %vm1358, %v5868, %v5870
  %v5883 = vsel %vm1358, %v5870, %v5872
  %v5884 = vsel %vm1358, %v5872, %v5874
  %v5885 = vsel %vm1358, %v5874, %v5876
  %v5886 = vsel %vm1358, %v5876, %v5878
  %v5888 = vsel %vm232, %v5851, 0
  %v5890 = vsel %vm105, %v5879, 0
  %v5892 = vsel %vm105, %v5880, 0
  %v5894 = vsel %vm105, %v5881, 0
  %v5896 = vsel %vm105, %v5882, 0
  %v5898 = vsel %vm105, %v5883, 0
  %v5900 = vsel %vm105, %v5884, 0
  %v5902 = vsel %vm105, %v5885, 0
  %v5904 = vsel %vm105, %v5886, 0
  %5906 = vmatprep.subr.mxu0 %v5892
  %5907 = vmatpush1.msra.mxu0 %v5890
  %5908 = vmatprep.subr.mxu0 0.0
  %5909 = vmatpush1.msra.mxu0 0.0
  %5910 = vmatprep.subr.mxu0 0.0
  %5911 = vmatpush1.msra.mxu0 0.0
  %5912 = vmatprep.subr.mxu0 0.0
  %5913 = vmatpush1.msra.mxu0 0.0
  %5914 = vmatprep.subr.mxu0 0.0
  %5915 = vmatpush1.msra.mxu0 0.0
  %5916 = vmatprep.subr.mxu0 0.0
  %5917 = vmatpush1.msra.mxu0 0.0
  %5918 = vmatprep.subr.mxu0 0.0
  %5919 = vmatpush1.msra.mxu0 0.0
  %5920 = vmatprep.subr.mxu0 0.0
  %5921 = vmatpush1.msra.mxu0 0.0
  %5922 = vmatprep.subr.mxu0 0.0
  %5923 = vmatpush1.msra.mxu0 0.0
  %5924 = vmatprep.subr.mxu0 0.0
  %5925 = vmatpush1.msra.mxu0 0.0
  %5926 = vmatprep.subr.mxu0 0.0
  %5927 = vmatpush1.msra.mxu0 0.0
  %5928 = vmatprep.subr.mxu0 0.0
  %5929 = vmatpush1.msra.mxu0 0.0
  %5930 = vmatprep.subr.mxu0 0.0
  %5931 = vmatpush1.msra.mxu0 0.0
  %5932 = vmatprep.subr.mxu0 0.0
  %5933 = vmatpush1.msra.mxu0 0.0
  %5934 = vmatprep.subr.mxu0 0.0
  %5935 = vmatpush1.msra.mxu0 0.0
  %5936 = vmatprep.subr.mxu0 0.0
  %5937 = vmatpush1.msra.mxu0 0.0
  %5938 = vmatprep.subr.mxu0 0.0
  %5939 = vmatpush1.msra.mxu0 0.0
  %5940 = vmatprep.subr.mxu0 0.0
  %5941 = vmatpush1.msra.mxu0 0.0
  %5942 = vmatprep.subr.mxu0 0.0
  %5943 = vmatpush1.msra.mxu0 0.0
  %5944 = vmatprep.subr.mxu0 0.0
  %5945 = vmatpush1.msra.mxu0 0.0
  %5946 = vmatprep.subr.mxu0 0.0
  %5947 = vmatpush1.msra.mxu0 0.0
  %5948 = vmatprep.subr.mxu0 0.0
  %5949 = vmatpush1.msra.mxu0 0.0
  %5950 = vmatprep.subr.mxu0 0.0
  %5951 = vmatpush1.msra.mxu0 0.0
  %5952 = vmatprep.subr.mxu0 0.0
  %5953 = vmatpush1.msra.mxu0 0.0
  %5954 = vmatprep.subr.mxu0 0.0
  %5955 = vmatpush1.msra.mxu0 0.0
  %5956 = vmatprep.subr.mxu0 0.0
  %5957 = vmatpush1.msra.mxu0 0.0
  %5958 = vmatprep.subr.mxu0 0.0
  %5959 = vmatpush1.msra.mxu0 0.0
  %5960 = vmatprep.subr.mxu0 0.0
  %5961 = vmatpush1.msra.mxu0 0.0
  %5962 = vmatprep.subr.mxu0 0.0
  %5963 = vmatpush1.msra.mxu0 0.0
  %5964 = vmatprep.subr.mxu0 0.0
  %5965 = vmatpush1.msra.mxu0 0.0
  %5966 = vmatprep.subr.mxu0 0.0
  %5967 = vmatpush1.msra.mxu0 0.0
  %5968 = vmatprep.subr.mxu0 0.0
  %5969 = vmatpush1.msra.mxu0 0.0
  %5970 = vmatprep.mubr.f32.mxu0 0.0
  %5971 = vmatmul.mubr.f32.gmra.mrb[0].mxu0 %v5888
  %v5972 = vpop.f32.mrb[0].mxu0
  %v5973 = vadd.f32 0.0, %v5972
  %v5974 = vpop.f32.mrb[0].mxu0
  %v5975 = vadd.f32 0.0, %v5974
  %5976 = vdwg.mxu0
  %5977 = vmatprep.subr.mxu0 %v5896
  %5978 = vmatpush1.msra.mxu0 %v5894
  %5979 = vmatprep.subr.mxu0 0.0
  %5980 = vmatpush1.msra.mxu0 0.0
  %5981 = vmatprep.subr.mxu0 0.0
  %5982 = vmatpush1.msra.mxu0 0.0
  %5983 = vmatprep.subr.mxu0 0.0
  %5984 = vmatpush1.msra.mxu0 0.0
  %5985 = vmatprep.subr.mxu0 0.0
  %5986 = vmatpush1.msra.mxu0 0.0
  %5987 = vmatprep.subr.mxu0 0.0
  %5988 = vmatpush1.msra.mxu0 0.0
  %5989 = vmatprep.subr.mxu0 0.0
  %5990 = vmatpush1.msra.mxu0 0.0
  %5991 = vmatprep.subr.mxu0 0.0
  %5992 = vmatpush1.msra.mxu0 0.0
  %5993 = vmatprep.subr.mxu0 0.0
  %5994 = vmatpush1.msra.mxu0 0.0
  %5995 = vmatprep.subr.mxu0 0.0
  %5996 = vmatpush1.msra.mxu0 0.0
  %5997 = vmatprep.subr.mxu0 0.0
  %5998 = vmatpush1.msra.mxu0 0.0
  %5999 = vmatprep.subr.mxu0 0.0
  %6000 = vmatpush1.msra.mxu0 0.0
  %6001 = vmatprep.subr.mxu0 0.0
  %6002 = vmatpush1.msra.mxu0 0.0
  %6003 = vmatprep.subr.mxu0 0.0
  %6004 = vmatpush1.msra.mxu0 0.0
  %6005 = vmatprep.subr.mxu0 0.0
  %6006 = vmatpush1.msra.mxu0 0.0
  %6007 = vmatprep.subr.mxu0 0.0
  %6008 = vmatpush1.msra.mxu0 0.0
  %6009 = vmatprep.subr.mxu0 0.0
  %6010 = vmatpush1.msra.mxu0 0.0
  %6011 = vmatprep.subr.mxu0 0.0
  %6012 = vmatpush1.msra.mxu0 0.0
  %6013 = vmatprep.subr.mxu0 0.0
  %6014 = vmatpush1.msra.mxu0 0.0
  %6015 = vmatprep.subr.mxu0 0.0
  %6016 = vmatpush1.msra.mxu0 0.0
  %6017 = vmatprep.subr.mxu0 0.0
  %6018 = vmatpush1.msra.mxu0 0.0
  %6019 = vmatprep.subr.mxu0 0.0
  %6020 = vmatpush1.msra.mxu0 0.0
  %6021 = vmatprep.subr.mxu0 0.0
  %6022 = vmatpush1.msra.mxu0 0.0
  %6023 = vmatprep.subr.mxu0 0.0
  %6024 = vmatpush1.msra.mxu0 0.0
  %6025 = vmatprep.subr.mxu0 0.0
  %6026 = vmatpush1.msra.mxu0 0.0
  %6027 = vmatprep.subr.mxu0 0.0
  %6028 = vmatpush1.msra.mxu0 0.0
  %6029 = vmatprep.subr.mxu0 0.0
  %6030 = vmatpush1.msra.mxu0 0.0
  %6031 = vmatprep.subr.mxu0 0.0
  %6032 = vmatpush1.msra.mxu0 0.0
  %6033 = vmatprep.subr.mxu0 0.0
  %6034 = vmatpush1.msra.mxu0 0.0
  %6035 = vmatprep.subr.mxu0 0.0
  %6036 = vmatpush1.msra.mxu0 0.0
  %6037 = vmatprep.subr.mxu0 0.0
  %6038 = vmatpush1.msra.mxu0 0.0
  %6039 = vmatprep.subr.mxu0 0.0
  %6040 = vmatpush1.msra.mxu0 0.0
  %6041 = vmatprep.mubr.f32.mxu0 0.0
  %6042 = vmatmul.mubr.f32.gmra.mrb[0].mxu0 %v5888
  %v6043 = vpop.f32.mrb[0].mxu0
  %v6044 = vadd.f32 0.0, %v6043
  %v6045 = vpop.f32.mrb[0].mxu0
  %v6046 = vadd.f32 0.0, %v6045
  %6047 = vdwg.mxu0
  %6048 = vmatprep.subr.mxu0 %v5900
  %6049 = vmatpush1.msra.mxu0 %v5898
  %6050 = vmatprep.subr.mxu0 0.0
  %6051 = vmatpush1.msra.mxu0 0.0
  %6052 = vmatprep.subr.mxu0 0.0
  %6053 = vmatpush1.msra.mxu0 0.0
  %6054 = vmatprep.subr.mxu0 0.0
  %6055 = vmatpush1.msra.mxu0 0.0
  %6056 = vmatprep.subr.mxu0 0.0
  %6057 = vmatpush1.msra.mxu0 0.0
  %6058 = vmatprep.subr.mxu0 0.0
  %6059 = vmatpush1.msra.mxu0 0.0
  %6060 = vmatprep.subr.mxu0 0.0
  %6061 = vmatpush1.msra.mxu0 0.0
  %6062 = vmatprep.subr.mxu0 0.0
  %6063 = vmatpush1.msra.mxu0 0.0
  %6064 = vmatprep.subr.mxu0 0.0
  %6065 = vmatpush1.msra.mxu0 0.0
  %6066 = vmatprep.subr.mxu0 0.0
  %6067 = vmatpush1.msra.mxu0 0.0
  %6068 = vmatprep.subr.mxu0 0.0
  %6069 = vmatpush1.msra.mxu0 0.0
  %6070 = vmatprep.subr.mxu0 0.0
  %6071 = vmatpush1.msra.mxu0 0.0
  %6072 = vmatprep.subr.mxu0 0.0
  %6073 = vmatpush1.msra.mxu0 0.0
  %6074 = vmatprep.subr.mxu0 0.0
  %6075 = vmatpush1.msra.mxu0 0.0
  %6076 = vmatprep.subr.mxu0 0.0
  %6077 = vmatpush1.msra.mxu0 0.0
  %6078 = vmatprep.subr.mxu0 0.0
  %6079 = vmatpush1.msra.mxu0 0.0
  %6080 = vmatprep.subr.mxu0 0.0
  %6081 = vmatpush1.msra.mxu0 0.0
  %6082 = vmatprep.subr.mxu0 0.0
  %6083 = vmatpush1.msra.mxu0 0.0
  %6084 = vmatprep.subr.mxu0 0.0
  %6085 = vmatpush1.msra.mxu0 0.0
  %6086 = vmatprep.subr.mxu0 0.0
  %6087 = vmatpush1.msra.mxu0 0.0
  %6088 = vmatprep.subr.mxu0 0.0
  %6089 = vmatpush1.msra.mxu0 0.0
  %6090 = vmatprep.subr.mxu0 0.0
  %6091 = vmatpush1.msra.mxu0 0.0
  %6092 = vmatprep.subr.mxu0 0.0
  %6093 = vmatpush1.msra.mxu0 0.0
  %6094 = vmatprep.subr.mxu0 0.0
  %6095 = vmatpush1.msra.mxu0 0.0
  %6096 = vmatprep.subr.mxu0 0.0
  %6097 = vmatpush1.msra.mxu0 0.0
  %6098 = vmatprep.subr.mxu0 0.0
  %6099 = vmatpush1.msra.mxu0 0.0
  %6100 = vmatprep.subr.mxu0 0.0
  %6101 = vmatpush1.msra.mxu0 0.0
  %6102 = vmatprep.subr.mxu0 0.0
  %6103 = vmatpush1.msra.mxu0 0.0
  %6104 = vmatprep.subr.mxu0 0.0
  %6105 = vmatpush1.msra.mxu0 0.0
  %6106 = vmatprep.subr.mxu0 0.0
  %6107 = vmatpush1.msra.mxu0 0.0
  %6108 = vmatprep.subr.mxu0 0.0
  %6109 = vmatpush1.msra.mxu0 0.0
  %6110 = vmatprep.subr.mxu0 0.0
  %6111 = vmatpush1.msra.mxu0 0.0
  %6112 = vmatprep.mubr.f32.mxu0 0.0
  %6113 = vmatmul.mubr.f32.gmra.mrb[0].mxu0 %v5888
  %v6114 = vpop.f32.mrb[0].mxu0
  %v6115 = vadd.f32 0.0, %v6114
  %v6116 = vpop.f32.mrb[0].mxu0
  %v6117 = vadd.f32 0.0, %v6116
  %6118 = vdwg.mxu0
  %6119 = vmatprep.subr.mxu0 %v5904
  %6120 = vmatpush1.msra.mxu0 %v5902
  %6121 = vmatprep.subr.mxu0 0.0
  %6122 = vmatpush1.msra.mxu0 0.0
  %6123 = vmatprep.subr.mxu0 0.0
  %6124 = vmatpush1.msra.mxu0 0.0
  %6125 = vmatprep.subr.mxu0 0.0
  %6126 = vmatpush1.msra.mxu0 0.0
  %6127 = vmatprep.subr.mxu0 0.0
  %6128 = vmatpush1.msra.mxu0 0.0
  %6129 = vmatprep.subr.mxu0 0.0
  %6130 = vmatpush1.msra.mxu0 0.0
  %6131 = vmatprep.subr.mxu0 0.0
  %6132 = vmatpush1.msra.mxu0 0.0
  %6133 = vmatprep.subr.mxu0 0.0
  %6134 = vmatpush1.msra.mxu0 0.0
  %6135 = vmatprep.subr.mxu0 0.0
  %6136 = vmatpush1.msra.mxu0 0.0
  %6137 = vmatprep.subr.mxu0 0.0
  %6138 = vmatpush1.msra.mxu0 0.0
  %6139 = vmatprep.subr.mxu0 0.0
  %6140 = vmatpush1.msra.mxu0 0.0
  %6141 = vmatprep.subr.mxu0 0.0
  %6142 = vmatpush1.msra.mxu0 0.0
  %6143 = vmatprep.subr.mxu0 0.0
  %6144 = vmatpush1.msra.mxu0 0.0
  %6145 = vmatprep.subr.mxu0 0.0
  %6146 = vmatpush1.msra.mxu0 0.0
  %6147 = vmatprep.subr.mxu0 0.0
  %6148 = vmatpush1.msra.mxu0 0.0
  %6149 = vmatprep.subr.mxu0 0.0
  %6150 = vmatpush1.msra.mxu0 0.0
  %6151 = vmatprep.subr.mxu0 0.0
  %6152 = vmatpush1.msra.mxu0 0.0
  %6153 = vmatprep.subr.mxu0 0.0
  %6154 = vmatpush1.msra.mxu0 0.0
  %6155 = vmatprep.subr.mxu0 0.0
  %6156 = vmatpush1.msra.mxu0 0.0
  %6157 = vmatprep.subr.mxu0 0.0
  %6158 = vmatpush1.msra.mxu0 0.0
  %6159 = vmatprep.subr.mxu0 0.0
  %6160 = vmatpush1.msra.mxu0 0.0
  %6161 = vmatprep.subr.mxu0 0.0
  %6162 = vmatpush1.msra.mxu0 0.0
  %6163 = vmatprep.subr.mxu0 0.0
  %6164 = vmatpush1.msra.mxu0 0.0
  %6165 = vmatprep.subr.mxu0 0.0
  %6166 = vmatpush1.msra.mxu0 0.0
  %6167 = vmatprep.subr.mxu0 0.0
  %6168 = vmatpush1.msra.mxu0 0.0
  %6169 = vmatprep.subr.mxu0 0.0
  %6170 = vmatpush1.msra.mxu0 0.0
  %6171 = vmatprep.subr.mxu0 0.0
  %6172 = vmatpush1.msra.mxu0 0.0
  %6173 = vmatprep.subr.mxu0 0.0
  %6174 = vmatpush1.msra.mxu0 0.0
  %6175 = vmatprep.subr.mxu0 0.0
  %6176 = vmatpush1.msra.mxu0 0.0
  %6177 = vmatprep.subr.mxu0 0.0
  %6178 = vmatpush1.msra.mxu0 0.0
  %6179 = vmatprep.subr.mxu0 0.0
  %6180 = vmatpush1.msra.mxu0 0.0
  %6181 = vmatprep.subr.mxu0 0.0
  %6182 = vmatpush1.msra.mxu0 0.0
  %6183 = vmatprep.mubr.f32.mxu0 0.0
  %6184 = vmatmul.mubr.f32.gmra.mrb[0].mxu0 %v5888
  %v6185 = vpop.f32.mrb[0].mxu0
  %v6186 = vadd.f32 0.0, %v6185
  %v6187 = vpop.f32.mrb[0].mxu0
  %v6188 = vadd.f32 0.0, %v6187
  %6189 = vdwg.mxu0
  %v6190 = vadd.f32 %v5768, %v5973
  %v6191 = vadd.f32 %v5769, %v5975
  %v6192 = vadd.f32 %v5770, %v6044
  %v6193 = vadd.f32 %v5771, %v6046
  %v6194 = vadd.f32 %v5772, %v6115
  %v6195 = vadd.f32 %v5773, %v6117
  %v6196 = vadd.f32 %v5774, %v6186
  %v6197 = vadd.f32 %v5775, %v6188
  %v6198 = vld [vmem:[#allocation3 + $0x4] sm:$0xff]
  %v6199 = vld [vmem:[#allocation3 + $0xc] sm:$0xff]
  %v6200 = vld [vmem:[#allocation3 + $0x14] sm:$0xff]
  %v6201 = vld [vmem:[#allocation3 + $0x1c] sm:$0xff]
  %v6202 = vld [vmem:[#allocation3 + $0x24] sm:$0xf]
  %v6203 = vld [vmem:[%s2478] ss:$8 sm:$0xf]
  %v6204 = vld [vmem:[%s2478] ss:$8 sm:$0xf0]
  %v6205 = vor.u32 %v6203, %v6204
  %v6207 = vlaneseq
  %v6208 = vshrl.u32 %v6207, 7
  %v6209 = vsub.s32 0, %v6208
  %v6210 = vrot.slane %v6205, %v6209
  %v6211 = vlaneseq
  %v6212 = vshrl.u32 %v6211, 7
  %v6213 = vsub.s32 1, %v6212
  %v6214 = vrot.slane %v6205, %v6213
  %v6215 = vlaneseq
  %v6216 = vshrl.u32 %v6215, 7
  %v6217 = vsub.s32 2, %v6216
  %v6218 = vrot.slane %v6205, %v6217
  %v6219 = vlaneseq
  %v6220 = vshrl.u32 %v6219, 7
  %v6221 = vsub.s32 3, %v6220
  %v6222 = vrot.slane %v6205, %v6221
  %v6223 = vlaneseq
  %v6224 = vshrl.u32 %v6223, 7
  %v6225 = vsub.s32 4, %v6224
  %v6226 = vrot.slane %v6205, %v6225
  %v6227 = vlaneseq
  %v6228 = vshrl.u32 %v6227, 7
  %v6229 = vsub.s32 5, %v6228
  %v6230 = vrot.slane %v6205, %v6229
  %v6231 = vlaneseq
  %v6232 = vshrl.u32 %v6231, 7
  %v6233 = vsub.s32 6, %v6232
  %v6234 = vrot.slane %v6205, %v6233
  %v6235 = vlaneseq
  %v6236 = vshrl.u32 %v6235, 7
  %v6237 = vsub.s32 7, %v6236
  %v6238 = vrot.slane %v6205, %v6237
  %v6239 = vcombine.low %v6210, %v6214
  %v6240 = vcombine.low %v6218, %v6222
  %v6241 = vcombine.low %v6226, %v6230
  %v6242 = vcombine.low %v6234, %v6238
  %6243 = vrot.lane.b32.xlu0 %v6239, 15
  %v6244 = vpop.permute.xlu0 %6243
  %6245 = vrot.lane.b32.xlu0 %v6240, 15
  %v6246 = vpop.permute.xlu0 %6245
  %6247 = vrot.lane.b32.xlu0 %v6241, 15
  %v6248 = vpop.permute.xlu0 %6247
  %6249 = vrot.lane.b32.xlu0 %v6242, 15
  %v6250 = vpop.permute.xlu0 %6249
  %v6251 = vrot.slane %v6244, 4
  %v6252 = vrot.slane %v6246, 4
  %v6253 = vrot.slane %v6248, 4
  %v6254 = vrot.slane %v6250, 4
  %v6255 = vsel %vm980, %v6251, %v6244
  %v6256 = vsel %vm105, %v6251, %v6252
  %v6257 = vsel %vm980, %v6256, %v6246
  %v6258 = vsel %vm105, %v6252, %v6253
  %v6259 = vsel %vm980, %v6258, %v6248
  %v6260 = vsel %vm105, %v6253, %v6254
  %v6261 = vsel %vm980, %v6260, %v6250
  %v6267 = vmul.f32 %v6198, %v6255
  %v6268 = vmul.f32 %v6199, %v6257
  %v6269 = vmul.f32 %v6200, %v6259
  %v6270 = vmul.f32 %v6201, %v6261
  %v6271 = vmul.f32 %v6202, %v6254
  %s6272 = scalar_lea.vmem %s2, 60
  %v6273 = vld [vmem:[%s6272] sm:$0xf]
  %v6279 = vcombine.high %v6267, %v6267
  %v6280 = vcombine.high %v6268, %v6268
  %v6281 = vcombine.high %v6269, %v6269
  %v6282 = vcombine.high %v6270, %v6270
  %6283 = vrot.lane.b32.xlu0 %v6267, 113
  %v6284 = vpop.permute.xlu0 %6283
  %6285 = vrot.lane.b32.xlu0 %v6279, 113
  %v6286 = vpop.permute.xlu0 %6285
  %6287 = vrot.lane.b32.xlu0 %v6268, 113
  %v6288 = vpop.permute.xlu0 %6287
  %6289 = vrot.lane.b32.xlu0 %v6280, 113
  %v6290 = vpop.permute.xlu0 %6289
  %6291 = vrot.lane.b32.xlu0 %v6269, 113
  %v6292 = vpop.permute.xlu0 %6291
  %6293 = vrot.lane.b32.xlu0 %v6281, 113
  %v6294 = vpop.permute.xlu0 %6293
  %6295 = vrot.lane.b32.xlu0 %v6270, 113
  %v6296 = vpop.permute.xlu0 %6295
  %6297 = vrot.lane.b32.xlu0 %v6282, 113
  %v6298 = vpop.permute.xlu0 %6297
  %6299 = vrot.lane.b32.xlu0 %v6271, 113
  %v6300 = vpop.permute.xlu0 %6299
  %v6301 = vsel %vm933, %v6284, %v6286
  %v6302 = vsel %vm933, %v6286, %v6288
  %v6303 = vsel %vm933, %v6288, %v6290
  %v6304 = vsel %vm933, %v6290, %v6292
  %v6305 = vsel %vm933, %v6292, %v6294
  %v6306 = vsel %vm933, %v6294, %v6296
  %v6307 = vsel %vm933, %v6296, %v6298
  %v6308 = vsel %vm933, %v6298, %v6300
  %v6310 = vsel %vm232, %v6273, 0
  %v6312 = vsel %vm105, %v6301, 0
  %v6314 = vsel %vm105, %v6302, 0
  %v6316 = vsel %vm105, %v6303, 0
  %v6318 = vsel %vm105, %v6304, 0
  %v6320 = vsel %vm105, %v6305, 0
  %v6322 = vsel %vm105, %v6306, 0
  %v6324 = vsel %vm105, %v6307, 0
  %v6326 = vsel %vm105, %v6308, 0
  %6328 = vmatprep.subr.mxu0 %v6314
  %6329 = vmatpush1.msra.mxu0 %v6312
  %6330 = vmatprep.subr.mxu0 0.0
  %6331 = vmatpush1.msra.mxu0 0.0
  %6332 = vmatprep.subr.mxu0 0.0
  %6333 = vmatpush1.msra.mxu0 0.0
  %6334 = vmatprep.subr.mxu0 0.0
  %6335 = vmatpush1.msra.mxu0 0.0
  %6336 = vmatprep.subr.mxu0 0.0
  %6337 = vmatpush1.msra.mxu0 0.0
  %6338 = vmatprep.subr.mxu0 0.0
  %6339 = vmatpush1.msra.mxu0 0.0
  %6340 = vmatprep.subr.mxu0 0.0
  %6341 = vmatpush1.msra.mxu0 0.0
  %6342 = vmatprep.subr.mxu0 0.0
  %6343 = vmatpush1.msra.mxu0 0.0
  %6344 = vmatprep.subr.mxu0 0.0
  %6345 = vmatpush1.msra.mxu0 0.0
  %6346 = vmatprep.subr.mxu0 0.0
  %6347 = vmatpush1.msra.mxu0 0.0
  %6348 = vmatprep.subr.mxu0 0.0
  %6349 = vmatpush1.msra.mxu0 0.0
  %6350 = vmatprep.subr.mxu0 0.0
  %6351 = vmatpush1.msra.mxu0 0.0
  %6352 = vmatprep.subr.mxu0 0.0
  %6353 = vmatpush1.msra.mxu0 0.0
  %6354 = vmatprep.subr.mxu0 0.0
  %6355 = vmatpush1.msra.mxu0 0.0
  %6356 = vmatprep.subr.mxu0 0.0
  %6357 = vmatpush1.msra.mxu0 0.0
  %6358 = vmatprep.subr.mxu0 0.0
  %6359 = vmatpush1.msra.mxu0 0.0
  %6360 = vmatprep.subr.mxu0 0.0
  %6361 = vmatpush1.msra.mxu0 0.0
  %6362 = vmatprep.subr.mxu0 0.0
  %6363 = vmatpush1.msra.mxu0 0.0
  %6364 = vmatprep.subr.mxu0 0.0
  %6365 = vmatpush1.msra.mxu0 0.0
  %6366 = vmatprep.subr.mxu0 0.0
  %6367 = vmatpush1.msra.mxu0 0.0
  %6368 = vmatprep.subr.mxu0 0.0
  %6369 = vmatpush1.msra.mxu0 0.0
  %6370 = vmatprep.subr.mxu0 0.0
  %6371 = vmatpush1.msra.mxu0 0.0
  %6372 = vmatprep.subr.mxu0 0.0
  %6373 = vmatpush1.msra.mxu0 0.0
  %6374 = vmatprep.subr.mxu0 0.0
  %6375 = vmatpush1.msra.mxu0 0.0
  %6376 = vmatprep.subr.mxu0 0.0
  %6377 = vmatpush1.msra.mxu0 0.0
  %6378 = vmatprep.subr.mxu0 0.0
  %6379 = vmatpush1.msra.mxu0 0.0
  %6380 = vmatprep.subr.mxu0 0.0
  %6381 = vmatpush1.msra.mxu0 0.0
  %6382 = vmatprep.subr.mxu0 0.0
  %6383 = vmatpush1.msra.mxu0 0.0
  %6384 = vmatprep.subr.mxu0 0.0
  %6385 = vmatpush1.msra.mxu0 0.0
  %6386 = vmatprep.subr.mxu0 0.0
  %6387 = vmatpush1.msra.mxu0 0.0
  %6388 = vmatprep.subr.mxu0 0.0
  %6389 = vmatpush1.msra.mxu0 0.0
  %6390 = vmatprep.subr.mxu0 0.0
  %6391 = vmatpush1.msra.mxu0 0.0
  %6392 = vmatprep.mubr.f32.mxu0 0.0
  %6393 = vmatmul.mubr.f32.gmra.mrb[0].mxu0 %v6310
  %v6394 = vpop.f32.mrb[0].mxu0
  %v6395 = vadd.f32 0.0, %v6394
  %v6396 = vpop.f32.mrb[0].mxu0
  %v6397 = vadd.f32 0.0, %v6396
  %6398 = vdwg.mxu0
  %6399 = vmatprep.subr.mxu0 %v6318
  %6400 = vmatpush1.msra.mxu0 %v6316
  %6401 = vmatprep.subr.mxu0 0.0
  %6402 = vmatpush1.msra.mxu0 0.0
  %6403 = vmatprep.subr.mxu0 0.0
  %6404 = vmatpush1.msra.mxu0 0.0
  %6405 = vmatprep.subr.mxu0 0.0
  %6406 = vmatpush1.msra.mxu0 0.0
  %6407 = vmatprep.subr.mxu0 0.0
  %6408 = vmatpush1.msra.mxu0 0.0
  %6409 = vmatprep.subr.mxu0 0.0
  %6410 = vmatpush1.msra.mxu0 0.0
  %6411 = vmatprep.subr.mxu0 0.0
  %6412 = vmatpush1.msra.mxu0 0.0
  %6413 = vmatprep.subr.mxu0 0.0
  %6414 = vmatpush1.msra.mxu0 0.0
  %6415 = vmatprep.subr.mxu0 0.0
  %6416 = vmatpush1.msra.mxu0 0.0
  %6417 = vmatprep.subr.mxu0 0.0
  %6418 = vmatpush1.msra.mxu0 0.0
  %6419 = vmatprep.subr.mxu0 0.0
  %6420 = vmatpush1.msra.mxu0 0.0
  %6421 = vmatprep.subr.mxu0 0.0
  %6422 = vmatpush1.msra.mxu0 0.0
  %6423 = vmatprep.subr.mxu0 0.0
  %6424 = vmatpush1.msra.mxu0 0.0
  %6425 = vmatprep.subr.mxu0 0.0
  %6426 = vmatpush1.msra.mxu0 0.0
  %6427 = vmatprep.subr.mxu0 0.0
  %6428 = vmatpush1.msra.mxu0 0.0
  %6429 = vmatprep.subr.mxu0 0.0
  %6430 = vmatpush1.msra.mxu0 0.0
  %6431 = vmatprep.subr.mxu0 0.0
  %6432 = vmatpush1.msra.mxu0 0.0
  %6433 = vmatprep.subr.mxu0 0.0
  %6434 = vmatpush1.msra.mxu0 0.0
  %6435 = vmatprep.subr.mxu0 0.0
  %6436 = vmatpush1.msra.mxu0 0.0
  %6437 = vmatprep.subr.mxu0 0.0
  %6438 = vmatpush1.msra.mxu0 0.0
  %6439 = vmatprep.subr.mxu0 0.0
  %6440 = vmatpush1.msra.mxu0 0.0
  %6441 = vmatprep.subr.mxu0 0.0
  %6442 = vmatpush1.msra.mxu0 0.0
  %6443 = vmatprep.subr.mxu0 0.0
  %6444 = vmatpush1.msra.mxu0 0.0
  %6445 = vmatprep.subr.mxu0 0.0
  %6446 = vmatpush1.msra.mxu0 0.0
  %6447 = vmatprep.subr.mxu0 0.0
  %6448 = vmatpush1.msra.mxu0 0.0
  %6449 = vmatprep.subr.mxu0 0.0
  %6450 = vmatpush1.msra.mxu0 0.0
  %6451 = vmatprep.subr.mxu0 0.0
  %6452 = vmatpush1.msra.mxu0 0.0
  %6453 = vmatprep.subr.mxu0 0.0
  %6454 = vmatpush1.msra.mxu0 0.0
  %6455 = vmatprep.subr.mxu0 0.0
  %6456 = vmatpush1.msra.mxu0 0.0
  %6457 = vmatprep.subr.mxu0 0.0
  %6458 = vmatpush1.msra.mxu0 0.0
  %6459 = vmatprep.subr.mxu0 0.0
  %6460 = vmatpush1.msra.mxu0 0.0
  %6461 = vmatprep.subr.mxu0 0.0
  %6462 = vmatpush1.msra.mxu0 0.0
  %6463 = vmatprep.mubr.f32.mxu0 0.0
  %6464 = vmatmul.mubr.f32.gmra.mrb[0].mxu0 %v6310
  %v6465 = vpop.f32.mrb[0].mxu0
  %v6466 = vadd.f32 0.0, %v6465
  %v6467 = vpop.f32.mrb[0].mxu0
  %v6468 = vadd.f32 0.0, %v6467
  %6469 = vdwg.mxu0
  %6470 = vmatprep.subr.mxu0 %v6322
  %6471 = vmatpush1.msra.mxu0 %v6320
  %6472 = vmatprep.subr.mxu0 0.0
  %6473 = vmatpush1.msra.mxu0 0.0
  %6474 = vmatprep.subr.mxu0 0.0
  %6475 = vmatpush1.msra.mxu0 0.0
  %6476 = vmatprep.subr.mxu0 0.0
  %6477 = vmatpush1.msra.mxu0 0.0
  %6478 = vmatprep.subr.mxu0 0.0
  %6479 = vmatpush1.msra.mxu0 0.0
  %6480 = vmatprep.subr.mxu0 0.0
  %6481 = vmatpush1.msra.mxu0 0.0
  %6482 = vmatprep.subr.mxu0 0.0
  %6483 = vmatpush1.msra.mxu0 0.0
  %6484 = vmatprep.subr.mxu0 0.0
  %6485 = vmatpush1.msra.mxu0 0.0
  %6486 = vmatprep.subr.mxu0 0.0
  %6487 = vmatpush1.msra.mxu0 0.0
  %6488 = vmatprep.subr.mxu0 0.0
  %6489 = vmatpush1.msra.mxu0 0.0
  %6490 = vmatprep.subr.mxu0 0.0
  %6491 = vmatpush1.msra.mxu0 0.0
  %6492 = vmatprep.subr.mxu0 0.0
  %6493 = vmatpush1.msra.mxu0 0.0
  %6494 = vmatprep.subr.mxu0 0.0
  %6495 = vmatpush1.msra.mxu0 0.0
  %6496 = vmatprep.subr.mxu0 0.0
  %6497 = vmatpush1.msra.mxu0 0.0
  %6498 = vmatprep.subr.mxu0 0.0
  %6499 = vmatpush1.msra.mxu0 0.0
  %6500 = vmatprep.subr.mxu0 0.0
  %6501 = vmatpush1.msra.mxu0 0.0
  %6502 = vmatprep.subr.mxu0 0.0
  %6503 = vmatpush1.msra.mxu0 0.0
  %6504 = vmatprep.subr.mxu0 0.0
  %6505 = vmatpush1.msra.mxu0 0.0
  %6506 = vmatprep.subr.mxu0 0.0
  %6507 = vmatpush1.msra.mxu0 0.0
  %6508 = vmatprep.subr.mxu0 0.0
  %6509 = vmatpush1.msra.mxu0 0.0
  %6510 = vmatprep.subr.mxu0 0.0
  %6511 = vmatpush1.msra.mxu0 0.0
  %6512 = vmatprep.subr.mxu0 0.0
  %6513 = vmatpush1.msra.mxu0 0.0
  %6514 = vmatprep.subr.mxu0 0.0
  %6515 = vmatpush1.msra.mxu0 0.0
  %6516 = vmatprep.subr.mxu0 0.0
  %6517 = vmatpush1.msra.mxu0 0.0
  %6518 = vmatprep.subr.mxu0 0.0
  %6519 = vmatpush1.msra.mxu0 0.0
  %6520 = vmatprep.subr.mxu0 0.0
  %6521 = vmatpush1.msra.mxu0 0.0
  %6522 = vmatprep.subr.mxu0 0.0
  %6523 = vmatpush1.msra.mxu0 0.0
  %6524 = vmatprep.subr.mxu0 0.0
  %6525 = vmatpush1.msra.mxu0 0.0
  %6526 = vmatprep.subr.mxu0 0.0
  %6527 = vmatpush1.msra.mxu0 0.0
  %6528 = vmatprep.subr.mxu0 0.0
  %6529 = vmatpush1.msra.mxu0 0.0
  %6530 = vmatprep.subr.mxu0 0.0
  %6531 = vmatpush1.msra.mxu0 0.0
  %6532 = vmatprep.subr.mxu0 0.0
  %6533 = vmatpush1.msra.mxu0 0.0
  %6534 = vmatprep.mubr.f32.mxu0 0.0
  %6535 = vmatmul.mubr.f32.gmra.mrb[0].mxu0 %v6310
  %v6536 = vpop.f32.mrb[0].mxu0
  %v6537 = vadd.f32 0.0, %v6536
  %v6538 = vpop.f32.mrb[0].mxu0
  %v6539 = vadd.f32 0.0, %v6538
  %6540 = vdwg.mxu0
  %6541 = vmatprep.subr.mxu0 %v6326
  %6542 = vmatpush1.msra.mxu0 %v6324
  %6543 = vmatprep.subr.mxu0 0.0
  %6544 = vmatpush1.msra.mxu0 0.0
  %6545 = vmatprep.subr.mxu0 0.0
  %6546 = vmatpush1.msra.mxu0 0.0
  %6547 = vmatprep.subr.mxu0 0.0
  %6548 = vmatpush1.msra.mxu0 0.0
  %6549 = vmatprep.subr.mxu0 0.0
  %6550 = vmatpush1.msra.mxu0 0.0
  %6551 = vmatprep.subr.mxu0 0.0
  %6552 = vmatpush1.msra.mxu0 0.0
  %6553 = vmatprep.subr.mxu0 0.0
  %6554 = vmatpush1.msra.mxu0 0.0
  %6555 = vmatprep.subr.mxu0 0.0
  %6556 = vmatpush1.msra.mxu0 0.0
  %6557 = vmatprep.subr.mxu0 0.0
  %6558 = vmatpush1.msra.mxu0 0.0
  %6559 = vmatprep.subr.mxu0 0.0
  %6560 = vmatpush1.msra.mxu0 0.0
  %6561 = vmatprep.subr.mxu0 0.0
  %6562 = vmatpush1.msra.mxu0 0.0
  %6563 = vmatprep.subr.mxu0 0.0
  %6564 = vmatpush1.msra.mxu0 0.0
  %6565 = vmatprep.subr.mxu0 0.0
  %6566 = vmatpush1.msra.mxu0 0.0
  %6567 = vmatprep.subr.mxu0 0.0
  %6568 = vmatpush1.msra.mxu0 0.0
  %6569 = vmatprep.subr.mxu0 0.0
  %6570 = vmatpush1.msra.mxu0 0.0
  %6571 = vmatprep.subr.mxu0 0.0
  %6572 = vmatpush1.msra.mxu0 0.0
  %6573 = vmatprep.subr.mxu0 0.0
  %6574 = vmatpush1.msra.mxu0 0.0
  %6575 = vmatprep.subr.mxu0 0.0
  %6576 = vmatpush1.msra.mxu0 0.0
  %6577 = vmatprep.subr.mxu0 0.0
  %6578 = vmatpush1.msra.mxu0 0.0
  %6579 = vmatprep.subr.mxu0 0.0
  %6580 = vmatpush1.msra.mxu0 0.0
  %6581 = vmatprep.subr.mxu0 0.0
  %6582 = vmatpush1.msra.mxu0 0.0
  %6583 = vmatprep.subr.mxu0 0.0
  %6584 = vmatpush1.msra.mxu0 0.0
  %6585 = vmatprep.subr.mxu0 0.0
  %6586 = vmatpush1.msra.mxu0 0.0
  %6587 = vmatprep.subr.mxu0 0.0
  %6588 = vmatpush1.msra.mxu0 0.0
  %6589 = vmatprep.subr.mxu0 0.0
  %6590 = vmatpush1.msra.mxu0 0.0
  %6591 = vmatprep.subr.mxu0 0.0
  %6592 = vmatpush1.msra.mxu0 0.0
  %6593 = vmatprep.subr.mxu0 0.0
  %6594 = vmatpush1.msra.mxu0 0.0
  %6595 = vmatprep.subr.mxu0 0.0
  %6596 = vmatpush1.msra.mxu0 0.0
  %6597 = vmatprep.subr.mxu0 0.0
  %6598 = vmatpush1.msra.mxu0 0.0
  %6599 = vmatprep.subr.mxu0 0.0
  %6600 = vmatpush1.msra.mxu0 0.0
  %6601 = vmatprep.subr.mxu0 0.0
  %6602 = vmatpush1.msra.mxu0 0.0
  %6603 = vmatprep.subr.mxu0 0.0
  %6604 = vmatpush1.msra.mxu0 0.0
  %6605 = vmatprep.mubr.f32.mxu0 0.0
  %6606 = vmatmul.mubr.f32.gmra.mrb[0].mxu0 %v6310
  %v6607 = vpop.f32.mrb[0].mxu0
  %v6608 = vadd.f32 0.0, %v6607
  %v6609 = vpop.f32.mrb[0].mxu0
  %v6610 = vadd.f32 0.0, %v6609
  %6611 = vdwg.mxu0
  %v6612 = vadd.f32 %v6190, %v6395
  %v6613 = vadd.f32 %v6191, %v6397
  %v6614 = vadd.f32 %v6192, %v6466
  %v6615 = vadd.f32 %v6193, %v6468
  %v6616 = vadd.f32 %v6194, %v6537
  %v6617 = vadd.f32 %v6195, %v6539
  %v6618 = vadd.f32 %v6196, %v6608
  %v6619 = vadd.f32 %v6197, %v6610
  %v6620 = vld [vmem:[#allocation3 + $0x4] sm:$0xff]
  %v6621 = vld [vmem:[#allocation3 + $0xc] sm:$0xff]
  %v6622 = vld [vmem:[#allocation3 + $0x14] sm:$0xff]
  %v6623 = vld [vmem:[#allocation3 + $0x1c] sm:$0xff]
  %v6624 = vld [vmem:[#allocation3 + $0x24] sm:$0xf]
  %v6625 = vld [vmem:[%s2901] ss:$8 sm:$0xf]
  %v6626 = vld [vmem:[%s2901] ss:$8 sm:$0xf0]
  %v6627 = vor.u32 %v6625, %v6626
  %v6629 = vlaneseq
  %v6630 = vshrl.u32 %v6629, 7
  %v6631 = vsub.s32 0, %v6630
  %v6632 = vrot.slane %v6627, %v6631
  %v6633 = vlaneseq
  %v6634 = vshrl.u32 %v6633, 7
  %v6635 = vsub.s32 1, %v6634
  %v6636 = vrot.slane %v6627, %v6635
  %v6637 = vlaneseq
  %v6638 = vshrl.u32 %v6637, 7
  %v6639 = vsub.s32 2, %v6638
  %v6640 = vrot.slane %v6627, %v6639
  %v6641 = vlaneseq
  %v6642 = vshrl.u32 %v6641, 7
  %v6643 = vsub.s32 3, %v6642
  %v6644 = vrot.slane %v6627, %v6643
  %v6645 = vlaneseq
  %v6646 = vshrl.u32 %v6645, 7
  %v6647 = vsub.s32 4, %v6646
  %v6648 = vrot.slane %v6627, %v6647
  %v6649 = vlaneseq
  %v6650 = vshrl.u32 %v6649, 7
  %v6651 = vsub.s32 5, %v6650
  %v6652 = vrot.slane %v6627, %v6651
  %v6653 = vlaneseq
  %v6654 = vshrl.u32 %v6653, 7
  %v6655 = vsub.s32 6, %v6654
  %v6656 = vrot.slane %v6627, %v6655
  %v6657 = vlaneseq
  %v6658 = vshrl.u32 %v6657, 7
  %v6659 = vsub.s32 7, %v6658
  %v6660 = vrot.slane %v6627, %v6659
  %v6661 = vcombine.low %v6632, %v6636
  %v6662 = vcombine.low %v6640, %v6644
  %v6663 = vcombine.low %v6648, %v6652
  %v6664 = vcombine.low %v6656, %v6660
  %6665 = vrot.lane.b32.xlu0 %v6661, 16
  %v6666 = vpop.permute.xlu0 %6665
  %6667 = vrot.lane.b32.xlu0 %v6662, 16
  %v6668 = vpop.permute.xlu0 %6667
  %6669 = vrot.lane.b32.xlu0 %v6663, 16
  %v6670 = vpop.permute.xlu0 %6669
  %6671 = vrot.lane.b32.xlu0 %v6664, 16
  %v6672 = vpop.permute.xlu0 %6671
  %v6673 = vrot.slane %v6666, 4
  %v6674 = vrot.slane %v6668, 4
  %v6675 = vrot.slane %v6670, 4
  %v6676 = vrot.slane %v6672, 4
  %v6677 = vsel %vm223, %v6673, %v6666
  %v6678 = vsel %vm105, %v6673, %v6674
  %v6679 = vsel %vm223, %v6678, %v6668
  %v6680 = vsel %vm105, %v6674, %v6675
  %v6681 = vsel %vm223, %v6680, %v6670
  %v6682 = vsel %vm105, %v6675, %v6676
  %v6683 = vsel %vm223, %v6682, %v6672
  %v6689 = vmul.f32 %v6620, %v6677
  %v6690 = vmul.f32 %v6621, %v6679
  %v6691 = vmul.f32 %v6622, %v6681
  %v6692 = vmul.f32 %v6623, %v6683
  %v6693 = vmul.f32 %v6624, %v6676
  %s6694 = scalar_lea.vmem %s2, 64
  %v6695 = vld [vmem:[%s6694] sm:$0xf]
  %v6701 = vcombine.high %v6689, %v6689
  %v6702 = vcombine.high %v6690, %v6690
  %v6703 = vcombine.high %v6691, %v6691
  %v6704 = vcombine.high %v6692, %v6692
  %6705 = vrot.lane.b32.xlu0 %v6689, 112
  %v6706 = vpop.permute.xlu0 %6705
  %6707 = vrot.lane.b32.xlu0 %v6701, 112
  %v6708 = vpop.permute.xlu0 %6707
  %6709 = vrot.lane.b32.xlu0 %v6690, 112
  %v6710 = vpop.permute.xlu0 %6709
  %6711 = vrot.lane.b32.xlu0 %v6702, 112
  %v6712 = vpop.permute.xlu0 %6711
  %6713 = vrot.lane.b32.xlu0 %v6691, 112
  %v6714 = vpop.permute.xlu0 %6713
  %6715 = vrot.lane.b32.xlu0 %v6703, 112
  %v6716 = vpop.permute.xlu0 %6715
  %6717 = vrot.lane.b32.xlu0 %v6692, 112
  %v6718 = vpop.permute.xlu0 %6717
  %6719 = vrot.lane.b32.xlu0 %v6704, 112
  %v6720 = vpop.permute.xlu0 %6719
  %6721 = vrot.lane.b32.xlu0 %v6693, 112
  %v6722 = vpop.permute.xlu0 %6721
  %v6723 = vsel %vm176, %v6706, %v6708
  %v6724 = vsel %vm176, %v6708, %v6710
  %v6725 = vsel %vm176, %v6710, %v6712
  %v6726 = vsel %vm176, %v6712, %v6714
  %v6727 = vsel %vm176, %v6714, %v6716
  %v6728 = vsel %vm176, %v6716, %v6718
  %v6729 = vsel %vm176, %v6718, %v6720
  %v6730 = vsel %vm176, %v6720, %v6722
  %v6732 = vsel %vm232, %v6695, 0
  %v6734 = vsel %vm105, %v6723, 0
  %v6736 = vsel %vm105, %v6724, 0
  %v6738 = vsel %vm105, %v6725, 0
  %v6740 = vsel %vm105, %v6726, 0
  %v6742 = vsel %vm105, %v6727, 0
  %v6744 = vsel %vm105, %v6728, 0
  %v6746 = vsel %vm105, %v6729, 0
  %v6748 = vsel %vm105, %v6730, 0
  %6750 = vmatprep.subr.mxu0 %v6736
  %6751 = vmatpush1.msra.mxu0 %v6734
  %6752 = vmatprep.subr.mxu0 0.0
  %6753 = vmatpush1.msra.mxu0 0.0
  %6754 = vmatprep.subr.mxu0 0.0
  %6755 = vmatpush1.msra.mxu0 0.0
  %6756 = vmatprep.subr.mxu0 0.0
  %6757 = vmatpush1.msra.mxu0 0.0
  %6758 = vmatprep.subr.mxu0 0.0
  %6759 = vmatpush1.msra.mxu0 0.0
  %6760 = vmatprep.subr.mxu0 0.0
  %6761 = vmatpush1.msra.mxu0 0.0
  %6762 = vmatprep.subr.mxu0 0.0
  %6763 = vmatpush1.msra.mxu0 0.0
  %6764 = vmatprep.subr.mxu0 0.0
  %6765 = vmatpush1.msra.mxu0 0.0
  %6766 = vmatprep.subr.mxu0 0.0
  %6767 = vmatpush1.msra.mxu0 0.0
  %6768 = vmatprep.subr.mxu0 0.0
  %6769 = vmatpush1.msra.mxu0 0.0
  %6770 = vmatprep.subr.mxu0 0.0
  %6771 = vmatpush1.msra.mxu0 0.0
  %6772 = vmatprep.subr.mxu0 0.0
  %6773 = vmatpush1.msra.mxu0 0.0
  %6774 = vmatprep.subr.mxu0 0.0
  %6775 = vmatpush1.msra.mxu0 0.0
  %6776 = vmatprep.subr.mxu0 0.0
  %6777 = vmatpush1.msra.mxu0 0.0
  %6778 = vmatprep.subr.mxu0 0.0
  %6779 = vmatpush1.msra.mxu0 0.0
  %6780 = vmatprep.subr.mxu0 0.0
  %6781 = vmatpush1.msra.mxu0 0.0
  %6782 = vmatprep.subr.mxu0 0.0
  %6783 = vmatpush1.msra.mxu0 0.0
  %6784 = vmatprep.subr.mxu0 0.0
  %6785 = vmatpush1.msra.mxu0 0.0
  %6786 = vmatprep.subr.mxu0 0.0
  %6787 = vmatpush1.msra.mxu0 0.0
  %6788 = vmatprep.subr.mxu0 0.0
  %6789 = vmatpush1.msra.mxu0 0.0
  %6790 = vmatprep.subr.mxu0 0.0
  %6791 = vmatpush1.msra.mxu0 0.0
  %6792 = vmatprep.subr.mxu0 0.0
  %6793 = vmatpush1.msra.mxu0 0.0
  %6794 = vmatprep.subr.mxu0 0.0
  %6795 = vmatpush1.msra.mxu0 0.0
  %6796 = vmatprep.subr.mxu0 0.0
  %6797 = vmatpush1.msra.mxu0 0.0
  %6798 = vmatprep.subr.mxu0 0.0
  %6799 = vmatpush1.msra.mxu0 0.0
  %6800 = vmatprep.subr.mxu0 0.0
  %6801 = vmatpush1.msra.mxu0 0.0
  %6802 = vmatprep.subr.mxu0 0.0
  %6803 = vmatpush1.msra.mxu0 0.0
  %6804 = vmatprep.subr.mxu0 0.0
  %6805 = vmatpush1.msra.mxu0 0.0
  %6806 = vmatprep.subr.mxu0 0.0
  %6807 = vmatpush1.msra.mxu0 0.0
  %6808 = vmatprep.subr.mxu0 0.0
  %6809 = vmatpush1.msra.mxu0 0.0
  %6810 = vmatprep.subr.mxu0 0.0
  %6811 = vmatpush1.msra.mxu0 0.0
  %6812 = vmatprep.subr.mxu0 0.0
  %6813 = vmatpush1.msra.mxu0 0.0
  %6814 = vmatprep.mubr.f32.mxu0 0.0
  %6815 = vmatmul.mubr.f32.gmra.mrb[0].mxu0 %v6732
  %v6816 = vpop.f32.mrb[0].mxu0
  %v6817 = vadd.f32 0.0, %v6816
  %v6818 = vpop.f32.mrb[0].mxu0
  %v6819 = vadd.f32 0.0, %v6818
  %6820 = vdwg.mxu0
  %6821 = vmatprep.subr.mxu0 %v6740
  %6822 = vmatpush1.msra.mxu0 %v6738
  %6823 = vmatprep.subr.mxu0 0.0
  %6824 = vmatpush1.msra.mxu0 0.0
  %6825 = vmatprep.subr.mxu0 0.0
  %6826 = vmatpush1.msra.mxu0 0.0
  %6827 = vmatprep.subr.mxu0 0.0
  %6828 = vmatpush1.msra.mxu0 0.0
  %6829 = vmatprep.subr.mxu0 0.0
  %6830 = vmatpush1.msra.mxu0 0.0
  %6831 = vmatprep.subr.mxu0 0.0
  %6832 = vmatpush1.msra.mxu0 0.0
  %6833 = vmatprep.subr.mxu0 0.0
  %6834 = vmatpush1.msra.mxu0 0.0
  %6835 = vmatprep.subr.mxu0 0.0
  %6836 = vmatpush1.msra.mxu0 0.0
  %6837 = vmatprep.subr.mxu0 0.0
  %6838 = vmatpush1.msra.mxu0 0.0
  %6839 = vmatprep.subr.mxu0 0.0
  %6840 = vmatpush1.msra.mxu0 0.0
  %6841 = vmatprep.subr.mxu0 0.0
  %6842 = vmatpush1.msra.mxu0 0.0
  %6843 = vmatprep.subr.mxu0 0.0
  %6844 = vmatpush1.msra.mxu0 0.0
  %6845 = vmatprep.subr.mxu0 0.0
  %6846 = vmatpush1.msra.mxu0 0.0
  %6847 = vmatprep.subr.mxu0 0.0
  %6848 = vmatpush1.msra.mxu0 0.0
  %6849 = vmatprep.subr.mxu0 0.0
  %6850 = vmatpush1.msra.mxu0 0.0
  %6851 = vmatprep.subr.mxu0 0.0
  %6852 = vmatpush1.msra.mxu0 0.0
  %6853 = vmatprep.subr.mxu0 0.0
  %6854 = vmatpush1.msra.mxu0 0.0
  %6855 = vmatprep.subr.mxu0 0.0
  %6856 = vmatpush1.msra.mxu0 0.0
  %6857 = vmatprep.subr.mxu0 0.0
  %6858 = vmatpush1.msra.mxu0 0.0
  %6859 = vmatprep.subr.mxu0 0.0
  %6860 = vmatpush1.msra.mxu0 0.0
  %6861 = vmatprep.subr.mxu0 0.0
  %6862 = vmatpush1.msra.mxu0 0.0
  %6863 = vmatprep.subr.mxu0 0.0
  %6864 = vmatpush1.msra.mxu0 0.0
  %6865 = vmatprep.subr.mxu0 0.0
  %6866 = vmatpush1.msra.mxu0 0.0
  %6867 = vmatprep.subr.mxu0 0.0
  %6868 = vmatpush1.msra.mxu0 0.0
  %6869 = vmatprep.subr.mxu0 0.0
  %6870 = vmatpush1.msra.mxu0 0.0
  %6871 = vmatprep.subr.mxu0 0.0
  %6872 = vmatpush1.msra.mxu0 0.0
  %6873 = vmatprep.subr.mxu0 0.0
  %6874 = vmatpush1.msra.mxu0 0.0
  %6875 = vmatprep.subr.mxu0 0.0
  %6876 = vmatpush1.msra.mxu0 0.0
  %6877 = vmatprep.subr.mxu0 0.0
  %6878 = vmatpush1.msra.mxu0 0.0
  %6879 = vmatprep.subr.mxu0 0.0
  %6880 = vmatpush1.msra.mxu0 0.0
  %6881 = vmatprep.subr.mxu0 0.0
  %6882 = vmatpush1.msra.mxu0 0.0
  %6883 = vmatprep.subr.mxu0 0.0
  %6884 = vmatpush1.msra.mxu0 0.0
  %6885 = vmatprep.mubr.f32.mxu0 0.0
  %6886 = vmatmul.mubr.f32.gmra.mrb[0].mxu0 %v6732
  %v6887 = vpop.f32.mrb[0].mxu0
  %v6888 = vadd.f32 0.0, %v6887
  %v6889 = vpop.f32.mrb[0].mxu0
  %v6890 = vadd.f32 0.0, %v6889
  %6891 = vdwg.mxu0
  %6892 = vmatprep.subr.mxu0 %v6744
  %6893 = vmatpush1.msra.mxu0 %v6742
  %6894 = vmatprep.subr.mxu0 0.0
  %6895 = vmatpush1.msra.mxu0 0.0
  %6896 = vmatprep.subr.mxu0 0.0
  %6897 = vmatpush1.msra.mxu0 0.0
  %6898 = vmatprep.subr.mxu0 0.0
  %6899 = vmatpush1.msra.mxu0 0.0
  %6900 = vmatprep.subr.mxu0 0.0
  %6901 = vmatpush1.msra.mxu0 0.0
  %6902 = vmatprep.subr.mxu0 0.0
  %6903 = vmatpush1.msra.mxu0 0.0
  %6904 = vmatprep.subr.mxu0 0.0
  %6905 = vmatpush1.msra.mxu0 0.0
  %6906 = vmatprep.subr.mxu0 0.0
  %6907 = vmatpush1.msra.mxu0 0.0
  %6908 = vmatprep.subr.mxu0 0.0
  %6909 = vmatpush1.msra.mxu0 0.0
  %6910 = vmatprep.subr.mxu0 0.0
  %6911 = vmatpush1.msra.mxu0 0.0
  %6912 = vmatprep.subr.mxu0 0.0
  %6913 = vmatpush1.msra.mxu0 0.0
  %6914 = vmatprep.subr.mxu0 0.0
  %6915 = vmatpush1.msra.mxu0 0.0
  %6916 = vmatprep.subr.mxu0 0.0
  %6917 = vmatpush1.msra.mxu0 0.0
  %6918 = vmatprep.subr.mxu0 0.0
  %6919 = vmatpush1.msra.mxu0 0.0
  %6920 = vmatprep.subr.mxu0 0.0
  %6921 = vmatpush1.msra.mxu0 0.0
  %6922 = vmatprep.subr.mxu0 0.0
  %6923 = vmatpush1.msra.mxu0 0.0
  %6924 = vmatprep.subr.mxu0 0.0
  %6925 = vmatpush1.msra.mxu0 0.0
  %6926 = vmatprep.subr.mxu0 0.0
  %6927 = vmatpush1.msra.mxu0 0.0
  %6928 = vmatprep.subr.mxu0 0.0
  %6929 = vmatpush1.msra.mxu0 0.0
  %6930 = vmatprep.subr.mxu0 0.0
  %6931 = vmatpush1.msra.mxu0 0.0
  %6932 = vmatprep.subr.mxu0 0.0
  %6933 = vmatpush1.msra.mxu0 0.0
  %6934 = vmatprep.subr.mxu0 0.0
  %6935 = vmatpush1.msra.mxu0 0.0
  %6936 = vmatprep.subr.mxu0 0.0
  %6937 = vmatpush1.msra.mxu0 0.0
  %6938 = vmatprep.subr.mxu0 0.0
  %6939 = vmatpush1.msra.mxu0 0.0
  %6940 = vmatprep.subr.mxu0 0.0
  %6941 = vmatpush1.msra.mxu0 0.0
  %6942 = vmatprep.subr.mxu0 0.0
  %6943 = vmatpush1.msra.mxu0 0.0
  %6944 = vmatprep.subr.mxu0 0.0
  %6945 = vmatpush1.msra.mxu0 0.0
  %6946 = vmatprep.subr.mxu0 0.0
  %6947 = vmatpush1.msra.mxu0 0.0
  %6948 = vmatprep.subr.mxu0 0.0
  %6949 = vmatpush1.msra.mxu0 0.0
  %6950 = vmatprep.subr.mxu0 0.0
  %6951 = vmatpush1.msra.mxu0 0.0
  %6952 = vmatprep.subr.mxu0 0.0
  %6953 = vmatpush1.msra.mxu0 0.0
  %6954 = vmatprep.subr.mxu0 0.0
  %6955 = vmatpush1.msra.mxu0 0.0
  %6956 = vmatprep.mubr.f32.mxu0 0.0
  %6957 = vmatmul.mubr.f32.gmra.mrb[0].mxu0 %v6732
  %v6958 = vpop.f32.mrb[0].mxu0
  %v6959 = vadd.f32 0.0, %v6958
  %v6960 = vpop.f32.mrb[0].mxu0
  %v6961 = vadd.f32 0.0, %v6960
  %6962 = vdwg.mxu0
  %6963 = vmatprep.subr.mxu0 %v6748
  %6964 = vmatpush1.msra.mxu0 %v6746
  %6965 = vmatprep.subr.mxu0 0.0
  %6966 = vmatpush1.msra.mxu0 0.0
  %6967 = vmatprep.subr.mxu0 0.0
  %6968 = vmatpush1.msra.mxu0 0.0
  %6969 = vmatprep.subr.mxu0 0.0
  %6970 = vmatpush1.msra.mxu0 0.0
  %6971 = vmatprep.subr.mxu0 0.0
  %6972 = vmatpush1.msra.mxu0 0.0
  %6973 = vmatprep.subr.mxu0 0.0
  %6974 = vmatpush1.msra.mxu0 0.0
  %6975 = vmatprep.subr.mxu0 0.0
  %6976 = vmatpush1.msra.mxu0 0.0
  %6977 = vmatprep.subr.mxu0 0.0
  %6978 = vmatpush1.msra.mxu0 0.0
  %6979 = vmatprep.subr.mxu0 0.0
  %6980 = vmatpush1.msra.mxu0 0.0
  %6981 = vmatprep.subr.mxu0 0.0
  %6982 = vmatpush1.msra.mxu0 0.0
  %6983 = vmatprep.subr.mxu0 0.0
  %6984 = vmatpush1.msra.mxu0 0.0
  %6985 = vmatprep.subr.mxu0 0.0
  %6986 = vmatpush1.msra.mxu0 0.0
  %6987 = vmatprep.subr.mxu0 0.0
  %6988 = vmatpush1.msra.mxu0 0.0
  %6989 = vmatprep.subr.mxu0 0.0
  %6990 = vmatpush1.msra.mxu0 0.0
  %6991 = vmatprep.subr.mxu0 0.0
  %6992 = vmatpush1.msra.mxu0 0.0
  %6993 = vmatprep.subr.mxu0 0.0
  %6994 = vmatpush1.msra.mxu0 0.0
  %6995 = vmatprep.subr.mxu0 0.0
  %6996 = vmatpush1.msra.mxu0 0.0
  %6997 = vmatprep.subr.mxu0 0.0
  %6998 = vmatpush1.msra.mxu0 0.0
  %6999 = vmatprep.subr.mxu0 0.0
  %7000 = vmatpush1.msra.mxu0 0.0
  %7001 = vmatprep.subr.mxu0 0.0
  %7002 = vmatpush1.msra.mxu0 0.0
  %7003 = vmatprep.subr.mxu0 0.0
  %7004 = vmatpush1.msra.mxu0 0.0
  %7005 = vmatprep.subr.mxu0 0.0
  %7006 = vmatpush1.msra.mxu0 0.0
  %7007 = vmatprep.subr.mxu0 0.0
  %7008 = vmatpush1.msra.mxu0 0.0
  %7009 = vmatprep.subr.mxu0 0.0
  %7010 = vmatpush1.msra.mxu0 0.0
  %7011 = vmatprep.subr.mxu0 0.0
  %7012 = vmatpush1.msra.mxu0 0.0
  %7013 = vmatprep.subr.mxu0 0.0
  %7014 = vmatpush1.msra.mxu0 0.0
  %7015 = vmatprep.subr.mxu0 0.0
  %7016 = vmatpush1.msra.mxu0 0.0
  %7017 = vmatprep.subr.mxu0 0.0
  %7018 = vmatpush1.msra.mxu0 0.0
  %7019 = vmatprep.subr.mxu0 0.0
  %7020 = vmatpush1.msra.mxu0 0.0
  %7021 = vmatprep.subr.mxu0 0.0
  %7022 = vmatpush1.msra.mxu0 0.0
  %7023 = vmatprep.subr.mxu0 0.0
  %7024 = vmatpush1.msra.mxu0 0.0
  %7025 = vmatprep.subr.mxu0 0.0
  %7026 = vmatpush1.msra.mxu0 0.0
  %7027 = vmatprep.mubr.f32.mxu0 0.0
  %7028 = vmatmul.mubr.f32.gmra.mrb[0].mxu0 %v6732
  %v7029 = vpop.f32.mrb[0].mxu0
  %v7030 = vadd.f32 0.0, %v7029
  %v7031 = vpop.f32.mrb[0].mxu0
  %v7032 = vadd.f32 0.0, %v7031
  %7033 = vdwg.mxu0
  %v7034 = vadd.f32 %v6612, %v6817
  %v7035 = vadd.f32 %v6613, %v6819
  %v7036 = vadd.f32 %v6614, %v6888
  %v7037 = vadd.f32 %v6615, %v6890
  %v7038 = vadd.f32 %v6616, %v6959
  %v7039 = vadd.f32 %v6617, %v6961
  %v7040 = vadd.f32 %v6618, %v7030
  %v7041 = vadd.f32 %v6619, %v7032
  %v7042 = vld [vmem:[#allocation3 + $0x4] sm:$0xff]
  %v7043 = vld [vmem:[#allocation3 + $0xc] sm:$0xff]
  %v7044 = vld [vmem:[#allocation3 + $0x14] sm:$0xff]
  %v7045 = vld [vmem:[#allocation3 + $0x1c] sm:$0xff]
  %v7046 = vld [vmem:[#allocation3 + $0x24] sm:$0xf]
  %v7047 = vld [vmem:[%s3324] ss:$8 sm:$0xf]
  %v7048 = vld [vmem:[%s3324] ss:$8 sm:$0xf0]
  %v7049 = vor.u32 %v7047, %v7048
  %v7051 = vlaneseq
  %v7052 = vshrl.u32 %v7051, 7
  %v7053 = vsub.s32 0, %v7052
  %v7054 = vrot.slane %v7049, %v7053
  %v7055 = vlaneseq
  %v7056 = vshrl.u32 %v7055, 7
  %v7057 = vsub.s32 1, %v7056
  %v7058 = vrot.slane %v7049, %v7057
  %v7059 = vlaneseq
  %v7060 = vshrl.u32 %v7059, 7
  %v7061 = vsub.s32 2, %v7060
  %v7062 = vrot.slane %v7049, %v7061
  %v7063 = vlaneseq
  %v7064 = vshrl.u32 %v7063, 7
  %v7065 = vsub.s32 3, %v7064
  %v7066 = vrot.slane %v7049, %v7065
  %v7067 = vlaneseq
  %v7068 = vshrl.u32 %v7067, 7
  %v7069 = vsub.s32 4, %v7068
  %v7070 = vrot.slane %v7049, %v7069
  %v7071 = vlaneseq
  %v7072 = vshrl.u32 %v7071, 7
  %v7073 = vsub.s32 5, %v7072
  %v7074 = vrot.slane %v7049, %v7073
  %v7075 = vlaneseq
  %v7076 = vshrl.u32 %v7075, 7
  %v7077 = vsub.s32 6, %v7076
  %v7078 = vrot.slane %v7049, %v7077
  %v7079 = vlaneseq
  %v7080 = vshrl.u32 %v7079, 7
  %v7081 = vsub.s32 7, %v7080
  %v7082 = vrot.slane %v7049, %v7081
  %v7083 = vcombine.low %v7054, %v7058
  %v7084 = vcombine.low %v7062, %v7066
  %v7085 = vcombine.low %v7070, %v7074
  %v7086 = vcombine.low %v7078, %v7082
  %7087 = vrot.lane.b32.xlu0 %v7083, 17
  %v7088 = vpop.permute.xlu0 %7087
  %7089 = vrot.lane.b32.xlu0 %v7084, 17
  %v7090 = vpop.permute.xlu0 %7089
  %7091 = vrot.lane.b32.xlu0 %v7085, 17
  %v7092 = vpop.permute.xlu0 %7091
  %7093 = vrot.lane.b32.xlu0 %v7086, 17
  %v7094 = vpop.permute.xlu0 %7093
  %v7095 = vrot.slane %v7088, 4
  %v7096 = vrot.slane %v7090, 4
  %v7097 = vrot.slane %v7092, 4
  %v7098 = vrot.slane %v7094, 4
  %v7099 = vsel %vm563, %v7095, %v7088
  %v7100 = vsel %vm105, %v7095, %v7096
  %v7101 = vsel %vm563, %v7100, %v7090
  %v7102 = vsel %vm105, %v7096, %v7097
  %v7103 = vsel %vm563, %v7102, %v7092
  %v7104 = vsel %vm105, %v7097, %v7098
  %v7105 = vsel %vm563, %v7104, %v7094
  %v7111 = vmul.f32 %v7042, %v7099
  %v7112 = vmul.f32 %v7043, %v7101
  %v7113 = vmul.f32 %v7044, %v7103
  %v7114 = vmul.f32 %v7045, %v7105
  %v7115 = vmul.f32 %v7046, %v7098
  %s7116 = scalar_lea.vmem %s2, 68
  %v7117 = vld [vmem:[%s7116] sm:$0xf]
  %v7123 = vcombine.high %v7111, %v7111
  %v7124 = vcombine.high %v7112, %v7112
  %v7125 = vcombine.high %v7113, %v7113
  %v7126 = vcombine.high %v7114, %v7114
  %7127 = vrot.lane.b32.xlu0 %v7111, 111
  %v7128 = vpop.permute.xlu0 %7127
  %7129 = vrot.lane.b32.xlu0 %v7123, 111
  %v7130 = vpop.permute.xlu0 %7129
  %7131 = vrot.lane.b32.xlu0 %v7112, 111
  %v7132 = vpop.permute.xlu0 %7131
  %7133 = vrot.lane.b32.xlu0 %v7124, 111
  %v7134 = vpop.permute.xlu0 %7133
  %7135 = vrot.lane.b32.xlu0 %v7113, 111
  %v7136 = vpop.permute.xlu0 %7135
  %7137 = vrot.lane.b32.xlu0 %v7125, 111
  %v7138 = vpop.permute.xlu0 %7137
  %7139 = vrot.lane.b32.xlu0 %v7114, 111
  %v7140 = vpop.permute.xlu0 %7139
  %7141 = vrot.lane.b32.xlu0 %v7126, 111
  %v7142 = vpop.permute.xlu0 %7141
  %7143 = vrot.lane.b32.xlu0 %v7115, 111
  %v7144 = vpop.permute.xlu0 %7143
  %v7145 = vsel %vm103, %v7128, %v7130
  %v7146 = vsel %vm103, %v7130, %v7132
  %v7147 = vsel %vm103, %v7132, %v7134
  %v7148 = vsel %vm103, %v7134, %v7136
  %v7149 = vsel %vm103, %v7136, %v7138
  %v7150 = vsel %vm103, %v7138, %v7140
  %v7151 = vsel %vm103, %v7140, %v7142
  %v7152 = vsel %vm103, %v7142, %v7144
  %v7154 = vsel %vm232, %v7117, 0
  %v7156 = vsel %vm105, %v7145, 0
  %v7158 = vsel %vm105, %v7146, 0
  %v7160 = vsel %vm105, %v7147, 0
  %v7162 = vsel %vm105, %v7148, 0
  %v7164 = vsel %vm105, %v7149, 0
  %v7166 = vsel %vm105, %v7150, 0
  %v7168 = vsel %vm105, %v7151, 0
  %v7170 = vsel %vm105, %v7152, 0
  %7172 = vmatprep.subr.mxu0 %v7158
  %7173 = vmatpush1.msra.mxu0 %v7156
  %7174 = vmatprep.subr.mxu0 0.0
  %7175 = vmatpush1.msra.mxu0 0.0
  %7176 = vmatprep.subr.mxu0 0.0
  %7177 = vmatpush1.msra.mxu0 0.0
  %7178 = vmatprep.subr.mxu0 0.0
  %7179 = vmatpush1.msra.mxu0 0.0
  %7180 = vmatprep.subr.mxu0 0.0
  %7181 = vmatpush1.msra.mxu0 0.0
  %7182 = vmatprep.subr.mxu0 0.0
  %7183 = vmatpush1.msra.mxu0 0.0
  %7184 = vmatprep.subr.mxu0 0.0
  %7185 = vmatpush1.msra.mxu0 0.0
  %7186 = vmatprep.subr.mxu0 0.0
  %7187 = vmatpush1.msra.mxu0 0.0
  %7188 = vmatprep.subr.mxu0 0.0
  %7189 = vmatpush1.msra.mxu0 0.0
  %7190 = vmatprep.subr.mxu0 0.0
  %7191 = vmatpush1.msra.mxu0 0.0
  %7192 = vmatprep.subr.mxu0 0.0
  %7193 = vmatpush1.msra.mxu0 0.0
  %7194 = vmatprep.subr.mxu0 0.0
  %7195 = vmatpush1.msra.mxu0 0.0
  %7196 = vmatprep.subr.mxu0 0.0
  %7197 = vmatpush1.msra.mxu0 0.0
  %7198 = vmatprep.subr.mxu0 0.0
  %7199 = vmatpush1.msra.mxu0 0.0
  %7200 = vmatprep.subr.mxu0 0.0
  %7201 = vmatpush1.msra.mxu0 0.0
  %7202 = vmatprep.subr.mxu0 0.0
  %7203 = vmatpush1.msra.mxu0 0.0
  %7204 = vmatprep.subr.mxu0 0.0
  %7205 = vmatpush1.msra.mxu0 0.0
  %7206 = vmatprep.subr.mxu0 0.0
  %7207 = vmatpush1.msra.mxu0 0.0
  %7208 = vmatprep.subr.mxu0 0.0
  %7209 = vmatpush1.msra.mxu0 0.0
  %7210 = vmatprep.subr.mxu0 0.0
  %7211 = vmatpush1.msra.mxu0 0.0
  %7212 = vmatprep.subr.mxu0 0.0
  %7213 = vmatpush1.msra.mxu0 0.0
  %7214 = vmatprep.subr.mxu0 0.0
  %7215 = vmatpush1.msra.mxu0 0.0
  %7216 = vmatprep.subr.mxu0 0.0
  %7217 = vmatpush1.msra.mxu0 0.0
  %7218 = vmatprep.subr.mxu0 0.0
  %7219 = vmatpush1.msra.mxu0 0.0
  %7220 = vmatprep.subr.mxu0 0.0
  %7221 = vmatpush1.msra.mxu0 0.0
  %7222 = vmatprep.subr.mxu0 0.0
  %7223 = vmatpush1.msra.mxu0 0.0
  %7224 = vmatprep.subr.mxu0 0.0
  %7225 = vmatpush1.msra.mxu0 0.0
  %7226 = vmatprep.subr.mxu0 0.0
  %7227 = vmatpush1.msra.mxu0 0.0
  %7228 = vmatprep.subr.mxu0 0.0
  %7229 = vmatpush1.msra.mxu0 0.0
  %7230 = vmatprep.subr.mxu0 0.0
  %7231 = vmatpush1.msra.mxu0 0.0
  %7232 = vmatprep.subr.mxu0 0.0
  %7233 = vmatpush1.msra.mxu0 0.0
  %7234 = vmatprep.subr.mxu0 0.0
  %7235 = vmatpush1.msra.mxu0 0.0
  %7236 = vmatprep.mubr.f32.mxu0 0.0
  %7237 = vmatmul.mubr.f32.gmra.mrb[0].mxu0 %v7154
  %v7238 = vpop.f32.mrb[0].mxu0
  %v7239 = vadd.f32 0.0, %v7238
  %v7240 = vpop.f32.mrb[0].mxu0
  %v7241 = vadd.f32 0.0, %v7240
  %7242 = vdwg.mxu0
  %7243 = vmatprep.subr.mxu0 %v7162
  %7244 = vmatpush1.msra.mxu0 %v7160
  %7245 = vmatprep.subr.mxu0 0.0
  %7246 = vmatpush1.msra.mxu0 0.0
  %7247 = vmatprep.subr.mxu0 0.0
  %7248 = vmatpush1.msra.mxu0 0.0
  %7249 = vmatprep.subr.mxu0 0.0
  %7250 = vmatpush1.msra.mxu0 0.0
  %7251 = vmatprep.subr.mxu0 0.0
  %7252 = vmatpush1.msra.mxu0 0.0
  %7253 = vmatprep.subr.mxu0 0.0
  %7254 = vmatpush1.msra.mxu0 0.0
  %7255 = vmatprep.subr.mxu0 0.0
  %7256 = vmatpush1.msra.mxu0 0.0
  %7257 = vmatprep.subr.mxu0 0.0
  %7258 = vmatpush1.msra.mxu0 0.0
  %7259 = vmatprep.subr.mxu0 0.0
  %7260 = vmatpush1.msra.mxu0 0.0
  %7261 = vmatprep.subr.mxu0 0.0
  %7262 = vmatpush1.msra.mxu0 0.0
  %7263 = vmatprep.subr.mxu0 0.0
  %7264 = vmatpush1.msra.mxu0 0.0
  %7265 = vmatprep.subr.mxu0 0.0
  %7266 = vmatpush1.msra.mxu0 0.0
  %7267 = vmatprep.subr.mxu0 0.0
  %7268 = vmatpush1.msra.mxu0 0.0
  %7269 = vmatprep.subr.mxu0 0.0
  %7270 = vmatpush1.msra.mxu0 0.0
  %7271 = vmatprep.subr.mxu0 0.0
  %7272 = vmatpush1.msra.mxu0 0.0
  %7273 = vmatprep.subr.mxu0 0.0
  %7274 = vmatpush1.msra.mxu0 0.0
  %7275 = vmatprep.subr.mxu0 0.0
  %7276 = vmatpush1.msra.mxu0 0.0
  %7277 = vmatprep.subr.mxu0 0.0
  %7278 = vmatpush1.msra.mxu0 0.0
  %7279 = vmatprep.subr.mxu0 0.0
  %7280 = vmatpush1.msra.mxu0 0.0
  %7281 = vmatprep.subr.mxu0 0.0
  %7282 = vmatpush1.msra.mxu0 0.0
  %7283 = vmatprep.subr.mxu0 0.0
  %7284 = vmatpush1.msra.mxu0 0.0
  %7285 = vmatprep.subr.mxu0 0.0
  %7286 = vmatpush1.msra.mxu0 0.0
  %7287 = vmatprep.subr.mxu0 0.0
  %7288 = vmatpush1.msra.mxu0 0.0
  %7289 = vmatprep.subr.mxu0 0.0
  %7290 = vmatpush1.msra.mxu0 0.0
  %7291 = vmatprep.subr.mxu0 0.0
  %7292 = vmatpush1.msra.mxu0 0.0
  %7293 = vmatprep.subr.mxu0 0.0
  %7294 = vmatpush1.msra.mxu0 0.0
  %7295 = vmatprep.subr.mxu0 0.0
  %7296 = vmatpush1.msra.mxu0 0.0
  %7297 = vmatprep.subr.mxu0 0.0
  %7298 = vmatpush1.msra.mxu0 0.0
  %7299 = vmatprep.subr.mxu0 0.0
  %7300 = vmatpush1.msra.mxu0 0.0
  %7301 = vmatprep.subr.mxu0 0.0
  %7302 = vmatpush1.msra.mxu0 0.0
  %7303 = vmatprep.subr.mxu0 0.0
  %7304 = vmatpush1.msra.mxu0 0.0
  %7305 = vmatprep.subr.mxu0 0.0
  %7306 = vmatpush1.msra.mxu0 0.0
  %7307 = vmatprep.mubr.f32.mxu0 0.0
  %7308 = vmatmul.mubr.f32.gmra.mrb[0].mxu0 %v7154
  %v7309 = vpop.f32.mrb[0].mxu0
  %v7310 = vadd.f32 0.0, %v7309
  %v7311 = vpop.f32.mrb[0].mxu0
  %v7312 = vadd.f32 0.0, %v7311
  %7313 = vdwg.mxu0
  %7314 = vmatprep.subr.mxu0 %v7166
  %7315 = vmatpush1.msra.mxu0 %v7164
  %7316 = vmatprep.subr.mxu0 0.0
  %7317 = vmatpush1.msra.mxu0 0.0
  %7318 = vmatprep.subr.mxu0 0.0
  %7319 = vmatpush1.msra.mxu0 0.0
  %7320 = vmatprep.subr.mxu0 0.0
  %7321 = vmatpush1.msra.mxu0 0.0
  %7322 = vmatprep.subr.mxu0 0.0
  %7323 = vmatpush1.msra.mxu0 0.0
  %7324 = vmatprep.subr.mxu0 0.0
  %7325 = vmatpush1.msra.mxu0 0.0
  %7326 = vmatprep.subr.mxu0 0.0
  %7327 = vmatpush1.msra.mxu0 0.0
  %7328 = vmatprep.subr.mxu0 0.0
  %7329 = vmatpush1.msra.mxu0 0.0
  %7330 = vmatprep.subr.mxu0 0.0
  %7331 = vmatpush1.msra.mxu0 0.0
  %7332 = vmatprep.subr.mxu0 0.0
  %7333 = vmatpush1.msra.mxu0 0.0
  %7334 = vmatprep.subr.mxu0 0.0
  %7335 = vmatpush1.msra.mxu0 0.0
  %7336 = vmatprep.subr.mxu0 0.0
  %7337 = vmatpush1.msra.mxu0 0.0
  %7338 = vmatprep.subr.mxu0 0.0
  %7339 = vmatpush1.msra.mxu0 0.0
  %7340 = vmatprep.subr.mxu0 0.0
  %7341 = vmatpush1.msra.mxu0 0.0
  %7342 = vmatprep.subr.mxu0 0.0
  %7343 = vmatpush1.msra.mxu0 0.0
  %7344 = vmatprep.subr.mxu0 0.0
  %7345 = vmatpush1.msra.mxu0 0.0
  %7346 = vmatprep.subr.mxu0 0.0
  %7347 = vmatpush1.msra.mxu0 0.0
  %7348 = vmatprep.subr.mxu0 0.0
  %7349 = vmatpush1.msra.mxu0 0.0
  %7350 = vmatprep.subr.mxu0 0.0
  %7351 = vmatpush1.msra.mxu0 0.0
  %7352 = vmatprep.subr.mxu0 0.0
  %7353 = vmatpush1.msra.mxu0 0.0
  %7354 = vmatprep.subr.mxu0 0.0
  %7355 = vmatpush1.msra.mxu0 0.0
  %7356 = vmatprep.subr.mxu0 0.0
  %7357 = vmatpush1.msra.mxu0 0.0
  %7358 = vmatprep.subr.mxu0 0.0
  %7359 = vmatpush1.msra.mxu0 0.0
  %7360 = vmatprep.subr.mxu0 0.0
  %7361 = vmatpush1.msra.mxu0 0.0
  %7362 = vmatprep.subr.mxu0 0.0
  %7363 = vmatpush1.msra.mxu0 0.0
  %7364 = vmatprep.subr.mxu0 0.0
  %7365 = vmatpush1.msra.mxu0 0.0
  %7366 = vmatprep.subr.mxu0 0.0
  %7367 = vmatpush1.msra.mxu0 0.0
  %7368 = vmatprep.subr.mxu0 0.0
  %7369 = vmatpush1.msra.mxu0 0.0
  %7370 = vmatprep.subr.mxu0 0.0
  %7371 = vmatpush1.msra.mxu0 0.0
  %7372 = vmatprep.subr.mxu0 0.0
  %7373 = vmatpush1.msra.mxu0 0.0
  %7374 = vmatprep.subr.mxu0 0.0
  %7375 = vmatpush1.msra.mxu0 0.0
  %7376 = vmatprep.subr.mxu0 0.0
  %7377 = vmatpush1.msra.mxu0 0.0
  %7378 = vmatprep.mubr.f32.mxu0 0.0
  %7379 = vmatmul.mubr.f32.gmra.mrb[0].mxu0 %v7154
  %v7380 = vpop.f32.mrb[0].mxu0
  %v7381 = vadd.f32 0.0, %v7380
  %v7382 = vpop.f32.mrb[0].mxu0
  %v7383 = vadd.f32 0.0, %v7382
  %7384 = vdwg.mxu0
  %7385 = vmatprep.subr.mxu0 %v7170
  %7386 = vmatpush1.msra.mxu0 %v7168
  %7387 = vmatprep.subr.mxu0 0.0
  %7388 = vmatpush1.msra.mxu0 0.0
  %7389 = vmatprep.subr.mxu0 0.0
  %7390 = vmatpush1.msra.mxu0 0.0
  %7391 = vmatprep.subr.mxu0 0.0
  %7392 = vmatpush1.msra.mxu0 0.0
  %7393 = vmatprep.subr.mxu0 0.0
  %7394 = vmatpush1.msra.mxu0 0.0
  %7395 = vmatprep.subr.mxu0 0.0
  %7396 = vmatpush1.msra.mxu0 0.0
  %7397 = vmatprep.subr.mxu0 0.0
  %7398 = vmatpush1.msra.mxu0 0.0
  %7399 = vmatprep.subr.mxu0 0.0
  %7400 = vmatpush1.msra.mxu0 0.0
  %7401 = vmatprep.subr.mxu0 0.0
  %7402 = vmatpush1.msra.mxu0 0.0
  %7403 = vmatprep.subr.mxu0 0.0
  %7404 = vmatpush1.msra.mxu0 0.0
  %7405 = vmatprep.subr.mxu0 0.0
  %7406 = vmatpush1.msra.mxu0 0.0
  %7407 = vmatprep.subr.mxu0 0.0
  %7408 = vmatpush1.msra.mxu0 0.0
  %7409 = vmatprep.subr.mxu0 0.0
  %7410 = vmatpush1.msra.mxu0 0.0
  %7411 = vmatprep.subr.mxu0 0.0
  %7412 = vmatpush1.msra.mxu0 0.0
  %7413 = vmatprep.subr.mxu0 0.0
  %7414 = vmatpush1.msra.mxu0 0.0
  %7415 = vmatprep.subr.mxu0 0.0
  %7416 = vmatpush1.msra.mxu0 0.0
  %7417 = vmatprep.subr.mxu0 0.0
  %7418 = vmatpush1.msra.mxu0 0.0
  %7419 = vmatprep.subr.mxu0 0.0
  %7420 = vmatpush1.msra.mxu0 0.0
  %7421 = vmatprep.subr.mxu0 0.0
  %7422 = vmatpush1.msra.mxu0 0.0
  %7423 = vmatprep.subr.mxu0 0.0
  %7424 = vmatpush1.msra.mxu0 0.0
  %7425 = vmatprep.subr.mxu0 0.0
  %7426 = vmatpush1.msra.mxu0 0.0
  %7427 = vmatprep.subr.mxu0 0.0
  %7428 = vmatpush1.msra.mxu0 0.0
  %7429 = vmatprep.subr.mxu0 0.0
  %7430 = vmatpush1.msra.mxu0 0.0
  %7431 = vmatprep.subr.mxu0 0.0
  %7432 = vmatpush1.msra.mxu0 0.0
  %7433 = vmatprep.subr.mxu0 0.0
  %7434 = vmatpush1.msra.mxu0 0.0
  %7435 = vmatprep.subr.mxu0 0.0
  %7436 = vmatpush1.msra.mxu0 0.0
  %7437 = vmatprep.subr.mxu0 0.0
  %7438 = vmatpush1.msra.mxu0 0.0
  %7439 = vmatprep.subr.mxu0 0.0
  %7440 = vmatpush1.msra.mxu0 0.0
  %7441 = vmatprep.subr.mxu0 0.0
  %7442 = vmatpush1.msra.mxu0 0.0
  %7443 = vmatprep.subr.mxu0 0.0
  %7444 = vmatpush1.msra.mxu0 0.0
  %7445 = vmatprep.subr.mxu0 0.0
  %7446 = vmatpush1.msra.mxu0 0.0
  %7447 = vmatprep.subr.mxu0 0.0
  %7448 = vmatpush1.msra.mxu0 0.0
  %7449 = vmatprep.mubr.f32.mxu0 0.0
  %7450 = vmatmul.mubr.f32.gmra.mrb[0].mxu0 %v7154
  %v7451 = vpop.f32.mrb[0].mxu0
  %v7452 = vadd.f32 0.0, %v7451
  %v7453 = vpop.f32.mrb[0].mxu0
  %v7454 = vadd.f32 0.0, %v7453
  %7455 = vdwg.mxu0
  %v7456 = vadd.f32 %v7034, %v7239
  %v7457 = vadd.f32 %v7035, %v7241
  %v7458 = vadd.f32 %v7036, %v7310
  %v7459 = vadd.f32 %v7037, %v7312
  %v7460 = vadd.f32 %v7038, %v7381
  %v7461 = vadd.f32 %v7039, %v7383
  %v7462 = vadd.f32 %v7040, %v7452
  %v7463 = vadd.f32 %v7041, %v7454
  %s7464 = scalar_lea.vmem %s3, 4
  %v7465 = vld [vmem:[%s7464] sm:$0xf]
  %7467 = vset.pattern.permute.xlu0 0
  %7468 = vperm.xlu0 %7467, %v7465
  %v7469 = vpop.permute.xlu0 %7468
  %v7471 = vadd.f32 %v7456, %v7469
  %v7472 = vadd.f32 %v7457, %v7469
  %v7473 = vadd.f32 %v7458, %v7469
  %v7474 = vadd.f32 %v7459, %v7469
  %v7475 = vadd.f32 %v7460, %v7469
  %v7476 = vadd.f32 %v7461, %v7469
  %v7477 = vadd.f32 %v7462, %v7469
  %v7478 = vadd.f32 %v7463, %v7469
  %v7479 = vmax.f32 %v7471, 0.0
  %v7480 = vmax.f32 %v7472, 0.0
  %v7481 = vmax.f32 %v7473, 0.0
  %v7482 = vmax.f32 %v7474, 0.0
  %v7483 = vmax.f32 %v7475, 0.0
  %v7484 = vmax.f32 %v7476, 0.0
  %v7485 = vmax.f32 %v7477, 0.0
  %v7486 = vmax.f32 %v7478, 0.0
  %v7495 = vcombine.low %v7479, %v7480
  %v7496 = vcombine.low %v7481, %v7482
  %v7497 = vcombine.low %v7483, %v7484
  %v7498 = vcombine.low %v7485, %v7486
  %v7503 = vadd.f32 %v5451, %v7495
  %v7504 = vadd.f32 %v5452, %v7496
  %v7505 = vadd.f32 %v5453, %v7497
  %v7506 = vadd.f32 %v5454, %v7498
  %7507 = vst [vmem:[#allocation2 + $0x4] sm:$0xff] %v7503
  %7508 = vst [vmem:[#allocation2 + $0xc] sm:$0xff] %v7504
  %7509 = vst [vmem:[#allocation2 + $0x14] sm:$0xff] %v7505
  %7510 = vst [vmem:[#allocation2 + $0x1c] sm:$0xff] %v7506
  %v7511 = vld [vmem:[#allocation2] sm:$0xff]
  %v7512 = vld [vmem:[#allocation2 + $0x8] sm:$0xff]
  %v7513 = vld [vmem:[#allocation2 + $0x10] sm:$0xff]
  %v7514 = vld [vmem:[#allocation2 + $0x18] sm:$0xff]
  %v7515 = vld [vmem:[#allocation2 + $0x20] sm:$0xf]
  %v7516 = vld [vmem:[%s8] ss:$8 sm:$0xf]
  %v7517 = vld [vmem:[%s8] ss:$8 sm:$0xf0]
  %v7518 = vor.u32 %v7516, %v7517
  %v7520 = vlaneseq
  %v7521 = vshrl.u32 %v7520, 7
  %v7522 = vsub.s32 0, %v7521
  %v7523 = vrot.slane %v7518, %v7522
  %v7524 = vlaneseq
  %v7525 = vshrl.u32 %v7524, 7
  %v7526 = vsub.s32 1, %v7525
  %v7527 = vrot.slane %v7518, %v7526
  %v7528 = vlaneseq
  %v7529 = vshrl.u32 %v7528, 7
  %v7530 = vsub.s32 2, %v7529
  %v7531 = vrot.slane %v7518, %v7530
  %v7532 = vlaneseq
  %v7533 = vshrl.u32 %v7532, 7
  %v7534 = vsub.s32 3, %v7533
  %v7535 = vrot.slane %v7518, %v7534
  %v7536 = vlaneseq
  %v7537 = vshrl.u32 %v7536, 7
  %v7538 = vsub.s32 4, %v7537
  %v7539 = vrot.slane %v7518, %v7538
  %v7540 = vlaneseq
  %v7541 = vshrl.u32 %v7540, 7
  %v7542 = vsub.s32 5, %v7541
  %v7543 = vrot.slane %v7518, %v7542
  %v7544 = vlaneseq
  %v7545 = vshrl.u32 %v7544, 7
  %v7546 = vsub.s32 6, %v7545
  %v7547 = vrot.slane %v7518, %v7546
  %v7548 = vlaneseq
  %v7549 = vshrl.u32 %v7548, 7
  %v7550 = vsub.s32 7, %v7549
  %v7551 = vrot.slane %v7518, %v7550
  %v7552 = vcombine.low %v7523, %v7527
  %v7553 = vcombine.low %v7531, %v7535
  %v7554 = vcombine.low %v7539, %v7543
  %v7555 = vcombine.low %v7547, %v7551
  %7556 = vrot.lane.b32.xlu0 %v7552, 111
  %v7557 = vpop.permute.xlu0 %7556
  %7558 = vrot.lane.b32.xlu0 %v7553, 111
  %v7559 = vpop.permute.xlu0 %7558
  %7560 = vrot.lane.b32.xlu0 %v7554, 111
  %v7561 = vpop.permute.xlu0 %7560
  %7562 = vrot.lane.b32.xlu0 %v7555, 111
  %v7563 = vpop.permute.xlu0 %7562
  %v7564 = vrot.slane %v7557, 4
  %v7565 = vrot.slane %v7559, 4
  %v7566 = vrot.slane %v7561, 4
  %v7567 = vrot.slane %v7563, 4
  %v7568 = vsel %vm103, %v7564, %v7557
  %v7569 = vsel %vm105, %v7564, %v7565
  %v7570 = vsel %vm103, %v7569, %v7559
  %v7571 = vsel %vm105, %v7565, %v7566
  %v7572 = vsel %vm103, %v7571, %v7561
  %v7573 = vsel %vm105, %v7566, %v7567
  %v7574 = vsel %vm103, %v7573, %v7563
  %v7580 = vmul.f32 %v7511, %v7568
  %v7581 = vmul.f32 %v7512, %v7570
  %v7582 = vmul.f32 %v7513, %v7572
  %v7583 = vmul.f32 %v7514, %v7574
  %v7584 = vmul.f32 %v7515, %v7567
  %s7585 = scalar_lea.vmem %s2, 72
  %v7586 = vld [vmem:[%s7585] sm:$0xf]
  %v7587 = vld [vmem:[%s123] ss:$8 sm:$0xf]
  %v7588 = vld [vmem:[%s123] ss:$8 sm:$0xf0]
  %v7589 = vor.u32 %v7587, %v7588
  %v7591 = vlaneseq
  %v7592 = vshrl.u32 %v7591, 7
  %v7593 = vsub.s32 0, %v7592
  %v7594 = vrot.slane %v7589, %v7593
  %v7595 = vlaneseq
  %v7596 = vshrl.u32 %v7595, 7
  %v7597 = vsub.s32 1, %v7596
  %v7598 = vrot.slane %v7589, %v7597
  %v7599 = vlaneseq
  %v7600 = vshrl.u32 %v7599, 7
  %v7601 = vsub.s32 2, %v7600
  %v7602 = vrot.slane %v7589, %v7601
  %v7603 = vlaneseq
  %v7604 = vshrl.u32 %v7603, 7
  %v7605 = vsub.s32 3, %v7604
  %v7606 = vrot.slane %v7589, %v7605
  %v7607 = vlaneseq
  %v7608 = vshrl.u32 %v7607, 7
  %v7609 = vsub.s32 4, %v7608
  %v7610 = vrot.slane %v7589, %v7609
  %v7611 = vlaneseq
  %v7612 = vshrl.u32 %v7611, 7
  %v7613 = vsub.s32 5, %v7612
  %v7614 = vrot.slane %v7589, %v7613
  %v7615 = vlaneseq
  %v7616 = vshrl.u32 %v7615, 7
  %v7617 = vsub.s32 6, %v7616
  %v7618 = vrot.slane %v7589, %v7617
  %v7619 = vlaneseq
  %v7620 = vshrl.u32 %v7619, 7
  %v7621 = vsub.s32 7, %v7620
  %v7622 = vrot.slane %v7589, %v7621
  %v7623 = vcombine.low %v7594, %v7598
  %v7624 = vcombine.low %v7602, %v7606
  %v7625 = vcombine.low %v7610, %v7614
  %v7626 = vcombine.low %v7618, %v7622
  %7627 = vrot.lane.b32.xlu0 %v7623, 112
  %v7628 = vpop.permute.xlu0 %7627
  %7629 = vrot.lane.b32.xlu0 %v7624, 112
  %v7630 = vpop.permute.xlu0 %7629
  %7631 = vrot.lane.b32.xlu0 %v7625, 112
  %v7632 = vpop.permute.xlu0 %7631
  %7633 = vrot.lane.b32.xlu0 %v7626, 112
  %v7634 = vpop.permute.xlu0 %7633
  %v7635 = vrot.slane %v7628, 4
  %v7636 = vrot.slane %v7630, 4
  %v7637 = vrot.slane %v7632, 4
  %v7638 = vrot.slane %v7634, 4
  %v7639 = vsel %vm176, %v7635, %v7628
  %v7640 = vsel %vm105, %v7635, %v7636
  %v7641 = vsel %vm176, %v7640, %v7630
  %v7642 = vsel %vm105, %v7636, %v7637
  %v7643 = vsel %vm176, %v7642, %v7632
  %v7644 = vsel %vm105, %v7637, %v7638
  %v7645 = vsel %vm176, %v7644, %v7634
  %v7651 = vmul.f32 %v7511, %v7639
  %v7652 = vmul.f32 %v7512, %v7641
  %v7653 = vmul.f32 %v7513, %v7643
  %v7654 = vmul.f32 %v7514, %v7645
  %v7655 = vmul.f32 %v7515, %v7638
  %s7656 = scalar_lea.vmem %s2, 76
  %v7657 = vld [vmem:[%s7656] sm:$0xf]
  %v7663 = vcombine.high %v7651, %v7651
  %v7664 = vcombine.high %v7652, %v7652
  %v7665 = vcombine.high %v7653, %v7653
  %v7666 = vcombine.high %v7654, %v7654
  %7667 = vrot.lane.b32.xlu0 %v7651, 16
  %v7668 = vpop.permute.xlu0 %7667
  %7669 = vrot.lane.b32.xlu0 %v7663, 16
  %v7670 = vpop.permute.xlu0 %7669
  %7671 = vrot.lane.b32.xlu0 %v7652, 16
  %v7672 = vpop.permute.xlu0 %7671
  %7673 = vrot.lane.b32.xlu0 %v7664, 16
  %v7674 = vpop.permute.xlu0 %7673
  %7675 = vrot.lane.b32.xlu0 %v7653, 16
  %v7676 = vpop.permute.xlu0 %7675
  %7677 = vrot.lane.b32.xlu0 %v7665, 16
  %v7678 = vpop.permute.xlu0 %7677
  %7679 = vrot.lane.b32.xlu0 %v7654, 16
  %v7680 = vpop.permute.xlu0 %7679
  %7681 = vrot.lane.b32.xlu0 %v7666, 16
  %v7682 = vpop.permute.xlu0 %7681
  %7683 = vrot.lane.b32.xlu0 %v7655, 16
  %v7684 = vpop.permute.xlu0 %7683
  %v7685 = vsel %vm223, %v7668, %v7670
  %v7686 = vsel %vm223, %v7670, %v7672
  %v7687 = vsel %vm223, %v7672, %v7674
  %v7688 = vsel %vm223, %v7674, %v7676
  %v7689 = vsel %vm223, %v7676, %v7678
  %v7690 = vsel %vm223, %v7678, %v7680
  %v7691 = vsel %vm223, %v7680, %v7682
  %v7692 = vsel %vm223, %v7682, %v7684
  %v7694 = vsel %vm232, %v7657, 0
  %v7696 = vsel %vm105, %v7685, 0
  %v7698 = vsel %vm105, %v7686, 0
  %v7700 = vsel %vm105, %v7687, 0
  %v7702 = vsel %vm105, %v7688, 0
  %v7704 = vsel %vm105, %v7689, 0
  %v7706 = vsel %vm105, %v7690, 0
  %v7708 = vsel %vm105, %v7691, 0
  %v7710 = vsel %vm105, %v7692, 0
  %7712 = vmatprep.subr.mxu0 %v7698
  %7713 = vmatpush1.msra.mxu0 %v7696
  %7714 = vmatprep.subr.mxu0 0.0
  %7715 = vmatpush1.msra.mxu0 0.0
  %7716 = vmatprep.subr.mxu0 0.0
  %7717 = vmatpush1.msra.mxu0 0.0
  %7718 = vmatprep.subr.mxu0 0.0
  %7719 = vmatpush1.msra.mxu0 0.0
  %7720 = vmatprep.subr.mxu0 0.0
  %7721 = vmatpush1.msra.mxu0 0.0
  %7722 = vmatprep.subr.mxu0 0.0
  %7723 = vmatpush1.msra.mxu0 0.0
  %7724 = vmatprep.subr.mxu0 0.0
  %7725 = vmatpush1.msra.mxu0 0.0
  %7726 = vmatprep.subr.mxu0 0.0
  %7727 = vmatpush1.msra.mxu0 0.0
  %7728 = vmatprep.subr.mxu0 0.0
  %7729 = vmatpush1.msra.mxu0 0.0
  %7730 = vmatprep.subr.mxu0 0.0
  %7731 = vmatpush1.msra.mxu0 0.0
  %7732 = vmatprep.subr.mxu0 0.0
  %7733 = vmatpush1.msra.mxu0 0.0
  %7734 = vmatprep.subr.mxu0 0.0
  %7735 = vmatpush1.msra.mxu0 0.0
  %7736 = vmatprep.subr.mxu0 0.0
  %7737 = vmatpush1.msra.mxu0 0.0
  %7738 = vmatprep.subr.mxu0 0.0
  %7739 = vmatpush1.msra.mxu0 0.0
  %7740 = vmatprep.subr.mxu0 0.0
  %7741 = vmatpush1.msra.mxu0 0.0
  %7742 = vmatprep.subr.mxu0 0.0
  %7743 = vmatpush1.msra.mxu0 0.0
  %7744 = vmatprep.subr.mxu0 0.0
  %7745 = vmatpush1.msra.mxu0 0.0
  %7746 = vmatprep.subr.mxu0 0.0
  %7747 = vmatpush1.msra.mxu0 0.0
  %7748 = vmatprep.subr.mxu0 0.0
  %7749 = vmatpush1.msra.mxu0 0.0
  %7750 = vmatprep.subr.mxu0 0.0
  %7751 = vmatpush1.msra.mxu0 0.0
  %7752 = vmatprep.subr.mxu0 0.0
  %7753 = vmatpush1.msra.mxu0 0.0
  %7754 = vmatprep.subr.mxu0 0.0
  %7755 = vmatpush1.msra.mxu0 0.0
  %7756 = vmatprep.subr.mxu0 0.0
  %7757 = vmatpush1.msra.mxu0 0.0
  %7758 = vmatprep.subr.mxu0 0.0
  %7759 = vmatpush1.msra.mxu0 0.0
  %7760 = vmatprep.subr.mxu0 0.0
  %7761 = vmatpush1.msra.mxu0 0.0
  %7762 = vmatprep.subr.mxu0 0.0
  %7763 = vmatpush1.msra.mxu0 0.0
  %7764 = vmatprep.subr.mxu0 0.0
  %7765 = vmatpush1.msra.mxu0 0.0
  %7766 = vmatprep.subr.mxu0 0.0
  %7767 = vmatpush1.msra.mxu0 0.0
  %7768 = vmatprep.subr.mxu0 0.0
  %7769 = vmatpush1.msra.mxu0 0.0
  %7770 = vmatprep.subr.mxu0 0.0
  %7771 = vmatpush1.msra.mxu0 0.0
  %7772 = vmatprep.subr.mxu0 0.0
  %7773 = vmatpush1.msra.mxu0 0.0
  %7774 = vmatprep.subr.mxu0 0.0
  %7775 = vmatpush1.msra.mxu0 0.0
  %7776 = vmatprep.mubr.f32.mxu0 0.0
  %7777 = vmatmul.mubr.f32.gmra.mrb[0].mxu0 %v7694
  %v7778 = vpop.f32.mrb[0].mxu0
  %v7779 = vadd.f32 0.0, %v7778
  %v7780 = vpop.f32.mrb[0].mxu0
  %v7781 = vadd.f32 0.0, %v7780
  %7782 = vdwg.mxu0
  %7783 = vmatprep.subr.mxu0 %v7702
  %7784 = vmatpush1.msra.mxu0 %v7700
  %7785 = vmatprep.subr.mxu0 0.0
  %7786 = vmatpush1.msra.mxu0 0.0
  %7787 = vmatprep.subr.mxu0 0.0
  %7788 = vmatpush1.msra.mxu0 0.0
  %7789 = vmatprep.subr.mxu0 0.0
  %7790 = vmatpush1.msra.mxu0 0.0
  %7791 = vmatprep.subr.mxu0 0.0
  %7792 = vmatpush1.msra.mxu0 0.0
  %7793 = vmatprep.subr.mxu0 0.0
  %7794 = vmatpush1.msra.mxu0 0.0
  %7795 = vmatprep.subr.mxu0 0.0
  %7796 = vmatpush1.msra.mxu0 0.0
  %7797 = vmatprep.subr.mxu0 0.0
  %7798 = vmatpush1.msra.mxu0 0.0
  %7799 = vmatprep.subr.mxu0 0.0
  %7800 = vmatpush1.msra.mxu0 0.0
  %7801 = vmatprep.subr.mxu0 0.0
  %7802 = vmatpush1.msra.mxu0 0.0
  %7803 = vmatprep.subr.mxu0 0.0
  %7804 = vmatpush1.msra.mxu0 0.0
  %7805 = vmatprep.subr.mxu0 0.0
  %7806 = vmatpush1.msra.mxu0 0.0
  %7807 = vmatprep.subr.mxu0 0.0
  %7808 = vmatpush1.msra.mxu0 0.0
  %7809 = vmatprep.subr.mxu0 0.0
  %7810 = vmatpush1.msra.mxu0 0.0
  %7811 = vmatprep.subr.mxu0 0.0
  %7812 = vmatpush1.msra.mxu0 0.0
  %7813 = vmatprep.subr.mxu0 0.0
  %7814 = vmatpush1.msra.mxu0 0.0
  %7815 = vmatprep.subr.mxu0 0.0
  %7816 = vmatpush1.msra.mxu0 0.0
  %7817 = vmatprep.subr.mxu0 0.0
  %7818 = vmatpush1.msra.mxu0 0.0
  %7819 = vmatprep.subr.mxu0 0.0
  %7820 = vmatpush1.msra.mxu0 0.0
  %7821 = vmatprep.subr.mxu0 0.0
  %7822 = vmatpush1.msra.mxu0 0.0
  %7823 = vmatprep.subr.mxu0 0.0
  %7824 = vmatpush1.msra.mxu0 0.0
  %7825 = vmatprep.subr.mxu0 0.0
  %7826 = vmatpush1.msra.mxu0 0.0
  %7827 = vmatprep.subr.mxu0 0.0
  %7828 = vmatpush1.msra.mxu0 0.0
  %7829 = vmatprep.subr.mxu0 0.0
  %7830 = vmatpush1.msra.mxu0 0.0
  %7831 = vmatprep.subr.mxu0 0.0
  %7832 = vmatpush1.msra.mxu0 0.0
  %7833 = vmatprep.subr.mxu0 0.0
  %7834 = vmatpush1.msra.mxu0 0.0
  %7835 = vmatprep.subr.mxu0 0.0
  %7836 = vmatpush1.msra.mxu0 0.0
  %7837 = vmatprep.subr.mxu0 0.0
  %7838 = vmatpush1.msra.mxu0 0.0
  %7839 = vmatprep.subr.mxu0 0.0
  %7840 = vmatpush1.msra.mxu0 0.0
  %7841 = vmatprep.subr.mxu0 0.0
  %7842 = vmatpush1.msra.mxu0 0.0
  %7843 = vmatprep.subr.mxu0 0.0
  %7844 = vmatpush1.msra.mxu0 0.0
  %7845 = vmatprep.subr.mxu0 0.0
  %7846 = vmatpush1.msra.mxu0 0.0
  %7847 = vmatprep.mubr.f32.mxu0 0.0
  %7848 = vmatmul.mubr.f32.gmra.mrb[0].mxu0 %v7694
  %v7849 = vpop.f32.mrb[0].mxu0
  %v7850 = vadd.f32 0.0, %v7849
  %v7851 = vpop.f32.mrb[0].mxu0
  %v7852 = vadd.f32 0.0, %v7851
  %7853 = vdwg.mxu0
  %7854 = vmatprep.subr.mxu0 %v7706
  %7855 = vmatpush1.msra.mxu0 %v7704
  %7856 = vmatprep.subr.mxu0 0.0
  %7857 = vmatpush1.msra.mxu0 0.0
  %7858 = vmatprep.subr.mxu0 0.0
  %7859 = vmatpush1.msra.mxu0 0.0
  %7860 = vmatprep.subr.mxu0 0.0
  %7861 = vmatpush1.msra.mxu0 0.0
  %7862 = vmatprep.subr.mxu0 0.0
  %7863 = vmatpush1.msra.mxu0 0.0
  %7864 = vmatprep.subr.mxu0 0.0
  %7865 = vmatpush1.msra.mxu0 0.0
  %7866 = vmatprep.subr.mxu0 0.0
  %7867 = vmatpush1.msra.mxu0 0.0
  %7868 = vmatprep.subr.mxu0 0.0
  %7869 = vmatpush1.msra.mxu0 0.0
  %7870 = vmatprep.subr.mxu0 0.0
  %7871 = vmatpush1.msra.mxu0 0.0
  %7872 = vmatprep.subr.mxu0 0.0
  %7873 = vmatpush1.msra.mxu0 0.0
  %7874 = vmatprep.subr.mxu0 0.0
  %7875 = vmatpush1.msra.mxu0 0.0
  %7876 = vmatprep.subr.mxu0 0.0
  %7877 = vmatpush1.msra.mxu0 0.0
  %7878 = vmatprep.subr.mxu0 0.0
  %7879 = vmatpush1.msra.mxu0 0.0
  %7880 = vmatprep.subr.mxu0 0.0
  %7881 = vmatpush1.msra.mxu0 0.0
  %7882 = vmatprep.subr.mxu0 0.0
  %7883 = vmatpush1.msra.mxu0 0.0
  %7884 = vmatprep.subr.mxu0 0.0
  %7885 = vmatpush1.msra.mxu0 0.0
  %7886 = vmatprep.subr.mxu0 0.0
  %7887 = vmatpush1.msra.mxu0 0.0
  %7888 = vmatprep.subr.mxu0 0.0
  %7889 = vmatpush1.msra.mxu0 0.0
  %7890 = vmatprep.subr.mxu0 0.0
  %7891 = vmatpush1.msra.mxu0 0.0
  %7892 = vmatprep.subr.mxu0 0.0
  %7893 = vmatpush1.msra.mxu0 0.0
  %7894 = vmatprep.subr.mxu0 0.0
  %7895 = vmatpush1.msra.mxu0 0.0
  %7896 = vmatprep.subr.mxu0 0.0
  %7897 = vmatpush1.msra.mxu0 0.0
  %7898 = vmatprep.subr.mxu0 0.0
  %7899 = vmatpush1.msra.mxu0 0.0
  %7900 = vmatprep.subr.mxu0 0.0
  %7901 = vmatpush1.msra.mxu0 0.0
  %7902 = vmatprep.subr.mxu0 0.0
  %7903 = vmatpush1.msra.mxu0 0.0
  %7904 = vmatprep.subr.mxu0 0.0
  %7905 = vmatpush1.msra.mxu0 0.0
  %7906 = vmatprep.subr.mxu0 0.0
  %7907 = vmatpush1.msra.mxu0 0.0
  %7908 = vmatprep.subr.mxu0 0.0
  %7909 = vmatpush1.msra.mxu0 0.0
  %7910 = vmatprep.subr.mxu0 0.0
  %7911 = vmatpush1.msra.mxu0 0.0
  %7912 = vmatprep.subr.mxu0 0.0
  %7913 = vmatpush1.msra.mxu0 0.0
  %7914 = vmatprep.subr.mxu0 0.0
  %7915 = vmatpush1.msra.mxu0 0.0
  %7916 = vmatprep.subr.mxu0 0.0
  %7917 = vmatpush1.msra.mxu0 0.0
  %7918 = vmatprep.mubr.f32.mxu0 0.0
  %7919 = vmatmul.mubr.f32.gmra.mrb[0].mxu0 %v7694
  %v7920 = vpop.f32.mrb[0].mxu0
  %v7921 = vadd.f32 0.0, %v7920
  %v7922 = vpop.f32.mrb[0].mxu0
  %v7923 = vadd.f32 0.0, %v7922
  %7924 = vdwg.mxu0
  %7925 = vmatprep.subr.mxu0 %v7710
  %7926 = vmatpush1.msra.mxu0 %v7708
  %7927 = vmatprep.subr.mxu0 0.0
  %7928 = vmatpush1.msra.mxu0 0.0
  %7929 = vmatprep.subr.mxu0 0.0
  %7930 = vmatpush1.msra.mxu0 0.0
  %7931 = vmatprep.subr.mxu0 0.0
  %7932 = vmatpush1.msra.mxu0 0.0
  %7933 = vmatprep.subr.mxu0 0.0
  %7934 = vmatpush1.msra.mxu0 0.0
  %7935 = vmatprep.subr.mxu0 0.0
  %7936 = vmatpush1.msra.mxu0 0.0
  %7937 = vmatprep.subr.mxu0 0.0
  %7938 = vmatpush1.msra.mxu0 0.0
  %7939 = vmatprep.subr.mxu0 0.0
  %7940 = vmatpush1.msra.mxu0 0.0
  %7941 = vmatprep.subr.mxu0 0.0
  %7942 = vmatpush1.msra.mxu0 0.0
  %7943 = vmatprep.subr.mxu0 0.0
  %7944 = vmatpush1.msra.mxu0 0.0
  %7945 = vmatprep.subr.mxu0 0.0
  %7946 = vmatpush1.msra.mxu0 0.0
  %7947 = vmatprep.subr.mxu0 0.0
  %7948 = vmatpush1.msra.mxu0 0.0
  %7949 = vmatprep.subr.mxu0 0.0
  %7950 = vmatpush1.msra.mxu0 0.0
  %7951 = vmatprep.subr.mxu0 0.0
  %7952 = vmatpush1.msra.mxu0 0.0
  %7953 = vmatprep.subr.mxu0 0.0
  %7954 = vmatpush1.msra.mxu0 0.0
  %7955 = vmatprep.subr.mxu0 0.0
  %7956 = vmatpush1.msra.mxu0 0.0
  %7957 = vmatprep.subr.mxu0 0.0
  %7958 = vmatpush1.msra.mxu0 0.0
  %7959 = vmatprep.subr.mxu0 0.0
  %7960 = vmatpush1.msra.mxu0 0.0
  %7961 = vmatprep.subr.mxu0 0.0
  %7962 = vmatpush1.msra.mxu0 0.0
  %7963 = vmatprep.subr.mxu0 0.0
  %7964 = vmatpush1.msra.mxu0 0.0
  %7965 = vmatprep.subr.mxu0 0.0
  %7966 = vmatpush1.msra.mxu0 0.0
  %7967 = vmatprep.subr.mxu0 0.0
  %7968 = vmatpush1.msra.mxu0 0.0
  %7969 = vmatprep.subr.mxu0 0.0
  %7970 = vmatpush1.msra.mxu0 0.0
  %7971 = vmatprep.subr.mxu0 0.0
  %7972 = vmatpush1.msra.mxu0 0.0
  %7973 = vmatprep.subr.mxu0 0.0
  %7974 = vmatpush1.msra.mxu0 0.0
  %7975 = vmatprep.subr.mxu0 0.0
  %7976 = vmatpush1.msra.mxu0 0.0
  %7977 = vmatprep.subr.mxu0 0.0
  %7978 = vmatpush1.msra.mxu0 0.0
  %7979 = vmatprep.subr.mxu0 0.0
  %7980 = vmatpush1.msra.mxu0 0.0
  %7981 = vmatprep.subr.mxu0 0.0
  %7982 = vmatpush1.msra.mxu0 0.0
  %7983 = vmatprep.subr.mxu0 0.0
  %7984 = vmatpush1.msra.mxu0 0.0
  %7985 = vmatprep.subr.mxu0 0.0
  %7986 = vmatpush1.msra.mxu0 0.0
  %7987 = vmatprep.subr.mxu0 0.0
  %7988 = vmatpush1.msra.mxu0 0.0
  %7989 = vmatprep.mubr.f32.mxu0 0.0
  %7990 = vmatmul.mubr.f32.gmra.mrb[0].mxu0 %v7694
  %v7991 = vpop.f32.mrb[0].mxu0
  %v7992 = vadd.f32 0.0, %v7991
  %v7993 = vpop.f32.mrb[0].mxu0
  %v7994 = vadd.f32 0.0, %v7993
  %7995 = vdwg.mxu0
  %v8001 = vcombine.high %v7580, %v7580
  %v8002 = vcombine.high %v7581, %v7581
  %v8003 = vcombine.high %v7582, %v7582
  %v8004 = vcombine.high %v7583, %v7583
  %8005 = vrot.lane.b32.xlu0 %v7580, 17
  %v8006 = vpop.permute.xlu0 %8005
  %8007 = vrot.lane.b32.xlu0 %v8001, 17
  %v8008 = vpop.permute.xlu0 %8007
  %8009 = vrot.lane.b32.xlu0 %v7581, 17
  %v8010 = vpop.permute.xlu0 %8009
  %8011 = vrot.lane.b32.xlu0 %v8002, 17
  %v8012 = vpop.permute.xlu0 %8011
  %8013 = vrot.lane.b32.xlu0 %v7582, 17
  %v8014 = vpop.permute.xlu0 %8013
  %8015 = vrot.lane.b32.xlu0 %v8003, 17
  %v8016 = vpop.permute.xlu0 %8015
  %8017 = vrot.lane.b32.xlu0 %v7583, 17
  %v8018 = vpop.permute.xlu0 %8017
  %8019 = vrot.lane.b32.xlu0 %v8004, 17
  %v8020 = vpop.permute.xlu0 %8019
  %8021 = vrot.lane.b32.xlu0 %v7584, 17
  %v8022 = vpop.permute.xlu0 %8021
  %v8023 = vsel %vm563, %v8006, %v8008
  %v8024 = vsel %vm563, %v8008, %v8010
  %v8025 = vsel %vm563, %v8010, %v8012
  %v8026 = vsel %vm563, %v8012, %v8014
  %v8027 = vsel %vm563, %v8014, %v8016
  %v8028 = vsel %vm563, %v8016, %v8018
  %v8029 = vsel %vm563, %v8018, %v8020
  %v8030 = vsel %vm563, %v8020, %v8022
  %v8032 = vsel %vm232, %v7586, 0
  %v8034 = vsel %vm105, %v8023, 0
  %v8036 = vsel %vm105, %v8024, 0
  %v8038 = vsel %vm105, %v8025, 0
  %v8040 = vsel %vm105, %v8026, 0
  %v8042 = vsel %vm105, %v8027, 0
  %v8044 = vsel %vm105, %v8028, 0
  %v8046 = vsel %vm105, %v8029, 0
  %v8048 = vsel %vm105, %v8030, 0
  %8050 = vmatprep.subr.mxu0 %v8036
  %8051 = vmatpush1.msra.mxu0 %v8034
  %8052 = vmatprep.subr.mxu0 0.0
  %8053 = vmatpush1.msra.mxu0 0.0
  %8054 = vmatprep.subr.mxu0 0.0
  %8055 = vmatpush1.msra.mxu0 0.0
  %8056 = vmatprep.subr.mxu0 0.0
  %8057 = vmatpush1.msra.mxu0 0.0
  %8058 = vmatprep.subr.mxu0 0.0
  %8059 = vmatpush1.msra.mxu0 0.0
  %8060 = vmatprep.subr.mxu0 0.0
  %8061 = vmatpush1.msra.mxu0 0.0
  %8062 = vmatprep.subr.mxu0 0.0
  %8063 = vmatpush1.msra.mxu0 0.0
  %8064 = vmatprep.subr.mxu0 0.0
  %8065 = vmatpush1.msra.mxu0 0.0
  %8066 = vmatprep.subr.mxu0 0.0
  %8067 = vmatpush1.msra.mxu0 0.0
  %8068 = vmatprep.subr.mxu0 0.0
  %8069 = vmatpush1.msra.mxu0 0.0
  %8070 = vmatprep.subr.mxu0 0.0
  %8071 = vmatpush1.msra.mxu0 0.0
  %8072 = vmatprep.subr.mxu0 0.0
  %8073 = vmatpush1.msra.mxu0 0.0
  %8074 = vmatprep.subr.mxu0 0.0
  %8075 = vmatpush1.msra.mxu0 0.0
  %8076 = vmatprep.subr.mxu0 0.0
  %8077 = vmatpush1.msra.mxu0 0.0
  %8078 = vmatprep.subr.mxu0 0.0
  %8079 = vmatpush1.msra.mxu0 0.0
  %8080 = vmatprep.subr.mxu0 0.0
  %8081 = vmatpush1.msra.mxu0 0.0
  %8082 = vmatprep.subr.mxu0 0.0
  %8083 = vmatpush1.msra.mxu0 0.0
  %8084 = vmatprep.subr.mxu0 0.0
  %8085 = vmatpush1.msra.mxu0 0.0
  %8086 = vmatprep.subr.mxu0 0.0
  %8087 = vmatpush1.msra.mxu0 0.0
  %8088 = vmatprep.subr.mxu0 0.0
  %8089 = vmatpush1.msra.mxu0 0.0
  %8090 = vmatprep.subr.mxu0 0.0
  %8091 = vmatpush1.msra.mxu0 0.0
  %8092 = vmatprep.subr.mxu0 0.0
  %8093 = vmatpush1.msra.mxu0 0.0
  %8094 = vmatprep.subr.mxu0 0.0
  %8095 = vmatpush1.msra.mxu0 0.0
  %8096 = vmatprep.subr.mxu0 0.0
  %8097 = vmatpush1.msra.mxu0 0.0
  %8098 = vmatprep.subr.mxu0 0.0
  %8099 = vmatpush1.msra.mxu0 0.0
  %8100 = vmatprep.subr.mxu0 0.0
  %8101 = vmatpush1.msra.mxu0 0.0
  %8102 = vmatprep.subr.mxu0 0.0
  %8103 = vmatpush1.msra.mxu0 0.0
  %8104 = vmatprep.subr.mxu0 0.0
  %8105 = vmatpush1.msra.mxu0 0.0
  %8106 = vmatprep.subr.mxu0 0.0
  %8107 = vmatpush1.msra.mxu0 0.0
  %8108 = vmatprep.subr.mxu0 0.0
  %8109 = vmatpush1.msra.mxu0 0.0
  %8110 = vmatprep.subr.mxu0 0.0
  %8111 = vmatpush1.msra.mxu0 0.0
  %8112 = vmatprep.subr.mxu0 0.0
  %8113 = vmatpush1.msra.mxu0 0.0
  %8114 = vmatprep.mubr.f32.mxu0 0.0
  %8115 = vmatmul.mubr.f32.gmra.mrb[0].mxu0 %v8032
  %v8116 = vpop.f32.mrb[0].mxu0
  %v8117 = vadd.f32 %v7779, %v8116
  %v8118 = vpop.f32.mrb[0].mxu0
  %v8119 = vadd.f32 %v7781, %v8118
  %8120 = vdwg.mxu0
  %8121 = vmatprep.subr.mxu0 %v8040
  %8122 = vmatpush1.msra.mxu0 %v8038
  %8123 = vmatprep.subr.mxu0 0.0
  %8124 = vmatpush1.msra.mxu0 0.0
  %8125 = vmatprep.subr.mxu0 0.0
  %8126 = vmatpush1.msra.mxu0 0.0
  %8127 = vmatprep.subr.mxu0 0.0
  %8128 = vmatpush1.msra.mxu0 0.0
  %8129 = vmatprep.subr.mxu0 0.0
  %8130 = vmatpush1.msra.mxu0 0.0
  %8131 = vmatprep.subr.mxu0 0.0
  %8132 = vmatpush1.msra.mxu0 0.0
  %8133 = vmatprep.subr.mxu0 0.0
  %8134 = vmatpush1.msra.mxu0 0.0
  %8135 = vmatprep.subr.mxu0 0.0
  %8136 = vmatpush1.msra.mxu0 0.0
  %8137 = vmatprep.subr.mxu0 0.0
  %8138 = vmatpush1.msra.mxu0 0.0
  %8139 = vmatprep.subr.mxu0 0.0
  %8140 = vmatpush1.msra.mxu0 0.0
  %8141 = vmatprep.subr.mxu0 0.0
  %8142 = vmatpush1.msra.mxu0 0.0
  %8143 = vmatprep.subr.mxu0 0.0
  %8144 = vmatpush1.msra.mxu0 0.0
  %8145 = vmatprep.subr.mxu0 0.0
  %8146 = vmatpush1.msra.mxu0 0.0
  %8147 = vmatprep.subr.mxu0 0.0
  %8148 = vmatpush1.msra.mxu0 0.0
  %8149 = vmatprep.subr.mxu0 0.0
  %8150 = vmatpush1.msra.mxu0 0.0
  %8151 = vmatprep.subr.mxu0 0.0
  %8152 = vmatpush1.msra.mxu0 0.0
  %8153 = vmatprep.subr.mxu0 0.0
  %8154 = vmatpush1.msra.mxu0 0.0
  %8155 = vmatprep.subr.mxu0 0.0
  %8156 = vmatpush1.msra.mxu0 0.0
  %8157 = vmatprep.subr.mxu0 0.0
  %8158 = vmatpush1.msra.mxu0 0.0
  %8159 = vmatprep.subr.mxu0 0.0
  %8160 = vmatpush1.msra.mxu0 0.0
  %8161 = vmatprep.subr.mxu0 0.0
  %8162 = vmatpush1.msra.mxu0 0.0
  %8163 = vmatprep.subr.mxu0 0.0
  %8164 = vmatpush1.msra.mxu0 0.0
  %8165 = vmatprep.subr.mxu0 0.0
  %8166 = vmatpush1.msra.mxu0 0.0
  %8167 = vmatprep.subr.mxu0 0.0
  %8168 = vmatpush1.msra.mxu0 0.0
  %8169 = vmatprep.subr.mxu0 0.0
  %8170 = vmatpush1.msra.mxu0 0.0
  %8171 = vmatprep.subr.mxu0 0.0
  %8172 = vmatpush1.msra.mxu0 0.0
  %8173 = vmatprep.subr.mxu0 0.0
  %8174 = vmatpush1.msra.mxu0 0.0
  %8175 = vmatprep.subr.mxu0 0.0
  %8176 = vmatpush1.msra.mxu0 0.0
  %8177 = vmatprep.subr.mxu0 0.0
  %8178 = vmatpush1.msra.mxu0 0.0
  %8179 = vmatprep.subr.mxu0 0.0
  %8180 = vmatpush1.msra.mxu0 0.0
  %8181 = vmatprep.subr.mxu0 0.0
  %8182 = vmatpush1.msra.mxu0 0.0
  %8183 = vmatprep.subr.mxu0 0.0
  %8184 = vmatpush1.msra.mxu0 0.0
  %8185 = vmatprep.mubr.f32.mxu0 0.0
  %8186 = vmatmul.mubr.f32.gmra.mrb[0].mxu0 %v8032
  %v8187 = vpop.f32.mrb[0].mxu0
  %v8188 = vadd.f32 %v7850, %v8187
  %v8189 = vpop.f32.mrb[0].mxu0
  %v8190 = vadd.f32 %v7852, %v8189
  %8191 = vdwg.mxu0
  %8192 = vmatprep.subr.mxu0 %v8044
  %8193 = vmatpush1.msra.mxu0 %v8042
  %8194 = vmatprep.subr.mxu0 0.0
  %8195 = vmatpush1.msra.mxu0 0.0
  %8196 = vmatprep.subr.mxu0 0.0
  %8197 = vmatpush1.msra.mxu0 0.0
  %8198 = vmatprep.subr.mxu0 0.0
  %8199 = vmatpush1.msra.mxu0 0.0
  %8200 = vmatprep.subr.mxu0 0.0
  %8201 = vmatpush1.msra.mxu0 0.0
  %8202 = vmatprep.subr.mxu0 0.0
  %8203 = vmatpush1.msra.mxu0 0.0
  %8204 = vmatprep.subr.mxu0 0.0
  %8205 = vmatpush1.msra.mxu0 0.0
  %8206 = vmatprep.subr.mxu0 0.0
  %8207 = vmatpush1.msra.mxu0 0.0
  %8208 = vmatprep.subr.mxu0 0.0
  %8209 = vmatpush1.msra.mxu0 0.0
  %8210 = vmatprep.subr.mxu0 0.0
  %8211 = vmatpush1.msra.mxu0 0.0
  %8212 = vmatprep.subr.mxu0 0.0
  %8213 = vmatpush1.msra.mxu0 0.0
  %8214 = vmatprep.subr.mxu0 0.0
  %8215 = vmatpush1.msra.mxu0 0.0
  %8216 = vmatprep.subr.mxu0 0.0
  %8217 = vmatpush1.msra.mxu0 0.0
  %8218 = vmatprep.subr.mxu0 0.0
  %8219 = vmatpush1.msra.mxu0 0.0
  %8220 = vmatprep.subr.mxu0 0.0
  %8221 = vmatpush1.msra.mxu0 0.0
  %8222 = vmatprep.subr.mxu0 0.0
  %8223 = vmatpush1.msra.mxu0 0.0
  %8224 = vmatprep.subr.mxu0 0.0
  %8225 = vmatpush1.msra.mxu0 0.0
  %8226 = vmatprep.subr.mxu0 0.0
  %8227 = vmatpush1.msra.mxu0 0.0
  %8228 = vmatprep.subr.mxu0 0.0
  %8229 = vmatpush1.msra.mxu0 0.0
  %8230 = vmatprep.subr.mxu0 0.0
  %8231 = vmatpush1.msra.mxu0 0.0
  %8232 = vmatprep.subr.mxu0 0.0
  %8233 = vmatpush1.msra.mxu0 0.0
  %8234 = vmatprep.subr.mxu0 0.0
  %8235 = vmatpush1.msra.mxu0 0.0
  %8236 = vmatprep.subr.mxu0 0.0
  %8237 = vmatpush1.msra.mxu0 0.0
  %8238 = vmatprep.subr.mxu0 0.0
  %8239 = vmatpush1.msra.mxu0 0.0
  %8240 = vmatprep.subr.mxu0 0.0
  %8241 = vmatpush1.msra.mxu0 0.0
  %8242 = vmatprep.subr.mxu0 0.0
  %8243 = vmatpush1.msra.mxu0 0.0
  %8244 = vmatprep.subr.mxu0 0.0
  %8245 = vmatpush1.msra.mxu0 0.0
  %8246 = vmatprep.subr.mxu0 0.0
  %8247 = vmatpush1.msra.mxu0 0.0
  %8248 = vmatprep.subr.mxu0 0.0
  %8249 = vmatpush1.msra.mxu0 0.0
  %8250 = vmatprep.subr.mxu0 0.0
  %8251 = vmatpush1.msra.mxu0 0.0
  %8252 = vmatprep.subr.mxu0 0.0
  %8253 = vmatpush1.msra.mxu0 0.0
  %8254 = vmatprep.subr.mxu0 0.0
  %8255 = vmatpush1.msra.mxu0 0.0
  %8256 = vmatprep.mubr.f32.mxu0 0.0
  %8257 = vmatmul.mubr.f32.gmra.mrb[0].mxu0 %v8032
  %v8258 = vpop.f32.mrb[0].mxu0
  %v8259 = vadd.f32 %v7921, %v8258
  %v8260 = vpop.f32.mrb[0].mxu0
  %v8261 = vadd.f32 %v7923, %v8260
  %8262 = vdwg.mxu0
  %8263 = vmatprep.subr.mxu0 %v8048
  %8264 = vmatpush1.msra.mxu0 %v8046
  %8265 = vmatprep.subr.mxu0 0.0
  %8266 = vmatpush1.msra.mxu0 0.0
  %8267 = vmatprep.subr.mxu0 0.0
  %8268 = vmatpush1.msra.mxu0 0.0
  %8269 = vmatprep.subr.mxu0 0.0
  %8270 = vmatpush1.msra.mxu0 0.0
  %8271 = vmatprep.subr.mxu0 0.0
  %8272 = vmatpush1.msra.mxu0 0.0
  %8273 = vmatprep.subr.mxu0 0.0
  %8274 = vmatpush1.msra.mxu0 0.0
  %8275 = vmatprep.subr.mxu0 0.0
  %8276 = vmatpush1.msra.mxu0 0.0
  %8277 = vmatprep.subr.mxu0 0.0
  %8278 = vmatpush1.msra.mxu0 0.0
  %8279 = vmatprep.subr.mxu0 0.0
  %8280 = vmatpush1.msra.mxu0 0.0
  %8281 = vmatprep.subr.mxu0 0.0
  %8282 = vmatpush1.msra.mxu0 0.0
  %8283 = vmatprep.subr.mxu0 0.0
  %8284 = vmatpush1.msra.mxu0 0.0
  %8285 = vmatprep.subr.mxu0 0.0
  %8286 = vmatpush1.msra.mxu0 0.0
  %8287 = vmatprep.subr.mxu0 0.0
  %8288 = vmatpush1.msra.mxu0 0.0
  %8289 = vmatprep.subr.mxu0 0.0
  %8290 = vmatpush1.msra.mxu0 0.0
  %8291 = vmatprep.subr.mxu0 0.0
  %8292 = vmatpush1.msra.mxu0 0.0
  %8293 = vmatprep.subr.mxu0 0.0
  %8294 = vmatpush1.msra.mxu0 0.0
  %8295 = vmatprep.subr.mxu0 0.0
  %8296 = vmatpush1.msra.mxu0 0.0
  %8297 = vmatprep.subr.mxu0 0.0
  %8298 = vmatpush1.msra.mxu0 0.0
  %8299 = vmatprep.subr.mxu0 0.0
  %8300 = vmatpush1.msra.mxu0 0.0
  %8301 = vmatprep.subr.mxu0 0.0
  %8302 = vmatpush1.msra.mxu0 0.0
  %8303 = vmatprep.subr.mxu0 0.0
  %8304 = vmatpush1.msra.mxu0 0.0
  %8305 = vmatprep.subr.mxu0 0.0
  %8306 = vmatpush1.msra.mxu0 0.0
  %8307 = vmatprep.subr.mxu0 0.0
  %8308 = vmatpush1.msra.mxu0 0.0
  %8309 = vmatprep.subr.mxu0 0.0
  %8310 = vmatpush1.msra.mxu0 0.0
  %8311 = vmatprep.subr.mxu0 0.0
  %8312 = vmatpush1.msra.mxu0 0.0
  %8313 = vmatprep.subr.mxu0 0.0
  %8314 = vmatpush1.msra.mxu0 0.0
  %8315 = vmatprep.subr.mxu0 0.0
  %8316 = vmatpush1.msra.mxu0 0.0
  %8317 = vmatprep.subr.mxu0 0.0
  %8318 = vmatpush1.msra.mxu0 0.0
  %8319 = vmatprep.subr.mxu0 0.0
  %8320 = vmatpush1.msra.mxu0 0.0
  %8321 = vmatprep.subr.mxu0 0.0
  %8322 = vmatpush1.msra.mxu0 0.0
  %8323 = vmatprep.subr.mxu0 0.0
  %8324 = vmatpush1.msra.mxu0 0.0
  %8325 = vmatprep.subr.mxu0 0.0
  %8326 = vmatpush1.msra.mxu0 0.0
  %8327 = vmatprep.mubr.f32.mxu0 0.0
  %8328 = vmatmul.mubr.f32.gmra.mrb[0].mxu0 %v8032
  %v8329 = vpop.f32.mrb[0].mxu0
  %v8330 = vadd.f32 %v7992, %v8329
  %v8331 = vpop.f32.mrb[0].mxu0
  %v8332 = vadd.f32 %v7994, %v8331
  %8333 = vdwg.mxu0
  %v8334 = vld [vmem:[#allocation2] sm:$0xff]
  %v8335 = vld [vmem:[#allocation2 + $0x8] sm:$0xff]
  %v8336 = vld [vmem:[#allocation2 + $0x10] sm:$0xff]
  %v8337 = vld [vmem:[#allocation2 + $0x18] sm:$0xff]
  %v8338 = vld [vmem:[#allocation2 + $0x20] sm:$0xf]
  %v8339 = vld [vmem:[%s880] ss:$8 sm:$0xf]
  %v8340 = vld [vmem:[%s880] ss:$8 sm:$0xf0]
  %v8341 = vor.u32 %v8339, %v8340
  %v8343 = vlaneseq
  %v8344 = vshrl.u32 %v8343, 7
  %v8345 = vsub.s32 0, %v8344
  %v8346 = vrot.slane %v8341, %v8345
  %v8347 = vlaneseq
  %v8348 = vshrl.u32 %v8347, 7
  %v8349 = vsub.s32 1, %v8348
  %v8350 = vrot.slane %v8341, %v8349
  %v8351 = vlaneseq
  %v8352 = vshrl.u32 %v8351, 7
  %v8353 = vsub.s32 2, %v8352
  %v8354 = vrot.slane %v8341, %v8353
  %v8355 = vlaneseq
  %v8356 = vshrl.u32 %v8355, 7
  %v8357 = vsub.s32 3, %v8356
  %v8358 = vrot.slane %v8341, %v8357
  %v8359 = vlaneseq
  %v8360 = vshrl.u32 %v8359, 7
  %v8361 = vsub.s32 4, %v8360
  %v8362 = vrot.slane %v8341, %v8361
  %v8363 = vlaneseq
  %v8364 = vshrl.u32 %v8363, 7
  %v8365 = vsub.s32 5, %v8364
  %v8366 = vrot.slane %v8341, %v8365
  %v8367 = vlaneseq
  %v8368 = vshrl.u32 %v8367, 7
  %v8369 = vsub.s32 6, %v8368
  %v8370 = vrot.slane %v8341, %v8369
  %v8371 = vlaneseq
  %v8372 = vshrl.u32 %v8371, 7
  %v8373 = vsub.s32 7, %v8372
  %v8374 = vrot.slane %v8341, %v8373
  %v8375 = vcombine.low %v8346, %v8350
  %v8376 = vcombine.low %v8354, %v8358
  %v8377 = vcombine.low %v8362, %v8366
  %v8378 = vcombine.low %v8370, %v8374
  %8379 = vrot.lane.b32.xlu0 %v8375, 113
  %v8380 = vpop.permute.xlu0 %8379
  %8381 = vrot.lane.b32.xlu0 %v8376, 113
  %v8382 = vpop.permute.xlu0 %8381
  %8383 = vrot.lane.b32.xlu0 %v8377, 113
  %v8384 = vpop.permute.xlu0 %8383
  %8385 = vrot.lane.b32.xlu0 %v8378, 113
  %v8386 = vpop.permute.xlu0 %8385
  %v8387 = vrot.slane %v8380, 4
  %v8388 = vrot.slane %v8382, 4
  %v8389 = vrot.slane %v8384, 4
  %v8390 = vrot.slane %v8386, 4
  %v8391 = vsel %vm933, %v8387, %v8380
  %v8392 = vsel %vm105, %v8387, %v8388
  %v8393 = vsel %vm933, %v8392, %v8382
  %v8394 = vsel %vm105, %v8388, %v8389
  %v8395 = vsel %vm933, %v8394, %v8384
  %v8396 = vsel %vm105, %v8389, %v8390
  %v8397 = vsel %vm933, %v8396, %v8386
  %v8403 = vmul.f32 %v8334, %v8391
  %v8404 = vmul.f32 %v8335, %v8393
  %v8405 = vmul.f32 %v8336, %v8395
  %v8406 = vmul.f32 %v8337, %v8397
  %v8407 = vmul.f32 %v8338, %v8390
  %s8408 = scalar_lea.vmem %s2, 80
  %v8409 = vld [vmem:[%s8408] sm:$0xf]
  %v8415 = vcombine.high %v8403, %v8403
  %v8416 = vcombine.high %v8404, %v8404
  %v8417 = vcombine.high %v8405, %v8405
  %v8418 = vcombine.high %v8406, %v8406
  %8419 = vrot.lane.b32.xlu0 %v8403, 15
  %v8420 = vpop.permute.xlu0 %8419
  %8421 = vrot.lane.b32.xlu0 %v8415, 15
  %v8422 = vpop.permute.xlu0 %8421
  %8423 = vrot.lane.b32.xlu0 %v8404, 15
  %v8424 = vpop.permute.xlu0 %8423
  %8425 = vrot.lane.b32.xlu0 %v8416, 15
  %v8426 = vpop.permute.xlu0 %8425
  %8427 = vrot.lane.b32.xlu0 %v8405, 15
  %v8428 = vpop.permute.xlu0 %8427
  %8429 = vrot.lane.b32.xlu0 %v8417, 15
  %v8430 = vpop.permute.xlu0 %8429
  %8431 = vrot.lane.b32.xlu0 %v8406, 15
  %v8432 = vpop.permute.xlu0 %8431
  %8433 = vrot.lane.b32.xlu0 %v8418, 15
  %v8434 = vpop.permute.xlu0 %8433
  %8435 = vrot.lane.b32.xlu0 %v8407, 15
  %v8436 = vpop.permute.xlu0 %8435
  %v8437 = vsel %vm980, %v8420, %v8422
  %v8438 = vsel %vm980, %v8422, %v8424
  %v8439 = vsel %vm980, %v8424, %v8426
  %v8440 = vsel %vm980, %v8426, %v8428
  %v8441 = vsel %vm980, %v8428, %v8430
  %v8442 = vsel %vm980, %v8430, %v8432
  %v8443 = vsel %vm980, %v8432, %v8434
  %v8444 = vsel %vm980, %v8434, %v8436
  %v8446 = vsel %vm232, %v8409, 0
  %v8448 = vsel %vm105, %v8437, 0
  %v8450 = vsel %vm105, %v8438, 0
  %v8452 = vsel %vm105, %v8439, 0
  %v8454 = vsel %vm105, %v8440, 0
  %v8456 = vsel %vm105, %v8441, 0
  %v8458 = vsel %vm105, %v8442, 0
  %v8460 = vsel %vm105, %v8443, 0
  %v8462 = vsel %vm105, %v8444, 0
  %8464 = vmatprep.subr.mxu0 %v8450
  %8465 = vmatpush1.msra.mxu0 %v8448
  %8466 = vmatprep.subr.mxu0 0.0
  %8467 = vmatpush1.msra.mxu0 0.0
  %8468 = vmatprep.subr.mxu0 0.0
  %8469 = vmatpush1.msra.mxu0 0.0
  %8470 = vmatprep.subr.mxu0 0.0
  %8471 = vmatpush1.msra.mxu0 0.0
  %8472 = vmatprep.subr.mxu0 0.0
  %8473 = vmatpush1.msra.mxu0 0.0
  %8474 = vmatprep.subr.mxu0 0.0
  %8475 = vmatpush1.msra.mxu0 0.0
  %8476 = vmatprep.subr.mxu0 0.0
  %8477 = vmatpush1.msra.mxu0 0.0
  %8478 = vmatprep.subr.mxu0 0.0
  %8479 = vmatpush1.msra.mxu0 0.0
  %8480 = vmatprep.subr.mxu0 0.0
  %8481 = vmatpush1.msra.mxu0 0.0
  %8482 = vmatprep.subr.mxu0 0.0
  %8483 = vmatpush1.msra.mxu0 0.0
  %8484 = vmatprep.subr.mxu0 0.0
  %8485 = vmatpush1.msra.mxu0 0.0
  %8486 = vmatprep.subr.mxu0 0.0
  %8487 = vmatpush1.msra.mxu0 0.0
  %8488 = vmatprep.subr.mxu0 0.0
  %8489 = vmatpush1.msra.mxu0 0.0
  %8490 = vmatprep.subr.mxu0 0.0
  %8491 = vmatpush1.msra.mxu0 0.0
  %8492 = vmatprep.subr.mxu0 0.0
  %8493 = vmatpush1.msra.mxu0 0.0
  %8494 = vmatprep.subr.mxu0 0.0
  %8495 = vmatpush1.msra.mxu0 0.0
  %8496 = vmatprep.subr.mxu0 0.0
  %8497 = vmatpush1.msra.mxu0 0.0
  %8498 = vmatprep.subr.mxu0 0.0
  %8499 = vmatpush1.msra.mxu0 0.0
  %8500 = vmatprep.subr.mxu0 0.0
  %8501 = vmatpush1.msra.mxu0 0.0
  %8502 = vmatprep.subr.mxu0 0.0
  %8503 = vmatpush1.msra.mxu0 0.0
  %8504 = vmatprep.subr.mxu0 0.0
  %8505 = vmatpush1.msra.mxu0 0.0
  %8506 = vmatprep.subr.mxu0 0.0
  %8507 = vmatpush1.msra.mxu0 0.0
  %8508 = vmatprep.subr.mxu0 0.0
  %8509 = vmatpush1.msra.mxu0 0.0
  %8510 = vmatprep.subr.mxu0 0.0
  %8511 = vmatpush1.msra.mxu0 0.0
  %8512 = vmatprep.subr.mxu0 0.0
  %8513 = vmatpush1.msra.mxu0 0.0
  %8514 = vmatprep.subr.mxu0 0.0
  %8515 = vmatpush1.msra.mxu0 0.0
  %8516 = vmatprep.subr.mxu0 0.0
  %8517 = vmatpush1.msra.mxu0 0.0
  %8518 = vmatprep.subr.mxu0 0.0
  %8519 = vmatpush1.msra.mxu0 0.0
  %8520 = vmatprep.subr.mxu0 0.0
  %8521 = vmatpush1.msra.mxu0 0.0
  %8522 = vmatprep.subr.mxu0 0.0
  %8523 = vmatpush1.msra.mxu0 0.0
  %8524 = vmatprep.subr.mxu0 0.0
  %8525 = vmatpush1.msra.mxu0 0.0
  %8526 = vmatprep.subr.mxu0 0.0
  %8527 = vmatpush1.msra.mxu0 0.0
  %8528 = vmatprep.mubr.f32.mxu0 0.0
  %8529 = vmatmul.mubr.f32.gmra.mrb[0].mxu0 %v8446
  %v8530 = vpop.f32.mrb[0].mxu0
  %v8531 = vadd.f32 0.0, %v8530
  %v8532 = vpop.f32.mrb[0].mxu0
  %v8533 = vadd.f32 0.0, %v8532
  %8534 = vdwg.mxu0
  %8535 = vmatprep.subr.mxu0 %v8454
  %8536 = vmatpush1.msra.mxu0 %v8452
  %8537 = vmatprep.subr.mxu0 0.0
  %8538 = vmatpush1.msra.mxu0 0.0
  %8539 = vmatprep.subr.mxu0 0.0
  %8540 = vmatpush1.msra.mxu0 0.0
  %8541 = vmatprep.subr.mxu0 0.0
  %8542 = vmatpush1.msra.mxu0 0.0
  %8543 = vmatprep.subr.mxu0 0.0
  %8544 = vmatpush1.msra.mxu0 0.0
  %8545 = vmatprep.subr.mxu0 0.0
  %8546 = vmatpush1.msra.mxu0 0.0
  %8547 = vmatprep.subr.mxu0 0.0
  %8548 = vmatpush1.msra.mxu0 0.0
  %8549 = vmatprep.subr.mxu0 0.0
  %8550 = vmatpush1.msra.mxu0 0.0
  %8551 = vmatprep.subr.mxu0 0.0
  %8552 = vmatpush1.msra.mxu0 0.0
  %8553 = vmatprep.subr.mxu0 0.0
  %8554 = vmatpush1.msra.mxu0 0.0
  %8555 = vmatprep.subr.mxu0 0.0
  %8556 = vmatpush1.msra.mxu0 0.0
  %8557 = vmatprep.subr.mxu0 0.0
  %8558 = vmatpush1.msra.mxu0 0.0
  %8559 = vmatprep.subr.mxu0 0.0
  %8560 = vmatpush1.msra.mxu0 0.0
  %8561 = vmatprep.subr.mxu0 0.0
  %8562 = vmatpush1.msra.mxu0 0.0
  %8563 = vmatprep.subr.mxu0 0.0
  %8564 = vmatpush1.msra.mxu0 0.0
  %8565 = vmatprep.subr.mxu0 0.0
  %8566 = vmatpush1.msra.mxu0 0.0
  %8567 = vmatprep.subr.mxu0 0.0
  %8568 = vmatpush1.msra.mxu0 0.0
  %8569 = vmatprep.subr.mxu0 0.0
  %8570 = vmatpush1.msra.mxu0 0.0
  %8571 = vmatprep.subr.mxu0 0.0
  %8572 = vmatpush1.msra.mxu0 0.0
  %8573 = vmatprep.subr.mxu0 0.0
  %8574 = vmatpush1.msra.mxu0 0.0
  %8575 = vmatprep.subr.mxu0 0.0
  %8576 = vmatpush1.msra.mxu0 0.0
  %8577 = vmatprep.subr.mxu0 0.0
  %8578 = vmatpush1.msra.mxu0 0.0
  %8579 = vmatprep.subr.mxu0 0.0
  %8580 = vmatpush1.msra.mxu0 0.0
  %8581 = vmatprep.subr.mxu0 0.0
  %8582 = vmatpush1.msra.mxu0 0.0
  %8583 = vmatprep.subr.mxu0 0.0
  %8584 = vmatpush1.msra.mxu0 0.0
  %8585 = vmatprep.subr.mxu0 0.0
  %8586 = vmatpush1.msra.mxu0 0.0
  %8587 = vmatprep.subr.mxu0 0.0
  %8588 = vmatpush1.msra.mxu0 0.0
  %8589 = vmatprep.subr.mxu0 0.0
  %8590 = vmatpush1.msra.mxu0 0.0
  %8591 = vmatprep.subr.mxu0 0.0
  %8592 = vmatpush1.msra.mxu0 0.0
  %8593 = vmatprep.subr.mxu0 0.0
  %8594 = vmatpush1.msra.mxu0 0.0
  %8595 = vmatprep.subr.mxu0 0.0
  %8596 = vmatpush1.msra.mxu0 0.0
  %8597 = vmatprep.subr.mxu0 0.0
  %8598 = vmatpush1.msra.mxu0 0.0
  %8599 = vmatprep.mubr.f32.mxu0 0.0
  %8600 = vmatmul.mubr.f32.gmra.mrb[0].mxu0 %v8446
  %v8601 = vpop.f32.mrb[0].mxu0
  %v8602 = vadd.f32 0.0, %v8601
  %v8603 = vpop.f32.mrb[0].mxu0
  %v8604 = vadd.f32 0.0, %v8603
  %8605 = vdwg.mxu0
  %8606 = vmatprep.subr.mxu0 %v8458
  %8607 = vmatpush1.msra.mxu0 %v8456
  %8608 = vmatprep.subr.mxu0 0.0
  %8609 = vmatpush1.msra.mxu0 0.0
  %8610 = vmatprep.subr.mxu0 0.0
  %8611 = vmatpush1.msra.mxu0 0.0
  %8612 = vmatprep.subr.mxu0 0.0
  %8613 = vmatpush1.msra.mxu0 0.0
  %8614 = vmatprep.subr.mxu0 0.0
  %8615 = vmatpush1.msra.mxu0 0.0
  %8616 = vmatprep.subr.mxu0 0.0
  %8617 = vmatpush1.msra.mxu0 0.0
  %8618 = vmatprep.subr.mxu0 0.0
  %8619 = vmatpush1.msra.mxu0 0.0
  %8620 = vmatprep.subr.mxu0 0.0
  %8621 = vmatpush1.msra.mxu0 0.0
  %8622 = vmatprep.subr.mxu0 0.0
  %8623 = vmatpush1.msra.mxu0 0.0
  %8624 = vmatprep.subr.mxu0 0.0
  %8625 = vmatpush1.msra.mxu0 0.0
  %8626 = vmatprep.subr.mxu0 0.0
  %8627 = vmatpush1.msra.mxu0 0.0
  %8628 = vmatprep.subr.mxu0 0.0
  %8629 = vmatpush1.msra.mxu0 0.0
  %8630 = vmatprep.subr.mxu0 0.0
  %8631 = vmatpush1.msra.mxu0 0.0
  %8632 = vmatprep.subr.mxu0 0.0
  %8633 = vmatpush1.msra.mxu0 0.0
  %8634 = vmatprep.subr.mxu0 0.0
  %8635 = vmatpush1.msra.mxu0 0.0
  %8636 = vmatprep.subr.mxu0 0.0
  %8637 = vmatpush1.msra.mxu0 0.0
  %8638 = vmatprep.subr.mxu0 0.0
  %8639 = vmatpush1.msra.mxu0 0.0
  %8640 = vmatprep.subr.mxu0 0.0
  %8641 = vmatpush1.msra.mxu0 0.0
  %8642 = vmatprep.subr.mxu0 0.0
  %8643 = vmatpush1.msra.mxu0 0.0
  %8644 = vmatprep.subr.mxu0 0.0
  %8645 = vmatpush1.msra.mxu0 0.0
  %8646 = vmatprep.subr.mxu0 0.0
  %8647 = vmatpush1.msra.mxu0 0.0
  %8648 = vmatprep.subr.mxu0 0.0
  %8649 = vmatpush1.msra.mxu0 0.0
  %8650 = vmatprep.subr.mxu0 0.0
  %8651 = vmatpush1.msra.mxu0 0.0
  %8652 = vmatprep.subr.mxu0 0.0
  %8653 = vmatpush1.msra.mxu0 0.0
  %8654 = vmatprep.subr.mxu0 0.0
  %8655 = vmatpush1.msra.mxu0 0.0
  %8656 = vmatprep.subr.mxu0 0.0
  %8657 = vmatpush1.msra.mxu0 0.0
  %8658 = vmatprep.subr.mxu0 0.0
  %8659 = vmatpush1.msra.mxu0 0.0
  %8660 = vmatprep.subr.mxu0 0.0
  %8661 = vmatpush1.msra.mxu0 0.0
  %8662 = vmatprep.subr.mxu0 0.0
  %8663 = vmatpush1.msra.mxu0 0.0
  %8664 = vmatprep.subr.mxu0 0.0
  %8665 = vmatpush1.msra.mxu0 0.0
  %8666 = vmatprep.subr.mxu0 0.0
  %8667 = vmatpush1.msra.mxu0 0.0
  %8668 = vmatprep.subr.mxu0 0.0
  %8669 = vmatpush1.msra.mxu0 0.0
  %8670 = vmatprep.mubr.f32.mxu0 0.0
  %8671 = vmatmul.mubr.f32.gmra.mrb[0].mxu0 %v8446
  %v8672 = vpop.f32.mrb[0].mxu0
  %v8673 = vadd.f32 0.0, %v8672
  %v8674 = vpop.f32.mrb[0].mxu0
  %v8675 = vadd.f32 0.0, %v8674
  %8676 = vdwg.mxu0
  %8677 = vmatprep.subr.mxu0 %v8462
  %8678 = vmatpush1.msra.mxu0 %v8460
  %8679 = vmatprep.subr.mxu0 0.0
  %8680 = vmatpush1.msra.mxu0 0.0
  %8681 = vmatprep.subr.mxu0 0.0
  %8682 = vmatpush1.msra.mxu0 0.0
  %8683 = vmatprep.subr.mxu0 0.0
  %8684 = vmatpush1.msra.mxu0 0.0
  %8685 = vmatprep.subr.mxu0 0.0
  %8686 = vmatpush1.msra.mxu0 0.0
  %8687 = vmatprep.subr.mxu0 0.0
  %8688 = vmatpush1.msra.mxu0 0.0
  %8689 = vmatprep.subr.mxu0 0.0
  %8690 = vmatpush1.msra.mxu0 0.0
  %8691 = vmatprep.subr.mxu0 0.0
  %8692 = vmatpush1.msra.mxu0 0.0
  %8693 = vmatprep.subr.mxu0 0.0
  %8694 = vmatpush1.msra.mxu0 0.0
  %8695 = vmatprep.subr.mxu0 0.0
  %8696 = vmatpush1.msra.mxu0 0.0
  %8697 = vmatprep.subr.mxu0 0.0
  %8698 = vmatpush1.msra.mxu0 0.0
  %8699 = vmatprep.subr.mxu0 0.0
  %8700 = vmatpush1.msra.mxu0 0.0
  %8701 = vmatprep.subr.mxu0 0.0
  %8702 = vmatpush1.msra.mxu0 0.0
  %8703 = vmatprep.subr.mxu0 0.0
  %8704 = vmatpush1.msra.mxu0 0.0
  %8705 = vmatprep.subr.mxu0 0.0
  %8706 = vmatpush1.msra.mxu0 0.0
  %8707 = vmatprep.subr.mxu0 0.0
  %8708 = vmatpush1.msra.mxu0 0.0
  %8709 = vmatprep.subr.mxu0 0.0
  %8710 = vmatpush1.msra.mxu0 0.0
  %8711 = vmatprep.subr.mxu0 0.0
  %8712 = vmatpush1.msra.mxu0 0.0
  %8713 = vmatprep.subr.mxu0 0.0
  %8714 = vmatpush1.msra.mxu0 0.0
  %8715 = vmatprep.subr.mxu0 0.0
  %8716 = vmatpush1.msra.mxu0 0.0
  %8717 = vmatprep.subr.mxu0 0.0
  %8718 = vmatpush1.msra.mxu0 0.0
  %8719 = vmatprep.subr.mxu0 0.0
  %8720 = vmatpush1.msra.mxu0 0.0
  %8721 = vmatprep.subr.mxu0 0.0
  %8722 = vmatpush1.msra.mxu0 0.0
  %8723 = vmatprep.subr.mxu0 0.0
  %8724 = vmatpush1.msra.mxu0 0.0
  %8725 = vmatprep.subr.mxu0 0.0
  %8726 = vmatpush1.msra.mxu0 0.0
  %8727 = vmatprep.subr.mxu0 0.0
  %8728 = vmatpush1.msra.mxu0 0.0
  %8729 = vmatprep.subr.mxu0 0.0
  %8730 = vmatpush1.msra.mxu0 0.0
  %8731 = vmatprep.subr.mxu0 0.0
  %8732 = vmatpush1.msra.mxu0 0.0
  %8733 = vmatprep.subr.mxu0 0.0
  %8734 = vmatpush1.msra.mxu0 0.0
  %8735 = vmatprep.subr.mxu0 0.0
  %8736 = vmatpush1.msra.mxu0 0.0
  %8737 = vmatprep.subr.mxu0 0.0
  %8738 = vmatpush1.msra.mxu0 0.0
  %8739 = vmatprep.subr.mxu0 0.0
  %8740 = vmatpush1.msra.mxu0 0.0
  %8741 = vmatprep.mubr.f32.mxu0 0.0
  %8742 = vmatmul.mubr.f32.gmra.mrb[0].mxu0 %v8446
  %v8743 = vpop.f32.mrb[0].mxu0
  %v8744 = vadd.f32 0.0, %v8743
  %v8745 = vpop.f32.mrb[0].mxu0
  %v8746 = vadd.f32 0.0, %v8745
  %8747 = vdwg.mxu0
  %v8748 = vadd.f32 %v8117, %v8531
  %v8749 = vadd.f32 %v8119, %v8533
  %v8750 = vadd.f32 %v8188, %v8602
  %v8751 = vadd.f32 %v8190, %v8604
  %v8752 = vadd.f32 %v8259, %v8673
  %v8753 = vadd.f32 %v8261, %v8675
  %v8754 = vadd.f32 %v8330, %v8744
  %v8755 = vadd.f32 %v8332, %v8746
  %v8756 = vld [vmem:[#allocation2] sm:$0xff]
  %v8757 = vld [vmem:[#allocation2 + $0x8] sm:$0xff]
  %v8758 = vld [vmem:[#allocation2 + $0x10] sm:$0xff]
  %v8759 = vld [vmem:[#allocation2 + $0x18] sm:$0xff]
  %v8760 = vld [vmem:[#allocation2 + $0x20] sm:$0xf]
  %v8761 = vld [vmem:[%s1305] ss:$8 sm:$0xf]
  %v8762 = vld [vmem:[%s1305] ss:$8 sm:$0xf0]
  %v8763 = vor.u32 %v8761, %v8762
  %v8765 = vlaneseq
  %v8766 = vshrl.u32 %v8765, 7
  %v8767 = vsub.s32 0, %v8766
  %v8768 = vrot.slane %v8763, %v8767
  %v8769 = vlaneseq
  %v8770 = vshrl.u32 %v8769, 7
  %v8771 = vsub.s32 1, %v8770
  %v8772 = vrot.slane %v8763, %v8771
  %v8773 = vlaneseq
  %v8774 = vshrl.u32 %v8773, 7
  %v8775 = vsub.s32 2, %v8774
  %v8776 = vrot.slane %v8763, %v8775
  %v8777 = vlaneseq
  %v8778 = vshrl.u32 %v8777, 7
  %v8779 = vsub.s32 3, %v8778
  %v8780 = vrot.slane %v8763, %v8779
  %v8781 = vlaneseq
  %v8782 = vshrl.u32 %v8781, 7
  %v8783 = vsub.s32 4, %v8782
  %v8784 = vrot.slane %v8763, %v8783
  %v8785 = vlaneseq
  %v8786 = vshrl.u32 %v8785, 7
  %v8787 = vsub.s32 5, %v8786
  %v8788 = vrot.slane %v8763, %v8787
  %v8789 = vlaneseq
  %v8790 = vshrl.u32 %v8789, 7
  %v8791 = vsub.s32 6, %v8790
  %v8792 = vrot.slane %v8763, %v8791
  %v8793 = vlaneseq
  %v8794 = vshrl.u32 %v8793, 7
  %v8795 = vsub.s32 7, %v8794
  %v8796 = vrot.slane %v8763, %v8795
  %v8797 = vcombine.low %v8768, %v8772
  %v8798 = vcombine.low %v8776, %v8780
  %v8799 = vcombine.low %v8784, %v8788
  %v8800 = vcombine.low %v8792, %v8796
  %8801 = vrot.lane.b32.xlu0 %v8797, 127
  %v8802 = vpop.permute.xlu0 %8801
  %8803 = vrot.lane.b32.xlu0 %v8798, 127
  %v8804 = vpop.permute.xlu0 %8803
  %8805 = vrot.lane.b32.xlu0 %v8799, 127
  %v8806 = vpop.permute.xlu0 %8805
  %8807 = vrot.lane.b32.xlu0 %v8800, 127
  %v8808 = vpop.permute.xlu0 %8807
  %v8809 = vrot.slane %v8802, 4
  %v8810 = vrot.slane %v8804, 4
  %v8811 = vrot.slane %v8806, 4
  %v8812 = vrot.slane %v8808, 4
  %v8813 = vsel %vm1358, %v8809, %v8802
  %v8814 = vsel %vm105, %v8809, %v8810
  %v8815 = vsel %vm1358, %v8814, %v8804
  %v8816 = vsel %vm105, %v8810, %v8811
  %v8817 = vsel %vm1358, %v8816, %v8806
  %v8818 = vsel %vm105, %v8811, %v8812
  %v8819 = vsel %vm1358, %v8818, %v8808
  %v8825 = vmul.f32 %v8756, %v8813
  %v8826 = vmul.f32 %v8757, %v8815
  %v8827 = vmul.f32 %v8758, %v8817
  %v8828 = vmul.f32 %v8759, %v8819
  %v8829 = vmul.f32 %v8760, %v8812
  %s8830 = scalar_lea.vmem %s2, 84
  %v8831 = vld [vmem:[%s8830] sm:$0xf]
  %v8837 = vcombine.high %v8825, %v8825
  %v8838 = vcombine.high %v8826, %v8826
  %v8839 = vcombine.high %v8827, %v8827
  %v8840 = vcombine.high %v8828, %v8828
  %8841 = vrot.lane.b32.xlu0 %v8825, 1
  %v8842 = vpop.permute.xlu0 %8841
  %8843 = vrot.lane.b32.xlu0 %v8837, 1
  %v8844 = vpop.permute.xlu0 %8843
  %8845 = vrot.lane.b32.xlu0 %v8826, 1
  %v8846 = vpop.permute.xlu0 %8845
  %8847 = vrot.lane.b32.xlu0 %v8838, 1
  %v8848 = vpop.permute.xlu0 %8847
  %8849 = vrot.lane.b32.xlu0 %v8827, 1
  %v8850 = vpop.permute.xlu0 %8849
  %8851 = vrot.lane.b32.xlu0 %v8839, 1
  %v8852 = vpop.permute.xlu0 %8851
  %8853 = vrot.lane.b32.xlu0 %v8828, 1
  %v8854 = vpop.permute.xlu0 %8853
  %8855 = vrot.lane.b32.xlu0 %v8840, 1
  %v8856 = vpop.permute.xlu0 %8855
  %8857 = vrot.lane.b32.xlu0 %v8829, 1
  %v8858 = vpop.permute.xlu0 %8857
  %v8859 = vsel %vm1405, %v8842, %v8844
  %v8860 = vsel %vm1405, %v8844, %v8846
  %v8861 = vsel %vm1405, %v8846, %v8848
  %v8862 = vsel %vm1405, %v8848, %v8850
  %v8863 = vsel %vm1405, %v8850, %v8852
  %v8864 = vsel %vm1405, %v8852, %v8854
  %v8865 = vsel %vm1405, %v8854, %v8856
  %v8866 = vsel %vm1405, %v8856, %v8858
  %v8868 = vsel %vm232, %v8831, 0
  %v8870 = vsel %vm105, %v8859, 0
  %v8872 = vsel %vm105, %v8860, 0
  %v8874 = vsel %vm105, %v8861, 0
  %v8876 = vsel %vm105, %v8862, 0
  %v8878 = vsel %vm105, %v8863, 0
  %v8880 = vsel %vm105, %v8864, 0
  %v8882 = vsel %vm105, %v8865, 0
  %v8884 = vsel %vm105, %v8866, 0
  %8886 = vmatprep.subr.mxu0 %v8872
  %8887 = vmatpush1.msra.mxu0 %v8870
  %8888 = vmatprep.subr.mxu0 0.0
  %8889 = vmatpush1.msra.mxu0 0.0
  %8890 = vmatprep.subr.mxu0 0.0
  %8891 = vmatpush1.msra.mxu0 0.0
  %8892 = vmatprep.subr.mxu0 0.0
  %8893 = vmatpush1.msra.mxu0 0.0
  %8894 = vmatprep.subr.mxu0 0.0
  %8895 = vmatpush1.msra.mxu0 0.0
  %8896 = vmatprep.subr.mxu0 0.0
  %8897 = vmatpush1.msra.mxu0 0.0
  %8898 = vmatprep.subr.mxu0 0.0
  %8899 = vmatpush1.msra.mxu0 0.0
  %8900 = vmatprep.subr.mxu0 0.0
  %8901 = vmatpush1.msra.mxu0 0.0
  %8902 = vmatprep.subr.mxu0 0.0
  %8903 = vmatpush1.msra.mxu0 0.0
  %8904 = vmatprep.subr.mxu0 0.0
  %8905 = vmatpush1.msra.mxu0 0.0
  %8906 = vmatprep.subr.mxu0 0.0
  %8907 = vmatpush1.msra.mxu0 0.0
  %8908 = vmatprep.subr.mxu0 0.0
  %8909 = vmatpush1.msra.mxu0 0.0
  %8910 = vmatprep.subr.mxu0 0.0
  %8911 = vmatpush1.msra.mxu0 0.0
  %8912 = vmatprep.subr.mxu0 0.0
  %8913 = vmatpush1.msra.mxu0 0.0
  %8914 = vmatprep.subr.mxu0 0.0
  %8915 = vmatpush1.msra.mxu0 0.0
  %8916 = vmatprep.subr.mxu0 0.0
  %8917 = vmatpush1.msra.mxu0 0.0
  %8918 = vmatprep.subr.mxu0 0.0
  %8919 = vmatpush1.msra.mxu0 0.0
  %8920 = vmatprep.subr.mxu0 0.0
  %8921 = vmatpush1.msra.mxu0 0.0
  %8922 = vmatprep.subr.mxu0 0.0
  %8923 = vmatpush1.msra.mxu0 0.0
  %8924 = vmatprep.subr.mxu0 0.0
  %8925 = vmatpush1.msra.mxu0 0.0
  %8926 = vmatprep.subr.mxu0 0.0
  %8927 = vmatpush1.msra.mxu0 0.0
  %8928 = vmatprep.subr.mxu0 0.0
  %8929 = vmatpush1.msra.mxu0 0.0
  %8930 = vmatprep.subr.mxu0 0.0
  %8931 = vmatpush1.msra.mxu0 0.0
  %8932 = vmatprep.subr.mxu0 0.0
  %8933 = vmatpush1.msra.mxu0 0.0
  %8934 = vmatprep.subr.mxu0 0.0
  %8935 = vmatpush1.msra.mxu0 0.0
  %8936 = vmatprep.subr.mxu0 0.0
  %8937 = vmatpush1.msra.mxu0 0.0
  %8938 = vmatprep.subr.mxu0 0.0
  %8939 = vmatpush1.msra.mxu0 0.0
  %8940 = vmatprep.subr.mxu0 0.0
  %8941 = vmatpush1.msra.mxu0 0.0
  %8942 = vmatprep.subr.mxu0 0.0
  %8943 = vmatpush1.msra.mxu0 0.0
  %8944 = vmatprep.subr.mxu0 0.0
  %8945 = vmatpush1.msra.mxu0 0.0
  %8946 = vmatprep.subr.mxu0 0.0
  %8947 = vmatpush1.msra.mxu0 0.0
  %8948 = vmatprep.subr.mxu0 0.0
  %8949 = vmatpush1.msra.mxu0 0.0
  %8950 = vmatprep.mubr.f32.mxu0 0.0
  %8951 = vmatmul.mubr.f32.gmra.mrb[0].mxu0 %v8868
  %v8952 = vpop.f32.mrb[0].mxu0
  %v8953 = vadd.f32 0.0, %v8952
  %v8954 = vpop.f32.mrb[0].mxu0
  %v8955 = vadd.f32 0.0, %v8954
  %8956 = vdwg.mxu0
  %8957 = vmatprep.subr.mxu0 %v8876
  %8958 = vmatpush1.msra.mxu0 %v8874
  %8959 = vmatprep.subr.mxu0 0.0
  %8960 = vmatpush1.msra.mxu0 0.0
  %8961 = vmatprep.subr.mxu0 0.0
  %8962 = vmatpush1.msra.mxu0 0.0
  %8963 = vmatprep.subr.mxu0 0.0
  %8964 = vmatpush1.msra.mxu0 0.0
  %8965 = vmatprep.subr.mxu0 0.0
  %8966 = vmatpush1.msra.mxu0 0.0
  %8967 = vmatprep.subr.mxu0 0.0
  %8968 = vmatpush1.msra.mxu0 0.0
  %8969 = vmatprep.subr.mxu0 0.0
  %8970 = vmatpush1.msra.mxu0 0.0
  %8971 = vmatprep.subr.mxu0 0.0
  %8972 = vmatpush1.msra.mxu0 0.0
  %8973 = vmatprep.subr.mxu0 0.0
  %8974 = vmatpush1.msra.mxu0 0.0
  %8975 = vmatprep.subr.mxu0 0.0
  %8976 = vmatpush1.msra.mxu0 0.0
  %8977 = vmatprep.subr.mxu0 0.0
  %8978 = vmatpush1.msra.mxu0 0.0
  %8979 = vmatprep.subr.mxu0 0.0
  %8980 = vmatpush1.msra.mxu0 0.0
  %8981 = vmatprep.subr.mxu0 0.0
  %8982 = vmatpush1.msra.mxu0 0.0
  %8983 = vmatprep.subr.mxu0 0.0
  %8984 = vmatpush1.msra.mxu0 0.0
  %8985 = vmatprep.subr.mxu0 0.0
  %8986 = vmatpush1.msra.mxu0 0.0
  %8987 = vmatprep.subr.mxu0 0.0
  %8988 = vmatpush1.msra.mxu0 0.0
  %8989 = vmatprep.subr.mxu0 0.0
  %8990 = vmatpush1.msra.mxu0 0.0
  %8991 = vmatprep.subr.mxu0 0.0
  %8992 = vmatpush1.msra.mxu0 0.0
  %8993 = vmatprep.subr.mxu0 0.0
  %8994 = vmatpush1.msra.mxu0 0.0
  %8995 = vmatprep.subr.mxu0 0.0
  %8996 = vmatpush1.msra.mxu0 0.0
  %8997 = vmatprep.subr.mxu0 0.0
  %8998 = vmatpush1.msra.mxu0 0.0
  %8999 = vmatprep.subr.mxu0 0.0
  %9000 = vmatpush1.msra.mxu0 0.0
  %9001 = vmatprep.subr.mxu0 0.0
  %9002 = vmatpush1.msra.mxu0 0.0
  %9003 = vmatprep.subr.mxu0 0.0
  %9004 = vmatpush1.msra.mxu0 0.0
  %9005 = vmatprep.subr.mxu0 0.0
  %9006 = vmatpush1.msra.mxu0 0.0
  %9007 = vmatprep.subr.mxu0 0.0
  %9008 = vmatpush1.msra.mxu0 0.0
  %9009 = vmatprep.subr.mxu0 0.0
  %9010 = vmatpush1.msra.mxu0 0.0
  %9011 = vmatprep.subr.mxu0 0.0
  %9012 = vmatpush1.msra.mxu0 0.0
  %9013 = vmatprep.subr.mxu0 0.0
  %9014 = vmatpush1.msra.mxu0 0.0
  %9015 = vmatprep.subr.mxu0 0.0
  %9016 = vmatpush1.msra.mxu0 0.0
  %9017 = vmatprep.subr.mxu0 0.0
  %9018 = vmatpush1.msra.mxu0 0.0
  %9019 = vmatprep.subr.mxu0 0.0
  %9020 = vmatpush1.msra.mxu0 0.0
  %9021 = vmatprep.mubr.f32.mxu0 0.0
  %9022 = vmatmul.mubr.f32.gmra.mrb[0].mxu0 %v8868
  %v9023 = vpop.f32.mrb[0].mxu0
  %v9024 = vadd.f32 0.0, %v9023
  %v9025 = vpop.f32.mrb[0].mxu0
  %v9026 = vadd.f32 0.0, %v9025
  %9027 = vdwg.mxu0
  %9028 = vmatprep.subr.mxu0 %v8880
  %9029 = vmatpush1.msra.mxu0 %v8878
  %9030 = vmatprep.subr.mxu0 0.0
  %9031 = vmatpush1.msra.mxu0 0.0
  %9032 = vmatprep.subr.mxu0 0.0
  %9033 = vmatpush1.msra.mxu0 0.0
  %9034 = vmatprep.subr.mxu0 0.0
  %9035 = vmatpush1.msra.mxu0 0.0
  %9036 = vmatprep.subr.mxu0 0.0
  %9037 = vmatpush1.msra.mxu0 0.0
  %9038 = vmatprep.subr.mxu0 0.0
  %9039 = vmatpush1.msra.mxu0 0.0
  %9040 = vmatprep.subr.mxu0 0.0
  %9041 = vmatpush1.msra.mxu0 0.0
  %9042 = vmatprep.subr.mxu0 0.0
  %9043 = vmatpush1.msra.mxu0 0.0
  %9044 = vmatprep.subr.mxu0 0.0
  %9045 = vmatpush1.msra.mxu0 0.0
  %9046 = vmatprep.subr.mxu0 0.0
  %9047 = vmatpush1.msra.mxu0 0.0
  %9048 = vmatprep.subr.mxu0 0.0
  %9049 = vmatpush1.msra.mxu0 0.0
  %9050 = vmatprep.subr.mxu0 0.0
  %9051 = vmatpush1.msra.mxu0 0.0
  %9052 = vmatprep.subr.mxu0 0.0
  %9053 = vmatpush1.msra.mxu0 0.0
  %9054 = vmatprep.subr.mxu0 0.0
  %9055 = vmatpush1.msra.mxu0 0.0
  %9056 = vmatprep.subr.mxu0 0.0
  %9057 = vmatpush1.msra.mxu0 0.0
  %9058 = vmatprep.subr.mxu0 0.0
  %9059 = vmatpush1.msra.mxu0 0.0
  %9060 = vmatprep.subr.mxu0 0.0
  %9061 = vmatpush1.msra.mxu0 0.0
  %9062 = vmatprep.subr.mxu0 0.0
  %9063 = vmatpush1.msra.mxu0 0.0
  %9064 = vmatprep.subr.mxu0 0.0
  %9065 = vmatpush1.msra.mxu0 0.0
  %9066 = vmatprep.subr.mxu0 0.0
  %9067 = vmatpush1.msra.mxu0 0.0
  %9068 = vmatprep.subr.mxu0 0.0
  %9069 = vmatpush1.msra.mxu0 0.0
  %9070 = vmatprep.subr.mxu0 0.0
  %9071 = vmatpush1.msra.mxu0 0.0
  %9072 = vmatprep.subr.mxu0 0.0
  %9073 = vmatpush1.msra.mxu0 0.0
  %9074 = vmatprep.subr.mxu0 0.0
  %9075 = vmatpush1.msra.mxu0 0.0
  %9076 = vmatprep.subr.mxu0 0.0
  %9077 = vmatpush1.msra.mxu0 0.0
  %9078 = vmatprep.subr.mxu0 0.0
  %9079 = vmatpush1.msra.mxu0 0.0
  %9080 = vmatprep.subr.mxu0 0.0
  %9081 = vmatpush1.msra.mxu0 0.0
  %9082 = vmatprep.subr.mxu0 0.0
  %9083 = vmatpush1.msra.mxu0 0.0
  %9084 = vmatprep.subr.mxu0 0.0
  %9085 = vmatpush1.msra.mxu0 0.0
  %9086 = vmatprep.subr.mxu0 0.0
  %9087 = vmatpush1.msra.mxu0 0.0
  %9088 = vmatprep.subr.mxu0 0.0
  %9089 = vmatpush1.msra.mxu0 0.0
  %9090 = vmatprep.subr.mxu0 0.0
  %9091 = vmatpush1.msra.mxu0 0.0
  %9092 = vmatprep.mubr.f32.mxu0 0.0
  %9093 = vmatmul.mubr.f32.gmra.mrb[0].mxu0 %v8868
  %v9094 = vpop.f32.mrb[0].mxu0
  %v9095 = vadd.f32 0.0, %v9094
  %v9096 = vpop.f32.mrb[0].mxu0
  %v9097 = vadd.f32 0.0, %v9096
  %9098 = vdwg.mxu0
  %9099 = vmatprep.subr.mxu0 %v8884
  %9100 = vmatpush1.msra.mxu0 %v8882
  %9101 = vmatprep.subr.mxu0 0.0
  %9102 = vmatpush1.msra.mxu0 0.0
  %9103 = vmatprep.subr.mxu0 0.0
  %9104 = vmatpush1.msra.mxu0 0.0
  %9105 = vmatprep.subr.mxu0 0.0
  %9106 = vmatpush1.msra.mxu0 0.0
  %9107 = vmatprep.subr.mxu0 0.0
  %9108 = vmatpush1.msra.mxu0 0.0
  %9109 = vmatprep.subr.mxu0 0.0
  %9110 = vmatpush1.msra.mxu0 0.0
  %9111 = vmatprep.subr.mxu0 0.0
  %9112 = vmatpush1.msra.mxu0 0.0
  %9113 = vmatprep.subr.mxu0 0.0
  %9114 = vmatpush1.msra.mxu0 0.0
  %9115 = vmatprep.subr.mxu0 0.0
  %9116 = vmatpush1.msra.mxu0 0.0
  %9117 = vmatprep.subr.mxu0 0.0
  %9118 = vmatpush1.msra.mxu0 0.0
  %9119 = vmatprep.subr.mxu0 0.0
  %9120 = vmatpush1.msra.mxu0 0.0
  %9121 = vmatprep.subr.mxu0 0.0
  %9122 = vmatpush1.msra.mxu0 0.0
  %9123 = vmatprep.subr.mxu0 0.0
  %9124 = vmatpush1.msra.mxu0 0.0
  %9125 = vmatprep.subr.mxu0 0.0
  %9126 = vmatpush1.msra.mxu0 0.0
  %9127 = vmatprep.subr.mxu0 0.0
  %9128 = vmatpush1.msra.mxu0 0.0
  %9129 = vmatprep.subr.mxu0 0.0
  %9130 = vmatpush1.msra.mxu0 0.0
  %9131 = vmatprep.subr.mxu0 0.0
  %9132 = vmatpush1.msra.mxu0 0.0
  %9133 = vmatprep.subr.mxu0 0.0
  %9134 = vmatpush1.msra.mxu0 0.0
  %9135 = vmatprep.subr.mxu0 0.0
  %9136 = vmatpush1.msra.mxu0 0.0
  %9137 = vmatprep.subr.mxu0 0.0
  %9138 = vmatpush1.msra.mxu0 0.0
  %9139 = vmatprep.subr.mxu0 0.0
  %9140 = vmatpush1.msra.mxu0 0.0
  %9141 = vmatprep.subr.mxu0 0.0
  %9142 = vmatpush1.msra.mxu0 0.0
  %9143 = vmatprep.subr.mxu0 0.0
  %9144 = vmatpush1.msra.mxu0 0.0
  %9145 = vmatprep.subr.mxu0 0.0
  %9146 = vmatpush1.msra.mxu0 0.0
  %9147 = vmatprep.subr.mxu0 0.0
  %9148 = vmatpush1.msra.mxu0 0.0
  %9149 = vmatprep.subr.mxu0 0.0
  %9150 = vmatpush1.msra.mxu0 0.0
  %9151 = vmatprep.subr.mxu0 0.0
  %9152 = vmatpush1.msra.mxu0 0.0
  %9153 = vmatprep.subr.mxu0 0.0
  %9154 = vmatpush1.msra.mxu0 0.0
  %9155 = vmatprep.subr.mxu0 0.0
  %9156 = vmatpush1.msra.mxu0 0.0
  %9157 = vmatprep.subr.mxu0 0.0
  %9158 = vmatpush1.msra.mxu0 0.0
  %9159 = vmatprep.subr.mxu0 0.0
  %9160 = vmatpush1.msra.mxu0 0.0
  %9161 = vmatprep.subr.mxu0 0.0
  %9162 = vmatpush1.msra.mxu0 0.0
  %9163 = vmatprep.mubr.f32.mxu0 0.0
  %9164 = vmatmul.mubr.f32.gmra.mrb[0].mxu0 %v8868
  %v9165 = vpop.f32.mrb[0].mxu0
  %v9166 = vadd.f32 0.0, %v9165
  %v9167 = vpop.f32.mrb[0].mxu0
  %v9168 = vadd.f32 0.0, %v9167
  %9169 = vdwg.mxu0
  %v9170 = vadd.f32 %v8748, %v8953
  %v9171 = vadd.f32 %v8749, %v8955
  %v9172 = vadd.f32 %v8750, %v9024
  %v9173 = vadd.f32 %v8751, %v9026
  %v9174 = vadd.f32 %v8752, %v9095
  %v9175 = vadd.f32 %v8753, %v9097
  %v9176 = vadd.f32 %v8754, %v9166
  %v9177 = vadd.f32 %v8755, %v9168
  %v9178 = vld [vmem:[#allocation2 + $0x4] sm:$0xff]
  %v9179 = vld [vmem:[#allocation2 + $0xc] sm:$0xff]
  %v9180 = vld [vmem:[#allocation2 + $0x14] sm:$0xff]
  %v9181 = vld [vmem:[#allocation2 + $0x1c] sm:$0xff]
  %s9182 = scalar_lea.vmem %s2, 88
  %v9183 = vld [vmem:[%s9182] sm:$0xf]
  %v9188 = vcombine.high %v9178, %v9178
  %v9189 = vcombine.high %v9179, %v9179
  %v9190 = vcombine.high %v9180, %v9180
  %v9191 = vcombine.high %v9181, %v9181
  %v9193 = vsel %vm232, %v9183, 0
  %v9195 = vsel %vm105, %v9178, 0
  %v9197 = vsel %vm105, %v9188, 0
  %v9199 = vsel %vm105, %v9179, 0
  %v9201 = vsel %vm105, %v9189, 0
  %v9203 = vsel %vm105, %v9180, 0
  %v9205 = vsel %vm105, %v9190, 0
  %v9207 = vsel %vm105, %v9181, 0
  %v9209 = vsel %vm105, %v9191, 0
  %9211 = vmatprep.subr.mxu0 %v9197
  %9212 = vmatpush1.msra.mxu0 %v9195
  %9213 = vmatprep.subr.mxu0 0.0
  %9214 = vmatpush1.msra.mxu0 0.0
  %9215 = vmatprep.subr.mxu0 0.0
  %9216 = vmatpush1.msra.mxu0 0.0
  %9217 = vmatprep.subr.mxu0 0.0
  %9218 = vmatpush1.msra.mxu0 0.0
  %9219 = vmatprep.subr.mxu0 0.0
  %9220 = vmatpush1.msra.mxu0 0.0
  %9221 = vmatprep.subr.mxu0 0.0
  %9222 = vmatpush1.msra.mxu0 0.0
  %9223 = vmatprep.subr.mxu0 0.0
  %9224 = vmatpush1.msra.mxu0 0.0
  %9225 = vmatprep.subr.mxu0 0.0
  %9226 = vmatpush1.msra.mxu0 0.0
  %9227 = vmatprep.subr.mxu0 0.0
  %9228 = vmatpush1.msra.mxu0 0.0
  %9229 = vmatprep.subr.mxu0 0.0
  %9230 = vmatpush1.msra.mxu0 0.0
  %9231 = vmatprep.subr.mxu0 0.0
  %9232 = vmatpush1.msra.mxu0 0.0
  %9233 = vmatprep.subr.mxu0 0.0
  %9234 = vmatpush1.msra.mxu0 0.0
  %9235 = vmatprep.subr.mxu0 0.0
  %9236 = vmatpush1.msra.mxu0 0.0
  %9237 = vmatprep.subr.mxu0 0.0
  %9238 = vmatpush1.msra.mxu0 0.0
  %9239 = vmatprep.subr.mxu0 0.0
  %9240 = vmatpush1.msra.mxu0 0.0
  %9241 = vmatprep.subr.mxu0 0.0
  %9242 = vmatpush1.msra.mxu0 0.0
  %9243 = vmatprep.subr.mxu0 0.0
  %9244 = vmatpush1.msra.mxu0 0.0
  %9245 = vmatprep.subr.mxu0 0.0
  %9246 = vmatpush1.msra.mxu0 0.0
  %9247 = vmatprep.subr.mxu0 0.0
  %9248 = vmatpush1.msra.mxu0 0.0
  %9249 = vmatprep.subr.mxu0 0.0
  %9250 = vmatpush1.msra.mxu0 0.0
  %9251 = vmatprep.subr.mxu0 0.0
  %9252 = vmatpush1.msra.mxu0 0.0
  %9253 = vmatprep.subr.mxu0 0.0
  %9254 = vmatpush1.msra.mxu0 0.0
  %9255 = vmatprep.subr.mxu0 0.0
  %9256 = vmatpush1.msra.mxu0 0.0
  %9257 = vmatprep.subr.mxu0 0.0
  %9258 = vmatpush1.msra.mxu0 0.0
  %9259 = vmatprep.subr.mxu0 0.0
  %9260 = vmatpush1.msra.mxu0 0.0
  %9261 = vmatprep.subr.mxu0 0.0
  %9262 = vmatpush1.msra.mxu0 0.0
  %9263 = vmatprep.subr.mxu0 0.0
  %9264 = vmatpush1.msra.mxu0 0.0
  %9265 = vmatprep.subr.mxu0 0.0
  %9266 = vmatpush1.msra.mxu0 0.0
  %9267 = vmatprep.subr.mxu0 0.0
  %9268 = vmatpush1.msra.mxu0 0.0
  %9269 = vmatprep.subr.mxu0 0.0
  %9270 = vmatpush1.msra.mxu0 0.0
  %9271 = vmatprep.subr.mxu0 0.0
  %9272 = vmatpush1.msra.mxu0 0.0
  %9273 = vmatprep.subr.mxu0 0.0
  %9274 = vmatpush1.msra.mxu0 0.0
  %9275 = vmatprep.mubr.f32.mxu0 0.0
  %9276 = vmatmul.mubr.f32.gmra.mrb[0].mxu0 %v9193
  %v9277 = vpop.f32.mrb[0].mxu0
  %v9278 = vadd.f32 0.0, %v9277
  %v9279 = vpop.f32.mrb[0].mxu0
  %v9280 = vadd.f32 0.0, %v9279
  %9281 = vdwg.mxu0
  %9282 = vmatprep.subr.mxu0 %v9201
  %9283 = vmatpush1.msra.mxu0 %v9199
  %9284 = vmatprep.subr.mxu0 0.0
  %9285 = vmatpush1.msra.mxu0 0.0
  %9286 = vmatprep.subr.mxu0 0.0
  %9287 = vmatpush1.msra.mxu0 0.0
  %9288 = vmatprep.subr.mxu0 0.0
  %9289 = vmatpush1.msra.mxu0 0.0
  %9290 = vmatprep.subr.mxu0 0.0
  %9291 = vmatpush1.msra.mxu0 0.0
  %9292 = vmatprep.subr.mxu0 0.0
  %9293 = vmatpush1.msra.mxu0 0.0
  %9294 = vmatprep.subr.mxu0 0.0
  %9295 = vmatpush1.msra.mxu0 0.0
  %9296 = vmatprep.subr.mxu0 0.0
  %9297 = vmatpush1.msra.mxu0 0.0
  %9298 = vmatprep.subr.mxu0 0.0
  %9299 = vmatpush1.msra.mxu0 0.0
  %9300 = vmatprep.subr.mxu0 0.0
  %9301 = vmatpush1.msra.mxu0 0.0
  %9302 = vmatprep.subr.mxu0 0.0
  %9303 = vmatpush1.msra.mxu0 0.0
  %9304 = vmatprep.subr.mxu0 0.0
  %9305 = vmatpush1.msra.mxu0 0.0
  %9306 = vmatprep.subr.mxu0 0.0
  %9307 = vmatpush1.msra.mxu0 0.0
  %9308 = vmatprep.subr.mxu0 0.0
  %9309 = vmatpush1.msra.mxu0 0.0
  %9310 = vmatprep.subr.mxu0 0.0
  %9311 = vmatpush1.msra.mxu0 0.0
  %9312 = vmatprep.subr.mxu0 0.0
  %9313 = vmatpush1.msra.mxu0 0.0
  %9314 = vmatprep.subr.mxu0 0.0
  %9315 = vmatpush1.msra.mxu0 0.0
  %9316 = vmatprep.subr.mxu0 0.0
  %9317 = vmatpush1.msra.mxu0 0.0
  %9318 = vmatprep.subr.mxu0 0.0
  %9319 = vmatpush1.msra.mxu0 0.0
  %9320 = vmatprep.subr.mxu0 0.0
  %9321 = vmatpush1.msra.mxu0 0.0
  %9322 = vmatprep.subr.mxu0 0.0
  %9323 = vmatpush1.msra.mxu0 0.0
  %9324 = vmatprep.subr.mxu0 0.0
  %9325 = vmatpush1.msra.mxu0 0.0
  %9326 = vmatprep.subr.mxu0 0.0
  %9327 = vmatpush1.msra.mxu0 0.0
  %9328 = vmatprep.subr.mxu0 0.0
  %9329 = vmatpush1.msra.mxu0 0.0
  %9330 = vmatprep.subr.mxu0 0.0
  %9331 = vmatpush1.msra.mxu0 0.0
  %9332 = vmatprep.subr.mxu0 0.0
  %9333 = vmatpush1.msra.mxu0 0.0
  %9334 = vmatprep.subr.mxu0 0.0
  %9335 = vmatpush1.msra.mxu0 0.0
  %9336 = vmatprep.subr.mxu0 0.0
  %9337 = vmatpush1.msra.mxu0 0.0
  %9338 = vmatprep.subr.mxu0 0.0
  %9339 = vmatpush1.msra.mxu0 0.0
  %9340 = vmatprep.subr.mxu0 0.0
  %9341 = vmatpush1.msra.mxu0 0.0
  %9342 = vmatprep.subr.mxu0 0.0
  %9343 = vmatpush1.msra.mxu0 0.0
  %9344 = vmatprep.subr.mxu0 0.0
  %9345 = vmatpush1.msra.mxu0 0.0
  %9346 = vmatprep.mubr.f32.mxu0 0.0
  %9347 = vmatmul.mubr.f32.gmra.mrb[0].mxu0 %v9193
  %v9348 = vpop.f32.mrb[0].mxu0
  %v9349 = vadd.f32 0.0, %v9348
  %v9350 = vpop.f32.mrb[0].mxu0
  %v9351 = vadd.f32 0.0, %v9350
  %9352 = vdwg.mxu0
  %9353 = vmatprep.subr.mxu0 %v9205
  %9354 = vmatpush1.msra.mxu0 %v9203
  %9355 = vmatprep.subr.mxu0 0.0
  %9356 = vmatpush1.msra.mxu0 0.0
  %9357 = vmatprep.subr.mxu0 0.0
  %9358 = vmatpush1.msra.mxu0 0.0
  %9359 = vmatprep.subr.mxu0 0.0
  %9360 = vmatpush1.msra.mxu0 0.0
  %9361 = vmatprep.subr.mxu0 0.0
  %9362 = vmatpush1.msra.mxu0 0.0
  %9363 = vmatprep.subr.mxu0 0.0
  %9364 = vmatpush1.msra.mxu0 0.0
  %9365 = vmatprep.subr.mxu0 0.0
  %9366 = vmatpush1.msra.mxu0 0.0
  %9367 = vmatprep.subr.mxu0 0.0
  %9368 = vmatpush1.msra.mxu0 0.0
  %9369 = vmatprep.subr.mxu0 0.0
  %9370 = vmatpush1.msra.mxu0 0.0
  %9371 = vmatprep.subr.mxu0 0.0
  %9372 = vmatpush1.msra.mxu0 0.0
  %9373 = vmatprep.subr.mxu0 0.0
  %9374 = vmatpush1.msra.mxu0 0.0
  %9375 = vmatprep.subr.mxu0 0.0
  %9376 = vmatpush1.msra.mxu0 0.0
  %9377 = vmatprep.subr.mxu0 0.0
  %9378 = vmatpush1.msra.mxu0 0.0
  %9379 = vmatprep.subr.mxu0 0.0
  %9380 = vmatpush1.msra.mxu0 0.0
  %9381 = vmatprep.subr.mxu0 0.0
  %9382 = vmatpush1.msra.mxu0 0.0
  %9383 = vmatprep.subr.mxu0 0.0
  %9384 = vmatpush1.msra.mxu0 0.0
  %9385 = vmatprep.subr.mxu0 0.0
  %9386 = vmatpush1.msra.mxu0 0.0
  %9387 = vmatprep.subr.mxu0 0.0
  %9388 = vmatpush1.msra.mxu0 0.0
  %9389 = vmatprep.subr.mxu0 0.0
  %9390 = vmatpush1.msra.mxu0 0.0
  %9391 = vmatprep.subr.mxu0 0.0
  %9392 = vmatpush1.msra.mxu0 0.0
  %9393 = vmatprep.subr.mxu0 0.0
  %9394 = vmatpush1.msra.mxu0 0.0
  %9395 = vmatprep.subr.mxu0 0.0
  %9396 = vmatpush1.msra.mxu0 0.0
  %9397 = vmatprep.subr.mxu0 0.0
  %9398 = vmatpush1.msra.mxu0 0.0
  %9399 = vmatprep.subr.mxu0 0.0
  %9400 = vmatpush1.msra.mxu0 0.0
  %9401 = vmatprep.subr.mxu0 0.0
  %9402 = vmatpush1.msra.mxu0 0.0
  %9403 = vmatprep.subr.mxu0 0.0
  %9404 = vmatpush1.msra.mxu0 0.0
  %9405 = vmatprep.subr.mxu0 0.0
  %9406 = vmatpush1.msra.mxu0 0.0
  %9407 = vmatprep.subr.mxu0 0.0
  %9408 = vmatpush1.msra.mxu0 0.0
  %9409 = vmatprep.subr.mxu0 0.0
  %9410 = vmatpush1.msra.mxu0 0.0
  %9411 = vmatprep.subr.mxu0 0.0
  %9412 = vmatpush1.msra.mxu0 0.0
  %9413 = vmatprep.subr.mxu0 0.0
  %9414 = vmatpush1.msra.mxu0 0.0
  %9415 = vmatprep.subr.mxu0 0.0
  %9416 = vmatpush1.msra.mxu0 0.0
  %9417 = vmatprep.mubr.f32.mxu0 0.0
  %9418 = vmatmul.mubr.f32.gmra.mrb[0].mxu0 %v9193
  %v9419 = vpop.f32.mrb[0].mxu0
  %v9420 = vadd.f32 0.0, %v9419
  %v9421 = vpop.f32.mrb[0].mxu0
  %v9422 = vadd.f32 0.0, %v9421
  %9423 = vdwg.mxu0
  %9424 = vmatprep.subr.mxu0 %v9209
  %9425 = vmatpush1.msra.mxu0 %v9207
  %9426 = vmatprep.subr.mxu0 0.0
  %9427 = vmatpush1.msra.mxu0 0.0
  %9428 = vmatprep.subr.mxu0 0.0
  %9429 = vmatpush1.msra.mxu0 0.0
  %9430 = vmatprep.subr.mxu0 0.0
  %9431 = vmatpush1.msra.mxu0 0.0
  %9432 = vmatprep.subr.mxu0 0.0
  %9433 = vmatpush1.msra.mxu0 0.0
  %9434 = vmatprep.subr.mxu0 0.0
  %9435 = vmatpush1.msra.mxu0 0.0
  %9436 = vmatprep.subr.mxu0 0.0
  %9437 = vmatpush1.msra.mxu0 0.0
  %9438 = vmatprep.subr.mxu0 0.0
  %9439 = vmatpush1.msra.mxu0 0.0
  %9440 = vmatprep.subr.mxu0 0.0
  %9441 = vmatpush1.msra.mxu0 0.0
  %9442 = vmatprep.subr.mxu0 0.0
  %9443 = vmatpush1.msra.mxu0 0.0
  %9444 = vmatprep.subr.mxu0 0.0
  %9445 = vmatpush1.msra.mxu0 0.0
  %9446 = vmatprep.subr.mxu0 0.0
  %9447 = vmatpush1.msra.mxu0 0.0
  %9448 = vmatprep.subr.mxu0 0.0
  %9449 = vmatpush1.msra.mxu0 0.0
  %9450 = vmatprep.subr.mxu0 0.0
  %9451 = vmatpush1.msra.mxu0 0.0
  %9452 = vmatprep.subr.mxu0 0.0
  %9453 = vmatpush1.msra.mxu0 0.0
  %9454 = vmatprep.subr.mxu0 0.0
  %9455 = vmatpush1.msra.mxu0 0.0
  %9456 = vmatprep.subr.mxu0 0.0
  %9457 = vmatpush1.msra.mxu0 0.0
  %9458 = vmatprep.subr.mxu0 0.0
  %9459 = vmatpush1.msra.mxu0 0.0
  %9460 = vmatprep.subr.mxu0 0.0
  %9461 = vmatpush1.msra.mxu0 0.0
  %9462 = vmatprep.subr.mxu0 0.0
  %9463 = vmatpush1.msra.mxu0 0.0
  %9464 = vmatprep.subr.mxu0 0.0
  %9465 = vmatpush1.msra.mxu0 0.0
  %9466 = vmatprep.subr.mxu0 0.0
  %9467 = vmatpush1.msra.mxu0 0.0
  %9468 = vmatprep.subr.mxu0 0.0
  %9469 = vmatpush1.msra.mxu0 0.0
  %9470 = vmatprep.subr.mxu0 0.0
  %9471 = vmatpush1.msra.mxu0 0.0
  %9472 = vmatprep.subr.mxu0 0.0
  %9473 = vmatpush1.msra.mxu0 0.0
  %9474 = vmatprep.subr.mxu0 0.0
  %9475 = vmatpush1.msra.mxu0 0.0
  %9476 = vmatprep.subr.mxu0 0.0
  %9477 = vmatpush1.msra.mxu0 0.0
  %9478 = vmatprep.subr.mxu0 0.0
  %9479 = vmatpush1.msra.mxu0 0.0
  %9480 = vmatprep.subr.mxu0 0.0
  %9481 = vmatpush1.msra.mxu0 0.0
  %9482 = vmatprep.subr.mxu0 0.0
  %9483 = vmatpush1.msra.mxu0 0.0
  %9484 = vmatprep.subr.mxu0 0.0
  %9485 = vmatpush1.msra.mxu0 0.0
  %9486 = vmatprep.subr.mxu0 0.0
  %9487 = vmatpush1.msra.mxu0 0.0
  %9488 = vmatprep.mubr.f32.mxu0 0.0
  %9489 = vmatmul.mubr.f32.gmra.mrb[0].mxu0 %v9193
  %v9490 = vpop.f32.mrb[0].mxu0
  %v9491 = vadd.f32 0.0, %v9490
  %v9492 = vpop.f32.mrb[0].mxu0
  %v9493 = vadd.f32 0.0, %v9492
  %9494 = vdwg.mxu0
  %v9495 = vadd.f32 %v9170, %v9278
  %v9496 = vadd.f32 %v9171, %v9280
  %v9497 = vadd.f32 %v9172, %v9349
  %v9498 = vadd.f32 %v9173, %v9351
  %v9499 = vadd.f32 %v9174, %v9420
  %v9500 = vadd.f32 %v9175, %v9422
  %v9501 = vadd.f32 %v9176, %v9491
  %v9502 = vadd.f32 %v9177, %v9493
  %v9503 = vld [vmem:[#allocation2 + $0x4] sm:$0xff]
  %v9504 = vld [vmem:[#allocation2 + $0xc] sm:$0xff]
  %v9505 = vld [vmem:[#allocation2 + $0x14] sm:$0xff]
  %v9506 = vld [vmem:[#allocation2 + $0x1c] sm:$0xff]
  %v9507 = vld [vmem:[#allocation2 + $0x24] sm:$0xf]
  %v9508 = vld [vmem:[%s2055] ss:$8 sm:$0xf]
  %v9509 = vld [vmem:[%s2055] ss:$8 sm:$0xf0]
  %v9510 = vor.u32 %v9508, %v9509
  %v9512 = vlaneseq
  %v9513 = vshrl.u32 %v9512, 7
  %v9514 = vsub.s32 0, %v9513
  %v9515 = vrot.slane %v9510, %v9514
  %v9516 = vlaneseq
  %v9517 = vshrl.u32 %v9516, 7
  %v9518 = vsub.s32 1, %v9517
  %v9519 = vrot.slane %v9510, %v9518
  %v9520 = vlaneseq
  %v9521 = vshrl.u32 %v9520, 7
  %v9522 = vsub.s32 2, %v9521
  %v9523 = vrot.slane %v9510, %v9522
  %v9524 = vlaneseq
  %v9525 = vshrl.u32 %v9524, 7
  %v9526 = vsub.s32 3, %v9525
  %v9527 = vrot.slane %v9510, %v9526
  %v9528 = vlaneseq
  %v9529 = vshrl.u32 %v9528, 7
  %v9530 = vsub.s32 4, %v9529
  %v9531 = vrot.slane %v9510, %v9530
  %v9532 = vlaneseq
  %v9533 = vshrl.u32 %v9532, 7
  %v9534 = vsub.s32 5, %v9533
  %v9535 = vrot.slane %v9510, %v9534
  %v9536 = vlaneseq
  %v9537 = vshrl.u32 %v9536, 7
  %v9538 = vsub.s32 6, %v9537
  %v9539 = vrot.slane %v9510, %v9538
  %v9540 = vlaneseq
  %v9541 = vshrl.u32 %v9540, 7
  %v9542 = vsub.s32 7, %v9541
  %v9543 = vrot.slane %v9510, %v9542
  %v9544 = vcombine.low %v9515, %v9519
  %v9545 = vcombine.low %v9523, %v9527
  %v9546 = vcombine.low %v9531, %v9535
  %v9547 = vcombine.low %v9539, %v9543
  %9548 = vrot.lane.b32.xlu0 %v9544, 1
  %v9549 = vpop.permute.xlu0 %9548
  %9550 = vrot.lane.b32.xlu0 %v9545, 1
  %v9551 = vpop.permute.xlu0 %9550
  %9552 = vrot.lane.b32.xlu0 %v9546, 1
  %v9553 = vpop.permute.xlu0 %9552
  %9554 = vrot.lane.b32.xlu0 %v9547, 1
  %v9555 = vpop.permute.xlu0 %9554
  %v9556 = vrot.slane %v9549, 4
  %v9557 = vrot.slane %v9551, 4
  %v9558 = vrot.slane %v9553, 4
  %v9559 = vrot.slane %v9555, 4
  %v9560 = vsel %vm1405, %v9556, %v9549
  %v9561 = vsel %vm105, %v9556, %v9557
  %v9562 = vsel %vm1405, %v9561, %v9551
  %v9563 = vsel %vm105, %v9557, %v9558
  %v9564 = vsel %vm1405, %v9563, %v9553
  %v9565 = vsel %vm105, %v9558, %v9559
  %v9566 = vsel %vm1405, %v9565, %v9555
  %v9572 = vmul.f32 %v9503, %v9560
  %v9573 = vmul.f32 %v9504, %v9562
  %v9574 = vmul.f32 %v9505, %v9564
  %v9575 = vmul.f32 %v9506, %v9566
  %v9576 = vmul.f32 %v9507, %v9559
  %s9577 = scalar_lea.vmem %s2, 92
  %v9578 = vld [vmem:[%s9577] sm:$0xf]
  %v9584 = vcombine.high %v9572, %v9572
  %v9585 = vcombine.high %v9573, %v9573
  %v9586 = vcombine.high %v9574, %v9574
  %v9587 = vcombine.high %v9575, %v9575
  %9588 = vrot.lane.b32.xlu0 %v9572, 127
  %v9589 = vpop.permute.xlu0 %9588
  %9590 = vrot.lane.b32.xlu0 %v9584, 127
  %v9591 = vpop.permute.xlu0 %9590
  %9592 = vrot.lane.b32.xlu0 %v9573, 127
  %v9593 = vpop.permute.xlu0 %9592
  %9594 = vrot.lane.b32.xlu0 %v9585, 127
  %v9595 = vpop.permute.xlu0 %9594
  %9596 = vrot.lane.b32.xlu0 %v9574, 127
  %v9597 = vpop.permute.xlu0 %9596
  %9598 = vrot.lane.b32.xlu0 %v9586, 127
  %v9599 = vpop.permute.xlu0 %9598
  %9600 = vrot.lane.b32.xlu0 %v9575, 127
  %v9601 = vpop.permute.xlu0 %9600
  %9602 = vrot.lane.b32.xlu0 %v9587, 127
  %v9603 = vpop.permute.xlu0 %9602
  %9604 = vrot.lane.b32.xlu0 %v9576, 127
  %v9605 = vpop.permute.xlu0 %9604
  %v9606 = vsel %vm1358, %v9589, %v9591
  %v9607 = vsel %vm1358, %v9591, %v9593
  %v9608 = vsel %vm1358, %v9593, %v9595
  %v9609 = vsel %vm1358, %v9595, %v9597
  %v9610 = vsel %vm1358, %v9597, %v9599
  %v9611 = vsel %vm1358, %v9599, %v9601
  %v9612 = vsel %vm1358, %v9601, %v9603
  %v9613 = vsel %vm1358, %v9603, %v9605
  %v9615 = vsel %vm232, %v9578, 0
  %v9617 = vsel %vm105, %v9606, 0
  %v9619 = vsel %vm105, %v9607, 0
  %v9621 = vsel %vm105, %v9608, 0
  %v9623 = vsel %vm105, %v9609, 0
  %v9625 = vsel %vm105, %v9610, 0
  %v9627 = vsel %vm105, %v9611, 0
  %v9629 = vsel %vm105, %v9612, 0
  %v9631 = vsel %vm105, %v9613, 0
  %9633 = vmatprep.subr.mxu0 %v9619
  %9634 = vmatpush1.msra.mxu0 %v9617
  %9635 = vmatprep.subr.mxu0 0.0
  %9636 = vmatpush1.msra.mxu0 0.0
  %9637 = vmatprep.subr.mxu0 0.0
  %9638 = vmatpush1.msra.mxu0 0.0
  %9639 = vmatprep.subr.mxu0 0.0
  %9640 = vmatpush1.msra.mxu0 0.0
  %9641 = vmatprep.subr.mxu0 0.0
  %9642 = vmatpush1.msra.mxu0 0.0
  %9643 = vmatprep.subr.mxu0 0.0
  %9644 = vmatpush1.msra.mxu0 0.0
  %9645 = vmatprep.subr.mxu0 0.0
  %9646 = vmatpush1.msra.mxu0 0.0
  %9647 = vmatprep.subr.mxu0 0.0
  %9648 = vmatpush1.msra.mxu0 0.0
  %9649 = vmatprep.subr.mxu0 0.0
  %9650 = vmatpush1.msra.mxu0 0.0
  %9651 = vmatprep.subr.mxu0 0.0
  %9652 = vmatpush1.msra.mxu0 0.0
  %9653 = vmatprep.subr.mxu0 0.0
  %9654 = vmatpush1.msra.mxu0 0.0
  %9655 = vmatprep.subr.mxu0 0.0
  %9656 = vmatpush1.msra.mxu0 0.0
  %9657 = vmatprep.subr.mxu0 0.0
  %9658 = vmatpush1.msra.mxu0 0.0
  %9659 = vmatprep.subr.mxu0 0.0
  %9660 = vmatpush1.msra.mxu0 0.0
  %9661 = vmatprep.subr.mxu0 0.0
  %9662 = vmatpush1.msra.mxu0 0.0
  %9663 = vmatprep.subr.mxu0 0.0
  %9664 = vmatpush1.msra.mxu0 0.0
  %9665 = vmatprep.subr.mxu0 0.0
  %9666 = vmatpush1.msra.mxu0 0.0
  %9667 = vmatprep.subr.mxu0 0.0
  %9668 = vmatpush1.msra.mxu0 0.0
  %9669 = vmatprep.subr.mxu0 0.0
  %9670 = vmatpush1.msra.mxu0 0.0
  %9671 = vmatprep.subr.mxu0 0.0
  %9672 = vmatpush1.msra.mxu0 0.0
  %9673 = vmatprep.subr.mxu0 0.0
  %9674 = vmatpush1.msra.mxu0 0.0
  %9675 = vmatprep.subr.mxu0 0.0
  %9676 = vmatpush1.msra.mxu0 0.0
  %9677 = vmatprep.subr.mxu0 0.0
  %9678 = vmatpush1.msra.mxu0 0.0
  %9679 = vmatprep.subr.mxu0 0.0
  %9680 = vmatpush1.msra.mxu0 0.0
  %9681 = vmatprep.subr.mxu0 0.0
  %9682 = vmatpush1.msra.mxu0 0.0
  %9683 = vmatprep.subr.mxu0 0.0
  %9684 = vmatpush1.msra.mxu0 0.0
  %9685 = vmatprep.subr.mxu0 0.0
  %9686 = vmatpush1.msra.mxu0 0.0
  %9687 = vmatprep.subr.mxu0 0.0
  %9688 = vmatpush1.msra.mxu0 0.0
  %9689 = vmatprep.subr.mxu0 0.0
  %9690 = vmatpush1.msra.mxu0 0.0
  %9691 = vmatprep.subr.mxu0 0.0
  %9692 = vmatpush1.msra.mxu0 0.0
  %9693 = vmatprep.subr.mxu0 0.0
  %9694 = vmatpush1.msra.mxu0 0.0
  %9695 = vmatprep.subr.mxu0 0.0
  %9696 = vmatpush1.msra.mxu0 0.0
  %9697 = vmatprep.mubr.f32.mxu0 0.0
  %9698 = vmatmul.mubr.f32.gmra.mrb[0].mxu0 %v9615
  %v9699 = vpop.f32.mrb[0].mxu0
  %v9700 = vadd.f32 0.0, %v9699
  %v9701 = vpop.f32.mrb[0].mxu0
  %v9702 = vadd.f32 0.0, %v9701
  %9703 = vdwg.mxu0
  %9704 = vmatprep.subr.mxu0 %v9623
  %9705 = vmatpush1.msra.mxu0 %v9621
  %9706 = vmatprep.subr.mxu0 0.0
  %9707 = vmatpush1.msra.mxu0 0.0
  %9708 = vmatprep.subr.mxu0 0.0
  %9709 = vmatpush1.msra.mxu0 0.0
  %9710 = vmatprep.subr.mxu0 0.0
  %9711 = vmatpush1.msra.mxu0 0.0
  %9712 = vmatprep.subr.mxu0 0.0
  %9713 = vmatpush1.msra.mxu0 0.0
  %9714 = vmatprep.subr.mxu0 0.0
  %9715 = vmatpush1.msra.mxu0 0.0
  %9716 = vmatprep.subr.mxu0 0.0
  %9717 = vmatpush1.msra.mxu0 0.0
  %9718 = vmatprep.subr.mxu0 0.0
  %9719 = vmatpush1.msra.mxu0 0.0
  %9720 = vmatprep.subr.mxu0 0.0
  %9721 = vmatpush1.msra.mxu0 0.0
  %9722 = vmatprep.subr.mxu0 0.0
  %9723 = vmatpush1.msra.mxu0 0.0
  %9724 = vmatprep.subr.mxu0 0.0
  %9725 = vmatpush1.msra.mxu0 0.0
  %9726 = vmatprep.subr.mxu0 0.0
  %9727 = vmatpush1.msra.mxu0 0.0
  %9728 = vmatprep.subr.mxu0 0.0
  %9729 = vmatpush1.msra.mxu0 0.0
  %9730 = vmatprep.subr.mxu0 0.0
  %9731 = vmatpush1.msra.mxu0 0.0
  %9732 = vmatprep.subr.mxu0 0.0
  %9733 = vmatpush1.msra.mxu0 0.0
  %9734 = vmatprep.subr.mxu0 0.0
  %9735 = vmatpush1.msra.mxu0 0.0
  %9736 = vmatprep.subr.mxu0 0.0
  %9737 = vmatpush1.msra.mxu0 0.0
  %9738 = vmatprep.subr.mxu0 0.0
  %9739 = vmatpush1.msra.mxu0 0.0
  %9740 = vmatprep.subr.mxu0 0.0
  %9741 = vmatpush1.msra.mxu0 0.0
  %9742 = vmatprep.subr.mxu0 0.0
  %9743 = vmatpush1.msra.mxu0 0.0
  %9744 = vmatprep.subr.mxu0 0.0
  %9745 = vmatpush1.msra.mxu0 0.0
  %9746 = vmatprep.subr.mxu0 0.0
  %9747 = vmatpush1.msra.mxu0 0.0
  %9748 = vmatprep.subr.mxu0 0.0
  %9749 = vmatpush1.msra.mxu0 0.0
  %9750 = vmatprep.subr.mxu0 0.0
  %9751 = vmatpush1.msra.mxu0 0.0
  %9752 = vmatprep.subr.mxu0 0.0
  %9753 = vmatpush1.msra.mxu0 0.0
  %9754 = vmatprep.subr.mxu0 0.0
  %9755 = vmatpush1.msra.mxu0 0.0
  %9756 = vmatprep.subr.mxu0 0.0
  %9757 = vmatpush1.msra.mxu0 0.0
  %9758 = vmatprep.subr.mxu0 0.0
  %9759 = vmatpush1.msra.mxu0 0.0
  %9760 = vmatprep.subr.mxu0 0.0
  %9761 = vmatpush1.msra.mxu0 0.0
  %9762 = vmatprep.subr.mxu0 0.0
  %9763 = vmatpush1.msra.mxu0 0.0
  %9764 = vmatprep.subr.mxu0 0.0
  %9765 = vmatpush1.msra.mxu0 0.0
  %9766 = vmatprep.subr.mxu0 0.0
  %9767 = vmatpush1.msra.mxu0 0.0
  %9768 = vmatprep.mubr.f32.mxu0 0.0
  %9769 = vmatmul.mubr.f32.gmra.mrb[0].mxu0 %v9615
  %v9770 = vpop.f32.mrb[0].mxu0
  %v9771 = vadd.f32 0.0, %v9770
  %v9772 = vpop.f32.mrb[0].mxu0
  %v9773 = vadd.f32 0.0, %v9772
  %9774 = vdwg.mxu0
  %9775 = vmatprep.subr.mxu0 %v9627
  %9776 = vmatpush1.msra.mxu0 %v9625
  %9777 = vmatprep.subr.mxu0 0.0
  %9778 = vmatpush1.msra.mxu0 0.0
  %9779 = vmatprep.subr.mxu0 0.0
  %9780 = vmatpush1.msra.mxu0 0.0
  %9781 = vmatprep.subr.mxu0 0.0
  %9782 = vmatpush1.msra.mxu0 0.0
  %9783 = vmatprep.subr.mxu0 0.0
  %9784 = vmatpush1.msra.mxu0 0.0
  %9785 = vmatprep.subr.mxu0 0.0
  %9786 = vmatpush1.msra.mxu0 0.0
  %9787 = vmatprep.subr.mxu0 0.0
  %9788 = vmatpush1.msra.mxu0 0.0
  %9789 = vmatprep.subr.mxu0 0.0
  %9790 = vmatpush1.msra.mxu0 0.0
  %9791 = vmatprep.subr.mxu0 0.0
  %9792 = vmatpush1.msra.mxu0 0.0
  %9793 = vmatprep.subr.mxu0 0.0
  %9794 = vmatpush1.msra.mxu0 0.0
  %9795 = vmatprep.subr.mxu0 0.0
  %9796 = vmatpush1.msra.mxu0 0.0
  %9797 = vmatprep.subr.mxu0 0.0
  %9798 = vmatpush1.msra.mxu0 0.0
  %9799 = vmatprep.subr.mxu0 0.0
  %9800 = vmatpush1.msra.mxu0 0.0
  %9801 = vmatprep.subr.mxu0 0.0
  %9802 = vmatpush1.msra.mxu0 0.0
  %9803 = vmatprep.subr.mxu0 0.0
  %9804 = vmatpush1.msra.mxu0 0.0
  %9805 = vmatprep.subr.mxu0 0.0
  %9806 = vmatpush1.msra.mxu0 0.0
  %9807 = vmatprep.subr.mxu0 0.0
  %9808 = vmatpush1.msra.mxu0 0.0
  %9809 = vmatprep.subr.mxu0 0.0
  %9810 = vmatpush1.msra.mxu0 0.0
  %9811 = vmatprep.subr.mxu0 0.0
  %9812 = vmatpush1.msra.mxu0 0.0
  %9813 = vmatprep.subr.mxu0 0.0
  %9814 = vmatpush1.msra.mxu0 0.0
  %9815 = vmatprep.subr.mxu0 0.0
  %9816 = vmatpush1.msra.mxu0 0.0
  %9817 = vmatprep.subr.mxu0 0.0
  %9818 = vmatpush1.msra.mxu0 0.0
  %9819 = vmatprep.subr.mxu0 0.0
  %9820 = vmatpush1.msra.mxu0 0.0
  %9821 = vmatprep.subr.mxu0 0.0
  %9822 = vmatpush1.msra.mxu0 0.0
  %9823 = vmatprep.subr.mxu0 0.0
  %9824 = vmatpush1.msra.mxu0 0.0
  %9825 = vmatprep.subr.mxu0 0.0
  %9826 = vmatpush1.msra.mxu0 0.0
  %9827 = vmatprep.subr.mxu0 0.0
  %9828 = vmatpush1.msra.mxu0 0.0
  %9829 = vmatprep.subr.mxu0 0.0
  %9830 = vmatpush1.msra.mxu0 0.0
  %9831 = vmatprep.subr.mxu0 0.0
  %9832 = vmatpush1.msra.mxu0 0.0
  %9833 = vmatprep.subr.mxu0 0.0
  %9834 = vmatpush1.msra.mxu0 0.0
  %9835 = vmatprep.subr.mxu0 0.0
  %9836 = vmatpush1.msra.mxu0 0.0
  %9837 = vmatprep.subr.mxu0 0.0
  %9838 = vmatpush1.msra.mxu0 0.0
  %9839 = vmatprep.mubr.f32.mxu0 0.0
  %9840 = vmatmul.mubr.f32.gmra.mrb[0].mxu0 %v9615
  %v9841 = vpop.f32.mrb[0].mxu0
  %v9842 = vadd.f32 0.0, %v9841
  %v9843 = vpop.f32.mrb[0].mxu0
  %v9844 = vadd.f32 0.0, %v9843
  %9845 = vdwg.mxu0
  %9846 = vmatprep.subr.mxu0 %v9631
  %9847 = vmatpush1.msra.mxu0 %v9629
  %9848 = vmatprep.subr.mxu0 0.0
  %9849 = vmatpush1.msra.mxu0 0.0
  %9850 = vmatprep.subr.mxu0 0.0
  %9851 = vmatpush1.msra.mxu0 0.0
  %9852 = vmatprep.subr.mxu0 0.0
  %9853 = vmatpush1.msra.mxu0 0.0
  %9854 = vmatprep.subr.mxu0 0.0
  %9855 = vmatpush1.msra.mxu0 0.0
  %9856 = vmatprep.subr.mxu0 0.0
  %9857 = vmatpush1.msra.mxu0 0.0
  %9858 = vmatprep.subr.mxu0 0.0
  %9859 = vmatpush1.msra.mxu0 0.0
  %9860 = vmatprep.subr.mxu0 0.0
  %9861 = vmatpush1.msra.mxu0 0.0
  %9862 = vmatprep.subr.mxu0 0.0
  %9863 = vmatpush1.msra.mxu0 0.0
  %9864 = vmatprep.subr.mxu0 0.0
  %9865 = vmatpush1.msra.mxu0 0.0
  %9866 = vmatprep.subr.mxu0 0.0
  %9867 = vmatpush1.msra.mxu0 0.0
  %9868 = vmatprep.subr.mxu0 0.0
  %9869 = vmatpush1.msra.mxu0 0.0
  %9870 = vmatprep.subr.mxu0 0.0
  %9871 = vmatpush1.msra.mxu0 0.0
  %9872 = vmatprep.subr.mxu0 0.0
  %9873 = vmatpush1.msra.mxu0 0.0
  %9874 = vmatprep.subr.mxu0 0.0
  %9875 = vmatpush1.msra.mxu0 0.0
  %9876 = vmatprep.subr.mxu0 0.0
  %9877 = vmatpush1.msra.mxu0 0.0
  %9878 = vmatprep.subr.mxu0 0.0
  %9879 = vmatpush1.msra.mxu0 0.0
  %9880 = vmatprep.subr.mxu0 0.0
  %9881 = vmatpush1.msra.mxu0 0.0
  %9882 = vmatprep.subr.mxu0 0.0
  %9883 = vmatpush1.msra.mxu0 0.0
  %9884 = vmatprep.subr.mxu0 0.0
  %9885 = vmatpush1.msra.mxu0 0.0
  %9886 = vmatprep.subr.mxu0 0.0
  %9887 = vmatpush1.msra.mxu0 0.0
  %9888 = vmatprep.subr.mxu0 0.0
  %9889 = vmatpush1.msra.mxu0 0.0
  %9890 = vmatprep.subr.mxu0 0.0
  %9891 = vmatpush1.msra.mxu0 0.0
  %9892 = vmatprep.subr.mxu0 0.0
  %9893 = vmatpush1.msra.mxu0 0.0
  %9894 = vmatprep.subr.mxu0 0.0
  %9895 = vmatpush1.msra.mxu0 0.0
  %9896 = vmatprep.subr.mxu0 0.0
  %9897 = vmatpush1.msra.mxu0 0.0
  %9898 = vmatprep.subr.mxu0 0.0
  %9899 = vmatpush1.msra.mxu0 0.0
  %9900 = vmatprep.subr.mxu0 0.0
  %9901 = vmatpush1.msra.mxu0 0.0
  %9902 = vmatprep.subr.mxu0 0.0
  %9903 = vmatpush1.msra.mxu0 0.0
  %9904 = vmatprep.subr.mxu0 0.0
  %9905 = vmatpush1.msra.mxu0 0.0
  %9906 = vmatprep.subr.mxu0 0.0
  %9907 = vmatpush1.msra.mxu0 0.0
  %9908 = vmatprep.subr.mxu0 0.0
  %9909 = vmatpush1.msra.mxu0 0.0
  %9910 = vmatprep.mubr.f32.mxu0 0.0
  %9911 = vmatmul.mubr.f32.gmra.mrb[0].mxu0 %v9615
  %v9912 = vpop.f32.mrb[0].mxu0
  %v9913 = vadd.f32 0.0, %v9912
  %v9914 = vpop.f32.mrb[0].mxu0
  %v9915 = vadd.f32 0.0, %v9914
  %9916 = vdwg.mxu0
  %v9917 = vadd.f32 %v9495, %v9700
  %v9918 = vadd.f32 %v9496, %v9702
  %v9919 = vadd.f32 %v9497, %v9771
  %v9920 = vadd.f32 %v9498, %v9773
  %v9921 = vadd.f32 %v9499, %v9842
  %v9922 = vadd.f32 %v9500, %v9844
  %v9923 = vadd.f32 %v9501, %v9913
  %v9924 = vadd.f32 %v9502, %v9915
  %v9925 = vld [vmem:[#allocation2 + $0x4] sm:$0xff]
  %v9926 = vld [vmem:[#allocation2 + $0xc] sm:$0xff]
  %v9927 = vld [vmem:[#allocation2 + $0x14] sm:$0xff]
  %v9928 = vld [vmem:[#allocation2 + $0x1c] sm:$0xff]
  %v9929 = vld [vmem:[#allocation2 + $0x24] sm:$0xf]
  %v9930 = vld [vmem:[%s2478] ss:$8 sm:$0xf]
  %v9931 = vld [vmem:[%s2478] ss:$8 sm:$0xf0]
  %v9932 = vor.u32 %v9930, %v9931
  %v9934 = vlaneseq
  %v9935 = vshrl.u32 %v9934, 7
  %v9936 = vsub.s32 0, %v9935
  %v9937 = vrot.slane %v9932, %v9936
  %v9938 = vlaneseq
  %v9939 = vshrl.u32 %v9938, 7
  %v9940 = vsub.s32 1, %v9939
  %v9941 = vrot.slane %v9932, %v9940
  %v9942 = vlaneseq
  %v9943 = vshrl.u32 %v9942, 7
  %v9944 = vsub.s32 2, %v9943
  %v9945 = vrot.slane %v9932, %v9944
  %v9946 = vlaneseq
  %v9947 = vshrl.u32 %v9946, 7
  %v9948 = vsub.s32 3, %v9947
  %v9949 = vrot.slane %v9932, %v9948
  %v9950 = vlaneseq
  %v9951 = vshrl.u32 %v9950, 7
  %v9952 = vsub.s32 4, %v9951
  %v9953 = vrot.slane %v9932, %v9952
  %v9954 = vlaneseq
  %v9955 = vshrl.u32 %v9954, 7
  %v9956 = vsub.s32 5, %v9955
  %v9957 = vrot.slane %v9932, %v9956
  %v9958 = vlaneseq
  %v9959 = vshrl.u32 %v9958, 7
  %v9960 = vsub.s32 6, %v9959
  %v9961 = vrot.slane %v9932, %v9960
  %v9962 = vlaneseq
  %v9963 = vshrl.u32 %v9962, 7
  %v9964 = vsub.s32 7, %v9963
  %v9965 = vrot.slane %v9932, %v9964
  %v9966 = vcombine.low %v9937, %v9941
  %v9967 = vcombine.low %v9945, %v9949
  %v9968 = vcombine.low %v9953, %v9957
  %v9969 = vcombine.low %v9961, %v9965
  %9970 = vrot.lane.b32.xlu0 %v9966, 15
  %v9971 = vpop.permute.xlu0 %9970
  %9972 = vrot.lane.b32.xlu0 %v9967, 15
  %v9973 = vpop.permute.xlu0 %9972
  %9974 = vrot.lane.b32.xlu0 %v9968, 15
  %v9975 = vpop.permute.xlu0 %9974
  %9976 = vrot.lane.b32.xlu0 %v9969, 15
  %v9977 = vpop.permute.xlu0 %9976
  %v9978 = vrot.slane %v9971, 4
  %v9979 = vrot.slane %v9973, 4
  %v9980 = vrot.slane %v9975, 4
  %v9981 = vrot.slane %v9977, 4
  %v9982 = vsel %vm980, %v9978, %v9971
  %v9983 = vsel %vm105, %v9978, %v9979
  %v9984 = vsel %vm980, %v9983, %v9973
  %v9985 = vsel %vm105, %v9979, %v9980
  %v9986 = vsel %vm980, %v9985, %v9975
  %v9987 = vsel %vm105, %v9980, %v9981
  %v9988 = vsel %vm980, %v9987, %v9977
  %v9994 = vmul.f32 %v9925, %v9982
  %v9995 = vmul.f32 %v9926, %v9984
  %v9996 = vmul.f32 %v9927, %v9986
  %v9997 = vmul.f32 %v9928, %v9988
  %v9998 = vmul.f32 %v9929, %v9981
  %s9999 = scalar_lea.vmem %s2, 96
  %v10000 = vld [vmem:[%s9999] sm:$0xf]
  %v10006 = vcombine.high %v9994, %v9994
  %v10007 = vcombine.high %v9995, %v9995
  %v10008 = vcombine.high %v9996, %v9996
  %v10009 = vcombine.high %v9997, %v9997
  %10010 = vrot.lane.b32.xlu0 %v9994, 113
  %v10011 = vpop.permute.xlu0 %10010
  %10012 = vrot.lane.b32.xlu0 %v10006, 113
  %v10013 = vpop.permute.xlu0 %10012
  %10014 = vrot.lane.b32.xlu0 %v9995, 113
  %v10015 = vpop.permute.xlu0 %10014
  %10016 = vrot.lane.b32.xlu0 %v10007, 113
  %v10017 = vpop.permute.xlu0 %10016
  %10018 = vrot.lane.b32.xlu0 %v9996, 113
  %v10019 = vpop.permute.xlu0 %10018
  %10020 = vrot.lane.b32.xlu0 %v10008, 113
  %v10021 = vpop.permute.xlu0 %10020
  %10022 = vrot.lane.b32.xlu0 %v9997, 113
  %v10023 = vpop.permute.xlu0 %10022
  %10024 = vrot.lane.b32.xlu0 %v10009, 113
  %v10025 = vpop.permute.xlu0 %10024
  %10026 = vrot.lane.b32.xlu0 %v9998, 113
  %v10027 = vpop.permute.xlu0 %10026
  %v10028 = vsel %vm933, %v10011, %v10013
  %v10029 = vsel %vm933, %v10013, %v10015
  %v10030 = vsel %vm933, %v10015, %v10017
  %v10031 = vsel %vm933, %v10017, %v10019
  %v10032 = vsel %vm933, %v10019, %v10021
  %v10033 = vsel %vm933, %v10021, %v10023
  %v10034 = vsel %vm933, %v10023, %v10025
  %v10035 = vsel %vm933, %v10025, %v10027
  %v10037 = vsel %vm232, %v10000, 0
  %v10039 = vsel %vm105, %v10028, 0
  %v10041 = vsel %vm105, %v10029, 0
  %v10043 = vsel %vm105, %v10030, 0
  %v10045 = vsel %vm105, %v10031, 0
  %v10047 = vsel %vm105, %v10032, 0
  %v10049 = vsel %vm105, %v10033, 0
  %v10051 = vsel %vm105, %v10034, 0
  %v10053 = vsel %vm105, %v10035, 0
  %10055 = vmatprep.subr.mxu0 %v10041
  %10056 = vmatpush1.msra.mxu0 %v10039
  %10057 = vmatprep.subr.mxu0 0.0
  %10058 = vmatpush1.msra.mxu0 0.0
  %10059 = vmatprep.subr.mxu0 0.0
  %10060 = vmatpush1.msra.mxu0 0.0
  %10061 = vmatprep.subr.mxu0 0.0
  %10062 = vmatpush1.msra.mxu0 0.0
  %10063 = vmatprep.subr.mxu0 0.0
  %10064 = vmatpush1.msra.mxu0 0.0
  %10065 = vmatprep.subr.mxu0 0.0
  %10066 = vmatpush1.msra.mxu0 0.0
  %10067 = vmatprep.subr.mxu0 0.0
  %10068 = vmatpush1.msra.mxu0 0.0
  %10069 = vmatprep.subr.mxu0 0.0
  %10070 = vmatpush1.msra.mxu0 0.0
  %10071 = vmatprep.subr.mxu0 0.0
  %10072 = vmatpush1.msra.mxu0 0.0
  %10073 = vmatprep.subr.mxu0 0.0
  %10074 = vmatpush1.msra.mxu0 0.0
  %10075 = vmatprep.subr.mxu0 0.0
  %10076 = vmatpush1.msra.mxu0 0.0
  %10077 = vmatprep.subr.mxu0 0.0
  %10078 = vmatpush1.msra.mxu0 0.0
  %10079 = vmatprep.subr.mxu0 0.0
  %10080 = vmatpush1.msra.mxu0 0.0
  %10081 = vmatprep.subr.mxu0 0.0
  %10082 = vmatpush1.msra.mxu0 0.0
  %10083 = vmatprep.subr.mxu0 0.0
  %10084 = vmatpush1.msra.mxu0 0.0
  %10085 = vmatprep.subr.mxu0 0.0
  %10086 = vmatpush1.msra.mxu0 0.0
  %10087 = vmatprep.subr.mxu0 0.0
  %10088 = vmatpush1.msra.mxu0 0.0
  %10089 = vmatprep.subr.mxu0 0.0
  %10090 = vmatpush1.msra.mxu0 0.0
  %10091 = vmatprep.subr.mxu0 0.0
  %10092 = vmatpush1.msra.mxu0 0.0
  %10093 = vmatprep.subr.mxu0 0.0
  %10094 = vmatpush1.msra.mxu0 0.0
  %10095 = vmatprep.subr.mxu0 0.0
  %10096 = vmatpush1.msra.mxu0 0.0
  %10097 = vmatprep.subr.mxu0 0.0
  %10098 = vmatpush1.msra.mxu0 0.0
  %10099 = vmatprep.subr.mxu0 0.0
  %10100 = vmatpush1.msra.mxu0 0.0
  %10101 = vmatprep.subr.mxu0 0.0
  %10102 = vmatpush1.msra.mxu0 0.0
  %10103 = vmatprep.subr.mxu0 0.0
  %10104 = vmatpush1.msra.mxu0 0.0
  %10105 = vmatprep.subr.mxu0 0.0
  %10106 = vmatpush1.msra.mxu0 0.0
  %10107 = vmatprep.subr.mxu0 0.0
  %10108 = vmatpush1.msra.mxu0 0.0
  %10109 = vmatprep.subr.mxu0 0.0
  %10110 = vmatpush1.msra.mxu0 0.0
  %10111 = vmatprep.subr.mxu0 0.0
  %10112 = vmatpush1.msra.mxu0 0.0
  %10113 = vmatprep.subr.mxu0 0.0
  %10114 = vmatpush1.msra.mxu0 0.0
  %10115 = vmatprep.subr.mxu0 0.0
  %10116 = vmatpush1.msra.mxu0 0.0
  %10117 = vmatprep.subr.mxu0 0.0
  %10118 = vmatpush1.msra.mxu0 0.0
  %10119 = vmatprep.mubr.f32.mxu0 0.0
  %10120 = vmatmul.mubr.f32.gmra.mrb[0].mxu0 %v10037
  %v10121 = vpop.f32.mrb[0].mxu0
  %v10122 = vadd.f32 0.0, %v10121
  %v10123 = vpop.f32.mrb[0].mxu0
  %v10124 = vadd.f32 0.0, %v10123
  %10125 = vdwg.mxu0
  %10126 = vmatprep.subr.mxu0 %v10045
  %10127 = vmatpush1.msra.mxu0 %v10043
  %10128 = vmatprep.subr.mxu0 0.0
  %10129 = vmatpush1.msra.mxu0 0.0
  %10130 = vmatprep.subr.mxu0 0.0
  %10131 = vmatpush1.msra.mxu0 0.0
  %10132 = vmatprep.subr.mxu0 0.0
  %10133 = vmatpush1.msra.mxu0 0.0
  %10134 = vmatprep.subr.mxu0 0.0
  %10135 = vmatpush1.msra.mxu0 0.0
  %10136 = vmatprep.subr.mxu0 0.0
  %10137 = vmatpush1.msra.mxu0 0.0
  %10138 = vmatprep.subr.mxu0 0.0
  %10139 = vmatpush1.msra.mxu0 0.0
  %10140 = vmatprep.subr.mxu0 0.0
  %10141 = vmatpush1.msra.mxu0 0.0
  %10142 = vmatprep.subr.mxu0 0.0
  %10143 = vmatpush1.msra.mxu0 0.0
  %10144 = vmatprep.subr.mxu0 0.0
  %10145 = vmatpush1.msra.mxu0 0.0
  %10146 = vmatprep.subr.mxu0 0.0
  %10147 = vmatpush1.msra.mxu0 0.0
  %10148 = vmatprep.subr.mxu0 0.0
  %10149 = vmatpush1.msra.mxu0 0.0
  %10150 = vmatprep.subr.mxu0 0.0
  %10151 = vmatpush1.msra.mxu0 0.0
  %10152 = vmatprep.subr.mxu0 0.0
  %10153 = vmatpush1.msra.mxu0 0.0
  %10154 = vmatprep.subr.mxu0 0.0
  %10155 = vmatpush1.msra.mxu0 0.0
  %10156 = vmatprep.subr.mxu0 0.0
  %10157 = vmatpush1.msra.mxu0 0.0
  %10158 = vmatprep.subr.mxu0 0.0
  %10159 = vmatpush1.msra.mxu0 0.0
  %10160 = vmatprep.subr.mxu0 0.0
  %10161 = vmatpush1.msra.mxu0 0.0
  %10162 = vmatprep.subr.mxu0 0.0
  %10163 = vmatpush1.msra.mxu0 0.0
  %10164 = vmatprep.subr.mxu0 0.0
  %10165 = vmatpush1.msra.mxu0 0.0
  %10166 = vmatprep.subr.mxu0 0.0
  %10167 = vmatpush1.msra.mxu0 0.0
  %10168 = vmatprep.subr.mxu0 0.0
  %10169 = vmatpush1.msra.mxu0 0.0
  %10170 = vmatprep.subr.mxu0 0.0
  %10171 = vmatpush1.msra.mxu0 0.0
  %10172 = vmatprep.subr.mxu0 0.0
  %10173 = vmatpush1.msra.mxu0 0.0
  %10174 = vmatprep.subr.mxu0 0.0
  %10175 = vmatpush1.msra.mxu0 0.0
  %10176 = vmatprep.subr.mxu0 0.0
  %10177 = vmatpush1.msra.mxu0 0.0
  %10178 = vmatprep.subr.mxu0 0.0
  %10179 = vmatpush1.msra.mxu0 0.0
  %10180 = vmatprep.subr.mxu0 0.0
  %10181 = vmatpush1.msra.mxu0 0.0
  %10182 = vmatprep.subr.mxu0 0.0
  %10183 = vmatpush1.msra.mxu0 0.0
  %10184 = vmatprep.subr.mxu0 0.0
  %10185 = vmatpush1.msra.mxu0 0.0
  %10186 = vmatprep.subr.mxu0 0.0
  %10187 = vmatpush1.msra.mxu0 0.0
  %10188 = vmatprep.subr.mxu0 0.0
  %10189 = vmatpush1.msra.mxu0 0.0
  %10190 = vmatprep.mubr.f32.mxu0 0.0
  %10191 = vmatmul.mubr.f32.gmra.mrb[0].mxu0 %v10037
  %v10192 = vpop.f32.mrb[0].mxu0
  %v10193 = vadd.f32 0.0, %v10192
  %v10194 = vpop.f32.mrb[0].mxu0
  %v10195 = vadd.f32 0.0, %v10194
  %10196 = vdwg.mxu0
  %10197 = vmatprep.subr.mxu0 %v10049
  %10198 = vmatpush1.msra.mxu0 %v10047
  %10199 = vmatprep.subr.mxu0 0.0
  %10200 = vmatpush1.msra.mxu0 0.0
  %10201 = vmatprep.subr.mxu0 0.0
  %10202 = vmatpush1.msra.mxu0 0.0
  %10203 = vmatprep.subr.mxu0 0.0
  %10204 = vmatpush1.msra.mxu0 0.0
  %10205 = vmatprep.subr.mxu0 0.0
  %10206 = vmatpush1.msra.mxu0 0.0
  %10207 = vmatprep.subr.mxu0 0.0
  %10208 = vmatpush1.msra.mxu0 0.0
  %10209 = vmatprep.subr.mxu0 0.0
  %10210 = vmatpush1.msra.mxu0 0.0
  %10211 = vmatprep.subr.mxu0 0.0
  %10212 = vmatpush1.msra.mxu0 0.0
  %10213 = vmatprep.subr.mxu0 0.0
  %10214 = vmatpush1.msra.mxu0 0.0
  %10215 = vmatprep.subr.mxu0 0.0
  %10216 = vmatpush1.msra.mxu0 0.0
  %10217 = vmatprep.subr.mxu0 0.0
  %10218 = vmatpush1.msra.mxu0 0.0
  %10219 = vmatprep.subr.mxu0 0.0
  %10220 = vmatpush1.msra.mxu0 0.0
  %10221 = vmatprep.subr.mxu0 0.0
  %10222 = vmatpush1.msra.mxu0 0.0
  %10223 = vmatprep.subr.mxu0 0.0
  %10224 = vmatpush1.msra.mxu0 0.0
  %10225 = vmatprep.subr.mxu0 0.0
  %10226 = vmatpush1.msra.mxu0 0.0
  %10227 = vmatprep.subr.mxu0 0.0
  %10228 = vmatpush1.msra.mxu0 0.0
  %10229 = vmatprep.subr.mxu0 0.0
  %10230 = vmatpush1.msra.mxu0 0.0
  %10231 = vmatprep.subr.mxu0 0.0
  %10232 = vmatpush1.msra.mxu0 0.0
  %10233 = vmatprep.subr.mxu0 0.0
  %10234 = vmatpush1.msra.mxu0 0.0
  %10235 = vmatprep.subr.mxu0 0.0
  %10236 = vmatpush1.msra.mxu0 0.0
  %10237 = vmatprep.subr.mxu0 0.0
  %10238 = vmatpush1.msra.mxu0 0.0
  %10239 = vmatprep.subr.mxu0 0.0
  %10240 = vmatpush1.msra.mxu0 0.0
  %10241 = vmatprep.subr.mxu0 0.0
  %10242 = vmatpush1.msra.mxu0 0.0
  %10243 = vmatprep.subr.mxu0 0.0
  %10244 = vmatpush1.msra.mxu0 0.0
  %10245 = vmatprep.subr.mxu0 0.0
  %10246 = vmatpush1.msra.mxu0 0.0
  %10247 = vmatprep.subr.mxu0 0.0
  %10248 = vmatpush1.msra.mxu0 0.0
  %10249 = vmatprep.subr.mxu0 0.0
  %10250 = vmatpush1.msra.mxu0 0.0
  %10251 = vmatprep.subr.mxu0 0.0
  %10252 = vmatpush1.msra.mxu0 0.0
  %10253 = vmatprep.subr.mxu0 0.0
  %10254 = vmatpush1.msra.mxu0 0.0
  %10255 = vmatprep.subr.mxu0 0.0
  %10256 = vmatpush1.msra.mxu0 0.0
  %10257 = vmatprep.subr.mxu0 0.0
  %10258 = vmatpush1.msra.mxu0 0.0
  %10259 = vmatprep.subr.mxu0 0.0
  %10260 = vmatpush1.msra.mxu0 0.0
  %10261 = vmatprep.mubr.f32.mxu0 0.0
  %10262 = vmatmul.mubr.f32.gmra.mrb[0].mxu0 %v10037
  %v10263 = vpop.f32.mrb[0].mxu0
  %v10264 = vadd.f32 0.0, %v10263
  %v10265 = vpop.f32.mrb[0].mxu0
  %v10266 = vadd.f32 0.0, %v10265
  %10267 = vdwg.mxu0
  %10268 = vmatprep.subr.mxu0 %v10053
  %10269 = vmatpush1.msra.mxu0 %v10051
  %10270 = vmatprep.subr.mxu0 0.0
  %10271 = vmatpush1.msra.mxu0 0.0
  %10272 = vmatprep.subr.mxu0 0.0
  %10273 = vmatpush1.msra.mxu0 0.0
  %10274 = vmatprep.subr.mxu0 0.0
  %10275 = vmatpush1.msra.mxu0 0.0
  %10276 = vmatprep.subr.mxu0 0.0
  %10277 = vmatpush1.msra.mxu0 0.0
  %10278 = vmatprep.subr.mxu0 0.0
  %10279 = vmatpush1.msra.mxu0 0.0
  %10280 = vmatprep.subr.mxu0 0.0
  %10281 = vmatpush1.msra.mxu0 0.0
  %10282 = vmatprep.subr.mxu0 0.0
  %10283 = vmatpush1.msra.mxu0 0.0
  %10284 = vmatprep.subr.mxu0 0.0
  %10285 = vmatpush1.msra.mxu0 0.0
  %10286 = vmatprep.subr.mxu0 0.0
  %10287 = vmatpush1.msra.mxu0 0.0
  %10288 = vmatprep.subr.mxu0 0.0
  %10289 = vmatpush1.msra.mxu0 0.0
  %10290 = vmatprep.subr.mxu0 0.0
  %10291 = vmatpush1.msra.mxu0 0.0
  %10292 = vmatprep.subr.mxu0 0.0
  %10293 = vmatpush1.msra.mxu0 0.0
  %10294 = vmatprep.subr.mxu0 0.0
  %10295 = vmatpush1.msra.mxu0 0.0
  %10296 = vmatprep.subr.mxu0 0.0
  %10297 = vmatpush1.msra.mxu0 0.0
  %10298 = vmatprep.subr.mxu0 0.0
  %10299 = vmatpush1.msra.mxu0 0.0
  %10300 = vmatprep.subr.mxu0 0.0
  %10301 = vmatpush1.msra.mxu0 0.0
  %10302 = vmatprep.subr.mxu0 0.0
  %10303 = vmatpush1.msra.mxu0 0.0
  %10304 = vmatprep.subr.mxu0 0.0
  %10305 = vmatpush1.msra.mxu0 0.0
  %10306 = vmatprep.subr.mxu0 0.0
  %10307 = vmatpush1.msra.mxu0 0.0
  %10308 = vmatprep.subr.mxu0 0.0
  %10309 = vmatpush1.msra.mxu0 0.0
  %10310 = vmatprep.subr.mxu0 0.0
  %10311 = vmatpush1.msra.mxu0 0.0
  %10312 = vmatprep.subr.mxu0 0.0
  %10313 = vmatpush1.msra.mxu0 0.0
  %10314 = vmatprep.subr.mxu0 0.0
  %10315 = vmatpush1.msra.mxu0 0.0
  %10316 = vmatprep.subr.mxu0 0.0
  %10317 = vmatpush1.msra.mxu0 0.0
  %10318 = vmatprep.subr.mxu0 0.0
  %10319 = vmatpush1.msra.mxu0 0.0
  %10320 = vmatprep.subr.mxu0 0.0
  %10321 = vmatpush1.msra.mxu0 0.0
  %10322 = vmatprep.subr.mxu0 0.0
  %10323 = vmatpush1.msra.mxu0 0.0
  %10324 = vmatprep.subr.mxu0 0.0
  %10325 = vmatpush1.msra.mxu0 0.0
  %10326 = vmatprep.subr.mxu0 0.0
  %10327 = vmatpush1.msra.mxu0 0.0
  %10328 = vmatprep.subr.mxu0 0.0
  %10329 = vmatpush1.msra.mxu0 0.0
  %10330 = vmatprep.subr.mxu0 0.0
  %10331 = vmatpush1.msra.mxu0 0.0
  %10332 = vmatprep.mubr.f32.mxu0 0.0
  %10333 = vmatmul.mubr.f32.gmra.mrb[0].mxu0 %v10037
  %v10334 = vpop.f32.mrb[0].mxu0
  %v10335 = vadd.f32 0.0, %v10334
  %v10336 = vpop.f32.mrb[0].mxu0
  %v10337 = vadd.f32 0.0, %v10336
  %10338 = vdwg.mxu0
  %v10339 = vadd.f32 %v9917, %v10122
  %v10340 = vadd.f32 %v9918, %v10124
  %v10341 = vadd.f32 %v9919, %v10193
  %v10342 = vadd.f32 %v9920, %v10195
  %v10343 = vadd.f32 %v9921, %v10264
  %v10344 = vadd.f32 %v9922, %v10266
  %v10345 = vadd.f32 %v9923, %v10335
  %v10346 = vadd.f32 %v9924, %v10337
  %v10347 = vld [vmem:[#allocation2 + $0x4] sm:$0xff]
  %v10348 = vld [vmem:[#allocation2 + $0xc] sm:$0xff]
  %v10349 = vld [vmem:[#allocation2 + $0x14] sm:$0xff]
  %v10350 = vld [vmem:[#allocation2 + $0x1c] sm:$0xff]
  %v10351 = vld [vmem:[#allocation2 + $0x24] sm:$0xf]
  %v10352 = vld [vmem:[%s2901] ss:$8 sm:$0xf]
  %v10353 = vld [vmem:[%s2901] ss:$8 sm:$0xf0]
  %v10354 = vor.u32 %v10352, %v10353
  %v10356 = vlaneseq
  %v10357 = vshrl.u32 %v10356, 7
  %v10358 = vsub.s32 0, %v10357
  %v10359 = vrot.slane %v10354, %v10358
  %v10360 = vlaneseq
  %v10361 = vshrl.u32 %v10360, 7
  %v10362 = vsub.s32 1, %v10361
  %v10363 = vrot.slane %v10354, %v10362
  %v10364 = vlaneseq
  %v10365 = vshrl.u32 %v10364, 7
  %v10366 = vsub.s32 2, %v10365
  %v10367 = vrot.slane %v10354, %v10366
  %v10368 = vlaneseq
  %v10369 = vshrl.u32 %v10368, 7
  %v10370 = vsub.s32 3, %v10369
  %v10371 = vrot.slane %v10354, %v10370
  %v10372 = vlaneseq
  %v10373 = vshrl.u32 %v10372, 7
  %v10374 = vsub.s32 4, %v10373
  %v10375 = vrot.slane %v10354, %v10374
  %v10376 = vlaneseq
  %v10377 = vshrl.u32 %v10376, 7
  %v10378 = vsub.s32 5, %v10377
  %v10379 = vrot.slane %v10354, %v10378
  %v10380 = vlaneseq
  %v10381 = vshrl.u32 %v10380, 7
  %v10382 = vsub.s32 6, %v10381
  %v10383 = vrot.slane %v10354, %v10382
  %v10384 = vlaneseq
  %v10385 = vshrl.u32 %v10384, 7
  %v10386 = vsub.s32 7, %v10385
  %v10387 = vrot.slane %v10354, %v10386
  %v10388 = vcombine.low %v10359, %v10363
  %v10389 = vcombine.low %v10367, %v10371
  %v10390 = vcombine.low %v10375, %v10379
  %v10391 = vcombine.low %v10383, %v10387
  %10392 = vrot.lane.b32.xlu0 %v10388, 16
  %v10393 = vpop.permute.xlu0 %10392
  %10394 = vrot.lane.b32.xlu0 %v10389, 16
  %v10395 = vpop.permute.xlu0 %10394
  %10396 = vrot.lane.b32.xlu0 %v10390, 16
  %v10397 = vpop.permute.xlu0 %10396
  %10398 = vrot.lane.b32.xlu0 %v10391, 16
  %v10399 = vpop.permute.xlu0 %10398
  %v10400 = vrot.slane %v10393, 4
  %v10401 = vrot.slane %v10395, 4
  %v10402 = vrot.slane %v10397, 4
  %v10403 = vrot.slane %v10399, 4
  %v10404 = vsel %vm223, %v10400, %v10393
  %v10405 = vsel %vm105, %v10400, %v10401
  %v10406 = vsel %vm223, %v10405, %v10395
  %v10407 = vsel %vm105, %v10401, %v10402
  %v10408 = vsel %vm223, %v10407, %v10397
  %v10409 = vsel %vm105, %v10402, %v10403
  %v10410 = vsel %vm223, %v10409, %v10399
  %v10416 = vmul.f32 %v10347, %v10404
  %v10417 = vmul.f32 %v10348, %v10406
  %v10418 = vmul.f32 %v10349, %v10408
  %v10419 = vmul.f32 %v10350, %v10410
  %v10420 = vmul.f32 %v10351, %v10403
  %s10421 = scalar_lea.vmem %s2, 100
  %v10422 = vld [vmem:[%s10421] sm:$0xf]
  %v10428 = vcombine.high %v10416, %v10416
  %v10429 = vcombine.high %v10417, %v10417
  %v10430 = vcombine.high %v10418, %v10418
  %v10431 = vcombine.high %v10419, %v10419
  %10432 = vrot.lane.b32.xlu0 %v10416, 112
  %v10433 = vpop.permute.xlu0 %10432
  %10434 = vrot.lane.b32.xlu0 %v10428, 112
  %v10435 = vpop.permute.xlu0 %10434
  %10436 = vrot.lane.b32.xlu0 %v10417, 112
  %v10437 = vpop.permute.xlu0 %10436
  %10438 = vrot.lane.b32.xlu0 %v10429, 112
  %v10439 = vpop.permute.xlu0 %10438
  %10440 = vrot.lane.b32.xlu0 %v10418, 112
  %v10441 = vpop.permute.xlu0 %10440
  %10442 = vrot.lane.b32.xlu0 %v10430, 112
  %v10443 = vpop.permute.xlu0 %10442
  %10444 = vrot.lane.b32.xlu0 %v10419, 112
  %v10445 = vpop.permute.xlu0 %10444
  %10446 = vrot.lane.b32.xlu0 %v10431, 112
  %v10447 = vpop.permute.xlu0 %10446
  %10448 = vrot.lane.b32.xlu0 %v10420, 112
  %v10449 = vpop.permute.xlu0 %10448
  %v10450 = vsel %vm176, %v10433, %v10435
  %v10451 = vsel %vm176, %v10435, %v10437
  %v10452 = vsel %vm176, %v10437, %v10439
  %v10453 = vsel %vm176, %v10439, %v10441
  %v10454 = vsel %vm176, %v10441, %v10443
  %v10455 = vsel %vm176, %v10443, %v10445
  %v10456 = vsel %vm176, %v10445, %v10447
  %v10457 = vsel %vm176, %v10447, %v10449
  %v10459 = vsel %vm232, %v10422, 0
  %v10461 = vsel %vm105, %v10450, 0
  %v10463 = vsel %vm105, %v10451, 0
  %v10465 = vsel %vm105, %v10452, 0
  %v10467 = vsel %vm105, %v10453, 0
  %v10469 = vsel %vm105, %v10454, 0
  %v10471 = vsel %vm105, %v10455, 0
  %v10473 = vsel %vm105, %v10456, 0
  %v10475 = vsel %vm105, %v10457, 0
  %10477 = vmatprep.subr.mxu0 %v10463
  %10478 = vmatpush1.msra.mxu0 %v10461
  %10479 = vmatprep.subr.mxu0 0.0
  %10480 = vmatpush1.msra.mxu0 0.0
  %10481 = vmatprep.subr.mxu0 0.0
  %10482 = vmatpush1.msra.mxu0 0.0
  %10483 = vmatprep.subr.mxu0 0.0
  %10484 = vmatpush1.msra.mxu0 0.0
  %10485 = vmatprep.subr.mxu0 0.0
  %10486 = vmatpush1.msra.mxu0 0.0
  %10487 = vmatprep.subr.mxu0 0.0
  %10488 = vmatpush1.msra.mxu0 0.0
  %10489 = vmatprep.subr.mxu0 0.0
  %10490 = vmatpush1.msra.mxu0 0.0
  %10491 = vmatprep.subr.mxu0 0.0
  %10492 = vmatpush1.msra.mxu0 0.0
  %10493 = vmatprep.subr.mxu0 0.0
  %10494 = vmatpush1.msra.mxu0 0.0
  %10495 = vmatprep.subr.mxu0 0.0
  %10496 = vmatpush1.msra.mxu0 0.0
  %10497 = vmatprep.subr.mxu0 0.0
  %10498 = vmatpush1.msra.mxu0 0.0
  %10499 = vmatprep.subr.mxu0 0.0
  %10500 = vmatpush1.msra.mxu0 0.0
  %10501 = vmatprep.subr.mxu0 0.0
  %10502 = vmatpush1.msra.mxu0 0.0
  %10503 = vmatprep.subr.mxu0 0.0
  %10504 = vmatpush1.msra.mxu0 0.0
  %10505 = vmatprep.subr.mxu0 0.0
  %10506 = vmatpush1.msra.mxu0 0.0
  %10507 = vmatprep.subr.mxu0 0.0
  %10508 = vmatpush1.msra.mxu0 0.0
  %10509 = vmatprep.subr.mxu0 0.0
  %10510 = vmatpush1.msra.mxu0 0.0
  %10511 = vmatprep.subr.mxu0 0.0
  %10512 = vmatpush1.msra.mxu0 0.0
  %10513 = vmatprep.subr.mxu0 0.0
  %10514 = vmatpush1.msra.mxu0 0.0
  %10515 = vmatprep.subr.mxu0 0.0
  %10516 = vmatpush1.msra.mxu0 0.0
  %10517 = vmatprep.subr.mxu0 0.0
  %10518 = vmatpush1.msra.mxu0 0.0
  %10519 = vmatprep.subr.mxu0 0.0
  %10520 = vmatpush1.msra.mxu0 0.0
  %10521 = vmatprep.subr.mxu0 0.0
  %10522 = vmatpush1.msra.mxu0 0.0
  %10523 = vmatprep.subr.mxu0 0.0
  %10524 = vmatpush1.msra.mxu0 0.0
  %10525 = vmatprep.subr.mxu0 0.0
  %10526 = vmatpush1.msra.mxu0 0.0
  %10527 = vmatprep.subr.mxu0 0.0
  %10528 = vmatpush1.msra.mxu0 0.0
  %10529 = vmatprep.subr.mxu0 0.0
  %10530 = vmatpush1.msra.mxu0 0.0
  %10531 = vmatprep.subr.mxu0 0.0
  %10532 = vmatpush1.msra.mxu0 0.0
  %10533 = vmatprep.subr.mxu0 0.0
  %10534 = vmatpush1.msra.mxu0 0.0
  %10535 = vmatprep.subr.mxu0 0.0
  %10536 = vmatpush1.msra.mxu0 0.0
  %10537 = vmatprep.subr.mxu0 0.0
  %10538 = vmatpush1.msra.mxu0 0.0
  %10539 = vmatprep.subr.mxu0 0.0
  %10540 = vmatpush1.msra.mxu0 0.0
  %10541 = vmatprep.mubr.f32.mxu0 0.0
  %10542 = vmatmul.mubr.f32.gmra.mrb[0].mxu0 %v10459
  %v10543 = vpop.f32.mrb[0].mxu0
  %v10544 = vadd.f32 0.0, %v10543
  %v10545 = vpop.f32.mrb[0].mxu0
  %v10546 = vadd.f32 0.0, %v10545
  %10547 = vdwg.mxu0
  %10548 = vmatprep.subr.mxu0 %v10467
  %10549 = vmatpush1.msra.mxu0 %v10465
  %10550 = vmatprep.subr.mxu0 0.0
  %10551 = vmatpush1.msra.mxu0 0.0
  %10552 = vmatprep.subr.mxu0 0.0
  %10553 = vmatpush1.msra.mxu0 0.0
  %10554 = vmatprep.subr.mxu0 0.0
  %10555 = vmatpush1.msra.mxu0 0.0
  %10556 = vmatprep.subr.mxu0 0.0
  %10557 = vmatpush1.msra.mxu0 0.0
  %10558 = vmatprep.subr.mxu0 0.0
  %10559 = vmatpush1.msra.mxu0 0.0
  %10560 = vmatprep.subr.mxu0 0.0
  %10561 = vmatpush1.msra.mxu0 0.0
  %10562 = vmatprep.subr.mxu0 0.0
  %10563 = vmatpush1.msra.mxu0 0.0
  %10564 = vmatprep.subr.mxu0 0.0
  %10565 = vmatpush1.msra.mxu0 0.0
  %10566 = vmatprep.subr.mxu0 0.0
  %10567 = vmatpush1.msra.mxu0 0.0
  %10568 = vmatprep.subr.mxu0 0.0
  %10569 = vmatpush1.msra.mxu0 0.0
  %10570 = vmatprep.subr.mxu0 0.0
  %10571 = vmatpush1.msra.mxu0 0.0
  %10572 = vmatprep.subr.mxu0 0.0
  %10573 = vmatpush1.msra.mxu0 0.0
  %10574 = vmatprep.subr.mxu0 0.0
  %10575 = vmatpush1.msra.mxu0 0.0
  %10576 = vmatprep.subr.mxu0 0.0
  %10577 = vmatpush1.msra.mxu0 0.0
  %10578 = vmatprep.subr.mxu0 0.0
  %10579 = vmatpush1.msra.mxu0 0.0
  %10580 = vmatprep.subr.mxu0 0.0
  %10581 = vmatpush1.msra.mxu0 0.0
  %10582 = vmatprep.subr.mxu0 0.0
  %10583 = vmatpush1.msra.mxu0 0.0
  %10584 = vmatprep.subr.mxu0 0.0
  %10585 = vmatpush1.msra.mxu0 0.0
  %10586 = vmatprep.subr.mxu0 0.0
  %10587 = vmatpush1.msra.mxu0 0.0
  %10588 = vmatprep.subr.mxu0 0.0
  %10589 = vmatpush1.msra.mxu0 0.0
  %10590 = vmatprep.subr.mxu0 0.0
  %10591 = vmatpush1.msra.mxu0 0.0
  %10592 = vmatprep.subr.mxu0 0.0
  %10593 = vmatpush1.msra.mxu0 0.0
  %10594 = vmatprep.subr.mxu0 0.0
  %10595 = vmatpush1.msra.mxu0 0.0
  %10596 = vmatprep.subr.mxu0 0.0
  %10597 = vmatpush1.msra.mxu0 0.0
  %10598 = vmatprep.subr.mxu0 0.0
  %10599 = vmatpush1.msra.mxu0 0.0
  %10600 = vmatprep.subr.mxu0 0.0
  %10601 = vmatpush1.msra.mxu0 0.0
  %10602 = vmatprep.subr.mxu0 0.0
  %10603 = vmatpush1.msra.mxu0 0.0
  %10604 = vmatprep.subr.mxu0 0.0
  %10605 = vmatpush1.msra.mxu0 0.0
  %10606 = vmatprep.subr.mxu0 0.0
  %10607 = vmatpush1.msra.mxu0 0.0
  %10608 = vmatprep.subr.mxu0 0.0
  %10609 = vmatpush1.msra.mxu0 0.0
  %10610 = vmatprep.subr.mxu0 0.0
  %10611 = vmatpush1.msra.mxu0 0.0
  %10612 = vmatprep.mubr.f32.mxu0 0.0
  %10613 = vmatmul.mubr.f32.gmra.mrb[0].mxu0 %v10459
  %v10614 = vpop.f32.mrb[0].mxu0
  %v10615 = vadd.f32 0.0, %v10614
  %v10616 = vpop.f32.mrb[0].mxu0
  %v10617 = vadd.f32 0.0, %v10616
  %10618 = vdwg.mxu0
  %10619 = vmatprep.subr.mxu0 %v10471
  %10620 = vmatpush1.msra.mxu0 %v10469
  %10621 = vmatprep.subr.mxu0 0.0
  %10622 = vmatpush1.msra.mxu0 0.0
  %10623 = vmatprep.subr.mxu0 0.0
  %10624 = vmatpush1.msra.mxu0 0.0
  %10625 = vmatprep.subr.mxu0 0.0
  %10626 = vmatpush1.msra.mxu0 0.0
  %10627 = vmatprep.subr.mxu0 0.0
  %10628 = vmatpush1.msra.mxu0 0.0
  %10629 = vmatprep.subr.mxu0 0.0
  %10630 = vmatpush1.msra.mxu0 0.0
  %10631 = vmatprep.subr.mxu0 0.0
  %10632 = vmatpush1.msra.mxu0 0.0
  %10633 = vmatprep.subr.mxu0 0.0
  %10634 = vmatpush1.msra.mxu0 0.0
  %10635 = vmatprep.subr.mxu0 0.0
  %10636 = vmatpush1.msra.mxu0 0.0
  %10637 = vmatprep.subr.mxu0 0.0
  %10638 = vmatpush1.msra.mxu0 0.0
  %10639 = vmatprep.subr.mxu0 0.0
  %10640 = vmatpush1.msra.mxu0 0.0
  %10641 = vmatprep.subr.mxu0 0.0
  %10642 = vmatpush1.msra.mxu0 0.0
  %10643 = vmatprep.subr.mxu0 0.0
  %10644 = vmatpush1.msra.mxu0 0.0
  %10645 = vmatprep.subr.mxu0 0.0
  %10646 = vmatpush1.msra.mxu0 0.0
  %10647 = vmatprep.subr.mxu0 0.0
  %10648 = vmatpush1.msra.mxu0 0.0
  %10649 = vmatprep.subr.mxu0 0.0
  %10650 = vmatpush1.msra.mxu0 0.0
  %10651 = vmatprep.subr.mxu0 0.0
  %10652 = vmatpush1.msra.mxu0 0.0
  %10653 = vmatprep.subr.mxu0 0.0
  %10654 = vmatpush1.msra.mxu0 0.0
  %10655 = vmatprep.subr.mxu0 0.0
  %10656 = vmatpush1.msra.mxu0 0.0
  %10657 = vmatprep.subr.mxu0 0.0
  %10658 = vmatpush1.msra.mxu0 0.0
  %10659 = vmatprep.subr.mxu0 0.0
  %10660 = vmatpush1.msra.mxu0 0.0
  %10661 = vmatprep.subr.mxu0 0.0
  %10662 = vmatpush1.msra.mxu0 0.0
  %10663 = vmatprep.subr.mxu0 0.0
  %10664 = vmatpush1.msra.mxu0 0.0
  %10665 = vmatprep.subr.mxu0 0.0
  %10666 = vmatpush1.msra.mxu0 0.0
  %10667 = vmatprep.subr.mxu0 0.0
  %10668 = vmatpush1.msra.mxu0 0.0
  %10669 = vmatprep.subr.mxu0 0.0
  %10670 = vmatpush1.msra.mxu0 0.0
  %10671 = vmatprep.subr.mxu0 0.0
  %10672 = vmatpush1.msra.mxu0 0.0
  %10673 = vmatprep.subr.mxu0 0.0
  %10674 = vmatpush1.msra.mxu0 0.0
  %10675 = vmatprep.subr.mxu0 0.0
  %10676 = vmatpush1.msra.mxu0 0.0
  %10677 = vmatprep.subr.mxu0 0.0
  %10678 = vmatpush1.msra.mxu0 0.0
  %10679 = vmatprep.subr.mxu0 0.0
  %10680 = vmatpush1.msra.mxu0 0.0
  %10681 = vmatprep.subr.mxu0 0.0
  %10682 = vmatpush1.msra.mxu0 0.0
  %10683 = vmatprep.mubr.f32.mxu0 0.0
  %10684 = vmatmul.mubr.f32.gmra.mrb[0].mxu0 %v10459
  %v10685 = vpop.f32.mrb[0].mxu0
  %v10686 = vadd.f32 0.0, %v10685
  %v10687 = vpop.f32.mrb[0].mxu0
  %v10688 = vadd.f32 0.0, %v10687
  %10689 = vdwg.mxu0
  %10690 = vmatprep.subr.mxu0 %v10475
  %10691 = vmatpush1.msra.mxu0 %v10473
  %10692 = vmatprep.subr.mxu0 0.0
  %10693 = vmatpush1.msra.mxu0 0.0
  %10694 = vmatprep.subr.mxu0 0.0
  %10695 = vmatpush1.msra.mxu0 0.0
  %10696 = vmatprep.subr.mxu0 0.0
  %10697 = vmatpush1.msra.mxu0 0.0
  %10698 = vmatprep.subr.mxu0 0.0
  %10699 = vmatpush1.msra.mxu0 0.0
  %10700 = vmatprep.subr.mxu0 0.0
  %10701 = vmatpush1.msra.mxu0 0.0
  %10702 = vmatprep.subr.mxu0 0.0
  %10703 = vmatpush1.msra.mxu0 0.0
  %10704 = vmatprep.subr.mxu0 0.0
  %10705 = vmatpush1.msra.mxu0 0.0
  %10706 = vmatprep.subr.mxu0 0.0
  %10707 = vmatpush1.msra.mxu0 0.0
  %10708 = vmatprep.subr.mxu0 0.0
  %10709 = vmatpush1.msra.mxu0 0.0
  %10710 = vmatprep.subr.mxu0 0.0
  %10711 = vmatpush1.msra.mxu0 0.0
  %10712 = vmatprep.subr.mxu0 0.0
  %10713 = vmatpush1.msra.mxu0 0.0
  %10714 = vmatprep.subr.mxu0 0.0
  %10715 = vmatpush1.msra.mxu0 0.0
  %10716 = vmatprep.subr.mxu0 0.0
  %10717 = vmatpush1.msra.mxu0 0.0
  %10718 = vmatprep.subr.mxu0 0.0
  %10719 = vmatpush1.msra.mxu0 0.0
  %10720 = vmatprep.subr.mxu0 0.0
  %10721 = vmatpush1.msra.mxu0 0.0
  %10722 = vmatprep.subr.mxu0 0.0
  %10723 = vmatpush1.msra.mxu0 0.0
  %10724 = vmatprep.subr.mxu0 0.0
  %10725 = vmatpush1.msra.mxu0 0.0
  %10726 = vmatprep.subr.mxu0 0.0
  %10727 = vmatpush1.msra.mxu0 0.0
  %10728 = vmatprep.subr.mxu0 0.0
  %10729 = vmatpush1.msra.mxu0 0.0
  %10730 = vmatprep.subr.mxu0 0.0
  %10731 = vmatpush1.msra.mxu0 0.0
  %10732 = vmatprep.subr.mxu0 0.0
  %10733 = vmatpush1.msra.mxu0 0.0
  %10734 = vmatprep.subr.mxu0 0.0
  %10735 = vmatpush1.msra.mxu0 0.0
  %10736 = vmatprep.subr.mxu0 0.0
  %10737 = vmatpush1.msra.mxu0 0.0
  %10738 = vmatprep.subr.mxu0 0.0
  %10739 = vmatpush1.msra.mxu0 0.0
  %10740 = vmatprep.subr.mxu0 0.0
  %10741 = vmatpush1.msra.mxu0 0.0
  %10742 = vmatprep.subr.mxu0 0.0
  %10743 = vmatpush1.msra.mxu0 0.0
  %10744 = vmatprep.subr.mxu0 0.0
  %10745 = vmatpush1.msra.mxu0 0.0
  %10746 = vmatprep.subr.mxu0 0.0
  %10747 = vmatpush1.msra.mxu0 0.0
  %10748 = vmatprep.subr.mxu0 0.0
  %10749 = vmatpush1.msra.mxu0 0.0
  %10750 = vmatprep.subr.mxu0 0.0
  %10751 = vmatpush1.msra.mxu0 0.0
  %10752 = vmatprep.subr.mxu0 0.0
  %10753 = vmatpush1.msra.mxu0 0.0
  %10754 = vmatprep.mubr.f32.mxu0 0.0
  %10755 = vmatmul.mubr.f32.gmra.mrb[0].mxu0 %v10459
  %v10756 = vpop.f32.mrb[0].mxu0
  %v10757 = vadd.f32 0.0, %v10756
  %v10758 = vpop.f32.mrb[0].mxu0
  %v10759 = vadd.f32 0.0, %v10758
  %10760 = vdwg.mxu0
  %v10761 = vadd.f32 %v10339, %v10544
  %v10762 = vadd.f32 %v10340, %v10546
  %v10763 = vadd.f32 %v10341, %v10615
  %v10764 = vadd.f32 %v10342, %v10617
  %v10765 = vadd.f32 %v10343, %v10686
  %v10766 = vadd.f32 %v10344, %v10688
  %v10767 = vadd.f32 %v10345, %v10757
  %v10768 = vadd.f32 %v10346, %v10759
  %v10769 = vld [vmem:[#allocation2 + $0x4] sm:$0xff]
  %v10770 = vld [vmem:[#allocation2 + $0xc] sm:$0xff]
  %v10771 = vld [vmem:[#allocation2 + $0x14] sm:$0xff]
  %v10772 = vld [vmem:[#allocation2 + $0x1c] sm:$0xff]
  %v10773 = vld [vmem:[#allocation2 + $0x24] sm:$0xf]
  %v10774 = vld [vmem:[%s3324] ss:$8 sm:$0xf]
  %v10775 = vld [vmem:[%s3324] ss:$8 sm:$0xf0]
  %v10776 = vor.u32 %v10774, %v10775
  %v10778 = vlaneseq
  %v10779 = vshrl.u32 %v10778, 7
  %v10780 = vsub.s32 0, %v10779
  %v10781 = vrot.slane %v10776, %v10780
  %v10782 = vlaneseq
  %v10783 = vshrl.u32 %v10782, 7
  %v10784 = vsub.s32 1, %v10783
  %v10785 = vrot.slane %v10776, %v10784
  %v10786 = vlaneseq
  %v10787 = vshrl.u32 %v10786, 7
  %v10788 = vsub.s32 2, %v10787
  %v10789 = vrot.slane %v10776, %v10788
  %v10790 = vlaneseq
  %v10791 = vshrl.u32 %v10790, 7
  %v10792 = vsub.s32 3, %v10791
  %v10793 = vrot.slane %v10776, %v10792
  %v10794 = vlaneseq
  %v10795 = vshrl.u32 %v10794, 7
  %v10796 = vsub.s32 4, %v10795
  %v10797 = vrot.slane %v10776, %v10796
  %v10798 = vlaneseq
  %v10799 = vshrl.u32 %v10798, 7
  %v10800 = vsub.s32 5, %v10799
  %v10801 = vrot.slane %v10776, %v10800
  %v10802 = vlaneseq
  %v10803 = vshrl.u32 %v10802, 7
  %v10804 = vsub.s32 6, %v10803
  %v10805 = vrot.slane %v10776, %v10804
  %v10806 = vlaneseq
  %v10807 = vshrl.u32 %v10806, 7
  %v10808 = vsub.s32 7, %v10807
  %v10809 = vrot.slane %v10776, %v10808
  %v10810 = vcombine.low %v10781, %v10785
  %v10811 = vcombine.low %v10789, %v10793
  %v10812 = vcombine.low %v10797, %v10801
  %v10813 = vcombine.low %v10805, %v10809
  %10814 = vrot.lane.b32.xlu0 %v10810, 17
  %v10815 = vpop.permute.xlu0 %10814
  %10816 = vrot.lane.b32.xlu0 %v10811, 17
  %v10817 = vpop.permute.xlu0 %10816
  %10818 = vrot.lane.b32.xlu0 %v10812, 17
  %v10819 = vpop.permute.xlu0 %10818
  %10820 = vrot.lane.b32.xlu0 %v10813, 17
  %v10821 = vpop.permute.xlu0 %10820
  %v10822 = vrot.slane %v10815, 4
  %v10823 = vrot.slane %v10817, 4
  %v10824 = vrot.slane %v10819, 4
  %v10825 = vrot.slane %v10821, 4
  %v10826 = vsel %vm563, %v10822, %v10815
  %v10827 = vsel %vm105, %v10822, %v10823
  %v10828 = vsel %vm563, %v10827, %v10817
  %v10829 = vsel %vm105, %v10823, %v10824
  %v10830 = vsel %vm563, %v10829, %v10819
  %v10831 = vsel %vm105, %v10824, %v10825
  %v10832 = vsel %vm563, %v10831, %v10821
  %v10838 = vmul.f32 %v10769, %v10826
  %v10839 = vmul.f32 %v10770, %v10828
  %v10840 = vmul.f32 %v10771, %v10830
  %v10841 = vmul.f32 %v10772, %v10832
  %v10842 = vmul.f32 %v10773, %v10825
  %s10843 = scalar_lea.vmem %s2, 104
  %v10844 = vld [vmem:[%s10843] sm:$0xf]
  %v10850 = vcombine.high %v10838, %v10838
  %v10851 = vcombine.high %v10839, %v10839
  %v10852 = vcombine.high %v10840, %v10840
  %v10853 = vcombine.high %v10841, %v10841
  %10854 = vrot.lane.b32.xlu0 %v10838, 111
  %v10855 = vpop.permute.xlu0 %10854
  %10856 = vrot.lane.b32.xlu0 %v10850, 111
  %v10857 = vpop.permute.xlu0 %10856
  %10858 = vrot.lane.b32.xlu0 %v10839, 111
  %v10859 = vpop.permute.xlu0 %10858
  %10860 = vrot.lane.b32.xlu0 %v10851, 111
  %v10861 = vpop.permute.xlu0 %10860
  %10862 = vrot.lane.b32.xlu0 %v10840, 111
  %v10863 = vpop.permute.xlu0 %10862
  %10864 = vrot.lane.b32.xlu0 %v10852, 111
  %v10865 = vpop.permute.xlu0 %10864
  %10866 = vrot.lane.b32.xlu0 %v10841, 111
  %v10867 = vpop.permute.xlu0 %10866
  %10868 = vrot.lane.b32.xlu0 %v10853, 111
  %v10869 = vpop.permute.xlu0 %10868
  %10870 = vrot.lane.b32.xlu0 %v10842, 111
  %v10871 = vpop.permute.xlu0 %10870
  %v10872 = vsel %vm103, %v10855, %v10857
  %v10873 = vsel %vm103, %v10857, %v10859
  %v10874 = vsel %vm103, %v10859, %v10861
  %v10875 = vsel %vm103, %v10861, %v10863
  %v10876 = vsel %vm103, %v10863, %v10865
  %v10877 = vsel %vm103, %v10865, %v10867
  %v10878 = vsel %vm103, %v10867, %v10869
  %v10879 = vsel %vm103, %v10869, %v10871
  %v10881 = vsel %vm232, %v10844, 0
  %v10883 = vsel %vm105, %v10872, 0
  %v10885 = vsel %vm105, %v10873, 0
  %v10887 = vsel %vm105, %v10874, 0
  %v10889 = vsel %vm105, %v10875, 0
  %v10891 = vsel %vm105, %v10876, 0
  %v10893 = vsel %vm105, %v10877, 0
  %v10895 = vsel %vm105, %v10878, 0
  %v10897 = vsel %vm105, %v10879, 0
  %10899 = vmatprep.subr.mxu0 %v10885
  %10900 = vmatpush1.msra.mxu0 %v10883
  %10901 = vmatprep.subr.mxu0 0.0
  %10902 = vmatpush1.msra.mxu0 0.0
  %10903 = vmatprep.subr.mxu0 0.0
  %10904 = vmatpush1.msra.mxu0 0.0
  %10905 = vmatprep.subr.mxu0 0.0
  %10906 = vmatpush1.msra.mxu0 0.0
  %10907 = vmatprep.subr.mxu0 0.0
  %10908 = vmatpush1.msra.mxu0 0.0
  %10909 = vmatprep.subr.mxu0 0.0
  %10910 = vmatpush1.msra.mxu0 0.0
  %10911 = vmatprep.subr.mxu0 0.0
  %10912 = vmatpush1.msra.mxu0 0.0
  %10913 = vmatprep.subr.mxu0 0.0
  %10914 = vmatpush1.msra.mxu0 0.0
  %10915 = vmatprep.subr.mxu0 0.0
  %10916 = vmatpush1.msra.mxu0 0.0
  %10917 = vmatprep.subr.mxu0 0.0
  %10918 = vmatpush1.msra.mxu0 0.0
  %10919 = vmatprep.subr.mxu0 0.0
  %10920 = vmatpush1.msra.mxu0 0.0
  %10921 = vmatprep.subr.mxu0 0.0
  %10922 = vmatpush1.msra.mxu0 0.0
  %10923 = vmatprep.subr.mxu0 0.0
  %10924 = vmatpush1.msra.mxu0 0.0
  %10925 = vmatprep.subr.mxu0 0.0
  %10926 = vmatpush1.msra.mxu0 0.0
  %10927 = vmatprep.subr.mxu0 0.0
  %10928 = vmatpush1.msra.mxu0 0.0
  %10929 = vmatprep.subr.mxu0 0.0
  %10930 = vmatpush1.msra.mxu0 0.0
  %10931 = vmatprep.subr.mxu0 0.0
  %10932 = vmatpush1.msra.mxu0 0.0
  %10933 = vmatprep.subr.mxu0 0.0
  %10934 = vmatpush1.msra.mxu0 0.0
  %10935 = vmatprep.subr.mxu0 0.0
  %10936 = vmatpush1.msra.mxu0 0.0
  %10937 = vmatprep.subr.mxu0 0.0
  %10938 = vmatpush1.msra.mxu0 0.0
  %10939 = vmatprep.subr.mxu0 0.0
  %10940 = vmatpush1.msra.mxu0 0.0
  %10941 = vmatprep.subr.mxu0 0.0
  %10942 = vmatpush1.msra.mxu0 0.0
  %10943 = vmatprep.subr.mxu0 0.0
  %10944 = vmatpush1.msra.mxu0 0.0
  %10945 = vmatprep.subr.mxu0 0.0
  %10946 = vmatpush1.msra.mxu0 0.0
  %10947 = vmatprep.subr.mxu0 0.0
  %10948 = vmatpush1.msra.mxu0 0.0
  %10949 = vmatprep.subr.mxu0 0.0
  %10950 = vmatpush1.msra.mxu0 0.0
  %10951 = vmatprep.subr.mxu0 0.0
  %10952 = vmatpush1.msra.mxu0 0.0
  %10953 = vmatprep.subr.mxu0 0.0
  %10954 = vmatpush1.msra.mxu0 0.0
  %10955 = vmatprep.subr.mxu0 0.0
  %10956 = vmatpush1.msra.mxu0 0.0
  %10957 = vmatprep.subr.mxu0 0.0
  %10958 = vmatpush1.msra.mxu0 0.0
  %10959 = vmatprep.subr.mxu0 0.0
  %10960 = vmatpush1.msra.mxu0 0.0
  %10961 = vmatprep.subr.mxu0 0.0
  %10962 = vmatpush1.msra.mxu0 0.0
  %10963 = vmatprep.mubr.f32.mxu0 0.0
  %10964 = vmatmul.mubr.f32.gmra.mrb[0].mxu0 %v10881
  %v10965 = vpop.f32.mrb[0].mxu0
  %v10966 = vadd.f32 0.0, %v10965
  %v10967 = vpop.f32.mrb[0].mxu0
  %v10968 = vadd.f32 0.0, %v10967
  %10969 = vdwg.mxu0
  %10970 = vmatprep.subr.mxu0 %v10889
  %10971 = vmatpush1.msra.mxu0 %v10887
  %10972 = vmatprep.subr.mxu0 0.0
  %10973 = vmatpush1.msra.mxu0 0.0
  %10974 = vmatprep.subr.mxu0 0.0
  %10975 = vmatpush1.msra.mxu0 0.0
  %10976 = vmatprep.subr.mxu0 0.0
  %10977 = vmatpush1.msra.mxu0 0.0
  %10978 = vmatprep.subr.mxu0 0.0
  %10979 = vmatpush1.msra.mxu0 0.0
  %10980 = vmatprep.subr.mxu0 0.0
  %10981 = vmatpush1.msra.mxu0 0.0
  %10982 = vmatprep.subr.mxu0 0.0
  %10983 = vmatpush1.msra.mxu0 0.0
  %10984 = vmatprep.subr.mxu0 0.0
  %10985 = vmatpush1.msra.mxu0 0.0
  %10986 = vmatprep.subr.mxu0 0.0
  %10987 = vmatpush1.msra.mxu0 0.0
  %10988 = vmatprep.subr.mxu0 0.0
  %10989 = vmatpush1.msra.mxu0 0.0
  %10990 = vmatprep.subr.mxu0 0.0
  %10991 = vmatpush1.msra.mxu0 0.0
  %10992 = vmatprep.subr.mxu0 0.0
  %10993 = vmatpush1.msra.mxu0 0.0
  %10994 = vmatprep.subr.mxu0 0.0
  %10995 = vmatpush1.msra.mxu0 0.0
  %10996 = vmatprep.subr.mxu0 0.0
  %10997 = vmatpush1.msra.mxu0 0.0
  %10998 = vmatprep.subr.mxu0 0.0
  %10999 = vmatpush1.msra.mxu0 0.0
  %11000 = vmatprep.subr.mxu0 0.0
  %11001 = vmatpush1.msra.mxu0 0.0
  %11002 = vmatprep.subr.mxu0 0.0
  %11003 = vmatpush1.msra.mxu0 0.0
  %11004 = vmatprep.subr.mxu0 0.0
  %11005 = vmatpush1.msra.mxu0 0.0
  %11006 = vmatprep.subr.mxu0 0.0
  %11007 = vmatpush1.msra.mxu0 0.0
  %11008 = vmatprep.subr.mxu0 0.0
  %11009 = vmatpush1.msra.mxu0 0.0
  %11010 = vmatprep.subr.mxu0 0.0
  %11011 = vmatpush1.msra.mxu0 0.0
  %11012 = vmatprep.subr.mxu0 0.0
  %11013 = vmatpush1.msra.mxu0 0.0
  %11014 = vmatprep.subr.mxu0 0.0
  %11015 = vmatpush1.msra.mxu0 0.0
  %11016 = vmatprep.subr.mxu0 0.0
  %11017 = vmatpush1.msra.mxu0 0.0
  %11018 = vmatprep.subr.mxu0 0.0
  %11019 = vmatpush1.msra.mxu0 0.0
  %11020 = vmatprep.subr.mxu0 0.0
  %11021 = vmatpush1.msra.mxu0 0.0
  %11022 = vmatprep.subr.mxu0 0.0
  %11023 = vmatpush1.msra.mxu0 0.0
  %11024 = vmatprep.subr.mxu0 0.0
  %11025 = vmatpush1.msra.mxu0 0.0
  %11026 = vmatprep.subr.mxu0 0.0
  %11027 = vmatpush1.msra.mxu0 0.0
  %11028 = vmatprep.subr.mxu0 0.0
  %11029 = vmatpush1.msra.mxu0 0.0
  %11030 = vmatprep.subr.mxu0 0.0
  %11031 = vmatpush1.msra.mxu0 0.0
  %11032 = vmatprep.subr.mxu0 0.0
  %11033 = vmatpush1.msra.mxu0 0.0
  %11034 = vmatprep.mubr.f32.mxu0 0.0
  %11035 = vmatmul.mubr.f32.gmra.mrb[0].mxu0 %v10881
  %v11036 = vpop.f32.mrb[0].mxu0
  %v11037 = vadd.f32 0.0, %v11036
  %v11038 = vpop.f32.mrb[0].mxu0
  %v11039 = vadd.f32 0.0, %v11038
  %11040 = vdwg.mxu0
  %11041 = vmatprep.subr.mxu0 %v10893
  %11042 = vmatpush1.msra.mxu0 %v10891
  %11043 = vmatprep.subr.mxu0 0.0
  %11044 = vmatpush1.msra.mxu0 0.0
  %11045 = vmatprep.subr.mxu0 0.0
  %11046 = vmatpush1.msra.mxu0 0.0
  %11047 = vmatprep.subr.mxu0 0.0
  %11048 = vmatpush1.msra.mxu0 0.0
  %11049 = vmatprep.subr.mxu0 0.0
  %11050 = vmatpush1.msra.mxu0 0.0
  %11051 = vmatprep.subr.mxu0 0.0
  %11052 = vmatpush1.msra.mxu0 0.0
  %11053 = vmatprep.subr.mxu0 0.0
  %11054 = vmatpush1.msra.mxu0 0.0
  %11055 = vmatprep.subr.mxu0 0.0
  %11056 = vmatpush1.msra.mxu0 0.0
  %11057 = vmatprep.subr.mxu0 0.0
  %11058 = vmatpush1.msra.mxu0 0.0
  %11059 = vmatprep.subr.mxu0 0.0
  %11060 = vmatpush1.msra.mxu0 0.0
  %11061 = vmatprep.subr.mxu0 0.0
  %11062 = vmatpush1.msra.mxu0 0.0
  %11063 = vmatprep.subr.mxu0 0.0
  %11064 = vmatpush1.msra.mxu0 0.0
  %11065 = vmatprep.subr.mxu0 0.0
  %11066 = vmatpush1.msra.mxu0 0.0
  %11067 = vmatprep.subr.mxu0 0.0
  %11068 = vmatpush1.msra.mxu0 0.0
  %11069 = vmatprep.subr.mxu0 0.0
  %11070 = vmatpush1.msra.mxu0 0.0
  %11071 = vmatprep.subr.mxu0 0.0
  %11072 = vmatpush1.msra.mxu0 0.0
  %11073 = vmatprep.subr.mxu0 0.0
  %11074 = vmatpush1.msra.mxu0 0.0
  %11075 = vmatprep.subr.mxu0 0.0
  %11076 = vmatpush1.msra.mxu0 0.0
  %11077 = vmatprep.subr.mxu0 0.0
  %11078 = vmatpush1.msra.mxu0 0.0
  %11079 = vmatprep.subr.mxu0 0.0
  %11080 = vmatpush1.msra.mxu0 0.0
  %11081 = vmatprep.subr.mxu0 0.0
  %11082 = vmatpush1.msra.mxu0 0.0
  %11083 = vmatprep.subr.mxu0 0.0
  %11084 = vmatpush1.msra.mxu0 0.0
  %11085 = vmatprep.subr.mxu0 0.0
  %11086 = vmatpush1.msra.mxu0 0.0
  %11087 = vmatprep.subr.mxu0 0.0
  %11088 = vmatpush1.msra.mxu0 0.0
  %11089 = vmatprep.subr.mxu0 0.0
  %11090 = vmatpush1.msra.mxu0 0.0
  %11091 = vmatprep.subr.mxu0 0.0
  %11092 = vmatpush1.msra.mxu0 0.0
  %11093 = vmatprep.subr.mxu0 0.0
  %11094 = vmatpush1.msra.mxu0 0.0
  %11095 = vmatprep.subr.mxu0 0.0
  %11096 = vmatpush1.msra.mxu0 0.0
  %11097 = vmatprep.subr.mxu0 0.0
  %11098 = vmatpush1.msra.mxu0 0.0
  %11099 = vmatprep.subr.mxu0 0.0
  %11100 = vmatpush1.msra.mxu0 0.0
  %11101 = vmatprep.subr.mxu0 0.0
  %11102 = vmatpush1.msra.mxu0 0.0
  %11103 = vmatprep.subr.mxu0 0.0
  %11104 = vmatpush1.msra.mxu0 0.0
  %11105 = vmatprep.mubr.f32.mxu0 0.0
  %11106 = vmatmul.mubr.f32.gmra.mrb[0].mxu0 %v10881
  %v11107 = vpop.f32.mrb[0].mxu0
  %v11108 = vadd.f32 0.0, %v11107
  %v11109 = vpop.f32.mrb[0].mxu0
  %v11110 = vadd.f32 0.0, %v11109
  %11111 = vdwg.mxu0
  %11112 = vmatprep.subr.mxu0 %v10897
  %11113 = vmatpush1.msra.mxu0 %v10895
  %11114 = vmatprep.subr.mxu0 0.0
  %11115 = vmatpush1.msra.mxu0 0.0
  %11116 = vmatprep.subr.mxu0 0.0
  %11117 = vmatpush1.msra.mxu0 0.0
  %11118 = vmatprep.subr.mxu0 0.0
  %11119 = vmatpush1.msra.mxu0 0.0
  %11120 = vmatprep.subr.mxu0 0.0
  %11121 = vmatpush1.msra.mxu0 0.0
  %11122 = vmatprep.subr.mxu0 0.0
  %11123 = vmatpush1.msra.mxu0 0.0
  %11124 = vmatprep.subr.mxu0 0.0
  %11125 = vmatpush1.msra.mxu0 0.0
  %11126 = vmatprep.subr.mxu0 0.0
  %11127 = vmatpush1.msra.mxu0 0.0
  %11128 = vmatprep.subr.mxu0 0.0
  %11129 = vmatpush1.msra.mxu0 0.0
  %11130 = vmatprep.subr.mxu0 0.0
  %11131 = vmatpush1.msra.mxu0 0.0
  %11132 = vmatprep.subr.mxu0 0.0
  %11133 = vmatpush1.msra.mxu0 0.0
  %11134 = vmatprep.subr.mxu0 0.0
  %11135 = vmatpush1.msra.mxu0 0.0
  %11136 = vmatprep.subr.mxu0 0.0
  %11137 = vmatpush1.msra.mxu0 0.0
  %11138 = vmatprep.subr.mxu0 0.0
  %11139 = vmatpush1.msra.mxu0 0.0
  %11140 = vmatprep.subr.mxu0 0.0
  %11141 = vmatpush1.msra.mxu0 0.0
  %11142 = vmatprep.subr.mxu0 0.0
  %11143 = vmatpush1.msra.mxu0 0.0
  %11144 = vmatprep.subr.mxu0 0.0
  %11145 = vmatpush1.msra.mxu0 0.0
  %11146 = vmatprep.subr.mxu0 0.0
  %11147 = vmatpush1.msra.mxu0 0.0
  %11148 = vmatprep.subr.mxu0 0.0
  %11149 = vmatpush1.msra.mxu0 0.0
  %11150 = vmatprep.subr.mxu0 0.0
  %11151 = vmatpush1.msra.mxu0 0.0
  %11152 = vmatprep.subr.mxu0 0.0
  %11153 = vmatpush1.msra.mxu0 0.0
  %11154 = vmatprep.subr.mxu0 0.0
  %11155 = vmatpush1.msra.mxu0 0.0
  %11156 = vmatprep.subr.mxu0 0.0
  %11157 = vmatpush1.msra.mxu0 0.0
  %11158 = vmatprep.subr.mxu0 0.0
  %11159 = vmatpush1.msra.mxu0 0.0
  %11160 = vmatprep.subr.mxu0 0.0
  %11161 = vmatpush1.msra.mxu0 0.0
  %11162 = vmatprep.subr.mxu0 0.0
  %11163 = vmatpush1.msra.mxu0 0.0
  %11164 = vmatprep.subr.mxu0 0.0
  %11165 = vmatpush1.msra.mxu0 0.0
  %11166 = vmatprep.subr.mxu0 0.0
  %11167 = vmatpush1.msra.mxu0 0.0
  %11168 = vmatprep.subr.mxu0 0.0
  %11169 = vmatpush1.msra.mxu0 0.0
  %11170 = vmatprep.subr.mxu0 0.0
  %11171 = vmatpush1.msra.mxu0 0.0
  %11172 = vmatprep.subr.mxu0 0.0
  %11173 = vmatpush1.msra.mxu0 0.0
  %11174 = vmatprep.subr.mxu0 0.0
  %11175 = vmatpush1.msra.mxu0 0.0
  %11176 = vmatprep.mubr.f32.mxu0 0.0
  %11177 = vmatmul.mubr.f32.gmra.mrb[0].mxu0 %v10881
  %v11178 = vpop.f32.mrb[0].mxu0
  %v11179 = vadd.f32 0.0, %v11178
  %v11180 = vpop.f32.mrb[0].mxu0
  %v11181 = vadd.f32 0.0, %v11180
  %11182 = vdwg.mxu0
  %v11183 = vadd.f32 %v10761, %v10966
  %v11184 = vadd.f32 %v10762, %v10968
  %v11185 = vadd.f32 %v10763, %v11037
  %v11186 = vadd.f32 %v10764, %v11039
  %v11187 = vadd.f32 %v10765, %v11108
  %v11188 = vadd.f32 %v10766, %v11110
  %v11189 = vadd.f32 %v10767, %v11179
  %v11190 = vadd.f32 %v10768, %v11181
  %s11191 = scalar_lea.vmem %s3, 8
  %v11192 = vld [vmem:[%s11191] sm:$0xf]
  %11194 = vset.pattern.permute.xlu0 0
  %11195 = vperm.xlu0 %11194, %v11192
  %v11196 = vpop.permute.xlu0 %11195
  %v11198 = vadd.f32 %v11183, %v11196
  %v11199 = vadd.f32 %v11184, %v11196
  %v11200 = vadd.f32 %v11185, %v11196
  %v11201 = vadd.f32 %v11186, %v11196
  %v11202 = vadd.f32 %v11187, %v11196
  %v11203 = vadd.f32 %v11188, %v11196
  %v11204 = vadd.f32 %v11189, %v11196
  %v11205 = vadd.f32 %v11190, %v11196
  %v11206 = vmax.f32 %v11198, 0.0
  %v11207 = vmax.f32 %v11199, 0.0
  %v11208 = vmax.f32 %v11200, 0.0
  %v11209 = vmax.f32 %v11201, 0.0
  %v11210 = vmax.f32 %v11202, 0.0
  %v11211 = vmax.f32 %v11203, 0.0
  %v11212 = vmax.f32 %v11204, 0.0
  %v11213 = vmax.f32 %v11205, 0.0
  %v11222 = vcombine.low %v11206, %v11207
  %v11223 = vcombine.low %v11208, %v11209
  %v11224 = vcombine.low %v11210, %v11211
  %v11225 = vcombine.low %v11212, %v11213
  %v11230 = vadd.f32 %v9178, %v11222
  %v11231 = vadd.f32 %v9179, %v11223
  %v11232 = vadd.f32 %v9180, %v11224
  %v11233 = vadd.f32 %v9181, %v11225
  %v11234 = vadd.f32 %v11230, %v11232
  %v11235 = vadd.f32 %v11231, %v11233
  %v11236 = vld [vmem:[%s4] sm:$0xff]
  %v11237 = vld [vmem:[%s5] sm:$0xff]
  %11239 = vset.pattern.permute.xlu0 0
  %11240 = vperm.xlu0 %11239, %v11237
  %v11241 = vpop.permute.xlu0 %11240
  %v11245 = vcombine.high %v11234, %v11234
  %v11246 = vcombine.high %v11235, %v11235
  %v11248 = vsel %vm232, %v11236, 0
  %v11250 = vsel %vm105, %v11234, 0
  %v11252 = vsel %vm105, %v11245, 0
  %v11254 = vsel %vm105, %v11235, 0
  %v11256 = vsel %vm105, %v11246, 0
  %11258 = vmatprep.subr.mxu0 %v11252
  %11259 = vmatpush1.msra.mxu0 %v11250
  %11260 = vmatprep.subr.mxu0 0.0
  %11261 = vmatpush1.msra.mxu0 0.0
  %11262 = vmatprep.subr.mxu0 0.0
  %11263 = vmatpush1.msra.mxu0 0.0
  %11264 = vmatprep.subr.mxu0 0.0
  %11265 = vmatpush1.msra.mxu0 0.0
  %11266 = vmatprep.subr.mxu0 0.0
  %11267 = vmatpush1.msra.mxu0 0.0
  %11268 = vmatprep.subr.mxu0 0.0
  %11269 = vmatpush1.msra.mxu0 0.0
  %11270 = vmatprep.subr.mxu0 0.0
  %11271 = vmatpush1.msra.mxu0 0.0
  %11272 = vmatprep.subr.mxu0 0.0
  %11273 = vmatpush1.msra.mxu0 0.0
  %11274 = vmatprep.subr.mxu0 0.0
  %11275 = vmatpush1.msra.mxu0 0.0
  %11276 = vmatprep.subr.mxu0 0.0
  %11277 = vmatpush1.msra.mxu0 0.0
  %11278 = vmatprep.subr.mxu0 0.0
  %11279 = vmatpush1.msra.mxu0 0.0
  %11280 = vmatprep.subr.mxu0 0.0
  %11281 = vmatpush1.msra.mxu0 0.0
  %11282 = vmatprep.subr.mxu0 0.0
  %11283 = vmatpush1.msra.mxu0 0.0
  %11284 = vmatprep.subr.mxu0 0.0
  %11285 = vmatpush1.msra.mxu0 0.0
  %11286 = vmatprep.subr.mxu0 0.0
  %11287 = vmatpush1.msra.mxu0 0.0
  %11288 = vmatprep.subr.mxu0 0.0
  %11289 = vmatpush1.msra.mxu0 0.0
  %11290 = vmatprep.subr.mxu0 0.0
  %11291 = vmatpush1.msra.mxu0 0.0
  %11292 = vmatprep.subr.mxu0 0.0
  %11293 = vmatpush1.msra.mxu0 0.0
  %11294 = vmatprep.subr.mxu0 0.0
  %11295 = vmatpush1.msra.mxu0 0.0
  %11296 = vmatprep.subr.mxu0 0.0
  %11297 = vmatpush1.msra.mxu0 0.0
  %11298 = vmatprep.subr.mxu0 0.0
  %11299 = vmatpush1.msra.mxu0 0.0
  %11300 = vmatprep.subr.mxu0 0.0
  %11301 = vmatpush1.msra.mxu0 0.0
  %11302 = vmatprep.subr.mxu0 0.0
  %11303 = vmatpush1.msra.mxu0 0.0
  %11304 = vmatprep.subr.mxu0 0.0
  %11305 = vmatpush1.msra.mxu0 0.0
  %11306 = vmatprep.subr.mxu0 0.0
  %11307 = vmatpush1.msra.mxu0 0.0
  %11308 = vmatprep.subr.mxu0 0.0
  %11309 = vmatpush1.msra.mxu0 0.0
  %11310 = vmatprep.subr.mxu0 0.0
  %11311 = vmatpush1.msra.mxu0 0.0
  %11312 = vmatprep.subr.mxu0 0.0
  %11313 = vmatpush1.msra.mxu0 0.0
  %11314 = vmatprep.subr.mxu0 0.0
  %11315 = vmatpush1.msra.mxu0 0.0
  %11316 = vmatprep.subr.mxu0 0.0
  %11317 = vmatpush1.msra.mxu0 0.0
  %11318 = vmatprep.subr.mxu0 0.0
  %11319 = vmatpush1.msra.mxu0 0.0
  %11320 = vmatprep.subr.mxu0 0.0
  %11321 = vmatpush1.msra.mxu0 0.0
  %11322 = vmatprep.mubr.f32.mxu0 0.0
  %11323 = vmatmul.mubr.f32.gmra.mrb[0].mxu0 %v11248
  %v11324 = vpop.f32.mrb[0].mxu0
  %v11325 = vadd.f32 %v11241, %v11324
  %v11326 = vpop.f32.mrb[0].mxu0
  %v11327 = vadd.f32 %v11241, %v11326
  %11328 = vdwg.mxu0
  %11329 = vmatprep.subr.mxu0 %v11256
  %11330 = vmatpush1.msra.mxu0 %v11254
  %11331 = vmatprep.subr.mxu0 0.0
  %11332 = vmatpush1.msra.mxu0 0.0
  %11333 = vmatprep.subr.mxu0 0.0
  %11334 = vmatpush1.msra.mxu0 0.0
  %11335 = vmatprep.subr.mxu0 0.0
  %11336 = vmatpush1.msra.mxu0 0.0
  %11337 = vmatprep.subr.mxu0 0.0
  %11338 = vmatpush1.msra.mxu0 0.0
  %11339 = vmatprep.subr.mxu0 0.0
  %11340 = vmatpush1.msra.mxu0 0.0
  %11341 = vmatprep.subr.mxu0 0.0
  %11342 = vmatpush1.msra.mxu0 0.0
  %11343 = vmatprep.subr.mxu0 0.0
  %11344 = vmatpush1.msra.mxu0 0.0
  %11345 = vmatprep.subr.mxu0 0.0
  %11346 = vmatpush1.msra.mxu0 0.0
  %11347 = vmatprep.subr.mxu0 0.0
  %11348 = vmatpush1.msra.mxu0 0.0
  %11349 = vmatprep.subr.mxu0 0.0
  %11350 = vmatpush1.msra.mxu0 0.0
  %11351 = vmatprep.subr.mxu0 0.0
  %11352 = vmatpush1.msra.mxu0 0.0
  %11353 = vmatprep.subr.mxu0 0.0
  %11354 = vmatpush1.msra.mxu0 0.0
  %11355 = vmatprep.subr.mxu0 0.0
  %11356 = vmatpush1.msra.mxu0 0.0
  %11357 = vmatprep.subr.mxu0 0.0
  %11358 = vmatpush1.msra.mxu0 0.0
  %11359 = vmatprep.subr.mxu0 0.0
  %11360 = vmatpush1.msra.mxu0 0.0
  %11361 = vmatprep.subr.mxu0 0.0
  %11362 = vmatpush1.msra.mxu0 0.0
  %11363 = vmatprep.subr.mxu0 0.0
  %11364 = vmatpush1.msra.mxu0 0.0
  %11365 = vmatprep.subr.mxu0 0.0
  %11366 = vmatpush1.msra.mxu0 0.0
  %11367 = vmatprep.subr.mxu0 0.0
  %11368 = vmatpush1.msra.mxu0 0.0
  %11369 = vmatprep.subr.mxu0 0.0
  %11370 = vmatpush1.msra.mxu0 0.0
  %11371 = vmatprep.subr.mxu0 0.0
  %11372 = vmatpush1.msra.mxu0 0.0
  %11373 = vmatprep.subr.mxu0 0.0
  %11374 = vmatpush1.msra.mxu0 0.0
  %11375 = vmatprep.subr.mxu0 0.0
  %11376 = vmatpush1.msra.mxu0 0.0
  %11377 = vmatprep.subr.mxu0 0.0
  %11378 = vmatpush1.msra.mxu0 0.0
  %11379 = vmatprep.subr.mxu0 0.0
  %11380 = vmatpush1.msra.mxu0 0.0
  %11381 = vmatprep.subr.mxu0 0.0
  %11382 = vmatpush1.msra.mxu0 0.0
  %11383 = vmatprep.subr.mxu0 0.0
  %11384 = vmatpush1.msra.mxu0 0.0
  %11385 = vmatprep.subr.mxu0 0.0
  %11386 = vmatpush1.msra.mxu0 0.0
  %11387 = vmatprep.subr.mxu0 0.0
  %11388 = vmatpush1.msra.mxu0 0.0
  %11389 = vmatprep.subr.mxu0 0.0
  %11390 = vmatpush1.msra.mxu0 0.0
  %11391 = vmatprep.subr.mxu0 0.0
  %11392 = vmatpush1.msra.mxu0 0.0
  %11393 = vmatprep.mubr.f32.mxu0 0.0
  %11394 = vmatmul.mubr.f32.gmra.mrb[0].mxu0 %v11248
  %v11395 = vpop.f32.mrb[0].mxu0
  %v11396 = vadd.f32 %v11241, %v11395
  %v11397 = vpop.f32.mrb[0].mxu0
  %v11398 = vadd.f32 %v11241, %v11397
  %11399 = vdwg.mxu0
  %v11400 = vadd.f32 %v11325, %v11327
  %v11401 = vadd.f32 %v11400, %v11396
  %v11402 = vadd.f32 %v11401, %v11398
  %11403 = vadd.xlane.f32.xlu0 %v11402
  %v11404 = vpop.xlane.xlu0 %11403
  %v11405 = vmul.f32 %v11404, 0.001953125
  %v11406 = vsub.f32 %v11325, %v11405
  %v11407 = vsub.f32 %v11327, %v11405
  %v11408 = vsub.f32 %v11396, %v11405
  %v11409 = vsub.f32 %v11398, %v11405
  %v11410 = vmul.f32 %v11406, %v11406
  %v11411 = vmul.f32 %v11407, %v11407
  %v11412 = vmul.f32 %v11408, %v11408
  %v11413 = vmul.f32 %v11409, %v11409
  %v11414 = vadd.f32 %v11410, %v11411
  %v11415 = vadd.f32 %v11414, %v11412
  %v11416 = vadd.f32 %v11415, %v11413
  %11417 = vadd.xlane.f32.xlu0 %v11416
  %v11418 = vpop.xlane.xlu0 %11417
  %v11419 = vmul.f32 %v11418, 0.001953125
  %v11420 = vadd.f32 %v11419, 1e-05
  %v11421 = vrsqrt.pop %v11420
  %v11422 = vmul.f32 %v11406, %v11421
  %v11423 = vmul.f32 %v11407, %v11421
  %v11424 = vmul.f32 %v11408, %v11421
  %v11425 = vmul.f32 %v11409, %v11421
  %v11426 = vld [vmem:[%s6] sm:$0xff]
  %11428 = vset.pattern.permute.xlu0 0
  %11429 = vperm.xlu0 %11428, %v11426
  %v11430 = vpop.permute.xlu0 %11429
  %v11432 = vmul.f32 %v11422, %v11430
  %v11433 = vmul.f32 %v11423, %v11430
  %v11434 = vmul.f32 %v11424, %v11430
  %v11435 = vmul.f32 %v11425, %v11430
  %v11436 = vld [vmem:[%s7] sm:$0xff]
  %11438 = vset.pattern.permute.xlu0 0
  %11439 = vperm.xlu0 %11438, %v11436
  %v11440 = vpop.permute.xlu0 %11439
  %v11442 = vadd.f32 %v11432, %v11440
  %v11443 = vadd.f32 %v11433, %v11440
  %v11444 = vadd.f32 %v11434, %v11440
  %v11445 = vadd.f32 %v11435, %v11440
  %v11446 = vmax.f32 %v11442, 0.0
  %v11447 = vmax.f32 %v11443, 0.0
  %v11448 = vmax.f32 %v11444, 0.0
  %v11449 = vmax.f32 %v11445, 0.0
  %11450 = vst [vmem:[%s9] sm:$0xff] %v11446
  %11451 = vst [vmem:[%s9 + $0x8] sm:$0xff] %v11447
  %s11452 = scalar_lea.vmem %s9, 16
  %11453 = vst [vmem:[%s11452] sm:$0xff] %v11448
  %11454 = vst [vmem:[%s11452 + $0x8] sm:$0xff] %v11449
  // Predicated region
  $region38: #{densecat_cat_add_forward.1} parent=0 // pred_check
    _
  $region39: #{densecat_cat_add_forward.1} parent=0 // pred_check_branch
    %11456 = sbr.rel (0) target = $region41
  $region40: #{densecat_cat_add_forward.1} parent=0 // pred_region
    _
  $region41: #{densecat_cat_add_forward.1} parent=0 // pred_fallthru
    _
  // Predicated region
  $region42: #{densecat_cat_add_forward.1} parent=0 // pred_check
    _
  $region43: #{densecat_cat_add_forward.1} parent=0 // pred_check_branch
    %11458 = sbr.rel (0) target = $region45
  $region44: #{densecat_cat_add_forward.1} parent=0 // pred_region
    _
  $region45: #{densecat_cat_add_forward.1} parent=0 // pred_fallthru
    _

</llo_original>
